<compile_context>
chip_gen: v5e
topology: v5e:2x2
jax: 0.10.0
libtpu: 0.0.40
codegen_flags: <defaults>
</compile_context>

<pallas_src>
import functools

import jax
import jax.numpy as jnp
from jax import lax
from jax.experimental import pallas as pl
from jax.experimental.pallas import tpu as pltpu

_SQRT2 = 1.4142135623730951


def _erf(x):
    # Abramowitz & Stegun 7.1.26 rational approximation, |err| < 1.5e-7
    # (f32-accurate stand-in for the exact erf used by torch.nn.GELU()).
    ax = jnp.abs(x)
    t = 1.0 / (1.0 + 0.3275911 * ax)
    poly = ((((1.061405429 * t - 1.453152027) * t + 1.421413741) * t
             - 0.284496736) * t + 0.254829592) * t
    y = 1.0 - poly * jnp.exp(-ax * ax)
    return jnp.where(x < 0, -y, y)


def _gelu(x):
    return 0.5 * x * (1.0 + _erf(x / _SQRT2))


def focal_modulation_kernel(x_ref, wf_ref, bf_ref, *rest,
                            H, W, C, SEG, kernel_sizes, use_postln, mm_dtype):
    L = len(kernel_sizes)
    dw_refs = rest[:L]
    wh_ref, bh_ref, wp_ref, bp_ref = rest[L:L + 4]
    idx = L + 4
    if use_postln:
        lng_ref, lnb_ref = rest[idx:idx + 2]
        idx += 2
    out_ref = rest[idx]
    pad_ref = rest[idx + 1]

    HW = H * W
    max_pad = max(k // 2 for k in kernel_sizes) if kernel_sizes else 0

    # ---- fused f projection: one MXU matmul, lane-aligned segment slices ---
    x2 = x_ref[0]                                                   # (HW, C) f32
    fz = jnp.dot(x2.astype(mm_dtype), wf_ref[...],
                 preferred_element_type=jnp.float32) + bf_ref[...]  # (HW, NF) f32

    q = fz[:, 0:C]                                                  # seg 0
    ctx = fz[:, SEG:SEG + C]                                        # seg 1

    def gate(l):  # gate l, already replicated across the channel lanes
        s = (2 + l) * SEG
        return fz[:, s:s + C]

    # ---- hierarchical focal contexts (depthwise convs) ---------------------
    # Zero the padded scratch ONCE; the halo ring is never written afterwards,
    # the interior is rewritten at fixed offset max_pad each level.
    if kernel_sizes:
        pad_ref[...] = jnp.zeros(pad_ref.shape, jnp.float32)

    ctx_all = jnp.zeros((HW, C), jnp.float32)
    for l, k in enumerate(kernel_sizes):
        p = k // 2
        off = max_pad - p
        pad_ref[pl.ds(max_pad, H), pl.ds(max_pad, W), :] = ctx.reshape(H, W, C)
        acc = jnp.zeros((H, W, C), jnp.float32)
        # TODO(synk): lane-dense (H, W*C) tap layout (W-shift on the XLU lane
        #             axis) would remove the sublane realignment per tap; kept
        #             in (H, W, C) here to avoid an in-kernel relayout.
        for ki in range(k):
            for kj in range(k):
                w_tap = dw_refs[l][ki, kj, :].reshape(1, 1, C)      # per-chan tap
                acc = acc + pad_ref[pl.ds(off + ki, H), pl.ds(off + kj, W), :] * w_tap
        ctx = _gelu(acc).reshape(HW, C)                             # level-l ctx
        ctx_all = ctx_all + ctx * gate(l)

    # ---- global context ----------------------------------------------------
    ctx_global = _gelu(jnp.mean(ctx, axis=0, keepdims=True))        # (1, C)
    ctx_all = ctx_all + ctx_global * gate(L)

    # ---- modulation (h 1x1 conv), q * mod, post-LN, proj -------------------
    mod = jnp.dot(ctx_all.astype(mm_dtype), wh_ref[...],
                  preferred_element_type=jnp.float32) + bh_ref[...]
    x_out = q * mod
    if use_postln:
        mu = jnp.mean(x_out, axis=-1, keepdims=True)
        xc = x_out - mu
        var = jnp.mean(xc * xc, axis=-1, keepdims=True)
        x_out = xc * lax.rsqrt(var + 1e-5) * lng_ref[...] + lnb_ref[...]
    y = jnp.dot(x_out.astype(mm_dtype), wp_ref[...],
                preferred_element_type=jnp.float32) + bp_ref[...]
    # proj_drop(p=0.0) == identity
    out_ref[0] = y.astype(out_ref.dtype)


def focal_modulation_forward(x_nchw, params, *, focal_level, focal_window,
                             focal_factor, use_postln=False,
                             matmul_dtype=jnp.float32):
    """x_nchw: (B, C, H, W) float32 (the PyTorch module's actual input layout)."""
    B, C, H, W = x_nchw.shape
    L = focal_level
    kernel_sizes = tuple(focal_factor * k + focal_window for k in range(L))
    max_pad = max((k // 2 for k in kernel_sizes), default=0)
    HW = H * W
    SEG = ((C + 127) // 128) * 128          # 128-lane-aligned segment width

    # NCHW -> flattened NHWC (B, HW, C); XLA fuses transpose+reshape into one copy.
    x = jnp.transpose(x_nchw, (0, 2, 3, 1)).reshape(B, HW, C).astype(jnp.float32)

    # ---- fused, lane-padded f weight: segments [q | ctx | g0 .. gL] --------
    f_w, f_b = params["f_w"], params["f_b"]                          # (2C+L+1, C), (2C+L+1,)
    wq, bq = f_w[:C].T, f_b[:C]
    wc, bc = f_w[C:2 * C].T, f_b[C:2 * C]
    wg, bg = f_w[2 * C:].T, f_b[2 * C:]                              # (C, L+1), (L+1,)

    pad_w = lambda w: jnp.pad(w, ((0, 0), (0, SEG - w.shape[1])))
    pad_b = lambda b: jnp.pad(b, (0, SEG - b.shape[0]))
    w_segs = [pad_w(wq), pad_w(wc)]
    b_segs = [pad_b(bq), pad_b(bc)]
    for l in range(L + 1):
        # replicate the gate column across the whole segment -> the matmul
        # produces the gate already broadcast over the channel lanes.
        w_segs.append(jnp.tile(wg[:, l:l + 1], (1, SEG)))
        b_segs.append(jnp.tile(bg[l:l + 1], (SEG,)))
    wf = jnp.concatenate(w_segs, axis=1).astype(matmul_dtype)        # (C, (3+L)*SEG)
    bf = jnp.concatenate(b_segs, axis=0).reshape(1, -1).astype(jnp.float32)
    NF = wf.shape[1]

    dws = [jnp.transpose(params[f"focal_w_{l}"][:, 0], (1, 2, 0)).astype(jnp.float32)
           for l in range(L)]                                        # (k, k, C)
    wh = params["h_w"][:, :, 0, 0].T.astype(matmul_dtype)            # (C, C)
    bh = params["h_b"].reshape(1, C).astype(jnp.float32)
    wp = params["proj_w"].T.astype(matmul_dtype)                     # (C, C)
    bp = params["proj_b"].reshape(1, C).astype(jnp.float32)

    inputs = [x, wf, bf, *dws, wh, bh, wp, bp]
    in_specs = [
        pl.BlockSpec((1, HW, C), lambda b: (b, 0, 0)),
        pl.BlockSpec((C, NF), lambda b: (0, 0)),
        pl.BlockSpec((1, NF), lambda b: (0, 0)),
        *[pl.BlockSpec((k, k, C), lambda b: (0, 0, 0)) for k in kernel_sizes],
        pl.BlockSpec((C, C), lambda b: (0, 0)),
        pl.BlockSpec((1, C), lambda b: (0, 0)),
        pl.BlockSpec((C, C), lambda b: (0, 0)),
        pl.BlockSpec((1, C), lambda b: (0, 0)),
    ]
    if use_postln:
        inputs += [params["ln_g"].reshape(1, C).astype(jnp.float32),
                   params["ln_b"].reshape(1, C).astype(jnp.float32)]
        in_specs += [pl.BlockSpec((1, C), lambda b: (0, 0)),
                     pl.BlockSpec((1, C), lambda b: (0, 0))]

    kernel = functools.partial(
        focal_modulation_kernel, H=H, W=W, C=C, SEG=SEG,
        kernel_sizes=kernel_sizes, use_postln=use_postln, mm_dtype=matmul_dtype)

    out = pl.pallas_call(
        kernel,
        out_shape=jax.ShapeDtypeStruct((B, HW, C), jnp.float32),
        grid=(B,),
        in_specs=in_specs,
        out_specs=pl.BlockSpec((1, HW, C), lambda b: (b, 0, 0)),
        scratch_shapes=[pltpu.VMEM((H + 2 * max_pad, W + 2 * max_pad, C),
                                   jnp.float32)],
        compiler_params=pltpu.CompilerParams(
            dimension_semantics=("parallel",),          # batch steps independent
            vmem_limit_bytes=32 * 1024 * 1024),
    )(*inputs)
    # back to NCHW
    return jnp.transpose(out.reshape(B, H, W, C), (0, 3, 1, 2))


# ----------------------------- plain-JAX reference -----------------------------
def focal_modulation_reference(x_nchw, params, *, focal_level, focal_window,
                               focal_factor, use_postln=False):
    B, C, H, W = x_nchw.shape
    gelu = lambda v: jax.nn.gelu(v, approximate=False)
    x = jnp.transpose(x_nchw, (0, 2, 3, 1))
    xf = x @ params["f_w"].T + params["f_b"]
    xf = jnp.transpose(xf, (0, 3, 1, 2))
    q, ctx, gates = xf[:, :C], xf[:, C:2 * C], xf[:, 2 * C:]
    ctx_all = 0.0
    for l in range(focal_level):
        k = focal_factor * l + focal_window
        ctx = lax.conv_general_dilated(
            ctx, params[f"focal_w_{l}"], (1, 1), [(k // 2, k // 2)] * 2,
            dimension_numbers=("NCHW", "OIHW", "NCHW"), feature_group_count=C)
        ctx = gelu(ctx)
        ctx_all = ctx_all + ctx * gates[:, l:l + 1]
    ctx_global = gelu(jnp.mean(ctx, axis=(2, 3), keepdims=True))
    ctx_all = ctx_all + ctx_global * gates[:, focal_level:]
    h_out = jnp.einsum("oc,bchw->bohw", params["h_w"][:, :, 0, 0], ctx_all) \
        + params["h_b"].reshape(1, C, 1, 1)
    x_out = q * h_out
    x_out = jnp.transpose(x_out, (0, 2, 3, 1))
    if use_postln:
        mu = jnp.mean(x_out, -1, keepdims=True)
        var = jnp.mean((x_out - mu) ** 2, -1, keepdims=True)
        x_out = (x_out - mu) / jnp.sqrt(var + 1e-5) * params["ln_g"] + params["ln_b"]
    x_out = x_out @ params["proj_w"].T + params["proj_b"]
    return jnp.transpose(x_out, (0, 3, 1, 2))


def init_params(key, dim, focal_level, focal_window, focal_factor, use_postln):
    keys = jax.random.split(key, 8 + focal_level)
    nf = 2 * dim + focal_level + 1
    s = 1.0 / jnp.sqrt(jnp.float32(dim))
    p = {
        "f_w": jax.random.normal(keys[0], (nf, dim), jnp.float32) * s,
        "f_b": jax.random.normal(keys[1], (nf,), jnp.float32) * 0.02,
        "h_w": jax.random.normal(keys[2], (dim, dim, 1, 1), jnp.float32) * s,
        "h_b": jax.random.normal(keys[3], (dim,), jnp.float32) * 0.02,
        "proj_w": jax.random.normal(keys[4], (dim, dim), jnp.float32) * s,
        "proj_b": jax.random.normal(keys[5], (dim,), jnp.float32) * 0.02,
    }
    for l in range(focal_level):
        k = focal_factor * l + focal_window
        p[f"focal_w_{l}"] = jax.random.normal(keys[6 + l], (dim, 1, k, k), jnp.float32) / k
    if use_postln:
        p["ln_g"] = jnp.ones((dim,), jnp.float32)
        p["ln_b"] = jnp.zeros((dim,), jnp.float32)
    return p


if __name__ == "__main__":
    B, dim, H, W = 2, 32, 16, 16
    focal_level, focal_window, focal_factor = 2, 3, 2
    use_postln = False  # module default

    key = jax.random.PRNGKey(0)
    kx, kp = jax.random.split(key)
    x = jax.random.normal(kx, (B, dim, H, W), dtype=jnp.float32)  # NCHW, like PyTorch
    params = init_params(kp, dim, focal_level, focal_window, focal_factor, use_postln)

    # f32-matmul path: exact semantics check against the plain-JAX reference.
    fwd_f32 = jax.jit(functools.partial(
        focal_modulation_forward, focal_level=focal_level,
        focal_window=focal_window, focal_factor=focal_factor,
        use_postln=use_postln, matmul_dtype=jnp.float32))
    out = jax.block_until_ready(fwd_f32(x, params))
    assert out.shape == (B, dim, H, W)

    ref = focal_modulation_reference(
        x, params, focal_level=focal_level, focal_window=focal_window,
        focal_factor=focal_factor, use_postln=use_postln)
    max_err = float(jnp.max(jnp.abs(out - ref)))
    assert max_err < 2e-2, f"max abs err too large (f32): {max_err}"

    # bf16-matmul path (v5e/v6e MXU feedback): loose tolerance, f32 accumulation.
    fwd_bf16 = jax.jit(functools.partial(
        focal_modulation_forward, focal_level=focal_level,
        focal_window=focal_window, focal_factor=focal_factor,
        use_postln=use_postln, matmul_dtype=jnp.bfloat16))
    out_bf16 = jax.block_until_ready(fwd_bf16(x, params))
    max_err_bf16 = float(jnp.max(jnp.abs(out_bf16 - ref)))
    assert max_err_bf16 < 2e-1, f"max abs err too large (bf16): {max_err_bf16}"

    print("KERNEL_OK")
</pallas_src>

<mosaic_0001>
module attributes {stable_mosaic.version = 11 : i64} {
  func.func @focal_modulation_kernel(%arg0: i32, %arg1: memref<1x256x32xf32, #tpu.memory_space<vmem>>, %arg2: memref<32x640xf32, #tpu.memory_space<vmem>>, %arg3: memref<1x640xf32, #tpu.memory_space<vmem>>, %arg4: memref<3x3x32xf32, #tpu.memory_space<vmem>>, %arg5: memref<5x5x32xf32, #tpu.memory_space<vmem>>, %arg6: memref<32x32xf32, #tpu.memory_space<vmem>>, %arg7: memref<1x32xf32, #tpu.memory_space<vmem>>, %arg8: memref<32x32xf32, #tpu.memory_space<vmem>>, %arg9: memref<1x32xf32, #tpu.memory_space<vmem>>, %arg10: memref<1x256x32xf32, #tpu.memory_space<vmem>>, %arg11: memref<20x20x32xf32, #tpu.memory_space<vmem>>) attributes {dimension_semantics = [#tpu.dimension_semantics<parallel>], iteration_bounds = array<i64: 2>, scalar_prefetch = 0 : i64, scratch_operands = 1 : i64, tpu.core_type = #tpu.core_type<tc>, window_params = [{transform_indices = @transform_0, window_bounds = array<i64: 1, 256, 32>}, {pipeline_mode = #tpu.pipeline_mode<synchronous>, transform_indices = @transform_1, window_bounds = array<i64: 32, 640>}, {pipeline_mode = #tpu.pipeline_mode<synchronous>, transform_indices = @transform_2, window_bounds = array<i64: 1, 640>}, {pipeline_mode = #tpu.pipeline_mode<synchronous>, transform_indices = @transform_3, window_bounds = array<i64: 3, 3, 32>}, {pipeline_mode = #tpu.pipeline_mode<synchronous>, transform_indices = @transform_4, window_bounds = array<i64: 5, 5, 32>}, {pipeline_mode = #tpu.pipeline_mode<synchronous>, transform_indices = @transform_5, window_bounds = array<i64: 32, 32>}, {pipeline_mode = #tpu.pipeline_mode<synchronous>, transform_indices = @transform_6, window_bounds = array<i64: 1, 32>}, {pipeline_mode = #tpu.pipeline_mode<synchronous>, transform_indices = @transform_7, window_bounds = array<i64: 32, 32>}, {pipeline_mode = #tpu.pipeline_mode<synchronous>, transform_indices = @transform_8, window_bounds = array<i64: 1, 32>}, {transform_indices = @transform_9, window_bounds = array<i64: 1, 256, 32>}]} {
    %c0 = arith.constant 0 : index
    %c0_0 = arith.constant 0 : index
    %c0_1 = arith.constant 0 : index
    %0 = vector.load %arg1[%c0, %c0_0, %c0_1] : memref<1x256x32xf32, #tpu.memory_space<vmem>>, vector<1x256x32xf32>
    %1 = vector.shape_cast %0 : vector<1x256x32xf32> to vector<256x32xf32>
    %c0_2 = arith.constant 0 : index
    %c0_3 = arith.constant 0 : index
    %2 = vector.load %arg2[%c0_2, %c0_3] : memref<32x640xf32, #tpu.memory_space<vmem>>, vector<32x640xf32>
    %cst = arith.constant dense<0.000000e+00> : vector<256x640xf32>
    %3 = tpu.matmul %1, %2, %cst {dimension_numbers = #tpu.dot_dimension_numbers<[1], [0], [0], [1], [0, 0, 1, 1], [], []>} : vector<256x32xf32>, vector<32x640xf32>, vector<256x640xf32> -> vector<256x640xf32>
    %c0_4 = arith.constant 0 : index
    %c0_5 = arith.constant 0 : index
    %4 = vector.load %arg3[%c0_4, %c0_5] : memref<1x640xf32, #tpu.memory_space<vmem>>, vector<1x640xf32>
    %5 = vector.broadcast %4 : vector<1x640xf32> to vector<256x640xf32>
    %6 = arith.addf %3, %5 : vector<256x640xf32>
    %7 = vector.extract_strided_slice %6 {offsets = [0, 0], sizes = [256, 32], strides = [1, 1]} : vector<256x640xf32> to vector<256x32xf32>
    %8 = vector.extract_strided_slice %6 {offsets = [0, 128], sizes = [256, 32], strides = [1, 1]} : vector<256x640xf32> to vector<256x32xf32>
    %cst_6 = arith.constant 0.000000e+00 : f32
    %9 = vector.broadcast %cst_6 : f32 to vector<20x20x32xf32>
    %c0_7 = arith.constant 0 : index
    %c0_8 = arith.constant 0 : index
    %c0_9 = arith.constant 0 : index
    %10 = vector.load %arg11[%c0_7, %c0_8, %c0_9] : memref<20x20x32xf32, #tpu.memory_space<vmem>>, vector<20x20x32xf32>
    tpu.vector_store %arg11[%c0_7, %c0_8, %c0_9], %9 {strides = array<i32>} : memref<20x20x32xf32, #tpu.memory_space<vmem>>, vector<20x20x32xf32>,
    %cst_10 = arith.constant 0.000000e+00 : f32
    %11 = vector.broadcast %cst_10 : f32 to vector<256x32xf32>
    %12 = vector.shape_cast %8 : vector<256x32xf32> to vector<16x16x32xf32>
    %c2 = arith.constant 2 : index
    %c2_11 = arith.constant 2 : index
    %c0_12 = arith.constant 0 : index
    %13 = vector.load %arg11[%c2, %c2_11, %c0_12] : memref<20x20x32xf32, #tpu.memory_space<vmem>>, vector<16x16x32xf32>
    tpu.vector_store %arg11[%c2, %c2_11, %c0_12], %12 {strides = array<i32>} : memref<20x20x32xf32, #tpu.memory_space<vmem>>, vector<16x16x32xf32>,
    %cst_13 = arith.constant 0.000000e+00 : f32
    %14 = vector.broadcast %cst_13 : f32 to vector<16x16x32xf32>
    %c0_14 = arith.constant 0 : index
    %c0_15 = arith.constant 0 : index
    %c0_16 = arith.constant 0 : index
    %15 = vector.load %arg4[%c0_14, %c0_15, %c0_16] : memref<3x3x32xf32, #tpu.memory_space<vmem>>, vector<1x1x32xf32>
    %16 = vector.shape_cast %15 : vector<1x1x32xf32> to vector<32xf32>
    %17 = vector.shape_cast %16 : vector<32xf32> to vector<1x1x32xf32>
    %c1 = arith.constant 1 : index
    %c1_17 = arith.constant 1 : index
    %c0_18 = arith.constant 0 : index
    %18 = vector.load %arg11[%c1, %c1_17, %c0_18] : memref<20x20x32xf32, #tpu.memory_space<vmem>>, vector<16x16x32xf32>
    %19 = vector.broadcast %17 : vector<1x1x32xf32> to vector<16x16x32xf32>
    %20 = arith.mulf %18, %19 : vector<16x16x32xf32>
    %21 = arith.addf %14, %20 : vector<16x16x32xf32>
    %c0_19 = arith.constant 0 : index
    %c1_20 = arith.constant 1 : index
    %c0_21 = arith.constant 0 : index
    %22 = vector.load %arg4[%c0_19, %c1_20, %c0_21] : memref<3x3x32xf32, #tpu.memory_space<vmem>>, vector<1x1x32xf32>
    %23 = vector.shape_cast %22 : vector<1x1x32xf32> to vector<32xf32>
    %24 = vector.shape_cast %23 : vector<32xf32> to vector<1x1x32xf32>
    %c1_22 = arith.constant 1 : index
    %c2_23 = arith.constant 2 : index
    %c0_24 = arith.constant 0 : index
    %25 = vector.load %arg11[%c1_22, %c2_23, %c0_24] : memref<20x20x32xf32, #tpu.memory_space<vmem>>, vector<16x16x32xf32>
    %26 = vector.broadcast %24 : vector<1x1x32xf32> to vector<16x16x32xf32>
    %27 = arith.mulf %25, %26 : vector<16x16x32xf32>
    %28 = arith.addf %21, %27 : vector<16x16x32xf32>
    %c0_25 = arith.constant 0 : index
    %c2_26 = arith.constant 2 : index
    %c0_27 = arith.constant 0 : index
    %29 = vector.load %arg4[%c0_25, %c2_26, %c0_27] : memref<3x3x32xf32, #tpu.memory_space<vmem>>, vector<1x1x32xf32>
    %30 = vector.shape_cast %29 : vector<1x1x32xf32> to vector<32xf32>
    %31 = vector.shape_cast %30 : vector<32xf32> to vector<1x1x32xf32>
    %c1_28 = arith.constant 1 : index
    %c3 = arith.constant 3 : index
    %c0_29 = arith.constant 0 : index
    %32 = vector.load %arg11[%c1_28, %c3, %c0_29] : memref<20x20x32xf32, #tpu.memory_space<vmem>>, vector<16x16x32xf32>
    %33 = vector.broadcast %31 : vector<1x1x32xf32> to vector<16x16x32xf32>
    %34 = arith.mulf %32, %33 : vector<16x16x32xf32>
    %35 = arith.addf %28, %34 : vector<16x16x32xf32>
    %c1_30 = arith.constant 1 : index
    %c0_31 = arith.constant 0 : index
    %c0_32 = arith.constant 0 : index
    %36 = vector.load %arg4[%c1_30, %c0_31, %c0_32] : memref<3x3x32xf32, #tpu.memory_space<vmem>>, vector<1x1x32xf32>
    %37 = vector.shape_cast %36 : vector<1x1x32xf32> to vector<32xf32>
    %38 = vector.shape_cast %37 : vector<32xf32> to vector<1x1x32xf32>
    %c2_33 = arith.constant 2 : index
    %c1_34 = arith.constant 1 : index
    %c0_35 = arith.constant 0 : index
    %39 = vector.load %arg11[%c2_33, %c1_34, %c0_35] : memref<20x20x32xf32, #tpu.memory_space<vmem>>, vector<16x16x32xf32>
    %40 = vector.broadcast %38 : vector<1x1x32xf32> to vector<16x16x32xf32>
    %41 = arith.mulf %39, %40 : vector<16x16x32xf32>
    %42 = arith.addf %35, %41 : vector<16x16x32xf32>
    %c1_36 = arith.constant 1 : index
    %c1_37 = arith.constant 1 : index
    %c0_38 = arith.constant 0 : index
    %43 = vector.load %arg4[%c1_36, %c1_37, %c0_38] : memref<3x3x32xf32, #tpu.memory_space<vmem>>, vector<1x1x32xf32>
    %44 = vector.shape_cast %43 : vector<1x1x32xf32> to vector<32xf32>
    %45 = vector.shape_cast %44 : vector<32xf32> to vector<1x1x32xf32>
    %c2_39 = arith.constant 2 : index
    %c2_40 = arith.constant 2 : index
    %c0_41 = arith.constant 0 : index
    %46 = vector.load %arg11[%c2_39, %c2_40, %c0_41] : memref<20x20x32xf32, #tpu.memory_space<vmem>>, vector<16x16x32xf32>
    %47 = vector.broadcast %45 : vector<1x1x32xf32> to vector<16x16x32xf32>
    %48 = arith.mulf %46, %47 : vector<16x16x32xf32>
    %49 = arith.addf %42, %48 : vector<16x16x32xf32>
    %c1_42 = arith.constant 1 : index
    %c2_43 = arith.constant 2 : index
    %c0_44 = arith.constant 0 : index
    %50 = vector.load %arg4[%c1_42, %c2_43, %c0_44] : memref<3x3x32xf32, #tpu.memory_space<vmem>>, vector<1x1x32xf32>
    %51 = vector.shape_cast %50 : vector<1x1x32xf32> to vector<32xf32>
    %52 = vector.shape_cast %51 : vector<32xf32> to vector<1x1x32xf32>
    %c2_45 = arith.constant 2 : index
    %c3_46 = arith.constant 3 : index
    %c0_47 = arith.constant 0 : index
    %53 = vector.load %arg11[%c2_45, %c3_46, %c0_47] : memref<20x20x32xf32, #tpu.memory_space<vmem>>, vector<16x16x32xf32>
    %54 = vector.broadcast %52 : vector<1x1x32xf32> to vector<16x16x32xf32>
    %55 = arith.mulf %53, %54 : vector<16x16x32xf32>
    %56 = arith.addf %49, %55 : vector<16x16x32xf32>
    %c2_48 = arith.constant 2 : index
    %c0_49 = arith.constant 0 : index
    %c0_50 = arith.constant 0 : index
    %57 = vector.load %arg4[%c2_48, %c0_49, %c0_50] : memref<3x3x32xf32, #tpu.memory_space<vmem>>, vector<1x1x32xf32>
    %58 = vector.shape_cast %57 : vector<1x1x32xf32> to vector<32xf32>
    %59 = vector.shape_cast %58 : vector<32xf32> to vector<1x1x32xf32>
    %c3_51 = arith.constant 3 : index
    %c1_52 = arith.constant 1 : index
    %c0_53 = arith.constant 0 : index
    %60 = vector.load %arg11[%c3_51, %c1_52, %c0_53] : memref<20x20x32xf32, #tpu.memory_space<vmem>>, vector<16x16x32xf32>
    %61 = vector.broadcast %59 : vector<1x1x32xf32> to vector<16x16x32xf32>
    %62 = arith.mulf %60, %61 : vector<16x16x32xf32>
    %63 = arith.addf %56, %62 : vector<16x16x32xf32>
    %c2_54 = arith.constant 2 : index
    %c1_55 = arith.constant 1 : index
    %c0_56 = arith.constant 0 : index
    %64 = vector.load %arg4[%c2_54, %c1_55, %c0_56] : memref<3x3x32xf32, #tpu.memory_space<vmem>>, vector<1x1x32xf32>
    %65 = vector.shape_cast %64 : vector<1x1x32xf32> to vector<32xf32>
    %66 = vector.shape_cast %65 : vector<32xf32> to vector<1x1x32xf32>
    %c3_57 = arith.constant 3 : index
    %c2_58 = arith.constant 2 : index
    %c0_59 = arith.constant 0 : index
    %67 = vector.load %arg11[%c3_57, %c2_58, %c0_59] : memref<20x20x32xf32, #tpu.memory_space<vmem>>, vector<16x16x32xf32>
    %68 = vector.broadcast %66 : vector<1x1x32xf32> to vector<16x16x32xf32>
    %69 = arith.mulf %67, %68 : vector<16x16x32xf32>
    %70 = arith.addf %63, %69 : vector<16x16x32xf32>
    %c2_60 = arith.constant 2 : index
    %c2_61 = arith.constant 2 : index
    %c0_62 = arith.constant 0 : index
    %71 = vector.load %arg4[%c2_60, %c2_61, %c0_62] : memref<3x3x32xf32, #tpu.memory_space<vmem>>, vector<1x1x32xf32>
    %72 = vector.shape_cast %71 : vector<1x1x32xf32> to vector<32xf32>
    %73 = vector.shape_cast %72 : vector<32xf32> to vector<1x1x32xf32>
    %c3_63 = arith.constant 3 : index
    %c3_64 = arith.constant 3 : index
    %c0_65 = arith.constant 0 : index
    %74 = vector.load %arg11[%c3_63, %c3_64, %c0_65] : memref<20x20x32xf32, #tpu.memory_space<vmem>>, vector<16x16x32xf32>
    %75 = vector.broadcast %73 : vector<1x1x32xf32> to vector<16x16x32xf32>
    %76 = arith.mulf %74, %75 : vector<16x16x32xf32>
    %77 = arith.addf %70, %76 : vector<16x16x32xf32>
    %cst_66 = arith.constant 5.000000e-01 : f32
    %78 = vector.broadcast %cst_66 : f32 to vector<16x16x32xf32>
    %79 = arith.mulf %78, %77 : vector<16x16x32xf32>
    %cst_67 = arith.constant 1.41421354 : f32
    %80 = vector.broadcast %cst_67 : f32 to vector<16x16x32xf32>
    %81 = arith.divf %77, %80 : vector<16x16x32xf32>
    %82 = math.absf %81 : vector<16x16x32xf32>
    %cst_68 = arith.constant 0.327591091 : f32
    %83 = vector.broadcast %cst_68 : f32 to vector<16x16x32xf32>
    %84 = arith.mulf %83, %82 : vector<16x16x32xf32>
    %cst_69 = arith.constant 1.000000e+00 : f32
    %85 = vector.broadcast %cst_69 : f32 to vector<16x16x32xf32>
    %86 = arith.addf %85, %84 : vector<16x16x32xf32>
    %cst_70 = arith.constant 1.000000e+00 : f32
    %87 = vector.broadcast %cst_70 : f32 to vector<16x16x32xf32>
    %88 = arith.divf %87, %86 : vector<16x16x32xf32>
    %cst_71 = arith.constant 1.06140542 : f32
    %89 = vector.broadcast %cst_71 : f32 to vector<16x16x32xf32>
    %90 = arith.mulf %89, %88 : vector<16x16x32xf32>
    %cst_72 = arith.constant 1.45315206 : f32
    %91 = vector.broadcast %cst_72 : f32 to vector<16x16x32xf32>
    %92 = arith.subf %90, %91 : vector<16x16x32xf32>
    %93 = arith.mulf %92, %88 : vector<16x16x32xf32>
    %cst_73 = arith.constant 1.42141378 : f32
    %94 = vector.broadcast %cst_73 : f32 to vector<16x16x32xf32>
    %95 = arith.addf %93, %94 : vector<16x16x32xf32>
    %96 = arith.mulf %95, %88 : vector<16x16x32xf32>
    %cst_74 = arith.constant 0.284496725 : f32
    %97 = vector.broadcast %cst_74 : f32 to vector<16x16x32xf32>
    %98 = arith.subf %96, %97 : vector<16x16x32xf32>
    %99 = arith.mulf %98, %88 : vector<16x16x32xf32>
    %cst_75 = arith.constant 0.254829586 : f32
    %100 = vector.broadcast %cst_75 : f32 to vector<16x16x32xf32>
    %101 = arith.addf %99, %100 : vector<16x16x32xf32>
    %102 = arith.mulf %101, %88 : vector<16x16x32xf32>
    %cst_76 = arith.constant 0.000000e+00 : f32
    %103 = vector.broadcast %cst_76 : f32 to vector<16x16x32xf32>
    %104 = arith.subf %103, %82 : vector<16x16x32xf32>
    %105 = arith.mulf %104, %82 : vector<16x16x32xf32>
    %106 = math.exp %105 : vector<16x16x32xf32>
    %107 = arith.mulf %102, %106 : vector<16x16x32xf32>
    %cst_77 = arith.constant 1.000000e+00 : f32
    %108 = vector.broadcast %cst_77 : f32 to vector<16x16x32xf32>
    %109 = arith.subf %108, %107 : vector<16x16x32xf32>
    %cst_78 = arith.constant 0.000000e+00 : f32
    %110 = vector.broadcast %cst_78 : f32 to vector<16x16x32xf32>
    %111 = arith.cmpf olt, %81, %110 : vector<16x16x32xf32>
    %cst_79 = arith.constant 0.000000e+00 : f32
    %112 = vector.broadcast %cst_79 : f32 to vector<16x16x32xf32>
    %113 = arith.subf %112, %109 : vector<16x16x32xf32>
    %114 = arith.select %111, %113, %109 : vector<16x16x32xi1>, vector<16x16x32xf32>
    %cst_80 = arith.constant 1.000000e+00 : f32
    %115 = vector.broadcast %cst_80 : f32 to vector<16x16x32xf32>
    %116 = arith.addf %115, %114 : vector<16x16x32xf32>
    %117 = arith.mulf %79, %116 : vector<16x16x32xf32>
    %118 = vector.shape_cast %117 : vector<16x16x32xf32> to vector<256x32xf32>
    %119 = vector.extract_strided_slice %6 {offsets = [0, 256], sizes = [256, 32], strides = [1, 1]} : vector<256x640xf32> to vector<256x32xf32>
    %120 = arith.mulf %118, %119 : vector<256x32xf32>
    %121 = arith.addf %11, %120 : vector<256x32xf32>
    %122 = vector.shape_cast %118 : vector<256x32xf32> to vector<16x16x32xf32>
    %c2_81 = arith.constant 2 : index
    %c2_82 = arith.constant 2 : index
    %c0_83 = arith.constant 0 : index
    %123 = vector.load %arg11[%c2_81, %c2_82, %c0_83] : memref<20x20x32xf32, #tpu.memory_space<vmem>>, vector<16x16x32xf32>
    tpu.vector_store %arg11[%c2_81, %c2_82, %c0_83], %122 {strides = array<i32>} : memref<20x20x32xf32, #tpu.memory_space<vmem>>, vector<16x16x32xf32>,
    %cst_84 = arith.constant 0.000000e+00 : f32
    %124 = vector.broadcast %cst_84 : f32 to vector<16x16x32xf32>
    %c0_85 = arith.constant 0 : index
    %c0_86 = arith.constant 0 : index
    %c0_87 = arith.constant 0 : index
    %125 = vector.load %arg5[%c0_85, %c0_86, %c0_87] : memref<5x5x32xf32, #tpu.memory_space<vmem>>, vector<1x1x32xf32>
    %126 = vector.shape_cast %125 : vector<1x1x32xf32> to vector<32xf32>
    %127 = vector.shape_cast %126 : vector<32xf32> to vector<1x1x32xf32>
    %c0_88 = arith.constant 0 : index
    %c0_89 = arith.constant 0 : index
    %c0_90 = arith.constant 0 : index
    %128 = vector.load %arg11[%c0_88, %c0_89, %c0_90] : memref<20x20x32xf32, #tpu.memory_space<vmem>>, vector<16x16x32xf32>
    %129 = vector.broadcast %127 : vector<1x1x32xf32> to vector<16x16x32xf32>
    %130 = arith.mulf %128, %129 : vector<16x16x32xf32>
    %131 = arith.addf %124, %130 : vector<16x16x32xf32>
    %c0_91 = arith.constant 0 : index
    %c1_92 = arith.constant 1 : index
    %c0_93 = arith.constant 0 : index
    %132 = vector.load %arg5[%c0_91, %c1_92, %c0_93] : memref<5x5x32xf32, #tpu.memory_space<vmem>>, vector<1x1x32xf32>
    %133 = vector.shape_cast %132 : vector<1x1x32xf32> to vector<32xf32>
    %134 = vector.shape_cast %133 : vector<32xf32> to vector<1x1x32xf32>
    %c0_94 = arith.constant 0 : index
    %c1_95 = arith.constant 1 : index
    %c0_96 = arith.constant 0 : index
    %135 = vector.load %arg11[%c0_94, %c1_95, %c0_96] : memref<20x20x32xf32, #tpu.memory_space<vmem>>, vector<16x16x32xf32>
    %136 = vector.broadcast %134 : vector<1x1x32xf32> to vector<16x16x32xf32>
    %137 = arith.mulf %135, %136 : vector<16x16x32xf32>
    %138 = arith.addf %131, %137 : vector<16x16x32xf32>
    %c0_97 = arith.constant 0 : index
    %c2_98 = arith.constant 2 : index
    %c0_99 = arith.constant 0 : index
    %139 = vector.load %arg5[%c0_97, %c2_98, %c0_99] : memref<5x5x32xf32, #tpu.memory_space<vmem>>, vector<1x1x32xf32>
    %140 = vector.shape_cast %139 : vector<1x1x32xf32> to vector<32xf32>
    %141 = vector.shape_cast %140 : vector<32xf32> to vector<1x1x32xf32>
    %c0_100 = arith.constant 0 : index
    %c2_101 = arith.constant 2 : index
    %c0_102 = arith.constant 0 : index
    %142 = vector.load %arg11[%c0_100, %c2_101, %c0_102] : memref<20x20x32xf32, #tpu.memory_space<vmem>>, vector<16x16x32xf32>
    %143 = vector.broadcast %141 : vector<1x1x32xf32> to vector<16x16x32xf32>
    %144 = arith.mulf %142, %143 : vector<16x16x32xf32>
    %145 = arith.addf %138, %144 : vector<16x16x32xf32>
    %c0_103 = arith.constant 0 : index
    %c3_104 = arith.constant 3 : index
    %c0_105 = arith.constant 0 : index
    %146 = vector.load %arg5[%c0_103, %c3_104, %c0_105] : memref<5x5x32xf32, #tpu.memory_space<vmem>>, vector<1x1x32xf32>
    %147 = vector.shape_cast %146 : vector<1x1x32xf32> to vector<32xf32>
    %148 = vector.shape_cast %147 : vector<32xf32> to vector<1x1x32xf32>
    %c0_106 = arith.constant 0 : index
    %c3_107 = arith.constant 3 : index
    %c0_108 = arith.constant 0 : index
    %149 = vector.load %arg11[%c0_106, %c3_107, %c0_108] : memref<20x20x32xf32, #tpu.memory_space<vmem>>, vector<16x16x32xf32>
    %150 = vector.broadcast %148 : vector<1x1x32xf32> to vector<16x16x32xf32>
    %151 = arith.mulf %149, %150 : vector<16x16x32xf32>
    %152 = arith.addf %145, %151 : vector<16x16x32xf32>
    %c0_109 = arith.constant 0 : index
    %c4 = arith.constant 4 : index
    %c0_110 = arith.constant 0 : index
    %153 = vector.load %arg5[%c0_109, %c4, %c0_110] : memref<5x5x32xf32, #tpu.memory_space<vmem>>, vector<1x1x32xf32>
    %154 = vector.shape_cast %153 : vector<1x1x32xf32> to vector<32xf32>
    %155 = vector.shape_cast %154 : vector<32xf32> to vector<1x1x32xf32>
    %c0_111 = arith.constant 0 : index
    %c4_112 = arith.constant 4 : index
    %c0_113 = arith.constant 0 : index
    %156 = vector.load %arg11[%c0_111, %c4_112, %c0_113] : memref<20x20x32xf32, #tpu.memory_space<vmem>>, vector<16x16x32xf32>
    %157 = vector.broadcast %155 : vector<1x1x32xf32> to vector<16x16x32xf32>
    %158 = arith.mulf %156, %157 : vector<16x16x32xf32>
    %159 = arith.addf %152, %158 : vector<16x16x32xf32>
    %c1_114 = arith.constant 1 : index
    %c0_115 = arith.constant 0 : index
    %c0_116 = arith.constant 0 : index
    %160 = vector.load %arg5[%c1_114, %c0_115, %c0_116] : memref<5x5x32xf32, #tpu.memory_space<vmem>>, vector<1x1x32xf32>
    %161 = vector.shape_cast %160 : vector<1x1x32xf32> to vector<32xf32>
    %162 = vector.shape_cast %161 : vector<32xf32> to vector<1x1x32xf32>
    %c1_117 = arith.constant 1 : index
    %c0_118 = arith.constant 0 : index
    %c0_119 = arith.constant 0 : index
    %163 = vector.load %arg11[%c1_117, %c0_118, %c0_119] : memref<20x20x32xf32, #tpu.memory_space<vmem>>, vector<16x16x32xf32>
    %164 = vector.broadcast %162 : vector<1x1x32xf32> to vector<16x16x32xf32>
    %165 = arith.mulf %163, %164 : vector<16x16x32xf32>
    %166 = arith.addf %159, %165 : vector<16x16x32xf32>
    %c1_120 = arith.constant 1 : index
    %c1_121 = arith.constant 1 : index
    %c0_122 = arith.constant 0 : index
    %167 = vector.load %arg5[%c1_120, %c1_121, %c0_122] : memref<5x5x32xf32, #tpu.memory_space<vmem>>, vector<1x1x32xf32>
    %168 = vector.shape_cast %167 : vector<1x1x32xf32> to vector<32xf32>
    %169 = vector.shape_cast %168 : vector<32xf32> to vector<1x1x32xf32>
    %c1_123 = arith.constant 1 : index
    %c1_124 = arith.constant 1 : index
    %c0_125 = arith.constant 0 : index
    %170 = vector.load %arg11[%c1_123, %c1_124, %c0_125] : memref<20x20x32xf32, #tpu.memory_space<vmem>>, vector<16x16x32xf32>
    %171 = vector.broadcast %169 : vector<1x1x32xf32> to vector<16x16x32xf32>
    %172 = arith.mulf %170, %171 : vector<16x16x32xf32>
    %173 = arith.addf %166, %172 : vector<16x16x32xf32>
    %c1_126 = arith.constant 1 : index
    %c2_127 = arith.constant 2 : index
    %c0_128 = arith.constant 0 : index
    %174 = vector.load %arg5[%c1_126, %c2_127, %c0_128] : memref<5x5x32xf32, #tpu.memory_space<vmem>>, vector<1x1x32xf32>
    %175 = vector.shape_cast %174 : vector<1x1x32xf32> to vector<32xf32>
    %176 = vector.shape_cast %175 : vector<32xf32> to vector<1x1x32xf32>
    %c1_129 = arith.constant 1 : index
    %c2_130 = arith.constant 2 : index
    %c0_131 = arith.constant 0 : index
    %177 = vector.load %arg11[%c1_129, %c2_130, %c0_131] : memref<20x20x32xf32, #tpu.memory_space<vmem>>, vector<16x16x32xf32>
    %178 = vector.broadcast %176 : vector<1x1x32xf32> to vector<16x16x32xf32>
    %179 = arith.mulf %177, %178 : vector<16x16x32xf32>
    %180 = arith.addf %173, %179 : vector<16x16x32xf32>
    %c1_132 = arith.constant 1 : index
    %c3_133 = arith.constant 3 : index
    %c0_134 = arith.constant 0 : index
    %181 = vector.load %arg5[%c1_132, %c3_133, %c0_134] : memref<5x5x32xf32, #tpu.memory_space<vmem>>, vector<1x1x32xf32>
    %182 = vector.shape_cast %181 : vector<1x1x32xf32> to vector<32xf32>
    %183 = vector.shape_cast %182 : vector<32xf32> to vector<1x1x32xf32>
    %c1_135 = arith.constant 1 : index
    %c3_136 = arith.constant 3 : index
    %c0_137 = arith.constant 0 : index
    %184 = vector.load %arg11[%c1_135, %c3_136, %c0_137] : memref<20x20x32xf32, #tpu.memory_space<vmem>>, vector<16x16x32xf32>
    %185 = vector.broadcast %183 : vector<1x1x32xf32> to vector<16x16x32xf32>
    %186 = arith.mulf %184, %185 : vector<16x16x32xf32>
    %187 = arith.addf %180, %186 : vector<16x16x32xf32>
    %c1_138 = arith.constant 1 : index
    %c4_139 = arith.constant 4 : index
    %c0_140 = arith.constant 0 : index
    %188 = vector.load %arg5[%c1_138, %c4_139, %c0_140] : memref<5x5x32xf32, #tpu.memory_space<vmem>>, vector<1x1x32xf32>
    %189 = vector.shape_cast %188 : vector<1x1x32xf32> to vector<32xf32>
    %190 = vector.shape_cast %189 : vector<32xf32> to vector<1x1x32xf32>
    %c1_141 = arith.constant 1 : index
    %c4_142 = arith.constant 4 : index
    %c0_143 = arith.constant 0 : index
    %191 = vector.load %arg11[%c1_141, %c4_142, %c0_143] : memref<20x20x32xf32, #tpu.memory_space<vmem>>, vector<16x16x32xf32>
    %192 = vector.broadcast %190 : vector<1x1x32xf32> to vector<16x16x32xf32>
    %193 = arith.mulf %191, %192 : vector<16x16x32xf32>
    %194 = arith.addf %187, %193 : vector<16x16x32xf32>
    %c2_144 = arith.constant 2 : index
    %c0_145 = arith.constant 0 : index
    %c0_146 = arith.constant 0 : index
    %195 = vector.load %arg5[%c2_144, %c0_145, %c0_146] : memref<5x5x32xf32, #tpu.memory_space<vmem>>, vector<1x1x32xf32>
    %196 = vector.shape_cast %195 : vector<1x1x32xf32> to vector<32xf32>
    %197 = vector.shape_cast %196 : vector<32xf32> to vector<1x1x32xf32>
    %c2_147 = arith.constant 2 : index
    %c0_148 = arith.constant 0 : index
    %c0_149 = arith.constant 0 : index
    %198 = vector.load %arg11[%c2_147, %c0_148, %c0_149] : memref<20x20x32xf32, #tpu.memory_space<vmem>>, vector<16x16x32xf32>
    %199 = vector.broadcast %197 : vector<1x1x32xf32> to vector<16x16x32xf32>
    %200 = arith.mulf %198, %199 : vector<16x16x32xf32>
    %201 = arith.addf %194, %200 : vector<16x16x32xf32>
    %c2_150 = arith.constant 2 : index
    %c1_151 = arith.constant 1 : index
    %c0_152 = arith.constant 0 : index
    %202 = vector.load %arg5[%c2_150, %c1_151, %c0_152] : memref<5x5x32xf32, #tpu.memory_space<vmem>>, vector<1x1x32xf32>
    %203 = vector.shape_cast %202 : vector<1x1x32xf32> to vector<32xf32>
    %204 = vector.shape_cast %203 : vector<32xf32> to vector<1x1x32xf32>
    %c2_153 = arith.constant 2 : index
    %c1_154 = arith.constant 1 : index
    %c0_155 = arith.constant 0 : index
    %205 = vector.load %arg11[%c2_153, %c1_154, %c0_155] : memref<20x20x32xf32, #tpu.memory_space<vmem>>, vector<16x16x32xf32>
    %206 = vector.broadcast %204 : vector<1x1x32xf32> to vector<16x16x32xf32>
    %207 = arith.mulf %205, %206 : vector<16x16x32xf32>
    %208 = arith.addf %201, %207 : vector<16x16x32xf32>
    %c2_156 = arith.constant 2 : index
    %c2_157 = arith.constant 2 : index
    %c0_158 = arith.constant 0 : index
    %209 = vector.load %arg5[%c2_156, %c2_157, %c0_158] : memref<5x5x32xf32, #tpu.memory_space<vmem>>, vector<1x1x32xf32>
    %210 = vector.shape_cast %209 : vector<1x1x32xf32> to vector<32xf32>
    %211 = vector.shape_cast %210 : vector<32xf32> to vector<1x1x32xf32>
    %c2_159 = arith.constant 2 : index
    %c2_160 = arith.constant 2 : index
    %c0_161 = arith.constant 0 : index
    %212 = vector.load %arg11[%c2_159, %c2_160, %c0_161] : memref<20x20x32xf32, #tpu.memory_space<vmem>>, vector<16x16x32xf32>
    %213 = vector.broadcast %211 : vector<1x1x32xf32> to vector<16x16x32xf32>
    %214 = arith.mulf %212, %213 : vector<16x16x32xf32>
    %215 = arith.addf %208, %214 : vector<16x16x32xf32>
    %c2_162 = arith.constant 2 : index
    %c3_163 = arith.constant 3 : index
    %c0_164 = arith.constant 0 : index
    %216 = vector.load %arg5[%c2_162, %c3_163, %c0_164] : memref<5x5x32xf32, #tpu.memory_space<vmem>>, vector<1x1x32xf32>
    %217 = vector.shape_cast %216 : vector<1x1x32xf32> to vector<32xf32>
    %218 = vector.shape_cast %217 : vector<32xf32> to vector<1x1x32xf32>
    %c2_165 = arith.constant 2 : index
    %c3_166 = arith.constant 3 : index
    %c0_167 = arith.constant 0 : index
    %219 = vector.load %arg11[%c2_165, %c3_166, %c0_167] : memref<20x20x32xf32, #tpu.memory_space<vmem>>, vector<16x16x32xf32>
    %220 = vector.broadcast %218 : vector<1x1x32xf32> to vector<16x16x32xf32>
    %221 = arith.mulf %219, %220 : vector<16x16x32xf32>
    %222 = arith.addf %215, %221 : vector<16x16x32xf32>
    %c2_168 = arith.constant 2 : index
    %c4_169 = arith.constant 4 : index
    %c0_170 = arith.constant 0 : index
    %223 = vector.load %arg5[%c2_168, %c4_169, %c0_170] : memref<5x5x32xf32, #tpu.memory_space<vmem>>, vector<1x1x32xf32>
    %224 = vector.shape_cast %223 : vector<1x1x32xf32> to vector<32xf32>
    %225 = vector.shape_cast %224 : vector<32xf32> to vector<1x1x32xf32>
    %c2_171 = arith.constant 2 : index
    %c4_172 = arith.constant 4 : index
    %c0_173 = arith.constant 0 : index
    %226 = vector.load %arg11[%c2_171, %c4_172, %c0_173] : memref<20x20x32xf32, #tpu.memory_space<vmem>>, vector<16x16x32xf32>
    %227 = vector.broadcast %225 : vector<1x1x32xf32> to vector<16x16x32xf32>
    %228 = arith.mulf %226, %227 : vector<16x16x32xf32>
    %229 = arith.addf %222, %228 : vector<16x16x32xf32>
    %c3_174 = arith.constant 3 : index
    %c0_175 = arith.constant 0 : index
    %c0_176 = arith.constant 0 : index
    %230 = vector.load %arg5[%c3_174, %c0_175, %c0_176] : memref<5x5x32xf32, #tpu.memory_space<vmem>>, vector<1x1x32xf32>
    %231 = vector.shape_cast %230 : vector<1x1x32xf32> to vector<32xf32>
    %232 = vector.shape_cast %231 : vector<32xf32> to vector<1x1x32xf32>
    %c3_177 = arith.constant 3 : index
    %c0_178 = arith.constant 0 : index
    %c0_179 = arith.constant 0 : index
    %233 = vector.load %arg11[%c3_177, %c0_178, %c0_179] : memref<20x20x32xf32, #tpu.memory_space<vmem>>, vector<16x16x32xf32>
    %234 = vector.broadcast %232 : vector<1x1x32xf32> to vector<16x16x32xf32>
    %235 = arith.mulf %233, %234 : vector<16x16x32xf32>
    %236 = arith.addf %229, %235 : vector<16x16x32xf32>
    %c3_180 = arith.constant 3 : index
    %c1_181 = arith.constant 1 : index
    %c0_182 = arith.constant 0 : index
    %237 = vector.load %arg5[%c3_180, %c1_181, %c0_182] : memref<5x5x32xf32, #tpu.memory_space<vmem>>, vector<1x1x32xf32>
    %238 = vector.shape_cast %237 : vector<1x1x32xf32> to vector<32xf32>
    %239 = vector.shape_cast %238 : vector<32xf32> to vector<1x1x32xf32>
    %c3_183 = arith.constant 3 : index
    %c1_184 = arith.constant 1 : index
    %c0_185 = arith.constant 0 : index
    %240 = vector.load %arg11[%c3_183, %c1_184, %c0_185] : memref<20x20x32xf32, #tpu.memory_space<vmem>>, vector<16x16x32xf32>
    %241 = vector.broadcast %239 : vector<1x1x32xf32> to vector<16x16x32xf32>
    %242 = arith.mulf %240, %241 : vector<16x16x32xf32>
    %243 = arith.addf %236, %242 : vector<16x16x32xf32>
    %c3_186 = arith.constant 3 : index
    %c2_187 = arith.constant 2 : index
    %c0_188 = arith.constant 0 : index
    %244 = vector.load %arg5[%c3_186, %c2_187, %c0_188] : memref<5x5x32xf32, #tpu.memory_space<vmem>>, vector<1x1x32xf32>
    %245 = vector.shape_cast %244 : vector<1x1x32xf32> to vector<32xf32>
    %246 = vector.shape_cast %245 : vector<32xf32> to vector<1x1x32xf32>
    %c3_189 = arith.constant 3 : index
    %c2_190 = arith.constant 2 : index
    %c0_191 = arith.constant 0 : index
    %247 = vector.load %arg11[%c3_189, %c2_190, %c0_191] : memref<20x20x32xf32, #tpu.memory_space<vmem>>, vector<16x16x32xf32>
    %248 = vector.broadcast %246 : vector<1x1x32xf32> to vector<16x16x32xf32>
    %249 = arith.mulf %247, %248 : vector<16x16x32xf32>
    %250 = arith.addf %243, %249 : vector<16x16x32xf32>
    %c3_192 = arith.constant 3 : index
    %c3_193 = arith.constant 3 : index
    %c0_194 = arith.constant 0 : index
    %251 = vector.load %arg5[%c3_192, %c3_193, %c0_194] : memref<5x5x32xf32, #tpu.memory_space<vmem>>, vector<1x1x32xf32>
    %252 = vector.shape_cast %251 : vector<1x1x32xf32> to vector<32xf32>
    %253 = vector.shape_cast %252 : vector<32xf32> to vector<1x1x32xf32>
    %c3_195 = arith.constant 3 : index
    %c3_196 = arith.constant 3 : index
    %c0_197 = arith.constant 0 : index
    %254 = vector.load %arg11[%c3_195, %c3_196, %c0_197] : memref<20x20x32xf32, #tpu.memory_space<vmem>>, vector<16x16x32xf32>
    %255 = vector.broadcast %253 : vector<1x1x32xf32> to vector<16x16x32xf32>
    %256 = arith.mulf %254, %255 : vector<16x16x32xf32>
    %257 = arith.addf %250, %256 : vector<16x16x32xf32>
    %c3_198 = arith.constant 3 : index
    %c4_199 = arith.constant 4 : index
    %c0_200 = arith.constant 0 : index
    %258 = vector.load %arg5[%c3_198, %c4_199, %c0_200] : memref<5x5x32xf32, #tpu.memory_space<vmem>>, vector<1x1x32xf32>
    %259 = vector.shape_cast %258 : vector<1x1x32xf32> to vector<32xf32>
    %260 = vector.shape_cast %259 : vector<32xf32> to vector<1x1x32xf32>
    %c3_201 = arith.constant 3 : index
    %c4_202 = arith.constant 4 : index
    %c0_203 = arith.constant 0 : index
    %261 = vector.load %arg11[%c3_201, %c4_202, %c0_203] : memref<20x20x32xf32, #tpu.memory_space<vmem>>, vector<16x16x32xf32>
    %262 = vector.broadcast %260 : vector<1x1x32xf32> to vector<16x16x32xf32>
    %263 = arith.mulf %261, %262 : vector<16x16x32xf32>
    %264 = arith.addf %257, %263 : vector<16x16x32xf32>
    %c4_204 = arith.constant 4 : index
    %c0_205 = arith.constant 0 : index
    %c0_206 = arith.constant 0 : index
    %265 = vector.load %arg5[%c4_204, %c0_205, %c0_206] : memref<5x5x32xf32, #tpu.memory_space<vmem>>, vector<1x1x32xf32>
    %266 = vector.shape_cast %265 : vector<1x1x32xf32> to vector<32xf32>
    %267 = vector.shape_cast %266 : vector<32xf32> to vector<1x1x32xf32>
    %c4_207 = arith.constant 4 : index
    %c0_208 = arith.constant 0 : index
    %c0_209 = arith.constant 0 : index
    %268 = vector.load %arg11[%c4_207, %c0_208, %c0_209] : memref<20x20x32xf32, #tpu.memory_space<vmem>>, vector<16x16x32xf32>
    %269 = vector.broadcast %267 : vector<1x1x32xf32> to vector<16x16x32xf32>
    %270 = arith.mulf %268, %269 : vector<16x16x32xf32>
    %271 = arith.addf %264, %270 : vector<16x16x32xf32>
    %c4_210 = arith.constant 4 : index
    %c1_211 = arith.constant 1 : index
    %c0_212 = arith.constant 0 : index
    %272 = vector.load %arg5[%c4_210, %c1_211, %c0_212] : memref<5x5x32xf32, #tpu.memory_space<vmem>>, vector<1x1x32xf32>
    %273 = vector.shape_cast %272 : vector<1x1x32xf32> to vector<32xf32>
    %274 = vector.shape_cast %273 : vector<32xf32> to vector<1x1x32xf32>
    %c4_213 = arith.constant 4 : index
    %c1_214 = arith.constant 1 : index
    %c0_215 = arith.constant 0 : index
    %275 = vector.load %arg11[%c4_213, %c1_214, %c0_215] : memref<20x20x32xf32, #tpu.memory_space<vmem>>, vector<16x16x32xf32>
    %276 = vector.broadcast %274 : vector<1x1x32xf32> to vector<16x16x32xf32>
    %277 = arith.mulf %275, %276 : vector<16x16x32xf32>
    %278 = arith.addf %271, %277 : vector<16x16x32xf32>
    %c4_216 = arith.constant 4 : index
    %c2_217 = arith.constant 2 : index
    %c0_218 = arith.constant 0 : index
    %279 = vector.load %arg5[%c4_216, %c2_217, %c0_218] : memref<5x5x32xf32, #tpu.memory_space<vmem>>, vector<1x1x32xf32>
    %280 = vector.shape_cast %279 : vector<1x1x32xf32> to vector<32xf32>
    %281 = vector.shape_cast %280 : vector<32xf32> to vector<1x1x32xf32>
    %c4_219 = arith.constant 4 : index
    %c2_220 = arith.constant 2 : index
    %c0_221 = arith.constant 0 : index
    %282 = vector.load %arg11[%c4_219, %c2_220, %c0_221] : memref<20x20x32xf32, #tpu.memory_space<vmem>>, vector<16x16x32xf32>
    %283 = vector.broadcast %281 : vector<1x1x32xf32> to vector<16x16x32xf32>
    %284 = arith.mulf %282, %283 : vector<16x16x32xf32>
    %285 = arith.addf %278, %284 : vector<16x16x32xf32>
    %c4_222 = arith.constant 4 : index
    %c3_223 = arith.constant 3 : index
    %c0_224 = arith.constant 0 : index
    %286 = vector.load %arg5[%c4_222, %c3_223, %c0_224] : memref<5x5x32xf32, #tpu.memory_space<vmem>>, vector<1x1x32xf32>
    %287 = vector.shape_cast %286 : vector<1x1x32xf32> to vector<32xf32>
    %288 = vector.shape_cast %287 : vector<32xf32> to vector<1x1x32xf32>
    %c4_225 = arith.constant 4 : index
    %c3_226 = arith.constant 3 : index
    %c0_227 = arith.constant 0 : index
    %289 = vector.load %arg11[%c4_225, %c3_226, %c0_227] : memref<20x20x32xf32, #tpu.memory_space<vmem>>, vector<16x16x32xf32>
    %290 = vector.broadcast %288 : vector<1x1x32xf32> to vector<16x16x32xf32>
    %291 = arith.mulf %289, %290 : vector<16x16x32xf32>
    %292 = arith.addf %285, %291 : vector<16x16x32xf32>
    %c4_228 = arith.constant 4 : index
    %c4_229 = arith.constant 4 : index
    %c0_230 = arith.constant 0 : index
    %293 = vector.load %arg5[%c4_228, %c4_229, %c0_230] : memref<5x5x32xf32, #tpu.memory_space<vmem>>, vector<1x1x32xf32>
    %294 = vector.shape_cast %293 : vector<1x1x32xf32> to vector<32xf32>
    %295 = vector.shape_cast %294 : vector<32xf32> to vector<1x1x32xf32>
    %c4_231 = arith.constant 4 : index
    %c4_232 = arith.constant 4 : index
    %c0_233 = arith.constant 0 : index
    %296 = vector.load %arg11[%c4_231, %c4_232, %c0_233] : memref<20x20x32xf32, #tpu.memory_space<vmem>>, vector<16x16x32xf32>
    %297 = vector.broadcast %295 : vector<1x1x32xf32> to vector<16x16x32xf32>
    %298 = arith.mulf %296, %297 : vector<16x16x32xf32>
    %299 = arith.addf %292, %298 : vector<16x16x32xf32>
    %cst_234 = arith.constant 5.000000e-01 : f32
    %300 = vector.broadcast %cst_234 : f32 to vector<16x16x32xf32>
    %301 = arith.mulf %300, %299 : vector<16x16x32xf32>
    %cst_235 = arith.constant 1.41421354 : f32
    %302 = vector.broadcast %cst_235 : f32 to vector<16x16x32xf32>
    %303 = arith.divf %299, %302 : vector<16x16x32xf32>
    %304 = math.absf %303 : vector<16x16x32xf32>
    %cst_236 = arith.constant 0.327591091 : f32
    %305 = vector.broadcast %cst_236 : f32 to vector<16x16x32xf32>
    %306 = arith.mulf %305, %304 : vector<16x16x32xf32>
    %cst_237 = arith.constant 1.000000e+00 : f32
    %307 = vector.broadcast %cst_237 : f32 to vector<16x16x32xf32>
    %308 = arith.addf %307, %306 : vector<16x16x32xf32>
    %cst_238 = arith.constant 1.000000e+00 : f32
    %309 = vector.broadcast %cst_238 : f32 to vector<16x16x32xf32>
    %310 = arith.divf %309, %308 : vector<16x16x32xf32>
    %cst_239 = arith.constant 1.06140542 : f32
    %311 = vector.broadcast %cst_239 : f32 to vector<16x16x32xf32>
    %312 = arith.mulf %311, %310 : vector<16x16x32xf32>
    %cst_240 = arith.constant 1.45315206 : f32
    %313 = vector.broadcast %cst_240 : f32 to vector<16x16x32xf32>
    %314 = arith.subf %312, %313 : vector<16x16x32xf32>
    %315 = arith.mulf %314, %310 : vector<16x16x32xf32>
    %cst_241 = arith.constant 1.42141378 : f32
    %316 = vector.broadcast %cst_241 : f32 to vector<16x16x32xf32>
    %317 = arith.addf %315, %316 : vector<16x16x32xf32>
    %318 = arith.mulf %317, %310 : vector<16x16x32xf32>
    %cst_242 = arith.constant 0.284496725 : f32
    %319 = vector.broadcast %cst_242 : f32 to vector<16x16x32xf32>
    %320 = arith.subf %318, %319 : vector<16x16x32xf32>
    %321 = arith.mulf %320, %310 : vector<16x16x32xf32>
    %cst_243 = arith.constant 0.254829586 : f32
    %322 = vector.broadcast %cst_243 : f32 to vector<16x16x32xf32>
    %323 = arith.addf %321, %322 : vector<16x16x32xf32>
    %324 = arith.mulf %323, %310 : vector<16x16x32xf32>
    %cst_244 = arith.constant 0.000000e+00 : f32
    %325 = vector.broadcast %cst_244 : f32 to vector<16x16x32xf32>
    %326 = arith.subf %325, %304 : vector<16x16x32xf32>
    %327 = arith.mulf %326, %304 : vector<16x16x32xf32>
    %328 = math.exp %327 : vector<16x16x32xf32>
    %329 = arith.mulf %324, %328 : vector<16x16x32xf32>
    %cst_245 = arith.constant 1.000000e+00 : f32
    %330 = vector.broadcast %cst_245 : f32 to vector<16x16x32xf32>
    %331 = arith.subf %330, %329 : vector<16x16x32xf32>
    %cst_246 = arith.constant 0.000000e+00 : f32
    %332 = vector.broadcast %cst_246 : f32 to vector<16x16x32xf32>
    %333 = arith.cmpf olt, %303, %332 : vector<16x16x32xf32>
    %cst_247 = arith.constant 0.000000e+00 : f32
    %334 = vector.broadcast %cst_247 : f32 to vector<16x16x32xf32>
    %335 = arith.subf %334, %331 : vector<16x16x32xf32>
    %336 = arith.select %333, %335, %331 : vector<16x16x32xi1>, vector<16x16x32xf32>
    %cst_248 = arith.constant 1.000000e+00 : f32
    %337 = vector.broadcast %cst_248 : f32 to vector<16x16x32xf32>
    %338 = arith.addf %337, %336 : vector<16x16x32xf32>
    %339 = arith.mulf %301, %338 : vector<16x16x32xf32>
    %340 = vector.shape_cast %339 : vector<16x16x32xf32> to vector<256x32xf32>
    %341 = vector.extract_strided_slice %6 {offsets = [0, 384], sizes = [256, 32], strides = [1, 1]} : vector<256x640xf32> to vector<256x32xf32>
    %342 = arith.mulf %340, %341 : vector<256x32xf32>
    %343 = arith.addf %121, %342 : vector<256x32xf32>
    %cst_249 = arith.constant dense<0.000000e+00> : vector<32xf32>
    %344 = vector.multi_reduction <add>, %340, %cst_249 [0] : vector<256x32xf32> to vector<32xf32>
    %345 = vector.shape_cast %344 : vector<32xf32> to vector<1x32xf32>
    %cst_250 = arith.constant 2.560000e+02 : f32
    %346 = vector.broadcast %cst_250 : f32 to vector<1x32xf32>
    %347 = arith.divf %345, %346 : vector<1x32xf32>
    %cst_251 = arith.constant 5.000000e-01 : f32
    %348 = vector.broadcast %cst_251 : f32 to vector<1x32xf32>
    %349 = arith.mulf %348, %347 : vector<1x32xf32>
    %cst_252 = arith.constant 1.41421354 : f32
    %350 = vector.broadcast %cst_252 : f32 to vector<1x32xf32>
    %351 = arith.divf %347, %350 : vector<1x32xf32>
    %352 = math.absf %351 : vector<1x32xf32>
    %cst_253 = arith.constant 0.327591091 : f32
    %353 = vector.broadcast %cst_253 : f32 to vector<1x32xf32>
    %354 = arith.mulf %353, %352 : vector<1x32xf32>
    %cst_254 = arith.constant 1.000000e+00 : f32
    %355 = vector.broadcast %cst_254 : f32 to vector<1x32xf32>
    %356 = arith.addf %355, %354 : vector<1x32xf32>
    %cst_255 = arith.constant 1.000000e+00 : f32
    %357 = vector.broadcast %cst_255 : f32 to vector<1x32xf32>
    %358 = arith.divf %357, %356 : vector<1x32xf32>
    %cst_256 = arith.constant 1.06140542 : f32
    %359 = vector.broadcast %cst_256 : f32 to vector<1x32xf32>
    %360 = arith.mulf %359, %358 : vector<1x32xf32>
    %cst_257 = arith.constant 1.45315206 : f32
    %361 = vector.broadcast %cst_257 : f32 to vector<1x32xf32>
    %362 = arith.subf %360, %361 : vector<1x32xf32>
    %363 = arith.mulf %362, %358 : vector<1x32xf32>
    %cst_258 = arith.constant 1.42141378 : f32
    %364 = vector.broadcast %cst_258 : f32 to vector<1x32xf32>
    %365 = arith.addf %363, %364 : vector<1x32xf32>
    %366 = arith.mulf %365, %358 : vector<1x32xf32>
    %cst_259 = arith.constant 0.284496725 : f32
    %367 = vector.broadcast %cst_259 : f32 to vector<1x32xf32>
    %368 = arith.subf %366, %367 : vector<1x32xf32>
    %369 = arith.mulf %368, %358 : vector<1x32xf32>
    %cst_260 = arith.constant 0.254829586 : f32
    %370 = vector.broadcast %cst_260 : f32 to vector<1x32xf32>
    %371 = arith.addf %369, %370 : vector<1x32xf32>
    %372 = arith.mulf %371, %358 : vector<1x32xf32>
    %cst_261 = arith.constant 0.000000e+00 : f32
    %373 = vector.broadcast %cst_261 : f32 to vector<1x32xf32>
    %374 = arith.subf %373, %352 : vector<1x32xf32>
    %375 = arith.mulf %374, %352 : vector<1x32xf32>
    %376 = math.exp %375 : vector<1x32xf32>
    %377 = arith.mulf %372, %376 : vector<1x32xf32>
    %cst_262 = arith.constant 1.000000e+00 : f32
    %378 = vector.broadcast %cst_262 : f32 to vector<1x32xf32>
    %379 = arith.subf %378, %377 : vector<1x32xf32>
    %cst_263 = arith.constant 0.000000e+00 : f32
    %380 = vector.broadcast %cst_263 : f32 to vector<1x32xf32>
    %381 = arith.cmpf olt, %351, %380 : vector<1x32xf32>
    %cst_264 = arith.constant 0.000000e+00 : f32
    %382 = vector.broadcast %cst_264 : f32 to vector<1x32xf32>
    %383 = arith.subf %382, %379 : vector<1x32xf32>
    %384 = arith.select %381, %383, %379 : vector<1x32xi1>, vector<1x32xf32>
    %cst_265 = arith.constant 1.000000e+00 : f32
    %385 = vector.broadcast %cst_265 : f32 to vector<1x32xf32>
    %386 = arith.addf %385, %384 : vector<1x32xf32>
    %387 = arith.mulf %349, %386 : vector<1x32xf32>
    %388 = vector.extract_strided_slice %6 {offsets = [0, 512], sizes = [256, 32], strides = [1, 1]} : vector<256x640xf32> to vector<256x32xf32>
    %389 = vector.broadcast %387 : vector<1x32xf32> to vector<256x32xf32>
    %390 = arith.mulf %389, %388 : vector<256x32xf32>
    %391 = arith.addf %343, %390 : vector<256x32xf32>
    %c0_266 = arith.constant 0 : index
    %c0_267 = arith.constant 0 : index
    %392 = vector.load %arg6[%c0_266, %c0_267] : memref<32x32xf32, #tpu.memory_space<vmem>>, vector<32x32xf32>
    %cst_268 = arith.constant dense<0.000000e+00> : vector<256x32xf32>
    %393 = tpu.matmul %391, %392, %cst_268 {dimension_numbers = #tpu.dot_dimension_numbers<[1], [0], [0], [1], [0, 0, 1, 1], [], []>} : vector<256x32xf32>, vector<32x32xf32>, vector<256x32xf32> -> vector<256x32xf32>
    %c0_269 = arith.constant 0 : index
    %c0_270 = arith.constant 0 : index
    %394 = vector.load %arg7[%c0_269, %c0_270] : memref<1x32xf32, #tpu.memory_space<vmem>>, vector<1x32xf32>
    %395 = vector.broadcast %394 : vector<1x32xf32> to vector<256x32xf32>
    %396 = arith.addf %393, %395 : vector<256x32xf32>
    %397 = arith.mulf %7, %396 : vector<256x32xf32>
    %c0_271 = arith.constant 0 : index
    %c0_272 = arith.constant 0 : index
    %398 = vector.load %arg8[%c0_271, %c0_272] : memref<32x32xf32, #tpu.memory_space<vmem>>, vector<32x32xf32>
    %cst_273 = arith.constant dense<0.000000e+00> : vector<256x32xf32>
    %399 = tpu.matmul %397, %398, %cst_273 {dimension_numbers = #tpu.dot_dimension_numbers<[1], [0], [0], [1], [0, 0, 1, 1], [], []>} : vector<256x32xf32>, vector<32x32xf32>, vector<256x32xf32> -> vector<256x32xf32>
    %c0_274 = arith.constant 0 : index
    %c0_275 = arith.constant 0 : index
    %400 = vector.load %arg9[%c0_274, %c0_275] : memref<1x32xf32, #tpu.memory_space<vmem>>, vector<1x32xf32>
    %401 = vector.broadcast %400 : vector<1x32xf32> to vector<256x32xf32>
    %402 = arith.addf %399, %401 : vector<256x32xf32>
    %c0_276 = arith.constant 0 : index
    %c0_277 = arith.constant 0 : index
    %c0_278 = arith.constant 0 : index
    %403 = vector.load %arg10[%c0_276, %c0_277, %c0_278] : memref<1x256x32xf32, #tpu.memory_space<vmem>>, vector<1x256x32xf32>
    %404 = vector.shape_cast %403 : vector<1x256x32xf32> to vector<256x32xf32>
    %405 = vector.shape_cast %402 : vector<256x32xf32> to vector<1x256x32xf32>
    tpu.vector_store %arg10[%c0_276, %c0_277, %c0_278], %405 {strides = array<i32>} : memref<1x256x32xf32, #tpu.memory_space<vmem>>, vector<1x256x32xf32>,
    return
  }
  func.func @transform_0(%arg0: i32) -> (i32, i32, i32) {
    %c0_i32 = arith.constant 0 : i32
    %c0_i32_0 = arith.constant 0 : i32
    %c0_i32_1 = arith.constant 0 : i32
    return %arg0, %c0_i32, %c0_i32_0 : i32, i32, i32
  }
  func.func @transform_1(%arg0: i32) -> (i32, i32) {
    %c0_i32 = arith.constant 0 : i32
    %c0_i32_0 = arith.constant 0 : i32
    %c0_i32_1 = arith.constant 0 : i32
    return %c0_i32, %c0_i32_0 : i32, i32
  }
  func.func @transform_2(%arg0: i32) -> (i32, i32) {
    %c0_i32 = arith.constant 0 : i32
    %c0_i32_0 = arith.constant 0 : i32
    %c0_i32_1 = arith.constant 0 : i32
    return %c0_i32, %c0_i32_0 : i32, i32
  }
  func.func @transform_3(%arg0: i32) -> (i32, i32, i32) {
    %c0_i32 = arith.constant 0 : i32
    %c0_i32_0 = arith.constant 0 : i32
    %c0_i32_1 = arith.constant 0 : i32
    %c0_i32_2 = arith.constant 0 : i32
    return %c0_i32, %c0_i32_0, %c0_i32_1 : i32, i32, i32
  }
  func.func @transform_4(%arg0: i32) -> (i32, i32, i32) {
    %c0_i32 = arith.constant 0 : i32
    %c0_i32_0 = arith.constant 0 : i32
    %c0_i32_1 = arith.constant 0 : i32
    %c0_i32_2 = arith.constant 0 : i32
    return %c0_i32, %c0_i32_0, %c0_i32_1 : i32, i32, i32
  }
  func.func @transform_5(%arg0: i32) -> (i32, i32) {
    %c0_i32 = arith.constant 0 : i32
    %c0_i32_0 = arith.constant 0 : i32
    %c0_i32_1 = arith.constant 0 : i32
    return %c0_i32, %c0_i32_0 : i32, i32
  }
  func.func @transform_6(%arg0: i32) -> (i32, i32) {
    %c0_i32 = arith.constant 0 : i32
    %c0_i32_0 = arith.constant 0 : i32
    %c0_i32_1 = arith.constant 0 : i32
    return %c0_i32, %c0_i32_0 : i32, i32
  }
  func.func @transform_7(%arg0: i32) -> (i32, i32) {
    %c0_i32 = arith.constant 0 : i32
    %c0_i32_0 = arith.constant 0 : i32
    %c0_i32_1 = arith.constant 0 : i32
    return %c0_i32, %c0_i32_0 : i32, i32
  }
  func.func @transform_8(%arg0: i32) -> (i32, i32) {
    %c0_i32 = arith.constant 0 : i32
    %c0_i32_0 = arith.constant 0 : i32
    %c0_i32_1 = arith.constant 0 : i32
    return %c0_i32, %c0_i32_0 : i32, i32
  }
  func.func @transform_9(%arg0: i32) -> (i32, i32, i32) {
    %c0_i32 = arith.constant 0 : i32
    %c0_i32_0 = arith.constant 0 : i32
    %c0_i32_1 = arith.constant 0 : i32
    return %arg0, %c0_i32, %c0_i32_0 : i32, i32, i32
  }
}

</mosaic_0001>

<llo_original>
// kernel: custom-call
$region0: #{custom-call}
  %s0 = inlined_call_operand.vmem [shape: f32[640], index: 0, kind: output, shape index: {}]

// kernel: focal_modulation_forward.1
$region0: #{focal_modulation_forward.1}
  #allocation0 [shape = 'u32[]', space=smem, size = 0x4, offset = 0x4, fixed_abs, tag = 'smem constant byte address 0x4 - core index']
  #allocation1 [shape = 'u32[72,128]{1,0:T(1,128)}', space=vmem, size = 0x9000, scoped, tag = 'internal scratch']
  #allocation2 [shape = 'f32[20,20,32]{2,1,0:T(8,128)}', space=vmem, size = 0x3c000, scoped, tag = 'scratch operand']
  %s0 = inlined_call_operand.hbm [shape: f32[2,256,32], index: 0, kind: input, shape index: {}]
  %s1 = inlined_call_operand.vmem [shape: f32[32,640], index: 1, kind: input, shape index: {}]
  %s2 = inlined_call_operand.vmem [shape: f32[1,640], index: 2, kind: input, shape index: {}]
  %s3 = inlined_call_operand.vmem [shape: f32[3,3,32], index: 3, kind: input, shape index: {}]
  %s4 = inlined_call_operand.vmem [shape: f32[5,5,32], index: 4, kind: input, shape index: {}]
  %s5 = inlined_call_operand.vmem [shape: f32[32,32], index: 5, kind: input, shape index: {}]
  %s6 = inlined_call_operand.vmem [shape: f32[1,32], index: 6, kind: input, shape index: {}]
  %s7 = inlined_call_operand.vmem [shape: f32[32,32], index: 7, kind: input, shape index: {}]
  %s8 = inlined_call_operand.vmem [shape: f32[1,32], index: 8, kind: input, shape index: {}]
  %s9 = inlined_call_operand.hbm [shape: f32[2,256,32], index: 9, kind: output, shape index: {}]
  %s10 = sld [smem:[#allocation0]]
  $region73: #{focal_modulation_forward.1} parent=0
    _
  %s12 = ssub.s32 1, %s10
  %s13 = scalar_select 0, %s12, %s10
  $region1: #{focal_modulation_forward.1} parent=0
    #allocation3 [shape = 'u8[262144]{0}', space=vmem, size = 0x40000, scoped, tag = 'input window, operand 0']
    #allocation4 [shape = 's32[2]{0}', space=sflag, size = 0x8, scoped, tag = 'scoped memory for focal_modulation_forward.1']
    #allocation5 [shape = 's32[2]{0}', space=sflag, size = 0x8, scoped, tag = 'scoped memory for focal_modulation_forward.1']
    #allocation6 [shape = 'u8[262144]{0}', space=vmem, size = 0x40000, scoped, tag = 'output window, operand 0']
    %14 = vsyncpa [#allocation4], 0
    %s15 = scalar_lea.sflag [#allocation4], 1
    %16 = vsyncpa %s15, 0
    %17 = vsyncpa [#allocation5], 0
    %s18 = scalar_lea.sflag [#allocation5], 1
    %19 = vsyncpa %s18, 0
    loop: start=0, step=1, limit=4
    $region2: #{focal_modulation_forward.1} parent=1 // loop_pre_header
      _
    $region3: #{focal_modulation_forward.1} parent=1 // loop_header
      %s21 = sphi 0, %s25
      %p22 = scmp.ge.s32.totalorder %s21, 4
      %s31 = sphi 0, %s33
      %s34 = sphi 0, %s31
      %s35 = sphi 0, %s34
      %s51 = sphi 0, %s35
      %s55 = sphi 0, %s55
      %s57 = sphi 0, %s55
      %s58 = sphi 0, %s57
      %s72 = sphi 0, %s58
      %s76 = sphi 0, %s76
      %s78 = sphi 0, %s76
      %s79 = sphi 0, %s78
      %s93 = sphi 0, %s79
      %s97 = sphi 0, %s97
      %s99 = sphi 0, %s97
      %s100 = sphi 0, %s99
      %s114 = sphi 0, %s100
      %s118 = sphi 0, %s118
      %s120 = sphi 0, %s118
      %s121 = sphi 0, %s120
      %s135 = sphi 0, %s121
      %s139 = sphi 0, %s139
      %s141 = sphi 0, %s139
      %s142 = sphi 0, %s141
      %s156 = sphi 0, %s142
      %s160 = sphi 0, %s160
      %s162 = sphi 0, %s160
      %s163 = sphi 0, %s162
      %s177 = sphi 0, %s163
      %s181 = sphi 0, %s181
      %s183 = sphi 0, %s181
      %s184 = sphi 0, %s183
      %s198 = sphi 0, %s184
      %s202 = sphi 0, %s202
      %s204 = sphi 0, %s202
      %s205 = sphi 0, %s204
      %s219 = sphi 0, %s205
      %s225 = sphi 0, %s227
      %s228 = sphi 0, %s225
      %s229 = sphi 0, %s228
      %s245 = sphi 0, %s229
    $region4: #{focal_modulation_forward.1} parent=1 // loop_header_branch
      %24 = sbr.rel (%p22) target = $region8
    $region5: #{focal_modulation_forward.1} parent=1 // loop_body
      %s26 = ssub.s32 %s21, 1
      %s27 = ssub.s32 %s21, 2
      %s28 = sadd.s32 %s21, 1
      %s29 = ssub.s32 %s21, %s28
      %p30 = scmp.eq.s32.totalorder %s29, 0
      %s32 = sadd.s32 %s31, 1
      %s33 = scalar_select %p30, %s31, %s32
      %p36 = pneg %p30
      %p37 = scmp.eq.s32.totalorder %s21, 1
      %p38 = por %p36, %p37
      %p39 = scmp.ne.s32.totalorder %s31, %s34
      %p40 = scmp.eq.s32.totalorder %s21, 0
      %p41 = por %p39, %p40
      %p42 = scmp.ne.s32.totalorder %s31, %s34
      %p43 = scmp.eq.s32.totalorder %s26, 1
      %p44 = por %p42, %p43
      %p45 = scmp.ne.s32.totalorder %s34, %s35
      %p46 = scmp.eq.s32.totalorder %s26, 0
      %p47 = por %p45, %p46
      %p48 = scmp.ne.s32.totalorder %s34, %s35
      %p49 = scmp.eq.s32.totalorder %s27, 1
      %p50 = por %p48, %p49
      %p52 = scmp.ne.s32.totalorder %s35, %s51
      %p53 = scmp.eq.s32.totalorder %s27, 0
      %p54 = por %p52, %p53
      %s56 = sadd.s32 %s55, 1
      %p59 = scmp.eq.s32.totalorder %s21, 1
      %p60 = scmp.ne.s32.totalorder %s55, %s57
      %p61 = scmp.eq.s32.totalorder %s21, 0
      %p62 = por %p60, %p61
      %p63 = scmp.ne.s32.totalorder %s55, %s57
      %p64 = scmp.eq.s32.totalorder %s26, 1
      %p65 = por %p63, %p64
      %p66 = scmp.ne.s32.totalorder %s57, %s58
      %p67 = scmp.eq.s32.totalorder %s26, 0
      %p68 = por %p66, %p67
      %p69 = scmp.ne.s32.totalorder %s57, %s58
      %p70 = scmp.eq.s32.totalorder %s27, 1
      %p71 = por %p69, %p70
      %p73 = scmp.ne.s32.totalorder %s58, %s72
      %p74 = scmp.eq.s32.totalorder %s27, 0
      %p75 = por %p73, %p74
      %s77 = sadd.s32 %s76, 1
      %p80 = scmp.eq.s32.totalorder %s21, 1
      %p81 = scmp.ne.s32.totalorder %s76, %s78
      %p82 = scmp.eq.s32.totalorder %s21, 0
      %p83 = por %p81, %p82
      %p84 = scmp.ne.s32.totalorder %s76, %s78
      %p85 = scmp.eq.s32.totalorder %s26, 1
      %p86 = por %p84, %p85
      %p87 = scmp.ne.s32.totalorder %s78, %s79
      %p88 = scmp.eq.s32.totalorder %s26, 0
      %p89 = por %p87, %p88
      %p90 = scmp.ne.s32.totalorder %s78, %s79
      %p91 = scmp.eq.s32.totalorder %s27, 1
      %p92 = por %p90, %p91
      %p94 = scmp.ne.s32.totalorder %s79, %s93
      %p95 = scmp.eq.s32.totalorder %s27, 0
      %p96 = por %p94, %p95
      %s98 = sadd.s32 %s97, 1
      %p101 = scmp.eq.s32.totalorder %s21, 1
      %p102 = scmp.ne.s32.totalorder %s97, %s99
      %p103 = scmp.eq.s32.totalorder %s21, 0
      %p104 = por %p102, %p103
      %p105 = scmp.ne.s32.totalorder %s97, %s99
      %p106 = scmp.eq.s32.totalorder %s26, 1
      %p107 = por %p105, %p106
      %p108 = scmp.ne.s32.totalorder %s99, %s100
      %p109 = scmp.eq.s32.totalorder %s26, 0
      %p110 = por %p108, %p109
      %p111 = scmp.ne.s32.totalorder %s99, %s100
      %p112 = scmp.eq.s32.totalorder %s27, 1
      %p113 = por %p111, %p112
      %p115 = scmp.ne.s32.totalorder %s100, %s114
      %p116 = scmp.eq.s32.totalorder %s27, 0
      %p117 = por %p115, %p116
      %s119 = sadd.s32 %s118, 1
      %p122 = scmp.eq.s32.totalorder %s21, 1
      %p123 = scmp.ne.s32.totalorder %s118, %s120
      %p124 = scmp.eq.s32.totalorder %s21, 0
      %p125 = por %p123, %p124
      %p126 = scmp.ne.s32.totalorder %s118, %s120
      %p127 = scmp.eq.s32.totalorder %s26, 1
      %p128 = por %p126, %p127
      %p129 = scmp.ne.s32.totalorder %s120, %s121
      %p130 = scmp.eq.s32.totalorder %s26, 0
      %p131 = por %p129, %p130
      %p132 = scmp.ne.s32.totalorder %s120, %s121
      %p133 = scmp.eq.s32.totalorder %s27, 1
      %p134 = por %p132, %p133
      %p136 = scmp.ne.s32.totalorder %s121, %s135
      %p137 = scmp.eq.s32.totalorder %s27, 0
      %p138 = por %p136, %p137
      %s140 = sadd.s32 %s139, 1
      %p143 = scmp.eq.s32.totalorder %s21, 1
      %p144 = scmp.ne.s32.totalorder %s139, %s141
      %p145 = scmp.eq.s32.totalorder %s21, 0
      %p146 = por %p144, %p145
      %p147 = scmp.ne.s32.totalorder %s139, %s141
      %p148 = scmp.eq.s32.totalorder %s26, 1
      %p149 = por %p147, %p148
      %p150 = scmp.ne.s32.totalorder %s141, %s142
      %p151 = scmp.eq.s32.totalorder %s26, 0
      %p152 = por %p150, %p151
      %p153 = scmp.ne.s32.totalorder %s141, %s142
      %p154 = scmp.eq.s32.totalorder %s27, 1
      %p155 = por %p153, %p154
      %p157 = scmp.ne.s32.totalorder %s142, %s156
      %p158 = scmp.eq.s32.totalorder %s27, 0
      %p159 = por %p157, %p158
      %s161 = sadd.s32 %s160, 1
      %p164 = scmp.eq.s32.totalorder %s21, 1
      %p165 = scmp.ne.s32.totalorder %s160, %s162
      %p166 = scmp.eq.s32.totalorder %s21, 0
      %p167 = por %p165, %p166
      %p168 = scmp.ne.s32.totalorder %s160, %s162
      %p169 = scmp.eq.s32.totalorder %s26, 1
      %p170 = por %p168, %p169
      %p171 = scmp.ne.s32.totalorder %s162, %s163
      %p172 = scmp.eq.s32.totalorder %s26, 0
      %p173 = por %p171, %p172
      %p174 = scmp.ne.s32.totalorder %s162, %s163
      %p175 = scmp.eq.s32.totalorder %s27, 1
      %p176 = por %p174, %p175
      %p178 = scmp.ne.s32.totalorder %s163, %s177
      %p179 = scmp.eq.s32.totalorder %s27, 0
      %p180 = por %p178, %p179
      %s182 = sadd.s32 %s181, 1
      %p185 = scmp.eq.s32.totalorder %s21, 1
      %p186 = scmp.ne.s32.totalorder %s181, %s183
      %p187 = scmp.eq.s32.totalorder %s21, 0
      %p188 = por %p186, %p187
      %p189 = scmp.ne.s32.totalorder %s181, %s183
      %p190 = scmp.eq.s32.totalorder %s26, 1
      %p191 = por %p189, %p190
      %p192 = scmp.ne.s32.totalorder %s183, %s184
      %p193 = scmp.eq.s32.totalorder %s26, 0
      %p194 = por %p192, %p193
      %p195 = scmp.ne.s32.totalorder %s183, %s184
      %p196 = scmp.eq.s32.totalorder %s27, 1
      %p197 = por %p195, %p196
      %p199 = scmp.ne.s32.totalorder %s184, %s198
      %p200 = scmp.eq.s32.totalorder %s27, 0
      %p201 = por %p199, %p200
      %s203 = sadd.s32 %s202, 1
      %p206 = scmp.eq.s32.totalorder %s21, 1
      %p207 = scmp.ne.s32.totalorder %s202, %s204
      %p208 = scmp.eq.s32.totalorder %s21, 0
      %p209 = por %p207, %p208
      %p210 = scmp.ne.s32.totalorder %s202, %s204
      %p211 = scmp.eq.s32.totalorder %s26, 1
      %p212 = por %p210, %p211
      %p213 = scmp.ne.s32.totalorder %s204, %s205
      %p214 = scmp.eq.s32.totalorder %s26, 0
      %p215 = por %p213, %p214
      %p216 = scmp.ne.s32.totalorder %s204, %s205
      %p217 = scmp.eq.s32.totalorder %s27, 1
      %p218 = por %p216, %p217
      %p220 = scmp.ne.s32.totalorder %s205, %s219
      %p221 = scmp.eq.s32.totalorder %s27, 0
      %p222 = por %p220, %p221
      %s223 = ssub.s32 %s21, %s28
      %p224 = scmp.eq.s32.totalorder %s223, 0
      %s226 = sadd.s32 %s225, 1
      %s227 = scalar_select %p224, %s225, %s226
      %p230 = pneg %p224
      %p231 = scmp.eq.s32.totalorder %s21, 1
      %p232 = por %p230, %p231
      %p233 = scmp.ne.s32.totalorder %s225, %s228
      %p234 = scmp.eq.s32.totalorder %s21, 0
      %p235 = por %p233, %p234
      %p236 = scmp.ne.s32.totalorder %s225, %s228
      %p237 = scmp.eq.s32.totalorder %s26, 1
      %p238 = por %p236, %p237
      %p239 = scmp.ne.s32.totalorder %s228, %s229
      %p240 = scmp.eq.s32.totalorder %s26, 0
      %p241 = por %p239, %p240
      %p242 = scmp.ne.s32.totalorder %s228, %s229
      %p243 = scmp.eq.s32.totalorder %s27, 1
      %p244 = por %p242, %p243
      %p246 = scmp.ne.s32.totalorder %s229, %s245
      %p247 = scmp.eq.s32.totalorder %s27, 0
      %p248 = por %p246, %p247
      %p249 = scmp.le.s32.totalorder 1, %s21
      %p250 = scmp.lt.s32.totalorder %s21, 3
      %p251 = pnand %p249, %p250
      %p252 = pneg %p251
      // Predicated region
      $region9: #{focal_modulation_forward.1} parent=5 // pred_check
        _
      $region10: #{focal_modulation_forward.1} parent=5 // pred_check_branch
        %254 = sbr.rel (%p251) target = $region12
      $region11: #{focal_modulation_forward.1} parent=5 // pred_region
        %s255 = ssub.s32 %s21, 1
        // Predicated region
        $region13: #{focal_modulation_forward.1} parent=11 // pred_check
          %p256 = pneg %p68
        $region14: #{focal_modulation_forward.1} parent=11 // pred_check_branch
          %258 = sbr.rel (%p256) target = $region16
        $region15: #{focal_modulation_forward.1} parent=11 // pred_region
          _
        $region16: #{focal_modulation_forward.1} parent=11 // pred_fallthru
          _
        // Predicated region
        $region17: #{focal_modulation_forward.1} parent=11 // pred_check
          %p259 = pneg %p89
        $region18: #{focal_modulation_forward.1} parent=11 // pred_check_branch
          %261 = sbr.rel (%p259) target = $region20
        $region19: #{focal_modulation_forward.1} parent=11 // pred_region
          _
        $region20: #{focal_modulation_forward.1} parent=11 // pred_fallthru
          _
        // Predicated region
        $region21: #{focal_modulation_forward.1} parent=11 // pred_check
          %p262 = pneg %p110
        $region22: #{focal_modulation_forward.1} parent=11 // pred_check_branch
          %264 = sbr.rel (%p262) target = $region24
        $region23: #{focal_modulation_forward.1} parent=11 // pred_region
          _
        $region24: #{focal_modulation_forward.1} parent=11 // pred_fallthru
          _
        // Predicated region
        $region25: #{focal_modulation_forward.1} parent=11 // pred_check
          %p265 = pneg %p131
        $region26: #{focal_modulation_forward.1} parent=11 // pred_check_branch
          %267 = sbr.rel (%p265) target = $region28
        $region27: #{focal_modulation_forward.1} parent=11 // pred_region
          _
        $region28: #{focal_modulation_forward.1} parent=11 // pred_fallthru
          _
        // Predicated region
        $region29: #{focal_modulation_forward.1} parent=11 // pred_check
          %p268 = pneg %p152
        $region30: #{focal_modulation_forward.1} parent=11 // pred_check_branch
          %270 = sbr.rel (%p268) target = $region32
        $region31: #{focal_modulation_forward.1} parent=11 // pred_region
          _
        $region32: #{focal_modulation_forward.1} parent=11 // pred_fallthru
          _
        // Predicated region
        $region33: #{focal_modulation_forward.1} parent=11 // pred_check
          %p271 = pneg %p173
        $region34: #{focal_modulation_forward.1} parent=11 // pred_check_branch
          %273 = sbr.rel (%p271) target = $region36
        $region35: #{focal_modulation_forward.1} parent=11 // pred_region
          _
        $region36: #{focal_modulation_forward.1} parent=11 // pred_fallthru
          _
        // Predicated region
        $region37: #{focal_modulation_forward.1} parent=11 // pred_check
          %p274 = pneg %p194
        $region38: #{focal_modulation_forward.1} parent=11 // pred_check_branch
          %276 = sbr.rel (%p274) target = $region40
        $region39: #{focal_modulation_forward.1} parent=11 // pred_region
          _
        $region40: #{focal_modulation_forward.1} parent=11 // pred_fallthru
          _
        // Predicated region
        $region41: #{focal_modulation_forward.1} parent=11 // pred_check
          %p277 = pneg %p215
        $region42: #{focal_modulation_forward.1} parent=11 // pred_check_branch
          %279 = sbr.rel (%p277) target = $region44
        $region43: #{focal_modulation_forward.1} parent=11 // pred_region
          _
        $region44: #{focal_modulation_forward.1} parent=11 // pred_fallthru
          _
      $region12: #{focal_modulation_forward.1} parent=5 // pred_fallthru
        _
      %p280 = scmp.lt.s32.totalorder %s21, 2
      // Predicated region
      $region45: #{focal_modulation_forward.1} parent=5 // pred_check
        %p281 = pneg %p280
      $region46: #{focal_modulation_forward.1} parent=5 // pred_check_branch
        %283 = sbr.rel (%p281) target = $region48
      $region47: #{focal_modulation_forward.1} parent=5 // pred_region
        // Predicated region
        $region49: #{focal_modulation_forward.1} parent=47 // pred_check
          %p284 = pneg %p41
        $region50: #{focal_modulation_forward.1} parent=47 // pred_check_branch
          %286 = sbr.rel (%p284) target = $region52
        $region51: #{focal_modulation_forward.1} parent=47 // pred_region
          %s287 = sand.u32 %s31, 1
          %s288 = scalar_lea.sflag [#allocation4], %s287
          %s289 = sand.u32 %s31, 1
          %s290 = smul.addr %s289, 256
          %s291 = scalar_lea.vmem [#allocation3], %s290
          %293 = vsyncadd %s288, 0
          %s294 = smul.addr %s21, 32
          %s295 = smul.addr %s294, 8
          %s296 = scalar_lea.hbm %s0, %s295
          %s297 = sshll.u32 %s296, 4
          %s298 = int_to_ptr.hbm [resolvable:$true] %s297
          %s299 = sshll.u32 %s291, 4
          %s300 = int_to_ptr.vmem [resolvable:$true] %s299
          %305 = dma.hbm_to_vmem [thread:$0]  %s298, 4096, %s300, %s288, 128, 128, 8
        $region52: #{focal_modulation_forward.1} parent=47 // pred_fallthru
          _
      $region48: #{focal_modulation_forward.1} parent=5 // pred_fallthru
        _
      %p306 = scmp.le.s32.totalorder 1, %s21
      %p307 = scmp.lt.s32.totalorder %s21, 3
      %p308 = pnand %p306, %p307
      %p309 = pneg %p308
      // Predicated region
      $region53: #{focal_modulation_forward.1} parent=5 // pred_check
        _
      $region54: #{focal_modulation_forward.1} parent=5 // pred_check_branch
        %311 = sbr.rel (%p308) target = $region56
      $region55: #{focal_modulation_forward.1} parent=5 // pred_region
        %s312 = ssub.s32 %s21, 1
        %s313 = sand.u32 %s34, 1
        %s314 = scalar_lea.sflag [#allocation4], %s313
        %s315 = sand.u32 %s34, 1
        %s316 = smul.addr %s315, 256
        %s317 = scalar_lea.vmem [#allocation3], %s316
        // Predicated region
        $region57: #{focal_modulation_forward.1} parent=55 // pred_check
          %p318 = pneg %p47
        $region58: #{focal_modulation_forward.1} parent=55 // pred_check_branch
          %320 = sbr.rel (%p318) target = $region60
        $region59: #{focal_modulation_forward.1} parent=55 // pred_region
          %322 = dma.done %s314, 4096
        $region60: #{focal_modulation_forward.1} parent=55 // pred_fallthru
          _
        %s323 = sand.u32 %s34, 1
        %s324 = scalar_lea.sflag [#allocation4], %s323
        %s325 = sand.u32 %s34, 1
        %s326 = smul.addr %s325, 256
        %s327 = scalar_lea.vmem [#allocation3], %s326
        %p328 = pneg %p47
        %p329 = pneg %p44
        %p330 = pneg %p68
        %p331 = pneg %p65
        %p332 = pneg %p89
        %p333 = pneg %p86
        %p334 = pneg %p110
        %p335 = pneg %p107
        %p336 = pneg %p131
        %p337 = pneg %p128
        %p338 = pneg %p152
        %p339 = pneg %p149
        %p340 = pneg %p173
        %p341 = pneg %p170
        %p342 = pneg %p194
        %p343 = pneg %p191
        %p344 = pneg %p215
        %p345 = pneg %p212
        %p346 = pneg %p241
        %p347 = pneg %p238
        %s348 = sand.u32 %s228, 1
        %s349 = scalar_lea.sflag [#allocation5], %s348
        %s350 = sand.u32 %s228, 1
        %s351 = smul.addr %s350, 256
        %s352 = scalar_lea.vmem [#allocation6], %s351
        %v353 = vld [vmem:[%s317] sm:$0xff]
        %v354 = vld [vmem:[%s317 + $0x8] sm:$0xff]
        %v355 = vld [vmem:[%s317 + $0x10] sm:$0xff]
        %v356 = vld [vmem:[%s317 + $0x18] sm:$0xff]
        %v357 = vld [vmem:[%s317 + $0x20] sm:$0xff]
        %v358 = vld [vmem:[%s317 + $0x28] sm:$0xff]
        %v359 = vld [vmem:[%s317 + $0x30] sm:$0xff]
        %v360 = vld [vmem:[%s317 + $0x38] sm:$0xff]
        %v361 = vld [vmem:[%s317 + $0x40] sm:$0xff]
        %v362 = vld [vmem:[%s317 + $0x48] sm:$0xff]
        %v363 = vld [vmem:[%s317 + $0x50] sm:$0xff]
        %v364 = vld [vmem:[%s317 + $0x58] sm:$0xff]
        %v365 = vld [vmem:[%s317 + $0x60] sm:$0xff]
        %v366 = vld [vmem:[%s317 + $0x68] sm:$0xff]
        %v367 = vld [vmem:[%s317 + $0x70] sm:$0xff]
        %v368 = vld [vmem:[%s317 + $0x78] sm:$0xff]
        %v369 = vld [vmem:[%s317 + $0x80] sm:$0xff]
        %v370 = vld [vmem:[%s317 + $0x88] sm:$0xff]
        %v371 = vld [vmem:[%s317 + $0x90] sm:$0xff]
        %v372 = vld [vmem:[%s317 + $0x98] sm:$0xff]
        %v373 = vld [vmem:[%s317 + $0xa0] sm:$0xff]
        %v374 = vld [vmem:[%s317 + $0xa8] sm:$0xff]
        %v375 = vld [vmem:[%s317 + $0xb0] sm:$0xff]
        %v376 = vld [vmem:[%s317 + $0xb8] sm:$0xff]
        %v377 = vld [vmem:[%s317 + $0xc0] sm:$0xff]
        %v378 = vld [vmem:[%s317 + $0xc8] sm:$0xff]
        %v379 = vld [vmem:[%s317 + $0xd0] sm:$0xff]
        %v380 = vld [vmem:[%s317 + $0xd8] sm:$0xff]
        %v381 = vld [vmem:[%s317 + $0xe0] sm:$0xff]
        %v382 = vld [vmem:[%s317 + $0xe8] sm:$0xff]
        %v383 = vld [vmem:[%s317 + $0xf0] sm:$0xff]
        %v384 = vld [vmem:[%s317 + $0xf8] sm:$0xff]
        %v385 = vld [vmem:[%s1] sm:$0xff]
        %v386 = vld [vmem:[%s1 + $0x8] sm:$0xff]
        %v387 = vld [vmem:[%s1 + $0x10] sm:$0xff]
        %v388 = vld [vmem:[%s1 + $0x18] sm:$0xff]
        %v389 = vld [vmem:[%s1 + $0x20] sm:$0xff]
        %v390 = vld [vmem:[%s1 + $0x28] sm:$0xff]
        %v391 = vld [vmem:[%s1 + $0x30] sm:$0xff]
        %v392 = vld [vmem:[%s1 + $0x38] sm:$0xff]
        %v393 = vld [vmem:[%s1 + $0x40] sm:$0xff]
        %v394 = vld [vmem:[%s1 + $0x48] sm:$0xff]
        %v395 = vld [vmem:[%s1 + $0x50] sm:$0xff]
        %v396 = vld [vmem:[%s1 + $0x58] sm:$0xff]
        %v397 = vld [vmem:[%s1 + $0x60] sm:$0xff]
        %v398 = vld [vmem:[%s1 + $0x68] sm:$0xff]
        %v399 = vld [vmem:[%s1 + $0x70] sm:$0xff]
        %v400 = vld [vmem:[%s1 + $0x78] sm:$0xff]
        %v401 = vld [vmem:[%s1 + $0x80] sm:$0xff]
        %v402 = vld [vmem:[%s1 + $0x88] sm:$0xff]
        %v403 = vld [vmem:[%s1 + $0x90] sm:$0xff]
        %v404 = vld [vmem:[%s1 + $0x98] sm:$0xff]
        %v405 = vld [vmem:[%s2] sm:$0x1f]
        %v407 = vperm.slane %v405, 0
        %v408 = vperm.slane %v405, 1
        %v409 = vperm.slane %v405, 2
        %v410 = vperm.slane %v405, 3
        %v411 = vperm.slane %v405, 4
        %vm417 = vcmask 261120
        %v419 = vsel %vm417, %v353, 0
        %v422 = vsel %vm417, %v354, 0
        %v425 = vsel %vm417, %v355, 0
        %v428 = vsel %vm417, %v356, 0
        %v431 = vsel %vm417, %v357, 0
        %v434 = vsel %vm417, %v358, 0
        %v437 = vsel %vm417, %v359, 0
        %v440 = vsel %vm417, %v360, 0
        %v443 = vsel %vm417, %v361, 0
        %v446 = vsel %vm417, %v362, 0
        %v449 = vsel %vm417, %v363, 0
        %v452 = vsel %vm417, %v364, 0
        %v455 = vsel %vm417, %v365, 0
        %v458 = vsel %vm417, %v366, 0
        %v461 = vsel %vm417, %v367, 0
        %v464 = vsel %vm417, %v368, 0
        %v467 = vsel %vm417, %v369, 0
        %v470 = vsel %vm417, %v370, 0
        %v473 = vsel %vm417, %v371, 0
        %v476 = vsel %vm417, %v372, 0
        %v479 = vsel %vm417, %v373, 0
        %v482 = vsel %vm417, %v374, 0
        %v485 = vsel %vm417, %v375, 0
        %v488 = vsel %vm417, %v376, 0
        %v491 = vsel %vm417, %v377, 0
        %v494 = vsel %vm417, %v378, 0
        %v497 = vsel %vm417, %v379, 0
        %v500 = vsel %vm417, %v380, 0
        %v503 = vsel %vm417, %v381, 0
        %v506 = vsel %vm417, %v382, 0
        %v509 = vsel %vm417, %v383, 0
        %v512 = vsel %vm417, %v384, 0
        %514 = vmatpush.msra.mxu0 0.0
        %515 = vmatpush.msra.mxu0 0.0
        %516 = vmatpush.msra.mxu0 0.0
        %517 = vmatpush.msra.mxu0 0.0
        %518 = vmatpush.msra.mxu0 0.0
        %519 = vmatpush.msra.mxu0 0.0
        %520 = vmatpush.msra.mxu0 0.0
        %521 = vmatpush.msra.mxu0 0.0
        %522 = vmatpush.msra.mxu0 0.0
        %523 = vmatpush.msra.mxu0 0.0
        %524 = vmatpush.msra.mxu0 0.0
        %525 = vmatpush.msra.mxu0 0.0
        %526 = vmatpush.msra.mxu0 %v400
        %527 = vmatpush.msra.mxu0 %v395
        %528 = vmatpush.msra.mxu0 %v390
        %529 = vmatpush.msra.mxu0 %v385
        %530 = vmatmul.f32.gmra.mxu0 %v419
        %v531 = vpop.f32.mrf.mxu0
        %v532 = vadd.f32 %v407, %v531
        %533 = vmatmul.f32.gmra.mxu0 %v422
        %v534 = vpop.f32.mrf.mxu0
        %v535 = vadd.f32 %v407, %v534
        %536 = vmatmul.f32.gmra.mxu0 %v425
        %v537 = vpop.f32.mrf.mxu0
        %v538 = vadd.f32 %v407, %v537
        %539 = vmatmul.f32.gmra.mxu0 %v428
        %v540 = vpop.f32.mrf.mxu0
        %v541 = vadd.f32 %v407, %v540
        %542 = vmatmul.f32.gmra.mxu0 %v431
        %v543 = vpop.f32.mrf.mxu0
        %v544 = vadd.f32 %v407, %v543
        %545 = vmatmul.f32.gmra.mxu0 %v434
        %v546 = vpop.f32.mrf.mxu0
        %v547 = vadd.f32 %v407, %v546
        %548 = vmatmul.f32.gmra.mxu0 %v437
        %v549 = vpop.f32.mrf.mxu0
        %v550 = vadd.f32 %v407, %v549
        %551 = vmatmul.f32.gmra.mxu0 %v440
        %v552 = vpop.f32.mrf.mxu0
        %v553 = vadd.f32 %v407, %v552
        %554 = vmatmul.f32.gmra.mxu0 %v443
        %v555 = vpop.f32.mrf.mxu0
        %v556 = vadd.f32 %v407, %v555
        %557 = vmatmul.f32.gmra.mxu0 %v446
        %v558 = vpop.f32.mrf.mxu0
        %v559 = vadd.f32 %v407, %v558
        %560 = vmatmul.f32.gmra.mxu0 %v449
        %v561 = vpop.f32.mrf.mxu0
        %v562 = vadd.f32 %v407, %v561
        %563 = vmatmul.f32.gmra.mxu0 %v452
        %v564 = vpop.f32.mrf.mxu0
        %v565 = vadd.f32 %v407, %v564
        %566 = vmatmul.f32.gmra.mxu0 %v455
        %v567 = vpop.f32.mrf.mxu0
        %v568 = vadd.f32 %v407, %v567
        %569 = vmatmul.f32.gmra.mxu0 %v458
        %v570 = vpop.f32.mrf.mxu0
        %v571 = vadd.f32 %v407, %v570
        %572 = vmatmul.f32.gmra.mxu0 %v461
        %v573 = vpop.f32.mrf.mxu0
        %v574 = vadd.f32 %v407, %v573
        %575 = vmatmul.f32.gmra.mxu0 %v464
        %v576 = vpop.f32.mrf.mxu0
        %v577 = vadd.f32 %v407, %v576
        %578 = vmatmul.f32.gmra.mxu0 %v467
        %v579 = vpop.f32.mrf.mxu0
        %v580 = vadd.f32 %v407, %v579
        %581 = vmatmul.f32.gmra.mxu0 %v470
        %v582 = vpop.f32.mrf.mxu0
        %v583 = vadd.f32 %v407, %v582
        %584 = vmatmul.f32.gmra.mxu0 %v473
        %v585 = vpop.f32.mrf.mxu0
        %v586 = vadd.f32 %v407, %v585
        %587 = vmatmul.f32.gmra.mxu0 %v476
        %v588 = vpop.f32.mrf.mxu0
        %v589 = vadd.f32 %v407, %v588
        %590 = vmatmul.f32.gmra.mxu0 %v479
        %v591 = vpop.f32.mrf.mxu0
        %v592 = vadd.f32 %v407, %v591
        %593 = vmatmul.f32.gmra.mxu0 %v482
        %v594 = vpop.f32.mrf.mxu0
        %v595 = vadd.f32 %v407, %v594
        %596 = vmatmul.f32.gmra.mxu0 %v485
        %v597 = vpop.f32.mrf.mxu0
        %v598 = vadd.f32 %v407, %v597
        %599 = vmatmul.f32.gmra.mxu0 %v488
        %v600 = vpop.f32.mrf.mxu0
        %v601 = vadd.f32 %v407, %v600
        %602 = vmatmul.f32.gmra.mxu0 %v491
        %v603 = vpop.f32.mrf.mxu0
        %v604 = vadd.f32 %v407, %v603
        %605 = vmatmul.f32.gmra.mxu0 %v494
        %v606 = vpop.f32.mrf.mxu0
        %v607 = vadd.f32 %v407, %v606
        %608 = vmatmul.f32.gmra.mxu0 %v497
        %v609 = vpop.f32.mrf.mxu0
        %v610 = vadd.f32 %v407, %v609
        %611 = vmatmul.f32.gmra.mxu0 %v500
        %v612 = vpop.f32.mrf.mxu0
        %v613 = vadd.f32 %v407, %v612
        %614 = vmatmul.f32.gmra.mxu0 %v503
        %v615 = vpop.f32.mrf.mxu0
        %v616 = vadd.f32 %v407, %v615
        %617 = vmatmul.f32.gmra.mxu0 %v506
        %v618 = vpop.f32.mrf.mxu0
        %v619 = vadd.f32 %v407, %v618
        %620 = vmatmul.f32.gmra.mxu0 %v509
        %v621 = vpop.f32.mrf.mxu0
        %v622 = vadd.f32 %v407, %v621
        %623 = vmatmul.f32.gmra.mxu0 %v512
        %v624 = vpop.f32.mrf.mxu0
        %v625 = vadd.f32 %v407, %v624
        %626 = vdwg.mxu0
        %627 = vmatpush.msra.mxu0 0.0
        %628 = vmatpush.msra.mxu0 0.0
        %629 = vmatpush.msra.mxu0 0.0
        %630 = vmatpush.msra.mxu0 0.0
        %631 = vmatpush.msra.mxu0 0.0
        %632 = vmatpush.msra.mxu0 0.0
        %633 = vmatpush.msra.mxu0 0.0
        %634 = vmatpush.msra.mxu0 0.0
        %635 = vmatpush.msra.mxu0 0.0
        %636 = vmatpush.msra.mxu0 0.0
        %637 = vmatpush.msra.mxu0 0.0
        %638 = vmatpush.msra.mxu0 0.0
        %639 = vmatpush.msra.mxu0 %v401
        %640 = vmatpush.msra.mxu0 %v396
        %641 = vmatpush.msra.mxu0 %v391
        %642 = vmatpush.msra.mxu0 %v386
        %643 = vmatmul.f32.gmra.mxu0 %v419
        %v644 = vpop.f32.mrf.mxu0
        %v645 = vadd.f32 %v408, %v644
        %646 = vmatmul.f32.gmra.mxu0 %v422
        %v647 = vpop.f32.mrf.mxu0
        %v648 = vadd.f32 %v408, %v647
        %649 = vmatmul.f32.gmra.mxu0 %v425
        %v650 = vpop.f32.mrf.mxu0
        %v651 = vadd.f32 %v408, %v650
        %652 = vmatmul.f32.gmra.mxu0 %v428
        %v653 = vpop.f32.mrf.mxu0
        %v654 = vadd.f32 %v408, %v653
        %655 = vmatmul.f32.gmra.mxu0 %v431
        %v656 = vpop.f32.mrf.mxu0
        %v657 = vadd.f32 %v408, %v656
        %658 = vmatmul.f32.gmra.mxu0 %v434
        %v659 = vpop.f32.mrf.mxu0
        %v660 = vadd.f32 %v408, %v659
        %661 = vmatmul.f32.gmra.mxu0 %v437
        %v662 = vpop.f32.mrf.mxu0
        %v663 = vadd.f32 %v408, %v662
        %664 = vmatmul.f32.gmra.mxu0 %v440
        %v665 = vpop.f32.mrf.mxu0
        %v666 = vadd.f32 %v408, %v665
        %667 = vmatmul.f32.gmra.mxu0 %v443
        %v668 = vpop.f32.mrf.mxu0
        %v669 = vadd.f32 %v408, %v668
        %670 = vmatmul.f32.gmra.mxu0 %v446
        %v671 = vpop.f32.mrf.mxu0
        %v672 = vadd.f32 %v408, %v671
        %673 = vmatmul.f32.gmra.mxu0 %v449
        %v674 = vpop.f32.mrf.mxu0
        %v675 = vadd.f32 %v408, %v674
        %676 = vmatmul.f32.gmra.mxu0 %v452
        %v677 = vpop.f32.mrf.mxu0
        %v678 = vadd.f32 %v408, %v677
        %679 = vmatmul.f32.gmra.mxu0 %v455
        %v680 = vpop.f32.mrf.mxu0
        %v681 = vadd.f32 %v408, %v680
        %682 = vmatmul.f32.gmra.mxu0 %v458
        %v683 = vpop.f32.mrf.mxu0
        %v684 = vadd.f32 %v408, %v683
        %685 = vmatmul.f32.gmra.mxu0 %v461
        %v686 = vpop.f32.mrf.mxu0
        %v687 = vadd.f32 %v408, %v686
        %688 = vmatmul.f32.gmra.mxu0 %v464
        %v689 = vpop.f32.mrf.mxu0
        %v690 = vadd.f32 %v408, %v689
        %691 = vmatmul.f32.gmra.mxu0 %v467
        %v692 = vpop.f32.mrf.mxu0
        %v693 = vadd.f32 %v408, %v692
        %694 = vmatmul.f32.gmra.mxu0 %v470
        %v695 = vpop.f32.mrf.mxu0
        %v696 = vadd.f32 %v408, %v695
        %697 = vmatmul.f32.gmra.mxu0 %v473
        %v698 = vpop.f32.mrf.mxu0
        %v699 = vadd.f32 %v408, %v698
        %700 = vmatmul.f32.gmra.mxu0 %v476
        %v701 = vpop.f32.mrf.mxu0
        %v702 = vadd.f32 %v408, %v701
        %703 = vmatmul.f32.gmra.mxu0 %v479
        %v704 = vpop.f32.mrf.mxu0
        %v705 = vadd.f32 %v408, %v704
        %706 = vmatmul.f32.gmra.mxu0 %v482
        %v707 = vpop.f32.mrf.mxu0
        %v708 = vadd.f32 %v408, %v707
        %709 = vmatmul.f32.gmra.mxu0 %v485
        %v710 = vpop.f32.mrf.mxu0
        %v711 = vadd.f32 %v408, %v710
        %712 = vmatmul.f32.gmra.mxu0 %v488
        %v713 = vpop.f32.mrf.mxu0
        %v714 = vadd.f32 %v408, %v713
        %715 = vmatmul.f32.gmra.mxu0 %v491
        %v716 = vpop.f32.mrf.mxu0
        %v717 = vadd.f32 %v408, %v716
        %718 = vmatmul.f32.gmra.mxu0 %v494
        %v719 = vpop.f32.mrf.mxu0
        %v720 = vadd.f32 %v408, %v719
        %721 = vmatmul.f32.gmra.mxu0 %v497
        %v722 = vpop.f32.mrf.mxu0
        %v723 = vadd.f32 %v408, %v722
        %724 = vmatmul.f32.gmra.mxu0 %v500
        %v725 = vpop.f32.mrf.mxu0
        %v726 = vadd.f32 %v408, %v725
        %727 = vmatmul.f32.gmra.mxu0 %v503
        %v728 = vpop.f32.mrf.mxu0
        %v729 = vadd.f32 %v408, %v728
        %730 = vmatmul.f32.gmra.mxu0 %v506
        %v731 = vpop.f32.mrf.mxu0
        %v732 = vadd.f32 %v408, %v731
        %733 = vmatmul.f32.gmra.mxu0 %v509
        %v734 = vpop.f32.mrf.mxu0
        %v735 = vadd.f32 %v408, %v734
        %736 = vmatmul.f32.gmra.mxu0 %v512
        %v737 = vpop.f32.mrf.mxu0
        %v738 = vadd.f32 %v408, %v737
        %739 = vdwg.mxu0
        %740 = vmatpush.msra.mxu0 0.0
        %741 = vmatpush.msra.mxu0 0.0
        %742 = vmatpush.msra.mxu0 0.0
        %743 = vmatpush.msra.mxu0 0.0
        %744 = vmatpush.msra.mxu0 0.0
        %745 = vmatpush.msra.mxu0 0.0
        %746 = vmatpush.msra.mxu0 0.0
        %747 = vmatpush.msra.mxu0 0.0
        %748 = vmatpush.msra.mxu0 0.0
        %749 = vmatpush.msra.mxu0 0.0
        %750 = vmatpush.msra.mxu0 0.0
        %751 = vmatpush.msra.mxu0 0.0
        %752 = vmatpush.msra.mxu0 %v402
        %753 = vmatpush.msra.mxu0 %v397
        %754 = vmatpush.msra.mxu0 %v392
        %755 = vmatpush.msra.mxu0 %v387
        %756 = vmatmul.f32.gmra.mxu0 %v419
        %v757 = vpop.f32.mrf.mxu0
        %v758 = vadd.f32 %v409, %v757
        %759 = vmatmul.f32.gmra.mxu0 %v422
        %v760 = vpop.f32.mrf.mxu0
        %v761 = vadd.f32 %v409, %v760
        %762 = vmatmul.f32.gmra.mxu0 %v425
        %v763 = vpop.f32.mrf.mxu0
        %v764 = vadd.f32 %v409, %v763
        %765 = vmatmul.f32.gmra.mxu0 %v428
        %v766 = vpop.f32.mrf.mxu0
        %v767 = vadd.f32 %v409, %v766
        %768 = vmatmul.f32.gmra.mxu0 %v431
        %v769 = vpop.f32.mrf.mxu0
        %v770 = vadd.f32 %v409, %v769
        %771 = vmatmul.f32.gmra.mxu0 %v434
        %v772 = vpop.f32.mrf.mxu0
        %v773 = vadd.f32 %v409, %v772
        %774 = vmatmul.f32.gmra.mxu0 %v437
        %v775 = vpop.f32.mrf.mxu0
        %v776 = vadd.f32 %v409, %v775
        %777 = vmatmul.f32.gmra.mxu0 %v440
        %v778 = vpop.f32.mrf.mxu0
        %v779 = vadd.f32 %v409, %v778
        %780 = vmatmul.f32.gmra.mxu0 %v443
        %v781 = vpop.f32.mrf.mxu0
        %v782 = vadd.f32 %v409, %v781
        %783 = vmatmul.f32.gmra.mxu0 %v446
        %v784 = vpop.f32.mrf.mxu0
        %v785 = vadd.f32 %v409, %v784
        %786 = vmatmul.f32.gmra.mxu0 %v449
        %v787 = vpop.f32.mrf.mxu0
        %v788 = vadd.f32 %v409, %v787
        %789 = vmatmul.f32.gmra.mxu0 %v452
        %v790 = vpop.f32.mrf.mxu0
        %v791 = vadd.f32 %v409, %v790
        %792 = vmatmul.f32.gmra.mxu0 %v455
        %v793 = vpop.f32.mrf.mxu0
        %v794 = vadd.f32 %v409, %v793
        %795 = vmatmul.f32.gmra.mxu0 %v458
        %v796 = vpop.f32.mrf.mxu0
        %v797 = vadd.f32 %v409, %v796
        %798 = vmatmul.f32.gmra.mxu0 %v461
        %v799 = vpop.f32.mrf.mxu0
        %v800 = vadd.f32 %v409, %v799
        %801 = vmatmul.f32.gmra.mxu0 %v464
        %v802 = vpop.f32.mrf.mxu0
        %v803 = vadd.f32 %v409, %v802
        %804 = vmatmul.f32.gmra.mxu0 %v467
        %v805 = vpop.f32.mrf.mxu0
        %v806 = vadd.f32 %v409, %v805
        %807 = vmatmul.f32.gmra.mxu0 %v470
        %v808 = vpop.f32.mrf.mxu0
        %v809 = vadd.f32 %v409, %v808
        %810 = vmatmul.f32.gmra.mxu0 %v473
        %v811 = vpop.f32.mrf.mxu0
        %v812 = vadd.f32 %v409, %v811
        %813 = vmatmul.f32.gmra.mxu0 %v476
        %v814 = vpop.f32.mrf.mxu0
        %v815 = vadd.f32 %v409, %v814
        %816 = vmatmul.f32.gmra.mxu0 %v479
        %v817 = vpop.f32.mrf.mxu0
        %v818 = vadd.f32 %v409, %v817
        %819 = vmatmul.f32.gmra.mxu0 %v482
        %v820 = vpop.f32.mrf.mxu0
        %v821 = vadd.f32 %v409, %v820
        %822 = vmatmul.f32.gmra.mxu0 %v485
        %v823 = vpop.f32.mrf.mxu0
        %v824 = vadd.f32 %v409, %v823
        %825 = vmatmul.f32.gmra.mxu0 %v488
        %v826 = vpop.f32.mrf.mxu0
        %v827 = vadd.f32 %v409, %v826
        %828 = vmatmul.f32.gmra.mxu0 %v491
        %v829 = vpop.f32.mrf.mxu0
        %v830 = vadd.f32 %v409, %v829
        %831 = vmatmul.f32.gmra.mxu0 %v494
        %v832 = vpop.f32.mrf.mxu0
        %v833 = vadd.f32 %v409, %v832
        %834 = vmatmul.f32.gmra.mxu0 %v497
        %v835 = vpop.f32.mrf.mxu0
        %v836 = vadd.f32 %v409, %v835
        %837 = vmatmul.f32.gmra.mxu0 %v500
        %v838 = vpop.f32.mrf.mxu0
        %v839 = vadd.f32 %v409, %v838
        %840 = vmatmul.f32.gmra.mxu0 %v503
        %v841 = vpop.f32.mrf.mxu0
        %v842 = vadd.f32 %v409, %v841
        %843 = vmatmul.f32.gmra.mxu0 %v506
        %v844 = vpop.f32.mrf.mxu0
        %v845 = vadd.f32 %v409, %v844
        %846 = vmatmul.f32.gmra.mxu0 %v509
        %v847 = vpop.f32.mrf.mxu0
        %v848 = vadd.f32 %v409, %v847
        %849 = vmatmul.f32.gmra.mxu0 %v512
        %v850 = vpop.f32.mrf.mxu0
        %v851 = vadd.f32 %v409, %v850
        %852 = vdwg.mxu0
        %853 = vmatpush.msra.mxu0 0.0
        %854 = vmatpush.msra.mxu0 0.0
        %855 = vmatpush.msra.mxu0 0.0
        %856 = vmatpush.msra.mxu0 0.0
        %857 = vmatpush.msra.mxu0 0.0
        %858 = vmatpush.msra.mxu0 0.0
        %859 = vmatpush.msra.mxu0 0.0
        %860 = vmatpush.msra.mxu0 0.0
        %861 = vmatpush.msra.mxu0 0.0
        %862 = vmatpush.msra.mxu0 0.0
        %863 = vmatpush.msra.mxu0 0.0
        %864 = vmatpush.msra.mxu0 0.0
        %865 = vmatpush.msra.mxu0 %v403
        %866 = vmatpush.msra.mxu0 %v398
        %867 = vmatpush.msra.mxu0 %v393
        %868 = vmatpush.msra.mxu0 %v388
        %869 = vmatmul.f32.gmra.mxu0 %v419
        %v870 = vpop.f32.mrf.mxu0
        %v871 = vadd.f32 %v410, %v870
        %872 = vmatmul.f32.gmra.mxu0 %v422
        %v873 = vpop.f32.mrf.mxu0
        %v874 = vadd.f32 %v410, %v873
        %875 = vmatmul.f32.gmra.mxu0 %v425
        %v876 = vpop.f32.mrf.mxu0
        %v877 = vadd.f32 %v410, %v876
        %878 = vmatmul.f32.gmra.mxu0 %v428
        %v879 = vpop.f32.mrf.mxu0
        %v880 = vadd.f32 %v410, %v879
        %881 = vmatmul.f32.gmra.mxu0 %v431
        %v882 = vpop.f32.mrf.mxu0
        %v883 = vadd.f32 %v410, %v882
        %884 = vmatmul.f32.gmra.mxu0 %v434
        %v885 = vpop.f32.mrf.mxu0
        %v886 = vadd.f32 %v410, %v885
        %887 = vmatmul.f32.gmra.mxu0 %v437
        %v888 = vpop.f32.mrf.mxu0
        %v889 = vadd.f32 %v410, %v888
        %890 = vmatmul.f32.gmra.mxu0 %v440
        %v891 = vpop.f32.mrf.mxu0
        %v892 = vadd.f32 %v410, %v891
        %893 = vmatmul.f32.gmra.mxu0 %v443
        %v894 = vpop.f32.mrf.mxu0
        %v895 = vadd.f32 %v410, %v894
        %896 = vmatmul.f32.gmra.mxu0 %v446
        %v897 = vpop.f32.mrf.mxu0
        %v898 = vadd.f32 %v410, %v897
        %899 = vmatmul.f32.gmra.mxu0 %v449
        %v900 = vpop.f32.mrf.mxu0
        %v901 = vadd.f32 %v410, %v900
        %902 = vmatmul.f32.gmra.mxu0 %v452
        %v903 = vpop.f32.mrf.mxu0
        %v904 = vadd.f32 %v410, %v903
        %905 = vmatmul.f32.gmra.mxu0 %v455
        %v906 = vpop.f32.mrf.mxu0
        %v907 = vadd.f32 %v410, %v906
        %908 = vmatmul.f32.gmra.mxu0 %v458
        %v909 = vpop.f32.mrf.mxu0
        %v910 = vadd.f32 %v410, %v909
        %911 = vmatmul.f32.gmra.mxu0 %v461
        %v912 = vpop.f32.mrf.mxu0
        %v913 = vadd.f32 %v410, %v912
        %914 = vmatmul.f32.gmra.mxu0 %v464
        %v915 = vpop.f32.mrf.mxu0
        %v916 = vadd.f32 %v410, %v915
        %917 = vmatmul.f32.gmra.mxu0 %v467
        %v918 = vpop.f32.mrf.mxu0
        %v919 = vadd.f32 %v410, %v918
        %920 = vmatmul.f32.gmra.mxu0 %v470
        %v921 = vpop.f32.mrf.mxu0
        %v922 = vadd.f32 %v410, %v921
        %923 = vmatmul.f32.gmra.mxu0 %v473
        %v924 = vpop.f32.mrf.mxu0
        %v925 = vadd.f32 %v410, %v924
        %926 = vmatmul.f32.gmra.mxu0 %v476
        %v927 = vpop.f32.mrf.mxu0
        %v928 = vadd.f32 %v410, %v927
        %929 = vmatmul.f32.gmra.mxu0 %v479
        %v930 = vpop.f32.mrf.mxu0
        %v931 = vadd.f32 %v410, %v930
        %932 = vmatmul.f32.gmra.mxu0 %v482
        %v933 = vpop.f32.mrf.mxu0
        %v934 = vadd.f32 %v410, %v933
        %935 = vmatmul.f32.gmra.mxu0 %v485
        %v936 = vpop.f32.mrf.mxu0
        %v937 = vadd.f32 %v410, %v936
        %938 = vmatmul.f32.gmra.mxu0 %v488
        %v939 = vpop.f32.mrf.mxu0
        %v940 = vadd.f32 %v410, %v939
        %941 = vmatmul.f32.gmra.mxu0 %v491
        %v942 = vpop.f32.mrf.mxu0
        %v943 = vadd.f32 %v410, %v942
        %944 = vmatmul.f32.gmra.mxu0 %v494
        %v945 = vpop.f32.mrf.mxu0
        %v946 = vadd.f32 %v410, %v945
        %947 = vmatmul.f32.gmra.mxu0 %v497
        %v948 = vpop.f32.mrf.mxu0
        %v949 = vadd.f32 %v410, %v948
        %950 = vmatmul.f32.gmra.mxu0 %v500
        %v951 = vpop.f32.mrf.mxu0
        %v952 = vadd.f32 %v410, %v951
        %953 = vmatmul.f32.gmra.mxu0 %v503
        %v954 = vpop.f32.mrf.mxu0
        %v955 = vadd.f32 %v410, %v954
        %956 = vmatmul.f32.gmra.mxu0 %v506
        %v957 = vpop.f32.mrf.mxu0
        %v958 = vadd.f32 %v410, %v957
        %959 = vmatmul.f32.gmra.mxu0 %v509
        %v960 = vpop.f32.mrf.mxu0
        %v961 = vadd.f32 %v410, %v960
        %962 = vmatmul.f32.gmra.mxu0 %v512
        %v963 = vpop.f32.mrf.mxu0
        %v964 = vadd.f32 %v410, %v963
        %965 = vdwg.mxu0
        %966 = vmatpush.msra.mxu0 0.0
        %967 = vmatpush.msra.mxu0 0.0
        %968 = vmatpush.msra.mxu0 0.0
        %969 = vmatpush.msra.mxu0 0.0
        %970 = vmatpush.msra.mxu0 0.0
        %971 = vmatpush.msra.mxu0 0.0
        %972 = vmatpush.msra.mxu0 0.0
        %973 = vmatpush.msra.mxu0 0.0
        %974 = vmatpush.msra.mxu0 0.0
        %975 = vmatpush.msra.mxu0 0.0
        %976 = vmatpush.msra.mxu0 0.0
        %977 = vmatpush.msra.mxu0 0.0
        %978 = vmatpush.msra.mxu0 %v404
        %979 = vmatpush.msra.mxu0 %v399
        %980 = vmatpush.msra.mxu0 %v394
        %981 = vmatpush.msra.mxu0 %v389
        %982 = vmatmul.f32.gmra.mxu0 %v419
        %v983 = vpop.f32.mrf.mxu0
        %v984 = vadd.f32 %v411, %v983
        %985 = vmatmul.f32.gmra.mxu0 %v422
        %v986 = vpop.f32.mrf.mxu0
        %v987 = vadd.f32 %v411, %v986
        %988 = vmatmul.f32.gmra.mxu0 %v425
        %v989 = vpop.f32.mrf.mxu0
        %v990 = vadd.f32 %v411, %v989
        %991 = vmatmul.f32.gmra.mxu0 %v428
        %v992 = vpop.f32.mrf.mxu0
        %v993 = vadd.f32 %v411, %v992
        %994 = vmatmul.f32.gmra.mxu0 %v431
        %v995 = vpop.f32.mrf.mxu0
        %v996 = vadd.f32 %v411, %v995
        %997 = vmatmul.f32.gmra.mxu0 %v434
        %v998 = vpop.f32.mrf.mxu0
        %v999 = vadd.f32 %v411, %v998
        %1000 = vmatmul.f32.gmra.mxu0 %v437
        %v1001 = vpop.f32.mrf.mxu0
        %v1002 = vadd.f32 %v411, %v1001
        %1003 = vmatmul.f32.gmra.mxu0 %v440
        %v1004 = vpop.f32.mrf.mxu0
        %v1005 = vadd.f32 %v411, %v1004
        %1006 = vmatmul.f32.gmra.mxu0 %v443
        %v1007 = vpop.f32.mrf.mxu0
        %v1008 = vadd.f32 %v411, %v1007
        %1009 = vmatmul.f32.gmra.mxu0 %v446
        %v1010 = vpop.f32.mrf.mxu0
        %v1011 = vadd.f32 %v411, %v1010
        %1012 = vmatmul.f32.gmra.mxu0 %v449
        %v1013 = vpop.f32.mrf.mxu0
        %v1014 = vadd.f32 %v411, %v1013
        %1015 = vmatmul.f32.gmra.mxu0 %v452
        %v1016 = vpop.f32.mrf.mxu0
        %v1017 = vadd.f32 %v411, %v1016
        %1018 = vmatmul.f32.gmra.mxu0 %v455
        %v1019 = vpop.f32.mrf.mxu0
        %v1020 = vadd.f32 %v411, %v1019
        %1021 = vmatmul.f32.gmra.mxu0 %v458
        %v1022 = vpop.f32.mrf.mxu0
        %v1023 = vadd.f32 %v411, %v1022
        %1024 = vmatmul.f32.gmra.mxu0 %v461
        %v1025 = vpop.f32.mrf.mxu0
        %v1026 = vadd.f32 %v411, %v1025
        %1027 = vmatmul.f32.gmra.mxu0 %v464
        %v1028 = vpop.f32.mrf.mxu0
        %v1029 = vadd.f32 %v411, %v1028
        %1030 = vmatmul.f32.gmra.mxu0 %v467
        %v1031 = vpop.f32.mrf.mxu0
        %v1032 = vadd.f32 %v411, %v1031
        %1033 = vmatmul.f32.gmra.mxu0 %v470
        %v1034 = vpop.f32.mrf.mxu0
        %v1035 = vadd.f32 %v411, %v1034
        %1036 = vmatmul.f32.gmra.mxu0 %v473
        %v1037 = vpop.f32.mrf.mxu0
        %v1038 = vadd.f32 %v411, %v1037
        %1039 = vmatmul.f32.gmra.mxu0 %v476
        %v1040 = vpop.f32.mrf.mxu0
        %v1041 = vadd.f32 %v411, %v1040
        %1042 = vmatmul.f32.gmra.mxu0 %v479
        %v1043 = vpop.f32.mrf.mxu0
        %v1044 = vadd.f32 %v411, %v1043
        %1045 = vmatmul.f32.gmra.mxu0 %v482
        %v1046 = vpop.f32.mrf.mxu0
        %v1047 = vadd.f32 %v411, %v1046
        %1048 = vmatmul.f32.gmra.mxu0 %v485
        %v1049 = vpop.f32.mrf.mxu0
        %v1050 = vadd.f32 %v411, %v1049
        %1051 = vmatmul.f32.gmra.mxu0 %v488
        %v1052 = vpop.f32.mrf.mxu0
        %v1053 = vadd.f32 %v411, %v1052
        %1054 = vmatmul.f32.gmra.mxu0 %v491
        %v1055 = vpop.f32.mrf.mxu0
        %v1056 = vadd.f32 %v411, %v1055
        %1057 = vmatmul.f32.gmra.mxu0 %v494
        %v1058 = vpop.f32.mrf.mxu0
        %v1059 = vadd.f32 %v411, %v1058
        %1060 = vmatmul.f32.gmra.mxu0 %v497
        %v1061 = vpop.f32.mrf.mxu0
        %v1062 = vadd.f32 %v411, %v1061
        %1063 = vmatmul.f32.gmra.mxu0 %v500
        %v1064 = vpop.f32.mrf.mxu0
        %v1065 = vadd.f32 %v411, %v1064
        %1066 = vmatmul.f32.gmra.mxu0 %v503
        %v1067 = vpop.f32.mrf.mxu0
        %v1068 = vadd.f32 %v411, %v1067
        %1069 = vmatmul.f32.gmra.mxu0 %v506
        %v1070 = vpop.f32.mrf.mxu0
        %v1071 = vadd.f32 %v411, %v1070
        %1072 = vmatmul.f32.gmra.mxu0 %v509
        %v1073 = vpop.f32.mrf.mxu0
        %v1074 = vadd.f32 %v411, %v1073
        %1075 = vmatmul.f32.gmra.mxu0 %v512
        %v1076 = vpop.f32.mrf.mxu0
        %v1077 = vadd.f32 %v411, %v1076
        %1078 = vdwg.mxu0
        %1079 = vst.msk [vmem:[#allocation2] sm:$0xff] %vm417, 0.0
        %1080 = vst.msk [vmem:[#allocation2 + $0x8] sm:$0xff] %vm417, 0.0
        %vm1081 = vcmask 257024
        %1082 = vst.msk [vmem:[#allocation2 + $0x10] sm:$0xf] %vm1081, 0.0
        %1083 = vst.msk [vmem:[#allocation2 + $0x18] sm:$0xff] %vm417, 0.0
        %1084 = vst.msk [vmem:[#allocation2 + $0x20] sm:$0xff] %vm417, 0.0
        %1085 = vst.msk [vmem:[#allocation2 + $0x28] sm:$0xf] %vm1081, 0.0
        %1086 = vst.msk [vmem:[#allocation2 + $0x30] sm:$0xff] %vm417, 0.0
        %1087 = vst.msk [vmem:[#allocation2 + $0x38] sm:$0xff] %vm417, 0.0
        %1088 = vst.msk [vmem:[#allocation2 + $0x40] sm:$0xf] %vm1081, 0.0
        %1089 = vst.msk [vmem:[#allocation2 + $0x48] sm:$0xff] %vm417, 0.0
        %1090 = vst.msk [vmem:[#allocation2 + $0x50] sm:$0xff] %vm417, 0.0
        %1091 = vst.msk [vmem:[#allocation2 + $0x58] sm:$0xf] %vm1081, 0.0
        %1092 = vst.msk [vmem:[#allocation2 + $0x60] sm:$0xff] %vm417, 0.0
        %1093 = vst.msk [vmem:[#allocation2 + $0x68] sm:$0xff] %vm417, 0.0
        %1094 = vst.msk [vmem:[#allocation2 + $0x70] sm:$0xf] %vm1081, 0.0
        %1095 = vst.msk [vmem:[#allocation2 + $0x78] sm:$0xff] %vm417, 0.0
        %1096 = vst.msk [vmem:[#allocation2 + $0x80] sm:$0xff] %vm417, 0.0
        %1097 = vst.msk [vmem:[#allocation2 + $0x88] sm:$0xf] %vm1081, 0.0
        %1098 = vst.msk [vmem:[#allocation2 + $0x90] sm:$0xff] %vm417, 0.0
        %1099 = vst.msk [vmem:[#allocation2 + $0x98] sm:$0xff] %vm417, 0.0
        %1100 = vst.msk [vmem:[#allocation2 + $0xa0] sm:$0xf] %vm1081, 0.0
        %1101 = vst.msk [vmem:[#allocation2 + $0xa8] sm:$0xff] %vm417, 0.0
        %1102 = vst.msk [vmem:[#allocation2 + $0xb0] sm:$0xff] %vm417, 0.0
        %1103 = vst.msk [vmem:[#allocation2 + $0xb8] sm:$0xf] %vm1081, 0.0
        %1104 = vst.msk [vmem:[#allocation2 + $0xc0] sm:$0xff] %vm417, 0.0
        %1105 = vst.msk [vmem:[#allocation2 + $0xc8] sm:$0xff] %vm417, 0.0
        %1106 = vst.msk [vmem:[#allocation2 + $0xd0] sm:$0xf] %vm1081, 0.0
        %1107 = vst.msk [vmem:[#allocation2 + $0xd8] sm:$0xff] %vm417, 0.0
        %1108 = vst.msk [vmem:[#allocation2 + $0xe0] sm:$0xff] %vm417, 0.0
        %1109 = vst.msk [vmem:[#allocation2 + $0xe8] sm:$0xf] %vm1081, 0.0
        %1110 = vst.msk [vmem:[#allocation2 + $0xf0] sm:$0xff] %vm417, 0.0
        %1111 = vst.msk [vmem:[#allocation2 + $0xf8] sm:$0xff] %vm417, 0.0
        %1112 = vst.msk [vmem:[#allocation2 + $0x100] sm:$0xf] %vm1081, 0.0
        %1113 = vst.msk [vmem:[#allocation2 + $0x108] sm:$0xff] %vm417, 0.0
        %1114 = vst.msk [vmem:[#allocation2 + $0x110] sm:$0xff] %vm417, 0.0
        %1115 = vst.msk [vmem:[#allocation2 + $0x118] sm:$0xf] %vm1081, 0.0
        %1116 = vst.msk [vmem:[#allocation2 + $0x120] sm:$0xff] %vm417, 0.0
        %1117 = vst.msk [vmem:[#allocation2 + $0x128] sm:$0xff] %vm417, 0.0
        %1118 = vst.msk [vmem:[#allocation2 + $0x130] sm:$0xf] %vm1081, 0.0
        %1119 = vst.msk [vmem:[#allocation2 + $0x138] sm:$0xff] %vm417, 0.0
        %1120 = vst.msk [vmem:[#allocation2 + $0x140] sm:$0xff] %vm417, 0.0
        %1121 = vst.msk [vmem:[#allocation2 + $0x148] sm:$0xf] %vm1081, 0.0
        %1122 = vst.msk [vmem:[#allocation2 + $0x150] sm:$0xff] %vm417, 0.0
        %1123 = vst.msk [vmem:[#allocation2 + $0x158] sm:$0xff] %vm417, 0.0
        %1124 = vst.msk [vmem:[#allocation2 + $0x160] sm:$0xf] %vm1081, 0.0
        %1125 = vst.msk [vmem:[#allocation2 + $0x168] sm:$0xff] %vm417, 0.0
        %1126 = vst.msk [vmem:[#allocation2 + $0x170] sm:$0xff] %vm417, 0.0
        %1127 = vst.msk [vmem:[#allocation2 + $0x178] sm:$0xf] %vm1081, 0.0
        %1128 = vst.msk [vmem:[#allocation2 + $0x180] sm:$0xff] %vm417, 0.0
        %1129 = vst.msk [vmem:[#allocation2 + $0x188] sm:$0xff] %vm417, 0.0
        %1130 = vst.msk [vmem:[#allocation2 + $0x190] sm:$0xf] %vm1081, 0.0
        %1131 = vst.msk [vmem:[#allocation2 + $0x198] sm:$0xff] %vm417, 0.0
        %1132 = vst.msk [vmem:[#allocation2 + $0x1a0] sm:$0xff] %vm417, 0.0
        %1133 = vst.msk [vmem:[#allocation2 + $0x1a8] sm:$0xf] %vm1081, 0.0
        %1134 = vst.msk [vmem:[#allocation2 + $0x1b0] sm:$0xff] %vm417, 0.0
        %1135 = vst.msk [vmem:[#allocation2 + $0x1b8] sm:$0xff] %vm417, 0.0
        %1136 = vst.msk [vmem:[#allocation2 + $0x1c0] sm:$0xf] %vm1081, 0.0
        %1137 = vst.msk [vmem:[#allocation2 + $0x1c8] sm:$0xff] %vm417, 0.0
        %1138 = vst.msk [vmem:[#allocation2 + $0x1d0] sm:$0xff] %vm417, 0.0
        %1139 = vst.msk [vmem:[#allocation2 + $0x1d8] sm:$0xf] %vm1081, 0.0
        %s1140 = scalar_lea.vmem [#allocation2], 48
        %1141 = vst.msk [vmem:[%s1140 + $0x2] sm:$0xff] %vm417, %v645
        %1142 = vst.msk [vmem:[%s1140 + $0xa] sm:$0xff] %vm417, %v648
        %1143 = vst.msk [vmem:[%s1140 + $0x1a] sm:$0xff] %vm417, %v651
        %1144 = vst.msk [vmem:[%s1140 + $0x22] sm:$0xff] %vm417, %v654
        %1145 = vst.msk [vmem:[%s1140 + $0x32] sm:$0xff] %vm417, %v657
        %1146 = vst.msk [vmem:[%s1140 + $0x3a] sm:$0xff] %vm417, %v660
        %1147 = vst.msk [vmem:[%s1140 + $0x4a] sm:$0xff] %vm417, %v663
        %1148 = vst.msk [vmem:[%s1140 + $0x52] sm:$0xff] %vm417, %v666
        %1149 = vst.msk [vmem:[%s1140 + $0x62] sm:$0xff] %vm417, %v669
        %1150 = vst.msk [vmem:[%s1140 + $0x6a] sm:$0xff] %vm417, %v672
        %1151 = vst.msk [vmem:[%s1140 + $0x7a] sm:$0xff] %vm417, %v675
        %1152 = vst.msk [vmem:[%s1140 + $0x82] sm:$0xff] %vm417, %v678
        %1153 = vst.msk [vmem:[%s1140 + $0x92] sm:$0xff] %vm417, %v681
        %1154 = vst.msk [vmem:[%s1140 + $0x9a] sm:$0xff] %vm417, %v684
        %1155 = vst.msk [vmem:[%s1140 + $0xaa] sm:$0xff] %vm417, %v687
        %1156 = vst.msk [vmem:[%s1140 + $0xb2] sm:$0xff] %vm417, %v690
        %1157 = vst.msk [vmem:[%s1140 + $0xc2] sm:$0xff] %vm417, %v693
        %1158 = vst.msk [vmem:[%s1140 + $0xca] sm:$0xff] %vm417, %v696
        %1159 = vst.msk [vmem:[%s1140 + $0xda] sm:$0xff] %vm417, %v699
        %1160 = vst.msk [vmem:[%s1140 + $0xe2] sm:$0xff] %vm417, %v702
        %1161 = vst.msk [vmem:[%s1140 + $0xf2] sm:$0xff] %vm417, %v705
        %1162 = vst.msk [vmem:[%s1140 + $0xfa] sm:$0xff] %vm417, %v708
        %1163 = vst.msk [vmem:[%s1140 + $0x10a] sm:$0xff] %vm417, %v711
        %1164 = vst.msk [vmem:[%s1140 + $0x112] sm:$0xff] %vm417, %v714
        %1165 = vst.msk [vmem:[%s1140 + $0x122] sm:$0xff] %vm417, %v717
        %1166 = vst.msk [vmem:[%s1140 + $0x12a] sm:$0xff] %vm417, %v720
        %1167 = vst.msk [vmem:[%s1140 + $0x13a] sm:$0xff] %vm417, %v723
        %1168 = vst.msk [vmem:[%s1140 + $0x142] sm:$0xff] %vm417, %v726
        %1169 = vst.msk [vmem:[%s1140 + $0x152] sm:$0xff] %vm417, %v729
        %1170 = vst.msk [vmem:[%s1140 + $0x15a] sm:$0xff] %vm417, %v732
        %1171 = vst.msk [vmem:[%s1140 + $0x16a] sm:$0xff] %vm417, %v735
        %1172 = vst.msk [vmem:[%s1140 + $0x172] sm:$0xff] %vm417, %v738
        %v1173 = vld [vmem:[%s3] sm:$0x1]
        %s1174 = scalar_lea.vmem [#allocation2], 24
        %v1175 = vld [vmem:[%s1174 + $0x1] sm:$0xff]
        %v1176 = vld [vmem:[%s1174 + $0x9] sm:$0xff]
        %v1177 = vld [vmem:[%s1174 + $0x19] sm:$0xff]
        %v1178 = vld [vmem:[%s1174 + $0x21] sm:$0xff]
        %v1179 = vld [vmem:[%s1174 + $0x31] sm:$0xff]
        %v1180 = vld [vmem:[%s1174 + $0x39] sm:$0xff]
        %v1181 = vld [vmem:[%s1174 + $0x49] sm:$0xff]
        %v1182 = vld [vmem:[%s1174 + $0x51] sm:$0xff]
        %v1183 = vld [vmem:[%s1174 + $0x61] sm:$0xff]
        %v1184 = vld [vmem:[%s1174 + $0x69] sm:$0xff]
        %v1185 = vld [vmem:[%s1174 + $0x79] sm:$0xff]
        %v1186 = vld [vmem:[%s1174 + $0x81] sm:$0xff]
        %v1187 = vld [vmem:[%s1174 + $0x91] sm:$0xff]
        %v1188 = vld [vmem:[%s1174 + $0x99] sm:$0xff]
        %v1189 = vld [vmem:[%s1174 + $0xa9] sm:$0xff]
        %v1190 = vld [vmem:[%s1174 + $0xb1] sm:$0xff]
        %v1191 = vld [vmem:[%s1174 + $0xc1] sm:$0xff]
        %v1192 = vld [vmem:[%s1174 + $0xc9] sm:$0xff]
        %v1193 = vld [vmem:[%s1174 + $0xd9] sm:$0xff]
        %v1194 = vld [vmem:[%s1174 + $0xe1] sm:$0xff]
        %v1195 = vld [vmem:[%s1174 + $0xf1] sm:$0xff]
        %v1196 = vld [vmem:[%s1174 + $0xf9] sm:$0xff]
        %v1197 = vld [vmem:[%s1174 + $0x109] sm:$0xff]
        %v1198 = vld [vmem:[%s1174 + $0x111] sm:$0xff]
        %v1199 = vld [vmem:[%s1174 + $0x121] sm:$0xff]
        %v1200 = vld [vmem:[%s1174 + $0x129] sm:$0xff]
        %v1201 = vld [vmem:[%s1174 + $0x139] sm:$0xff]
        %v1202 = vld [vmem:[%s1174 + $0x141] sm:$0xff]
        %v1203 = vld [vmem:[%s1174 + $0x151] sm:$0xff]
        %v1204 = vld [vmem:[%s1174 + $0x159] sm:$0xff]
        %v1205 = vld [vmem:[%s1174 + $0x169] sm:$0xff]
        %v1206 = vld [vmem:[%s1174 + $0x171] sm:$0xff]
        %v1207 = vperm.slane %v1173, 0
        %v1208 = vmul.f32 %v1175, %v1207
        %v1209 = vmul.f32 %v1176, %v1207
        %v1210 = vmul.f32 %v1177, %v1207
        %v1211 = vmul.f32 %v1178, %v1207
        %v1212 = vmul.f32 %v1179, %v1207
        %v1213 = vmul.f32 %v1180, %v1207
        %v1214 = vmul.f32 %v1181, %v1207
        %v1215 = vmul.f32 %v1182, %v1207
        %v1216 = vmul.f32 %v1183, %v1207
        %v1217 = vmul.f32 %v1184, %v1207
        %v1218 = vmul.f32 %v1185, %v1207
        %v1219 = vmul.f32 %v1186, %v1207
        %v1220 = vmul.f32 %v1187, %v1207
        %v1221 = vmul.f32 %v1188, %v1207
        %v1222 = vmul.f32 %v1189, %v1207
        %v1223 = vmul.f32 %v1190, %v1207
        %v1224 = vmul.f32 %v1191, %v1207
        %v1225 = vmul.f32 %v1192, %v1207
        %v1226 = vmul.f32 %v1193, %v1207
        %v1227 = vmul.f32 %v1194, %v1207
        %v1228 = vmul.f32 %v1195, %v1207
        %v1229 = vmul.f32 %v1196, %v1207
        %v1230 = vmul.f32 %v1197, %v1207
        %v1231 = vmul.f32 %v1198, %v1207
        %v1232 = vmul.f32 %v1199, %v1207
        %v1233 = vmul.f32 %v1200, %v1207
        %v1234 = vmul.f32 %v1201, %v1207
        %v1235 = vmul.f32 %v1202, %v1207
        %v1236 = vmul.f32 %v1203, %v1207
        %v1237 = vmul.f32 %v1204, %v1207
        %v1238 = vmul.f32 %v1205, %v1207
        %v1239 = vmul.f32 %v1206, %v1207
        %v1240 = vadd.f32 %v1208, 0.0
        %v1241 = vadd.f32 %v1209, 0.0
        %v1242 = vadd.f32 %v1210, 0.0
        %v1243 = vadd.f32 %v1211, 0.0
        %v1244 = vadd.f32 %v1212, 0.0
        %v1245 = vadd.f32 %v1213, 0.0
        %v1246 = vadd.f32 %v1214, 0.0
        %v1247 = vadd.f32 %v1215, 0.0
        %v1248 = vadd.f32 %v1216, 0.0
        %v1249 = vadd.f32 %v1217, 0.0
        %v1250 = vadd.f32 %v1218, 0.0
        %v1251 = vadd.f32 %v1219, 0.0
        %v1252 = vadd.f32 %v1220, 0.0
        %v1253 = vadd.f32 %v1221, 0.0
        %v1254 = vadd.f32 %v1222, 0.0
        %v1255 = vadd.f32 %v1223, 0.0
        %v1256 = vadd.f32 %v1224, 0.0
        %v1257 = vadd.f32 %v1225, 0.0
        %v1258 = vadd.f32 %v1226, 0.0
        %v1259 = vadd.f32 %v1227, 0.0
        %v1260 = vadd.f32 %v1228, 0.0
        %v1261 = vadd.f32 %v1229, 0.0
        %v1262 = vadd.f32 %v1230, 0.0
        %v1263 = vadd.f32 %v1231, 0.0
        %v1264 = vadd.f32 %v1232, 0.0
        %v1265 = vadd.f32 %v1233, 0.0
        %v1266 = vadd.f32 %v1234, 0.0
        %v1267 = vadd.f32 %v1235, 0.0
        %v1268 = vadd.f32 %v1236, 0.0
        %v1269 = vadd.f32 %v1237, 0.0
        %v1270 = vadd.f32 %v1238, 0.0
        %v1271 = vadd.f32 %v1239, 0.0
        %v1272 = vld [vmem:[%s3 + $0x1] sm:$0x1]
        %v1273 = vld [vmem:[%s1174 + $0x2] sm:$0xff]
        %v1274 = vld [vmem:[%s1174 + $0xa] sm:$0xff]
        %v1275 = vld [vmem:[%s1174 + $0x1a] sm:$0xff]
        %v1276 = vld [vmem:[%s1174 + $0x22] sm:$0xff]
        %v1277 = vld [vmem:[%s1174 + $0x32] sm:$0xff]
        %v1278 = vld [vmem:[%s1174 + $0x3a] sm:$0xff]
        %v1279 = vld [vmem:[%s1174 + $0x4a] sm:$0xff]
        %v1280 = vld [vmem:[%s1174 + $0x52] sm:$0xff]
        %v1281 = vld [vmem:[%s1174 + $0x62] sm:$0xff]
        %v1282 = vld [vmem:[%s1174 + $0x6a] sm:$0xff]
        %v1283 = vld [vmem:[%s1174 + $0x7a] sm:$0xff]
        %v1284 = vld [vmem:[%s1174 + $0x82] sm:$0xff]
        %v1285 = vld [vmem:[%s1174 + $0x92] sm:$0xff]
        %v1286 = vld [vmem:[%s1174 + $0x9a] sm:$0xff]
        %v1287 = vld [vmem:[%s1174 + $0xaa] sm:$0xff]
        %v1288 = vld [vmem:[%s1174 + $0xb2] sm:$0xff]
        %v1289 = vld [vmem:[%s1174 + $0xc2] sm:$0xff]
        %v1290 = vld [vmem:[%s1174 + $0xca] sm:$0xff]
        %v1291 = vld [vmem:[%s1174 + $0xda] sm:$0xff]
        %v1292 = vld [vmem:[%s1174 + $0xe2] sm:$0xff]
        %v1293 = vld [vmem:[%s1174 + $0xf2] sm:$0xff]
        %v1294 = vld [vmem:[%s1174 + $0xfa] sm:$0xff]
        %v1295 = vld [vmem:[%s1174 + $0x10a] sm:$0xff]
        %v1296 = vld [vmem:[%s1174 + $0x112] sm:$0xff]
        %v1297 = vld [vmem:[%s1174 + $0x122] sm:$0xff]
        %v1298 = vld [vmem:[%s1174 + $0x12a] sm:$0xff]
        %v1299 = vld [vmem:[%s1174 + $0x13a] sm:$0xff]
        %v1300 = vld [vmem:[%s1174 + $0x142] sm:$0xff]
        %v1301 = vld [vmem:[%s1174 + $0x152] sm:$0xff]
        %v1302 = vld [vmem:[%s1174 + $0x15a] sm:$0xff]
        %v1303 = vld [vmem:[%s1174 + $0x16a] sm:$0xff]
        %v1304 = vld [vmem:[%s1174 + $0x172] sm:$0xff]
        %v1305 = vperm.slane %v1272, 0
        %v1306 = vmul.f32 %v1273, %v1305
        %v1307 = vmul.f32 %v1274, %v1305
        %v1308 = vmul.f32 %v1275, %v1305
        %v1309 = vmul.f32 %v1276, %v1305
        %v1310 = vmul.f32 %v1277, %v1305
        %v1311 = vmul.f32 %v1278, %v1305
        %v1312 = vmul.f32 %v1279, %v1305
        %v1313 = vmul.f32 %v1280, %v1305
        %v1314 = vmul.f32 %v1281, %v1305
        %v1315 = vmul.f32 %v1282, %v1305
        %v1316 = vmul.f32 %v1283, %v1305
        %v1317 = vmul.f32 %v1284, %v1305
        %v1318 = vmul.f32 %v1285, %v1305
        %v1319 = vmul.f32 %v1286, %v1305
        %v1320 = vmul.f32 %v1287, %v1305
        %v1321 = vmul.f32 %v1288, %v1305
        %v1322 = vmul.f32 %v1289, %v1305
        %v1323 = vmul.f32 %v1290, %v1305
        %v1324 = vmul.f32 %v1291, %v1305
        %v1325 = vmul.f32 %v1292, %v1305
        %v1326 = vmul.f32 %v1293, %v1305
        %v1327 = vmul.f32 %v1294, %v1305
        %v1328 = vmul.f32 %v1295, %v1305
        %v1329 = vmul.f32 %v1296, %v1305
        %v1330 = vmul.f32 %v1297, %v1305
        %v1331 = vmul.f32 %v1298, %v1305
        %v1332 = vmul.f32 %v1299, %v1305
        %v1333 = vmul.f32 %v1300, %v1305
        %v1334 = vmul.f32 %v1301, %v1305
        %v1335 = vmul.f32 %v1302, %v1305
        %v1336 = vmul.f32 %v1303, %v1305
        %v1337 = vmul.f32 %v1304, %v1305
        %v1338 = vadd.f32 %v1240, %v1306
        %v1339 = vadd.f32 %v1241, %v1307
        %v1340 = vadd.f32 %v1242, %v1308
        %v1341 = vadd.f32 %v1243, %v1309
        %v1342 = vadd.f32 %v1244, %v1310
        %v1343 = vadd.f32 %v1245, %v1311
        %v1344 = vadd.f32 %v1246, %v1312
        %v1345 = vadd.f32 %v1247, %v1313
        %v1346 = vadd.f32 %v1248, %v1314
        %v1347 = vadd.f32 %v1249, %v1315
        %v1348 = vadd.f32 %v1250, %v1316
        %v1349 = vadd.f32 %v1251, %v1317
        %v1350 = vadd.f32 %v1252, %v1318
        %v1351 = vadd.f32 %v1253, %v1319
        %v1352 = vadd.f32 %v1254, %v1320
        %v1353 = vadd.f32 %v1255, %v1321
        %v1354 = vadd.f32 %v1256, %v1322
        %v1355 = vadd.f32 %v1257, %v1323
        %v1356 = vadd.f32 %v1258, %v1324
        %v1357 = vadd.f32 %v1259, %v1325
        %v1358 = vadd.f32 %v1260, %v1326
        %v1359 = vadd.f32 %v1261, %v1327
        %v1360 = vadd.f32 %v1262, %v1328
        %v1361 = vadd.f32 %v1263, %v1329
        %v1362 = vadd.f32 %v1264, %v1330
        %v1363 = vadd.f32 %v1265, %v1331
        %v1364 = vadd.f32 %v1266, %v1332
        %v1365 = vadd.f32 %v1267, %v1333
        %v1366 = vadd.f32 %v1268, %v1334
        %v1367 = vadd.f32 %v1269, %v1335
        %v1368 = vadd.f32 %v1270, %v1336
        %v1369 = vadd.f32 %v1271, %v1337
        %v1370 = vld [vmem:[%s3 + $0x2] sm:$0x1]
        %v1371 = vld [vmem:[%s1174 + $0x3] sm:$0xff]
        %v1372 = vld [vmem:[%s1174 + $0xb] sm:$0xff]
        %v1373 = vld [vmem:[%s1174 + $0x1b] sm:$0xff]
        %v1374 = vld [vmem:[%s1174 + $0x23] sm:$0xff]
        %v1375 = vld [vmem:[%s1174 + $0x33] sm:$0xff]
        %v1376 = vld [vmem:[%s1174 + $0x3b] sm:$0xff]
        %v1377 = vld [vmem:[%s1174 + $0x4b] sm:$0xff]
        %v1378 = vld [vmem:[%s1174 + $0x53] sm:$0xff]
        %v1379 = vld [vmem:[%s1174 + $0x63] sm:$0xff]
        %v1380 = vld [vmem:[%s1174 + $0x6b] sm:$0xff]
        %v1381 = vld [vmem:[%s1174 + $0x7b] sm:$0xff]
        %v1382 = vld [vmem:[%s1174 + $0x83] sm:$0xff]
        %v1383 = vld [vmem:[%s1174 + $0x93] sm:$0xff]
        %v1384 = vld [vmem:[%s1174 + $0x9b] sm:$0xff]
        %v1385 = vld [vmem:[%s1174 + $0xab] sm:$0xff]
        %v1386 = vld [vmem:[%s1174 + $0xb3] sm:$0xff]
        %v1387 = vld [vmem:[%s1174 + $0xc3] sm:$0xff]
        %v1388 = vld [vmem:[%s1174 + $0xcb] sm:$0xff]
        %v1389 = vld [vmem:[%s1174 + $0xdb] sm:$0xff]
        %v1390 = vld [vmem:[%s1174 + $0xe3] sm:$0xff]
        %v1391 = vld [vmem:[%s1174 + $0xf3] sm:$0xff]
        %v1392 = vld [vmem:[%s1174 + $0xfb] sm:$0xff]
        %v1393 = vld [vmem:[%s1174 + $0x10b] sm:$0xff]
        %v1394 = vld [vmem:[%s1174 + $0x113] sm:$0xff]
        %v1395 = vld [vmem:[%s1174 + $0x123] sm:$0xff]
        %v1396 = vld [vmem:[%s1174 + $0x12b] sm:$0xff]
        %v1397 = vld [vmem:[%s1174 + $0x13b] sm:$0xff]
        %v1398 = vld [vmem:[%s1174 + $0x143] sm:$0xff]
        %v1399 = vld [vmem:[%s1174 + $0x153] sm:$0xff]
        %v1400 = vld [vmem:[%s1174 + $0x15b] sm:$0xff]
        %v1401 = vld [vmem:[%s1174 + $0x16b] sm:$0xff]
        %v1402 = vld [vmem:[%s1174 + $0x173] sm:$0xff]
        %v1403 = vperm.slane %v1370, 0
        %v1404 = vmul.f32 %v1371, %v1403
        %v1405 = vmul.f32 %v1372, %v1403
        %v1406 = vmul.f32 %v1373, %v1403
        %v1407 = vmul.f32 %v1374, %v1403
        %v1408 = vmul.f32 %v1375, %v1403
        %v1409 = vmul.f32 %v1376, %v1403
        %v1410 = vmul.f32 %v1377, %v1403
        %v1411 = vmul.f32 %v1378, %v1403
        %v1412 = vmul.f32 %v1379, %v1403
        %v1413 = vmul.f32 %v1380, %v1403
        %v1414 = vmul.f32 %v1381, %v1403
        %v1415 = vmul.f32 %v1382, %v1403
        %v1416 = vmul.f32 %v1383, %v1403
        %v1417 = vmul.f32 %v1384, %v1403
        %v1418 = vmul.f32 %v1385, %v1403
        %v1419 = vmul.f32 %v1386, %v1403
        %v1420 = vmul.f32 %v1387, %v1403
        %v1421 = vmul.f32 %v1388, %v1403
        %v1422 = vmul.f32 %v1389, %v1403
        %v1423 = vmul.f32 %v1390, %v1403
        %v1424 = vmul.f32 %v1391, %v1403
        %v1425 = vmul.f32 %v1392, %v1403
        %v1426 = vmul.f32 %v1393, %v1403
        %v1427 = vmul.f32 %v1394, %v1403
        %v1428 = vmul.f32 %v1395, %v1403
        %v1429 = vmul.f32 %v1396, %v1403
        %v1430 = vmul.f32 %v1397, %v1403
        %v1431 = vmul.f32 %v1398, %v1403
        %v1432 = vmul.f32 %v1399, %v1403
        %v1433 = vmul.f32 %v1400, %v1403
        %v1434 = vmul.f32 %v1401, %v1403
        %v1435 = vmul.f32 %v1402, %v1403
        %v1436 = vadd.f32 %v1338, %v1404
        %v1437 = vadd.f32 %v1339, %v1405
        %v1438 = vadd.f32 %v1340, %v1406
        %v1439 = vadd.f32 %v1341, %v1407
        %v1440 = vadd.f32 %v1342, %v1408
        %v1441 = vadd.f32 %v1343, %v1409
        %v1442 = vadd.f32 %v1344, %v1410
        %v1443 = vadd.f32 %v1345, %v1411
        %v1444 = vadd.f32 %v1346, %v1412
        %v1445 = vadd.f32 %v1347, %v1413
        %v1446 = vadd.f32 %v1348, %v1414
        %v1447 = vadd.f32 %v1349, %v1415
        %v1448 = vadd.f32 %v1350, %v1416
        %v1449 = vadd.f32 %v1351, %v1417
        %v1450 = vadd.f32 %v1352, %v1418
        %v1451 = vadd.f32 %v1353, %v1419
        %v1452 = vadd.f32 %v1354, %v1420
        %v1453 = vadd.f32 %v1355, %v1421
        %v1454 = vadd.f32 %v1356, %v1422
        %v1455 = vadd.f32 %v1357, %v1423
        %v1456 = vadd.f32 %v1358, %v1424
        %v1457 = vadd.f32 %v1359, %v1425
        %v1458 = vadd.f32 %v1360, %v1426
        %v1459 = vadd.f32 %v1361, %v1427
        %v1460 = vadd.f32 %v1362, %v1428
        %v1461 = vadd.f32 %v1363, %v1429
        %v1462 = vadd.f32 %v1364, %v1430
        %v1463 = vadd.f32 %v1365, %v1431
        %v1464 = vadd.f32 %v1366, %v1432
        %v1465 = vadd.f32 %v1367, %v1433
        %v1466 = vadd.f32 %v1368, %v1434
        %v1467 = vadd.f32 %v1369, %v1435
        %s1468 = scalar_lea.vmem %s3, 4
        %v1469 = vld [vmem:[%s1468] sm:$0x1]
        %v1470 = vld [vmem:[%s1140 + $0x1] sm:$0xff]
        %v1471 = vld [vmem:[%s1140 + $0x9] sm:$0xff]
        %v1472 = vld [vmem:[%s1140 + $0x19] sm:$0xff]
        %v1473 = vld [vmem:[%s1140 + $0x21] sm:$0xff]
        %v1474 = vld [vmem:[%s1140 + $0x31] sm:$0xff]
        %v1475 = vld [vmem:[%s1140 + $0x39] sm:$0xff]
        %v1476 = vld [vmem:[%s1140 + $0x49] sm:$0xff]
        %v1477 = vld [vmem:[%s1140 + $0x51] sm:$0xff]
        %v1478 = vld [vmem:[%s1140 + $0x61] sm:$0xff]
        %v1479 = vld [vmem:[%s1140 + $0x69] sm:$0xff]
        %v1480 = vld [vmem:[%s1140 + $0x79] sm:$0xff]
        %v1481 = vld [vmem:[%s1140 + $0x81] sm:$0xff]
        %v1482 = vld [vmem:[%s1140 + $0x91] sm:$0xff]
        %v1483 = vld [vmem:[%s1140 + $0x99] sm:$0xff]
        %v1484 = vld [vmem:[%s1140 + $0xa9] sm:$0xff]
        %v1485 = vld [vmem:[%s1140 + $0xb1] sm:$0xff]
        %v1486 = vld [vmem:[%s1140 + $0xc1] sm:$0xff]
        %v1487 = vld [vmem:[%s1140 + $0xc9] sm:$0xff]
        %v1488 = vld [vmem:[%s1140 + $0xd9] sm:$0xff]
        %v1489 = vld [vmem:[%s1140 + $0xe1] sm:$0xff]
        %v1490 = vld [vmem:[%s1140 + $0xf1] sm:$0xff]
        %v1491 = vld [vmem:[%s1140 + $0xf9] sm:$0xff]
        %v1492 = vld [vmem:[%s1140 + $0x109] sm:$0xff]
        %v1493 = vld [vmem:[%s1140 + $0x111] sm:$0xff]
        %v1494 = vld [vmem:[%s1140 + $0x121] sm:$0xff]
        %v1495 = vld [vmem:[%s1140 + $0x129] sm:$0xff]
        %v1496 = vld [vmem:[%s1140 + $0x139] sm:$0xff]
        %v1497 = vld [vmem:[%s1140 + $0x141] sm:$0xff]
        %v1498 = vld [vmem:[%s1140 + $0x151] sm:$0xff]
        %v1499 = vld [vmem:[%s1140 + $0x159] sm:$0xff]
        %v1500 = vld [vmem:[%s1140 + $0x169] sm:$0xff]
        %v1501 = vld [vmem:[%s1140 + $0x171] sm:$0xff]
        %v1502 = vperm.slane %v1469, 0
        %v1503 = vmul.f32 %v1470, %v1502
        %v1504 = vmul.f32 %v1471, %v1502
        %v1505 = vmul.f32 %v1472, %v1502
        %v1506 = vmul.f32 %v1473, %v1502
        %v1507 = vmul.f32 %v1474, %v1502
        %v1508 = vmul.f32 %v1475, %v1502
        %v1509 = vmul.f32 %v1476, %v1502
        %v1510 = vmul.f32 %v1477, %v1502
        %v1511 = vmul.f32 %v1478, %v1502
        %v1512 = vmul.f32 %v1479, %v1502
        %v1513 = vmul.f32 %v1480, %v1502
        %v1514 = vmul.f32 %v1481, %v1502
        %v1515 = vmul.f32 %v1482, %v1502
        %v1516 = vmul.f32 %v1483, %v1502
        %v1517 = vmul.f32 %v1484, %v1502
        %v1518 = vmul.f32 %v1485, %v1502
        %v1519 = vmul.f32 %v1486, %v1502
        %v1520 = vmul.f32 %v1487, %v1502
        %v1521 = vmul.f32 %v1488, %v1502
        %v1522 = vmul.f32 %v1489, %v1502
        %v1523 = vmul.f32 %v1490, %v1502
        %v1524 = vmul.f32 %v1491, %v1502
        %v1525 = vmul.f32 %v1492, %v1502
        %v1526 = vmul.f32 %v1493, %v1502
        %v1527 = vmul.f32 %v1494, %v1502
        %v1528 = vmul.f32 %v1495, %v1502
        %v1529 = vmul.f32 %v1496, %v1502
        %v1530 = vmul.f32 %v1497, %v1502
        %v1531 = vmul.f32 %v1498, %v1502
        %v1532 = vmul.f32 %v1499, %v1502
        %v1533 = vmul.f32 %v1500, %v1502
        %v1534 = vmul.f32 %v1501, %v1502
        %v1535 = vadd.f32 %v1436, %v1503
        %v1536 = vadd.f32 %v1437, %v1504
        %v1537 = vadd.f32 %v1438, %v1505
        %v1538 = vadd.f32 %v1439, %v1506
        %v1539 = vadd.f32 %v1440, %v1507
        %v1540 = vadd.f32 %v1441, %v1508
        %v1541 = vadd.f32 %v1442, %v1509
        %v1542 = vadd.f32 %v1443, %v1510
        %v1543 = vadd.f32 %v1444, %v1511
        %v1544 = vadd.f32 %v1445, %v1512
        %v1545 = vadd.f32 %v1446, %v1513
        %v1546 = vadd.f32 %v1447, %v1514
        %v1547 = vadd.f32 %v1448, %v1515
        %v1548 = vadd.f32 %v1449, %v1516
        %v1549 = vadd.f32 %v1450, %v1517
        %v1550 = vadd.f32 %v1451, %v1518
        %v1551 = vadd.f32 %v1452, %v1519
        %v1552 = vadd.f32 %v1453, %v1520
        %v1553 = vadd.f32 %v1454, %v1521
        %v1554 = vadd.f32 %v1455, %v1522
        %v1555 = vadd.f32 %v1456, %v1523
        %v1556 = vadd.f32 %v1457, %v1524
        %v1557 = vadd.f32 %v1458, %v1525
        %v1558 = vadd.f32 %v1459, %v1526
        %v1559 = vadd.f32 %v1460, %v1527
        %v1560 = vadd.f32 %v1461, %v1528
        %v1561 = vadd.f32 %v1462, %v1529
        %v1562 = vadd.f32 %v1463, %v1530
        %v1563 = vadd.f32 %v1464, %v1531
        %v1564 = vadd.f32 %v1465, %v1532
        %v1565 = vadd.f32 %v1466, %v1533
        %v1566 = vadd.f32 %v1467, %v1534
        %v1567 = vld [vmem:[%s1468 + $0x1] sm:$0x1]
        %v1568 = vld [vmem:[%s1140 + $0x2] sm:$0xff]
        %v1569 = vld [vmem:[%s1140 + $0xa] sm:$0xff]
        %v1570 = vld [vmem:[%s1140 + $0x1a] sm:$0xff]
        %v1571 = vld [vmem:[%s1140 + $0x22] sm:$0xff]
        %v1572 = vld [vmem:[%s1140 + $0x32] sm:$0xff]
        %v1573 = vld [vmem:[%s1140 + $0x3a] sm:$0xff]
        %v1574 = vld [vmem:[%s1140 + $0x4a] sm:$0xff]
        %v1575 = vld [vmem:[%s1140 + $0x52] sm:$0xff]
        %v1576 = vld [vmem:[%s1140 + $0x62] sm:$0xff]
        %v1577 = vld [vmem:[%s1140 + $0x6a] sm:$0xff]
        %v1578 = vld [vmem:[%s1140 + $0x7a] sm:$0xff]
        %v1579 = vld [vmem:[%s1140 + $0x82] sm:$0xff]
        %v1580 = vld [vmem:[%s1140 + $0x92] sm:$0xff]
        %v1581 = vld [vmem:[%s1140 + $0x9a] sm:$0xff]
        %v1582 = vld [vmem:[%s1140 + $0xaa] sm:$0xff]
        %v1583 = vld [vmem:[%s1140 + $0xb2] sm:$0xff]
        %v1584 = vld [vmem:[%s1140 + $0xc2] sm:$0xff]
        %v1585 = vld [vmem:[%s1140 + $0xca] sm:$0xff]
        %v1586 = vld [vmem:[%s1140 + $0xda] sm:$0xff]
        %v1587 = vld [vmem:[%s1140 + $0xe2] sm:$0xff]
        %v1588 = vld [vmem:[%s1140 + $0xf2] sm:$0xff]
        %v1589 = vld [vmem:[%s1140 + $0xfa] sm:$0xff]
        %v1590 = vld [vmem:[%s1140 + $0x10a] sm:$0xff]
        %v1591 = vld [vmem:[%s1140 + $0x112] sm:$0xff]
        %v1592 = vld [vmem:[%s1140 + $0x122] sm:$0xff]
        %v1593 = vld [vmem:[%s1140 + $0x12a] sm:$0xff]
        %v1594 = vld [vmem:[%s1140 + $0x13a] sm:$0xff]
        %v1595 = vld [vmem:[%s1140 + $0x142] sm:$0xff]
        %v1596 = vld [vmem:[%s1140 + $0x152] sm:$0xff]
        %v1597 = vld [vmem:[%s1140 + $0x15a] sm:$0xff]
        %v1598 = vld [vmem:[%s1140 + $0x16a] sm:$0xff]
        %v1599 = vld [vmem:[%s1140 + $0x172] sm:$0xff]
        %v1600 = vperm.slane %v1567, 0
        %v1601 = vmul.f32 %v1568, %v1600
        %v1602 = vmul.f32 %v1569, %v1600
        %v1603 = vmul.f32 %v1570, %v1600
        %v1604 = vmul.f32 %v1571, %v1600
        %v1605 = vmul.f32 %v1572, %v1600
        %v1606 = vmul.f32 %v1573, %v1600
        %v1607 = vmul.f32 %v1574, %v1600
        %v1608 = vmul.f32 %v1575, %v1600
        %v1609 = vmul.f32 %v1576, %v1600
        %v1610 = vmul.f32 %v1577, %v1600
        %v1611 = vmul.f32 %v1578, %v1600
        %v1612 = vmul.f32 %v1579, %v1600
        %v1613 = vmul.f32 %v1580, %v1600
        %v1614 = vmul.f32 %v1581, %v1600
        %v1615 = vmul.f32 %v1582, %v1600
        %v1616 = vmul.f32 %v1583, %v1600
        %v1617 = vmul.f32 %v1584, %v1600
        %v1618 = vmul.f32 %v1585, %v1600
        %v1619 = vmul.f32 %v1586, %v1600
        %v1620 = vmul.f32 %v1587, %v1600
        %v1621 = vmul.f32 %v1588, %v1600
        %v1622 = vmul.f32 %v1589, %v1600
        %v1623 = vmul.f32 %v1590, %v1600
        %v1624 = vmul.f32 %v1591, %v1600
        %v1625 = vmul.f32 %v1592, %v1600
        %v1626 = vmul.f32 %v1593, %v1600
        %v1627 = vmul.f32 %v1594, %v1600
        %v1628 = vmul.f32 %v1595, %v1600
        %v1629 = vmul.f32 %v1596, %v1600
        %v1630 = vmul.f32 %v1597, %v1600
        %v1631 = vmul.f32 %v1598, %v1600
        %v1632 = vmul.f32 %v1599, %v1600
        %v1633 = vadd.f32 %v1535, %v1601
        %v1634 = vadd.f32 %v1536, %v1602
        %v1635 = vadd.f32 %v1537, %v1603
        %v1636 = vadd.f32 %v1538, %v1604
        %v1637 = vadd.f32 %v1539, %v1605
        %v1638 = vadd.f32 %v1540, %v1606
        %v1639 = vadd.f32 %v1541, %v1607
        %v1640 = vadd.f32 %v1542, %v1608
        %v1641 = vadd.f32 %v1543, %v1609
        %v1642 = vadd.f32 %v1544, %v1610
        %v1643 = vadd.f32 %v1545, %v1611
        %v1644 = vadd.f32 %v1546, %v1612
        %v1645 = vadd.f32 %v1547, %v1613
        %v1646 = vadd.f32 %v1548, %v1614
        %v1647 = vadd.f32 %v1549, %v1615
        %v1648 = vadd.f32 %v1550, %v1616
        %v1649 = vadd.f32 %v1551, %v1617
        %v1650 = vadd.f32 %v1552, %v1618
        %v1651 = vadd.f32 %v1553, %v1619
        %v1652 = vadd.f32 %v1554, %v1620
        %v1653 = vadd.f32 %v1555, %v1621
        %v1654 = vadd.f32 %v1556, %v1622
        %v1655 = vadd.f32 %v1557, %v1623
        %v1656 = vadd.f32 %v1558, %v1624
        %v1657 = vadd.f32 %v1559, %v1625
        %v1658 = vadd.f32 %v1560, %v1626
        %v1659 = vadd.f32 %v1561, %v1627
        %v1660 = vadd.f32 %v1562, %v1628
        %v1661 = vadd.f32 %v1563, %v1629
        %v1662 = vadd.f32 %v1564, %v1630
        %v1663 = vadd.f32 %v1565, %v1631
        %v1664 = vadd.f32 %v1566, %v1632
        %v1665 = vld [vmem:[%s1468 + $0x2] sm:$0x1]
        %v1666 = vld [vmem:[%s1140 + $0x3] sm:$0xff]
        %v1667 = vld [vmem:[%s1140 + $0xb] sm:$0xff]
        %v1668 = vld [vmem:[%s1140 + $0x1b] sm:$0xff]
        %v1669 = vld [vmem:[%s1140 + $0x23] sm:$0xff]
        %v1670 = vld [vmem:[%s1140 + $0x33] sm:$0xff]
        %v1671 = vld [vmem:[%s1140 + $0x3b] sm:$0xff]
        %v1672 = vld [vmem:[%s1140 + $0x4b] sm:$0xff]
        %v1673 = vld [vmem:[%s1140 + $0x53] sm:$0xff]
        %v1674 = vld [vmem:[%s1140 + $0x63] sm:$0xff]
        %v1675 = vld [vmem:[%s1140 + $0x6b] sm:$0xff]
        %v1676 = vld [vmem:[%s1140 + $0x7b] sm:$0xff]
        %v1677 = vld [vmem:[%s1140 + $0x83] sm:$0xff]
        %v1678 = vld [vmem:[%s1140 + $0x93] sm:$0xff]
        %v1679 = vld [vmem:[%s1140 + $0x9b] sm:$0xff]
        %v1680 = vld [vmem:[%s1140 + $0xab] sm:$0xff]
        %v1681 = vld [vmem:[%s1140 + $0xb3] sm:$0xff]
        %v1682 = vld [vmem:[%s1140 + $0xc3] sm:$0xff]
        %v1683 = vld [vmem:[%s1140 + $0xcb] sm:$0xff]
        %v1684 = vld [vmem:[%s1140 + $0xdb] sm:$0xff]
        %v1685 = vld [vmem:[%s1140 + $0xe3] sm:$0xff]
        %v1686 = vld [vmem:[%s1140 + $0xf3] sm:$0xff]
        %v1687 = vld [vmem:[%s1140 + $0xfb] sm:$0xff]
        %v1688 = vld [vmem:[%s1140 + $0x10b] sm:$0xff]
        %v1689 = vld [vmem:[%s1140 + $0x113] sm:$0xff]
        %v1690 = vld [vmem:[%s1140 + $0x123] sm:$0xff]
        %v1691 = vld [vmem:[%s1140 + $0x12b] sm:$0xff]
        %v1692 = vld [vmem:[%s1140 + $0x13b] sm:$0xff]
        %v1693 = vld [vmem:[%s1140 + $0x143] sm:$0xff]
        %v1694 = vld [vmem:[%s1140 + $0x153] sm:$0xff]
        %v1695 = vld [vmem:[%s1140 + $0x15b] sm:$0xff]
        %v1696 = vld [vmem:[%s1140 + $0x16b] sm:$0xff]
        %v1697 = vld [vmem:[%s1140 + $0x173] sm:$0xff]
        %v1698 = vperm.slane %v1665, 0
        %v1699 = vmul.f32 %v1666, %v1698
        %v1700 = vmul.f32 %v1667, %v1698
        %v1701 = vmul.f32 %v1668, %v1698
        %v1702 = vmul.f32 %v1669, %v1698
        %v1703 = vmul.f32 %v1670, %v1698
        %v1704 = vmul.f32 %v1671, %v1698
        %v1705 = vmul.f32 %v1672, %v1698
        %v1706 = vmul.f32 %v1673, %v1698
        %v1707 = vmul.f32 %v1674, %v1698
        %v1708 = vmul.f32 %v1675, %v1698
        %v1709 = vmul.f32 %v1676, %v1698
        %v1710 = vmul.f32 %v1677, %v1698
        %v1711 = vmul.f32 %v1678, %v1698
        %v1712 = vmul.f32 %v1679, %v1698
        %v1713 = vmul.f32 %v1680, %v1698
        %v1714 = vmul.f32 %v1681, %v1698
        %v1715 = vmul.f32 %v1682, %v1698
        %v1716 = vmul.f32 %v1683, %v1698
        %v1717 = vmul.f32 %v1684, %v1698
        %v1718 = vmul.f32 %v1685, %v1698
        %v1719 = vmul.f32 %v1686, %v1698
        %v1720 = vmul.f32 %v1687, %v1698
        %v1721 = vmul.f32 %v1688, %v1698
        %v1722 = vmul.f32 %v1689, %v1698
        %v1723 = vmul.f32 %v1690, %v1698
        %v1724 = vmul.f32 %v1691, %v1698
        %v1725 = vmul.f32 %v1692, %v1698
        %v1726 = vmul.f32 %v1693, %v1698
        %v1727 = vmul.f32 %v1694, %v1698
        %v1728 = vmul.f32 %v1695, %v1698
        %v1729 = vmul.f32 %v1696, %v1698
        %v1730 = vmul.f32 %v1697, %v1698
        %v1731 = vadd.f32 %v1633, %v1699
        %v1732 = vadd.f32 %v1634, %v1700
        %v1733 = vadd.f32 %v1635, %v1701
        %v1734 = vadd.f32 %v1636, %v1702
        %v1735 = vadd.f32 %v1637, %v1703
        %v1736 = vadd.f32 %v1638, %v1704
        %v1737 = vadd.f32 %v1639, %v1705
        %v1738 = vadd.f32 %v1640, %v1706
        %v1739 = vadd.f32 %v1641, %v1707
        %v1740 = vadd.f32 %v1642, %v1708
        %v1741 = vadd.f32 %v1643, %v1709
        %v1742 = vadd.f32 %v1644, %v1710
        %v1743 = vadd.f32 %v1645, %v1711
        %v1744 = vadd.f32 %v1646, %v1712
        %v1745 = vadd.f32 %v1647, %v1713
        %v1746 = vadd.f32 %v1648, %v1714
        %v1747 = vadd.f32 %v1649, %v1715
        %v1748 = vadd.f32 %v1650, %v1716
        %v1749 = vadd.f32 %v1651, %v1717
        %v1750 = vadd.f32 %v1652, %v1718
        %v1751 = vadd.f32 %v1653, %v1719
        %v1752 = vadd.f32 %v1654, %v1720
        %v1753 = vadd.f32 %v1655, %v1721
        %v1754 = vadd.f32 %v1656, %v1722
        %v1755 = vadd.f32 %v1657, %v1723
        %v1756 = vadd.f32 %v1658, %v1724
        %v1757 = vadd.f32 %v1659, %v1725
        %v1758 = vadd.f32 %v1660, %v1726
        %v1759 = vadd.f32 %v1661, %v1727
        %v1760 = vadd.f32 %v1662, %v1728
        %v1761 = vadd.f32 %v1663, %v1729
        %v1762 = vadd.f32 %v1664, %v1730
        %s1763 = scalar_lea.vmem %s3, 8
        %v1764 = vld [vmem:[%s1763] sm:$0x1]
        %s1765 = scalar_lea.vmem [#allocation2], 72
        %v1766 = vld [vmem:[%s1765 + $0x1] sm:$0xff]
        %v1767 = vld [vmem:[%s1765 + $0x9] sm:$0xff]
        %v1768 = vld [vmem:[%s1765 + $0x19] sm:$0xff]
        %v1769 = vld [vmem:[%s1765 + $0x21] sm:$0xff]
        %v1770 = vld [vmem:[%s1765 + $0x31] sm:$0xff]
        %v1771 = vld [vmem:[%s1765 + $0x39] sm:$0xff]
        %v1772 = vld [vmem:[%s1765 + $0x49] sm:$0xff]
        %v1773 = vld [vmem:[%s1765 + $0x51] sm:$0xff]
        %v1774 = vld [vmem:[%s1765 + $0x61] sm:$0xff]
        %v1775 = vld [vmem:[%s1765 + $0x69] sm:$0xff]
        %v1776 = vld [vmem:[%s1765 + $0x79] sm:$0xff]
        %v1777 = vld [vmem:[%s1765 + $0x81] sm:$0xff]
        %v1778 = vld [vmem:[%s1765 + $0x91] sm:$0xff]
        %v1779 = vld [vmem:[%s1765 + $0x99] sm:$0xff]
        %v1780 = vld [vmem:[%s1765 + $0xa9] sm:$0xff]
        %v1781 = vld [vmem:[%s1765 + $0xb1] sm:$0xff]
        %v1782 = vld [vmem:[%s1765 + $0xc1] sm:$0xff]
        %v1783 = vld [vmem:[%s1765 + $0xc9] sm:$0xff]
        %v1784 = vld [vmem:[%s1765 + $0xd9] sm:$0xff]
        %v1785 = vld [vmem:[%s1765 + $0xe1] sm:$0xff]
        %v1786 = vld [vmem:[%s1765 + $0xf1] sm:$0xff]
        %v1787 = vld [vmem:[%s1765 + $0xf9] sm:$0xff]
        %v1788 = vld [vmem:[%s1765 + $0x109] sm:$0xff]
        %v1789 = vld [vmem:[%s1765 + $0x111] sm:$0xff]
        %v1790 = vld [vmem:[%s1765 + $0x121] sm:$0xff]
        %v1791 = vld [vmem:[%s1765 + $0x129] sm:$0xff]
        %v1792 = vld [vmem:[%s1765 + $0x139] sm:$0xff]
        %v1793 = vld [vmem:[%s1765 + $0x141] sm:$0xff]
        %v1794 = vld [vmem:[%s1765 + $0x151] sm:$0xff]
        %v1795 = vld [vmem:[%s1765 + $0x159] sm:$0xff]
        %v1796 = vld [vmem:[%s1765 + $0x169] sm:$0xff]
        %v1797 = vld [vmem:[%s1765 + $0x171] sm:$0xff]
        %v1798 = vperm.slane %v1764, 0
        %v1799 = vmul.f32 %v1766, %v1798
        %v1800 = vmul.f32 %v1767, %v1798
        %v1801 = vmul.f32 %v1768, %v1798
        %v1802 = vmul.f32 %v1769, %v1798
        %v1803 = vmul.f32 %v1770, %v1798
        %v1804 = vmul.f32 %v1771, %v1798
        %v1805 = vmul.f32 %v1772, %v1798
        %v1806 = vmul.f32 %v1773, %v1798
        %v1807 = vmul.f32 %v1774, %v1798
        %v1808 = vmul.f32 %v1775, %v1798
        %v1809 = vmul.f32 %v1776, %v1798
        %v1810 = vmul.f32 %v1777, %v1798
        %v1811 = vmul.f32 %v1778, %v1798
        %v1812 = vmul.f32 %v1779, %v1798
        %v1813 = vmul.f32 %v1780, %v1798
        %v1814 = vmul.f32 %v1781, %v1798
        %v1815 = vmul.f32 %v1782, %v1798
        %v1816 = vmul.f32 %v1783, %v1798
        %v1817 = vmul.f32 %v1784, %v1798
        %v1818 = vmul.f32 %v1785, %v1798
        %v1819 = vmul.f32 %v1786, %v1798
        %v1820 = vmul.f32 %v1787, %v1798
        %v1821 = vmul.f32 %v1788, %v1798
        %v1822 = vmul.f32 %v1789, %v1798
        %v1823 = vmul.f32 %v1790, %v1798
        %v1824 = vmul.f32 %v1791, %v1798
        %v1825 = vmul.f32 %v1792, %v1798
        %v1826 = vmul.f32 %v1793, %v1798
        %v1827 = vmul.f32 %v1794, %v1798
        %v1828 = vmul.f32 %v1795, %v1798
        %v1829 = vmul.f32 %v1796, %v1798
        %v1830 = vmul.f32 %v1797, %v1798
        %v1831 = vadd.f32 %v1731, %v1799
        %v1832 = vadd.f32 %v1732, %v1800
        %v1833 = vadd.f32 %v1733, %v1801
        %v1834 = vadd.f32 %v1734, %v1802
        %v1835 = vadd.f32 %v1735, %v1803
        %v1836 = vadd.f32 %v1736, %v1804
        %v1837 = vadd.f32 %v1737, %v1805
        %v1838 = vadd.f32 %v1738, %v1806
        %v1839 = vadd.f32 %v1739, %v1807
        %v1840 = vadd.f32 %v1740, %v1808
        %v1841 = vadd.f32 %v1741, %v1809
        %v1842 = vadd.f32 %v1742, %v1810
        %v1843 = vadd.f32 %v1743, %v1811
        %v1844 = vadd.f32 %v1744, %v1812
        %v1845 = vadd.f32 %v1745, %v1813
        %v1846 = vadd.f32 %v1746, %v1814
        %v1847 = vadd.f32 %v1747, %v1815
        %v1848 = vadd.f32 %v1748, %v1816
        %v1849 = vadd.f32 %v1749, %v1817
        %v1850 = vadd.f32 %v1750, %v1818
        %v1851 = vadd.f32 %v1751, %v1819
        %v1852 = vadd.f32 %v1752, %v1820
        %v1853 = vadd.f32 %v1753, %v1821
        %v1854 = vadd.f32 %v1754, %v1822
        %v1855 = vadd.f32 %v1755, %v1823
        %v1856 = vadd.f32 %v1756, %v1824
        %v1857 = vadd.f32 %v1757, %v1825
        %v1858 = vadd.f32 %v1758, %v1826
        %v1859 = vadd.f32 %v1759, %v1827
        %v1860 = vadd.f32 %v1760, %v1828
        %v1861 = vadd.f32 %v1761, %v1829
        %v1862 = vadd.f32 %v1762, %v1830
        %v1863 = vld [vmem:[%s1763 + $0x1] sm:$0x1]
        %v1864 = vld [vmem:[%s1765 + $0x2] sm:$0xff]
        %v1865 = vld [vmem:[%s1765 + $0xa] sm:$0xff]
        %v1866 = vld [vmem:[%s1765 + $0x1a] sm:$0xff]
        %v1867 = vld [vmem:[%s1765 + $0x22] sm:$0xff]
        %v1868 = vld [vmem:[%s1765 + $0x32] sm:$0xff]
        %v1869 = vld [vmem:[%s1765 + $0x3a] sm:$0xff]
        %v1870 = vld [vmem:[%s1765 + $0x4a] sm:$0xff]
        %v1871 = vld [vmem:[%s1765 + $0x52] sm:$0xff]
        %v1872 = vld [vmem:[%s1765 + $0x62] sm:$0xff]
        %v1873 = vld [vmem:[%s1765 + $0x6a] sm:$0xff]
        %v1874 = vld [vmem:[%s1765 + $0x7a] sm:$0xff]
        %v1875 = vld [vmem:[%s1765 + $0x82] sm:$0xff]
        %v1876 = vld [vmem:[%s1765 + $0x92] sm:$0xff]
        %v1877 = vld [vmem:[%s1765 + $0x9a] sm:$0xff]
        %v1878 = vld [vmem:[%s1765 + $0xaa] sm:$0xff]
        %v1879 = vld [vmem:[%s1765 + $0xb2] sm:$0xff]
        %v1880 = vld [vmem:[%s1765 + $0xc2] sm:$0xff]
        %v1881 = vld [vmem:[%s1765 + $0xca] sm:$0xff]
        %v1882 = vld [vmem:[%s1765 + $0xda] sm:$0xff]
        %v1883 = vld [vmem:[%s1765 + $0xe2] sm:$0xff]
        %v1884 = vld [vmem:[%s1765 + $0xf2] sm:$0xff]
        %v1885 = vld [vmem:[%s1765 + $0xfa] sm:$0xff]
        %v1886 = vld [vmem:[%s1765 + $0x10a] sm:$0xff]
        %v1887 = vld [vmem:[%s1765 + $0x112] sm:$0xff]
        %v1888 = vld [vmem:[%s1765 + $0x122] sm:$0xff]
        %v1889 = vld [vmem:[%s1765 + $0x12a] sm:$0xff]
        %v1890 = vld [vmem:[%s1765 + $0x13a] sm:$0xff]
        %v1891 = vld [vmem:[%s1765 + $0x142] sm:$0xff]
        %v1892 = vld [vmem:[%s1765 + $0x152] sm:$0xff]
        %v1893 = vld [vmem:[%s1765 + $0x15a] sm:$0xff]
        %v1894 = vld [vmem:[%s1765 + $0x16a] sm:$0xff]
        %v1895 = vld [vmem:[%s1765 + $0x172] sm:$0xff]
        %v1896 = vperm.slane %v1863, 0
        %v1897 = vmul.f32 %v1864, %v1896
        %v1898 = vmul.f32 %v1865, %v1896
        %v1899 = vmul.f32 %v1866, %v1896
        %v1900 = vmul.f32 %v1867, %v1896
        %v1901 = vmul.f32 %v1868, %v1896
        %v1902 = vmul.f32 %v1869, %v1896
        %v1903 = vmul.f32 %v1870, %v1896
        %v1904 = vmul.f32 %v1871, %v1896
        %v1905 = vmul.f32 %v1872, %v1896
        %v1906 = vmul.f32 %v1873, %v1896
        %v1907 = vmul.f32 %v1874, %v1896
        %v1908 = vmul.f32 %v1875, %v1896
        %v1909 = vmul.f32 %v1876, %v1896
        %v1910 = vmul.f32 %v1877, %v1896
        %v1911 = vmul.f32 %v1878, %v1896
        %v1912 = vmul.f32 %v1879, %v1896
        %v1913 = vmul.f32 %v1880, %v1896
        %v1914 = vmul.f32 %v1881, %v1896
        %v1915 = vmul.f32 %v1882, %v1896
        %v1916 = vmul.f32 %v1883, %v1896
        %v1917 = vmul.f32 %v1884, %v1896
        %v1918 = vmul.f32 %v1885, %v1896
        %v1919 = vmul.f32 %v1886, %v1896
        %v1920 = vmul.f32 %v1887, %v1896
        %v1921 = vmul.f32 %v1888, %v1896
        %v1922 = vmul.f32 %v1889, %v1896
        %v1923 = vmul.f32 %v1890, %v1896
        %v1924 = vmul.f32 %v1891, %v1896
        %v1925 = vmul.f32 %v1892, %v1896
        %v1926 = vmul.f32 %v1893, %v1896
        %v1927 = vmul.f32 %v1894, %v1896
        %v1928 = vmul.f32 %v1895, %v1896
        %v1929 = vadd.f32 %v1831, %v1897
        %v1930 = vadd.f32 %v1832, %v1898
        %v1931 = vadd.f32 %v1833, %v1899
        %v1932 = vadd.f32 %v1834, %v1900
        %v1933 = vadd.f32 %v1835, %v1901
        %v1934 = vadd.f32 %v1836, %v1902
        %v1935 = vadd.f32 %v1837, %v1903
        %v1936 = vadd.f32 %v1838, %v1904
        %v1937 = vadd.f32 %v1839, %v1905
        %v1938 = vadd.f32 %v1840, %v1906
        %v1939 = vadd.f32 %v1841, %v1907
        %v1940 = vadd.f32 %v1842, %v1908
        %v1941 = vadd.f32 %v1843, %v1909
        %v1942 = vadd.f32 %v1844, %v1910
        %v1943 = vadd.f32 %v1845, %v1911
        %v1944 = vadd.f32 %v1846, %v1912
        %v1945 = vadd.f32 %v1847, %v1913
        %v1946 = vadd.f32 %v1848, %v1914
        %v1947 = vadd.f32 %v1849, %v1915
        %v1948 = vadd.f32 %v1850, %v1916
        %v1949 = vadd.f32 %v1851, %v1917
        %v1950 = vadd.f32 %v1852, %v1918
        %v1951 = vadd.f32 %v1853, %v1919
        %v1952 = vadd.f32 %v1854, %v1920
        %v1953 = vadd.f32 %v1855, %v1921
        %v1954 = vadd.f32 %v1856, %v1922
        %v1955 = vadd.f32 %v1857, %v1923
        %v1956 = vadd.f32 %v1858, %v1924
        %v1957 = vadd.f32 %v1859, %v1925
        %v1958 = vadd.f32 %v1860, %v1926
        %v1959 = vadd.f32 %v1861, %v1927
        %v1960 = vadd.f32 %v1862, %v1928
        %v1961 = vld [vmem:[%s1763 + $0x2] sm:$0x1]
        %v1962 = vld [vmem:[%s1765 + $0x3] sm:$0xff]
        %v1963 = vld [vmem:[%s1765 + $0xb] sm:$0xff]
        %v1964 = vld [vmem:[%s1765 + $0x1b] sm:$0xff]
        %v1965 = vld [vmem:[%s1765 + $0x23] sm:$0xff]
        %v1966 = vld [vmem:[%s1765 + $0x33] sm:$0xff]
        %v1967 = vld [vmem:[%s1765 + $0x3b] sm:$0xff]
        %v1968 = vld [vmem:[%s1765 + $0x4b] sm:$0xff]
        %v1969 = vld [vmem:[%s1765 + $0x53] sm:$0xff]
        %v1970 = vld [vmem:[%s1765 + $0x63] sm:$0xff]
        %v1971 = vld [vmem:[%s1765 + $0x6b] sm:$0xff]
        %v1972 = vld [vmem:[%s1765 + $0x7b] sm:$0xff]
        %v1973 = vld [vmem:[%s1765 + $0x83] sm:$0xff]
        %v1974 = vld [vmem:[%s1765 + $0x93] sm:$0xff]
        %v1975 = vld [vmem:[%s1765 + $0x9b] sm:$0xff]
        %v1976 = vld [vmem:[%s1765 + $0xab] sm:$0xff]
        %v1977 = vld [vmem:[%s1765 + $0xb3] sm:$0xff]
        %v1978 = vld [vmem:[%s1765 + $0xc3] sm:$0xff]
        %v1979 = vld [vmem:[%s1765 + $0xcb] sm:$0xff]
        %v1980 = vld [vmem:[%s1765 + $0xdb] sm:$0xff]
        %v1981 = vld [vmem:[%s1765 + $0xe3] sm:$0xff]
        %v1982 = vld [vmem:[%s1765 + $0xf3] sm:$0xff]
        %v1983 = vld [vmem:[%s1765 + $0xfb] sm:$0xff]
        %v1984 = vld [vmem:[%s1765 + $0x10b] sm:$0xff]
        %v1985 = vld [vmem:[%s1765 + $0x113] sm:$0xff]
        %v1986 = vld [vmem:[%s1765 + $0x123] sm:$0xff]
        %v1987 = vld [vmem:[%s1765 + $0x12b] sm:$0xff]
        %v1988 = vld [vmem:[%s1765 + $0x13b] sm:$0xff]
        %v1989 = vld [vmem:[%s1765 + $0x143] sm:$0xff]
        %v1990 = vld [vmem:[%s1765 + $0x153] sm:$0xff]
        %v1991 = vld [vmem:[%s1765 + $0x15b] sm:$0xff]
        %v1992 = vld [vmem:[%s1765 + $0x16b] sm:$0xff]
        %v1993 = vld [vmem:[%s1765 + $0x173] sm:$0xff]
        %v1994 = vperm.slane %v1961, 0
        %v1995 = vmul.f32 %v1962, %v1994
        %v1996 = vmul.f32 %v1963, %v1994
        %v1997 = vmul.f32 %v1964, %v1994
        %v1998 = vmul.f32 %v1965, %v1994
        %v1999 = vmul.f32 %v1966, %v1994
        %v2000 = vmul.f32 %v1967, %v1994
        %v2001 = vmul.f32 %v1968, %v1994
        %v2002 = vmul.f32 %v1969, %v1994
        %v2003 = vmul.f32 %v1970, %v1994
        %v2004 = vmul.f32 %v1971, %v1994
        %v2005 = vmul.f32 %v1972, %v1994
        %v2006 = vmul.f32 %v1973, %v1994
        %v2007 = vmul.f32 %v1974, %v1994
        %v2008 = vmul.f32 %v1975, %v1994
        %v2009 = vmul.f32 %v1976, %v1994
        %v2010 = vmul.f32 %v1977, %v1994
        %v2011 = vmul.f32 %v1978, %v1994
        %v2012 = vmul.f32 %v1979, %v1994
        %v2013 = vmul.f32 %v1980, %v1994
        %v2014 = vmul.f32 %v1981, %v1994
        %v2015 = vmul.f32 %v1982, %v1994
        %v2016 = vmul.f32 %v1983, %v1994
        %v2017 = vmul.f32 %v1984, %v1994
        %v2018 = vmul.f32 %v1985, %v1994
        %v2019 = vmul.f32 %v1986, %v1994
        %v2020 = vmul.f32 %v1987, %v1994
        %v2021 = vmul.f32 %v1988, %v1994
        %v2022 = vmul.f32 %v1989, %v1994
        %v2023 = vmul.f32 %v1990, %v1994
        %v2024 = vmul.f32 %v1991, %v1994
        %v2025 = vmul.f32 %v1992, %v1994
        %v2026 = vmul.f32 %v1993, %v1994
        %v2027 = vadd.f32 %v1929, %v1995
        %v2028 = vadd.f32 %v1930, %v1996
        %v2029 = vadd.f32 %v1931, %v1997
        %v2030 = vadd.f32 %v1932, %v1998
        %v2031 = vadd.f32 %v1933, %v1999
        %v2032 = vadd.f32 %v1934, %v2000
        %v2033 = vadd.f32 %v1935, %v2001
        %v2034 = vadd.f32 %v1936, %v2002
        %v2035 = vadd.f32 %v1937, %v2003
        %v2036 = vadd.f32 %v1938, %v2004
        %v2037 = vadd.f32 %v1939, %v2005
        %v2038 = vadd.f32 %v1940, %v2006
        %v2039 = vadd.f32 %v1941, %v2007
        %v2040 = vadd.f32 %v1942, %v2008
        %v2041 = vadd.f32 %v1943, %v2009
        %v2042 = vadd.f32 %v1944, %v2010
        %v2043 = vadd.f32 %v1945, %v2011
        %v2044 = vadd.f32 %v1946, %v2012
        %v2045 = vadd.f32 %v1947, %v2013
        %v2046 = vadd.f32 %v1948, %v2014
        %v2047 = vadd.f32 %v1949, %v2015
        %v2048 = vadd.f32 %v1950, %v2016
        %v2049 = vadd.f32 %v1951, %v2017
        %v2050 = vadd.f32 %v1952, %v2018
        %v2051 = vadd.f32 %v1953, %v2019
        %v2052 = vadd.f32 %v1954, %v2020
        %v2053 = vadd.f32 %v1955, %v2021
        %v2054 = vadd.f32 %v1956, %v2022
        %v2055 = vadd.f32 %v1957, %v2023
        %v2056 = vadd.f32 %v1958, %v2024
        %v2057 = vadd.f32 %v1959, %v2025
        %v2058 = vadd.f32 %v1960, %v2026
        %v2059 = vmul.f32 %v2027, 0.5
        %v2060 = vmul.f32 %v2028, 0.5
        %v2061 = vmul.f32 %v2029, 0.5
        %v2062 = vmul.f32 %v2030, 0.5
        %v2063 = vmul.f32 %v2031, 0.5
        %v2064 = vmul.f32 %v2032, 0.5
        %v2065 = vmul.f32 %v2033, 0.5
        %v2066 = vmul.f32 %v2034, 0.5
        %v2067 = vmul.f32 %v2035, 0.5
        %v2068 = vmul.f32 %v2036, 0.5
        %v2069 = vmul.f32 %v2037, 0.5
        %v2070 = vmul.f32 %v2038, 0.5
        %v2071 = vmul.f32 %v2039, 0.5
        %v2072 = vmul.f32 %v2040, 0.5
        %v2073 = vmul.f32 %v2041, 0.5
        %v2074 = vmul.f32 %v2042, 0.5
        %v2075 = vmul.f32 %v2043, 0.5
        %v2076 = vmul.f32 %v2044, 0.5
        %v2077 = vmul.f32 %v2045, 0.5
        %v2078 = vmul.f32 %v2046, 0.5
        %v2079 = vmul.f32 %v2047, 0.5
        %v2080 = vmul.f32 %v2048, 0.5
        %v2081 = vmul.f32 %v2049, 0.5
        %v2082 = vmul.f32 %v2050, 0.5
        %v2083 = vmul.f32 %v2051, 0.5
        %v2084 = vmul.f32 %v2052, 0.5
        %v2085 = vmul.f32 %v2053, 0.5
        %v2086 = vmul.f32 %v2054, 0.5
        %v2087 = vmul.f32 %v2055, 0.5
        %v2088 = vmul.f32 %v2056, 0.5
        %v2089 = vmul.f32 %v2057, 0.5
        %v2090 = vmul.f32 %v2058, 0.5
        %v2091 = vrcp.pop 1.4142135
        %v2092 = vmul.f32 1.4142135, %v2091
        %v2093 = vsub.f32 1.0, %v2092
        %v2094 = vmul.f32 %v2091, %v2093
        %v2095 = vadd.f32 %v2091, %v2094
        %vm2096 = vweird.f32 %v2091
        %v2097 = vsel %vm2096, %v2091, %v2095
        %v2098 = vmul.f32 %v2027, %v2097
        %v2099 = vmul.f32 %v2028, %v2097
        %v2100 = vmul.f32 %v2029, %v2097
        %v2101 = vmul.f32 %v2030, %v2097
        %v2102 = vmul.f32 %v2031, %v2097
        %v2103 = vmul.f32 %v2032, %v2097
        %v2104 = vmul.f32 %v2033, %v2097
        %v2105 = vmul.f32 %v2034, %v2097
        %v2106 = vmul.f32 %v2035, %v2097
        %v2107 = vmul.f32 %v2036, %v2097
        %v2108 = vmul.f32 %v2037, %v2097
        %v2109 = vmul.f32 %v2038, %v2097
        %v2110 = vmul.f32 %v2039, %v2097
        %v2111 = vmul.f32 %v2040, %v2097
        %v2112 = vmul.f32 %v2041, %v2097
        %v2113 = vmul.f32 %v2042, %v2097
        %v2114 = vmul.f32 %v2043, %v2097
        %v2115 = vmul.f32 %v2044, %v2097
        %v2116 = vmul.f32 %v2045, %v2097
        %v2117 = vmul.f32 %v2046, %v2097
        %v2118 = vmul.f32 %v2047, %v2097
        %v2119 = vmul.f32 %v2048, %v2097
        %v2120 = vmul.f32 %v2049, %v2097
        %v2121 = vmul.f32 %v2050, %v2097
        %v2122 = vmul.f32 %v2051, %v2097
        %v2123 = vmul.f32 %v2052, %v2097
        %v2124 = vmul.f32 %v2053, %v2097
        %v2125 = vmul.f32 %v2054, %v2097
        %v2126 = vmul.f32 %v2055, %v2097
        %v2127 = vmul.f32 %v2056, %v2097
        %v2128 = vmul.f32 %v2057, %v2097
        %v2129 = vmul.f32 %v2058, %v2097
        %v2130 = vand.u32 2147483647, %v2098
        %v2131 = vand.u32 2147483647, %v2099
        %v2132 = vand.u32 2147483647, %v2100
        %v2133 = vand.u32 2147483647, %v2101
        %v2134 = vand.u32 2147483647, %v2102
        %v2135 = vand.u32 2147483647, %v2103
        %v2136 = vand.u32 2147483647, %v2104
        %v2137 = vand.u32 2147483647, %v2105
        %v2138 = vand.u32 2147483647, %v2106
        %v2139 = vand.u32 2147483647, %v2107
        %v2140 = vand.u32 2147483647, %v2108
        %v2141 = vand.u32 2147483647, %v2109
        %v2142 = vand.u32 2147483647, %v2110
        %v2143 = vand.u32 2147483647, %v2111
        %v2144 = vand.u32 2147483647, %v2112
        %v2145 = vand.u32 2147483647, %v2113
        %v2146 = vand.u32 2147483647, %v2114
        %v2147 = vand.u32 2147483647, %v2115
        %v2148 = vand.u32 2147483647, %v2116
        %v2149 = vand.u32 2147483647, %v2117
        %v2150 = vand.u32 2147483647, %v2118
        %v2151 = vand.u32 2147483647, %v2119
        %v2152 = vand.u32 2147483647, %v2120
        %v2153 = vand.u32 2147483647, %v2121
        %v2154 = vand.u32 2147483647, %v2122
        %v2155 = vand.u32 2147483647, %v2123
        %v2156 = vand.u32 2147483647, %v2124
        %v2157 = vand.u32 2147483647, %v2125
        %v2158 = vand.u32 2147483647, %v2126
        %v2159 = vand.u32 2147483647, %v2127
        %v2160 = vand.u32 2147483647, %v2128
        %v2161 = vand.u32 2147483647, %v2129
        %v2162 = vmul.f32 %v2130, 0.3275911
        %v2163 = vmul.f32 %v2131, 0.3275911
        %v2164 = vmul.f32 %v2132, 0.3275911
        %v2165 = vmul.f32 %v2133, 0.3275911
        %v2166 = vmul.f32 %v2134, 0.3275911
        %v2167 = vmul.f32 %v2135, 0.3275911
        %v2168 = vmul.f32 %v2136, 0.3275911
        %v2169 = vmul.f32 %v2137, 0.3275911
        %v2170 = vmul.f32 %v2138, 0.3275911
        %v2171 = vmul.f32 %v2139, 0.3275911
        %v2172 = vmul.f32 %v2140, 0.3275911
        %v2173 = vmul.f32 %v2141, 0.3275911
        %v2174 = vmul.f32 %v2142, 0.3275911
        %v2175 = vmul.f32 %v2143, 0.3275911
        %v2176 = vmul.f32 %v2144, 0.3275911
        %v2177 = vmul.f32 %v2145, 0.3275911
        %v2178 = vmul.f32 %v2146, 0.3275911
        %v2179 = vmul.f32 %v2147, 0.3275911
        %v2180 = vmul.f32 %v2148, 0.3275911
        %v2181 = vmul.f32 %v2149, 0.3275911
        %v2182 = vmul.f32 %v2150, 0.3275911
        %v2183 = vmul.f32 %v2151, 0.3275911
        %v2184 = vmul.f32 %v2152, 0.3275911
        %v2185 = vmul.f32 %v2153, 0.3275911
        %v2186 = vmul.f32 %v2154, 0.3275911
        %v2187 = vmul.f32 %v2155, 0.3275911
        %v2188 = vmul.f32 %v2156, 0.3275911
        %v2189 = vmul.f32 %v2157, 0.3275911
        %v2190 = vmul.f32 %v2158, 0.3275911
        %v2191 = vmul.f32 %v2159, 0.3275911
        %v2192 = vmul.f32 %v2160, 0.3275911
        %v2193 = vmul.f32 %v2161, 0.3275911
        %v2194 = vadd.f32 %v2162, 1.0
        %v2195 = vadd.f32 %v2163, 1.0
        %v2196 = vadd.f32 %v2164, 1.0
        %v2197 = vadd.f32 %v2165, 1.0
        %v2198 = vadd.f32 %v2166, 1.0
        %v2199 = vadd.f32 %v2167, 1.0
        %v2200 = vadd.f32 %v2168, 1.0
        %v2201 = vadd.f32 %v2169, 1.0
        %v2202 = vadd.f32 %v2170, 1.0
        %v2203 = vadd.f32 %v2171, 1.0
        %v2204 = vadd.f32 %v2172, 1.0
        %v2205 = vadd.f32 %v2173, 1.0
        %v2206 = vadd.f32 %v2174, 1.0
        %v2207 = vadd.f32 %v2175, 1.0
        %v2208 = vadd.f32 %v2176, 1.0
        %v2209 = vadd.f32 %v2177, 1.0
        %v2210 = vadd.f32 %v2178, 1.0
        %v2211 = vadd.f32 %v2179, 1.0
        %v2212 = vadd.f32 %v2180, 1.0
        %v2213 = vadd.f32 %v2181, 1.0
        %v2214 = vadd.f32 %v2182, 1.0
        %v2215 = vadd.f32 %v2183, 1.0
        %v2216 = vadd.f32 %v2184, 1.0
        %v2217 = vadd.f32 %v2185, 1.0
        %v2218 = vadd.f32 %v2186, 1.0
        %v2219 = vadd.f32 %v2187, 1.0
        %v2220 = vadd.f32 %v2188, 1.0
        %v2221 = vadd.f32 %v2189, 1.0
        %v2222 = vadd.f32 %v2190, 1.0
        %v2223 = vadd.f32 %v2191, 1.0
        %v2224 = vadd.f32 %v2192, 1.0
        %v2225 = vadd.f32 %v2193, 1.0
        %v2226 = vrcp.pop %v2194
        %v2227 = vmul.f32 %v2194, %v2226
        %v2228 = vsub.f32 1.0, %v2227
        %v2229 = vmul.f32 %v2226, %v2228
        %v2230 = vadd.f32 %v2226, %v2229
        %vm2231 = vweird.f32 %v2194
        %vm2232 = vweird.f32 %v2226
        %vm2233 = vmor %vm2231, %vm2232
        %v2234 = vsel %vm2233, %v2226, %v2230
        %v2235 = vand.u32 2147483647, %v2194
        %vm2236 = vcmp.eq.f32.partialorder %v2235, 8.507059e+37
        %v2237 = vand.u32 %v2194, 2147483648
        %v2238 = vor.u32 1.1754944e-38, %v2237
        %v2239 = vsel %vm2236, %v2238, %v2234
        %v2240 = vmul.f32 1.0, %v2239
        %v2241 = vrcp.pop %v2195
        %v2242 = vmul.f32 %v2195, %v2241
        %v2243 = vsub.f32 1.0, %v2242
        %v2244 = vmul.f32 %v2241, %v2243
        %v2245 = vadd.f32 %v2241, %v2244
        %vm2246 = vweird.f32 %v2195
        %vm2247 = vweird.f32 %v2241
        %vm2248 = vmor %vm2246, %vm2247
        %v2249 = vsel %vm2248, %v2241, %v2245
        %v2250 = vand.u32 2147483647, %v2195
        %vm2251 = vcmp.eq.f32.partialorder %v2250, 8.507059e+37
        %v2252 = vand.u32 %v2195, 2147483648
        %v2253 = vor.u32 1.1754944e-38, %v2252
        %v2254 = vsel %vm2251, %v2253, %v2249
        %v2255 = vmul.f32 1.0, %v2254
        %v2256 = vrcp.pop %v2196
        %v2257 = vmul.f32 %v2196, %v2256
        %v2258 = vsub.f32 1.0, %v2257
        %v2259 = vmul.f32 %v2256, %v2258
        %v2260 = vadd.f32 %v2256, %v2259
        %vm2261 = vweird.f32 %v2196
        %vm2262 = vweird.f32 %v2256
        %vm2263 = vmor %vm2261, %vm2262
        %v2264 = vsel %vm2263, %v2256, %v2260
        %v2265 = vand.u32 2147483647, %v2196
        %vm2266 = vcmp.eq.f32.partialorder %v2265, 8.507059e+37
        %v2267 = vand.u32 %v2196, 2147483648
        %v2268 = vor.u32 1.1754944e-38, %v2267
        %v2269 = vsel %vm2266, %v2268, %v2264
        %v2270 = vmul.f32 1.0, %v2269
        %v2271 = vrcp.pop %v2197
        %v2272 = vmul.f32 %v2197, %v2271
        %v2273 = vsub.f32 1.0, %v2272
        %v2274 = vmul.f32 %v2271, %v2273
        %v2275 = vadd.f32 %v2271, %v2274
        %vm2276 = vweird.f32 %v2197
        %vm2277 = vweird.f32 %v2271
        %vm2278 = vmor %vm2276, %vm2277
        %v2279 = vsel %vm2278, %v2271, %v2275
        %v2280 = vand.u32 2147483647, %v2197
        %vm2281 = vcmp.eq.f32.partialorder %v2280, 8.507059e+37
        %v2282 = vand.u32 %v2197, 2147483648
        %v2283 = vor.u32 1.1754944e-38, %v2282
        %v2284 = vsel %vm2281, %v2283, %v2279
        %v2285 = vmul.f32 1.0, %v2284
        %v2286 = vrcp.pop %v2198
        %v2287 = vmul.f32 %v2198, %v2286
        %v2288 = vsub.f32 1.0, %v2287
        %v2289 = vmul.f32 %v2286, %v2288
        %v2290 = vadd.f32 %v2286, %v2289
        %vm2291 = vweird.f32 %v2198
        %vm2292 = vweird.f32 %v2286
        %vm2293 = vmor %vm2291, %vm2292
        %v2294 = vsel %vm2293, %v2286, %v2290
        %v2295 = vand.u32 2147483647, %v2198
        %vm2296 = vcmp.eq.f32.partialorder %v2295, 8.507059e+37
        %v2297 = vand.u32 %v2198, 2147483648
        %v2298 = vor.u32 1.1754944e-38, %v2297
        %v2299 = vsel %vm2296, %v2298, %v2294
        %v2300 = vmul.f32 1.0, %v2299
        %v2301 = vrcp.pop %v2199
        %v2302 = vmul.f32 %v2199, %v2301
        %v2303 = vsub.f32 1.0, %v2302
        %v2304 = vmul.f32 %v2301, %v2303
        %v2305 = vadd.f32 %v2301, %v2304
        %vm2306 = vweird.f32 %v2199
        %vm2307 = vweird.f32 %v2301
        %vm2308 = vmor %vm2306, %vm2307
        %v2309 = vsel %vm2308, %v2301, %v2305
        %v2310 = vand.u32 2147483647, %v2199
        %vm2311 = vcmp.eq.f32.partialorder %v2310, 8.507059e+37
        %v2312 = vand.u32 %v2199, 2147483648
        %v2313 = vor.u32 1.1754944e-38, %v2312
        %v2314 = vsel %vm2311, %v2313, %v2309
        %v2315 = vmul.f32 1.0, %v2314
        %v2316 = vrcp.pop %v2200
        %v2317 = vmul.f32 %v2200, %v2316
        %v2318 = vsub.f32 1.0, %v2317
        %v2319 = vmul.f32 %v2316, %v2318
        %v2320 = vadd.f32 %v2316, %v2319
        %vm2321 = vweird.f32 %v2200
        %vm2322 = vweird.f32 %v2316
        %vm2323 = vmor %vm2321, %vm2322
        %v2324 = vsel %vm2323, %v2316, %v2320
        %v2325 = vand.u32 2147483647, %v2200
        %vm2326 = vcmp.eq.f32.partialorder %v2325, 8.507059e+37
        %v2327 = vand.u32 %v2200, 2147483648
        %v2328 = vor.u32 1.1754944e-38, %v2327
        %v2329 = vsel %vm2326, %v2328, %v2324
        %v2330 = vmul.f32 1.0, %v2329
        %v2331 = vrcp.pop %v2201
        %v2332 = vmul.f32 %v2201, %v2331
        %v2333 = vsub.f32 1.0, %v2332
        %v2334 = vmul.f32 %v2331, %v2333
        %v2335 = vadd.f32 %v2331, %v2334
        %vm2336 = vweird.f32 %v2201
        %vm2337 = vweird.f32 %v2331
        %vm2338 = vmor %vm2336, %vm2337
        %v2339 = vsel %vm2338, %v2331, %v2335
        %v2340 = vand.u32 2147483647, %v2201
        %vm2341 = vcmp.eq.f32.partialorder %v2340, 8.507059e+37
        %v2342 = vand.u32 %v2201, 2147483648
        %v2343 = vor.u32 1.1754944e-38, %v2342
        %v2344 = vsel %vm2341, %v2343, %v2339
        %v2345 = vmul.f32 1.0, %v2344
        %v2346 = vrcp.pop %v2202
        %v2347 = vmul.f32 %v2202, %v2346
        %v2348 = vsub.f32 1.0, %v2347
        %v2349 = vmul.f32 %v2346, %v2348
        %v2350 = vadd.f32 %v2346, %v2349
        %vm2351 = vweird.f32 %v2202
        %vm2352 = vweird.f32 %v2346
        %vm2353 = vmor %vm2351, %vm2352
        %v2354 = vsel %vm2353, %v2346, %v2350
        %v2355 = vand.u32 2147483647, %v2202
        %vm2356 = vcmp.eq.f32.partialorder %v2355, 8.507059e+37
        %v2357 = vand.u32 %v2202, 2147483648
        %v2358 = vor.u32 1.1754944e-38, %v2357
        %v2359 = vsel %vm2356, %v2358, %v2354
        %v2360 = vmul.f32 1.0, %v2359
        %v2361 = vrcp.pop %v2203
        %v2362 = vmul.f32 %v2203, %v2361
        %v2363 = vsub.f32 1.0, %v2362
        %v2364 = vmul.f32 %v2361, %v2363
        %v2365 = vadd.f32 %v2361, %v2364
        %vm2366 = vweird.f32 %v2203
        %vm2367 = vweird.f32 %v2361
        %vm2368 = vmor %vm2366, %vm2367
        %v2369 = vsel %vm2368, %v2361, %v2365
        %v2370 = vand.u32 2147483647, %v2203
        %vm2371 = vcmp.eq.f32.partialorder %v2370, 8.507059e+37
        %v2372 = vand.u32 %v2203, 2147483648
        %v2373 = vor.u32 1.1754944e-38, %v2372
        %v2374 = vsel %vm2371, %v2373, %v2369
        %v2375 = vmul.f32 1.0, %v2374
        %v2376 = vrcp.pop %v2204
        %v2377 = vmul.f32 %v2204, %v2376
        %v2378 = vsub.f32 1.0, %v2377
        %v2379 = vmul.f32 %v2376, %v2378
        %v2380 = vadd.f32 %v2376, %v2379
        %vm2381 = vweird.f32 %v2204
        %vm2382 = vweird.f32 %v2376
        %vm2383 = vmor %vm2381, %vm2382
        %v2384 = vsel %vm2383, %v2376, %v2380
        %v2385 = vand.u32 2147483647, %v2204
        %vm2386 = vcmp.eq.f32.partialorder %v2385, 8.507059e+37
        %v2387 = vand.u32 %v2204, 2147483648
        %v2388 = vor.u32 1.1754944e-38, %v2387
        %v2389 = vsel %vm2386, %v2388, %v2384
        %v2390 = vmul.f32 1.0, %v2389
        %v2391 = vrcp.pop %v2205
        %v2392 = vmul.f32 %v2205, %v2391
        %v2393 = vsub.f32 1.0, %v2392
        %v2394 = vmul.f32 %v2391, %v2393
        %v2395 = vadd.f32 %v2391, %v2394
        %vm2396 = vweird.f32 %v2205
        %vm2397 = vweird.f32 %v2391
        %vm2398 = vmor %vm2396, %vm2397
        %v2399 = vsel %vm2398, %v2391, %v2395
        %v2400 = vand.u32 2147483647, %v2205
        %vm2401 = vcmp.eq.f32.partialorder %v2400, 8.507059e+37
        %v2402 = vand.u32 %v2205, 2147483648
        %v2403 = vor.u32 1.1754944e-38, %v2402
        %v2404 = vsel %vm2401, %v2403, %v2399
        %v2405 = vmul.f32 1.0, %v2404
        %v2406 = vrcp.pop %v2206
        %v2407 = vmul.f32 %v2206, %v2406
        %v2408 = vsub.f32 1.0, %v2407
        %v2409 = vmul.f32 %v2406, %v2408
        %v2410 = vadd.f32 %v2406, %v2409
        %vm2411 = vweird.f32 %v2206
        %vm2412 = vweird.f32 %v2406
        %vm2413 = vmor %vm2411, %vm2412
        %v2414 = vsel %vm2413, %v2406, %v2410
        %v2415 = vand.u32 2147483647, %v2206
        %vm2416 = vcmp.eq.f32.partialorder %v2415, 8.507059e+37
        %v2417 = vand.u32 %v2206, 2147483648
        %v2418 = vor.u32 1.1754944e-38, %v2417
        %v2419 = vsel %vm2416, %v2418, %v2414
        %v2420 = vmul.f32 1.0, %v2419
        %v2421 = vrcp.pop %v2207
        %v2422 = vmul.f32 %v2207, %v2421
        %v2423 = vsub.f32 1.0, %v2422
        %v2424 = vmul.f32 %v2421, %v2423
        %v2425 = vadd.f32 %v2421, %v2424
        %vm2426 = vweird.f32 %v2207
        %vm2427 = vweird.f32 %v2421
        %vm2428 = vmor %vm2426, %vm2427
        %v2429 = vsel %vm2428, %v2421, %v2425
        %v2430 = vand.u32 2147483647, %v2207
        %vm2431 = vcmp.eq.f32.partialorder %v2430, 8.507059e+37
        %v2432 = vand.u32 %v2207, 2147483648
        %v2433 = vor.u32 1.1754944e-38, %v2432
        %v2434 = vsel %vm2431, %v2433, %v2429
        %v2435 = vmul.f32 1.0, %v2434
        %v2436 = vrcp.pop %v2208
        %v2437 = vmul.f32 %v2208, %v2436
        %v2438 = vsub.f32 1.0, %v2437
        %v2439 = vmul.f32 %v2436, %v2438
        %v2440 = vadd.f32 %v2436, %v2439
        %vm2441 = vweird.f32 %v2208
        %vm2442 = vweird.f32 %v2436
        %vm2443 = vmor %vm2441, %vm2442
        %v2444 = vsel %vm2443, %v2436, %v2440
        %v2445 = vand.u32 2147483647, %v2208
        %vm2446 = vcmp.eq.f32.partialorder %v2445, 8.507059e+37
        %v2447 = vand.u32 %v2208, 2147483648
        %v2448 = vor.u32 1.1754944e-38, %v2447
        %v2449 = vsel %vm2446, %v2448, %v2444
        %v2450 = vmul.f32 1.0, %v2449
        %v2451 = vrcp.pop %v2209
        %v2452 = vmul.f32 %v2209, %v2451
        %v2453 = vsub.f32 1.0, %v2452
        %v2454 = vmul.f32 %v2451, %v2453
        %v2455 = vadd.f32 %v2451, %v2454
        %vm2456 = vweird.f32 %v2209
        %vm2457 = vweird.f32 %v2451
        %vm2458 = vmor %vm2456, %vm2457
        %v2459 = vsel %vm2458, %v2451, %v2455
        %v2460 = vand.u32 2147483647, %v2209
        %vm2461 = vcmp.eq.f32.partialorder %v2460, 8.507059e+37
        %v2462 = vand.u32 %v2209, 2147483648
        %v2463 = vor.u32 1.1754944e-38, %v2462
        %v2464 = vsel %vm2461, %v2463, %v2459
        %v2465 = vmul.f32 1.0, %v2464
        %v2466 = vrcp.pop %v2210
        %v2467 = vmul.f32 %v2210, %v2466
        %v2468 = vsub.f32 1.0, %v2467
        %v2469 = vmul.f32 %v2466, %v2468
        %v2470 = vadd.f32 %v2466, %v2469
        %vm2471 = vweird.f32 %v2210
        %vm2472 = vweird.f32 %v2466
        %vm2473 = vmor %vm2471, %vm2472
        %v2474 = vsel %vm2473, %v2466, %v2470
        %v2475 = vand.u32 2147483647, %v2210
        %vm2476 = vcmp.eq.f32.partialorder %v2475, 8.507059e+37
        %v2477 = vand.u32 %v2210, 2147483648
        %v2478 = vor.u32 1.1754944e-38, %v2477
        %v2479 = vsel %vm2476, %v2478, %v2474
        %v2480 = vmul.f32 1.0, %v2479
        %v2481 = vrcp.pop %v2211
        %v2482 = vmul.f32 %v2211, %v2481
        %v2483 = vsub.f32 1.0, %v2482
        %v2484 = vmul.f32 %v2481, %v2483
        %v2485 = vadd.f32 %v2481, %v2484
        %vm2486 = vweird.f32 %v2211
        %vm2487 = vweird.f32 %v2481
        %vm2488 = vmor %vm2486, %vm2487
        %v2489 = vsel %vm2488, %v2481, %v2485
        %v2490 = vand.u32 2147483647, %v2211
        %vm2491 = vcmp.eq.f32.partialorder %v2490, 8.507059e+37
        %v2492 = vand.u32 %v2211, 2147483648
        %v2493 = vor.u32 1.1754944e-38, %v2492
        %v2494 = vsel %vm2491, %v2493, %v2489
        %v2495 = vmul.f32 1.0, %v2494
        %v2496 = vrcp.pop %v2212
        %v2497 = vmul.f32 %v2212, %v2496
        %v2498 = vsub.f32 1.0, %v2497
        %v2499 = vmul.f32 %v2496, %v2498
        %v2500 = vadd.f32 %v2496, %v2499
        %vm2501 = vweird.f32 %v2212
        %vm2502 = vweird.f32 %v2496
        %vm2503 = vmor %vm2501, %vm2502
        %v2504 = vsel %vm2503, %v2496, %v2500
        %v2505 = vand.u32 2147483647, %v2212
        %vm2506 = vcmp.eq.f32.partialorder %v2505, 8.507059e+37
        %v2507 = vand.u32 %v2212, 2147483648
        %v2508 = vor.u32 1.1754944e-38, %v2507
        %v2509 = vsel %vm2506, %v2508, %v2504
        %v2510 = vmul.f32 1.0, %v2509
        %v2511 = vrcp.pop %v2213
        %v2512 = vmul.f32 %v2213, %v2511
        %v2513 = vsub.f32 1.0, %v2512
        %v2514 = vmul.f32 %v2511, %v2513
        %v2515 = vadd.f32 %v2511, %v2514
        %vm2516 = vweird.f32 %v2213
        %vm2517 = vweird.f32 %v2511
        %vm2518 = vmor %vm2516, %vm2517
        %v2519 = vsel %vm2518, %v2511, %v2515
        %v2520 = vand.u32 2147483647, %v2213
        %vm2521 = vcmp.eq.f32.partialorder %v2520, 8.507059e+37
        %v2522 = vand.u32 %v2213, 2147483648
        %v2523 = vor.u32 1.1754944e-38, %v2522
        %v2524 = vsel %vm2521, %v2523, %v2519
        %v2525 = vmul.f32 1.0, %v2524
        %v2526 = vrcp.pop %v2214
        %v2527 = vmul.f32 %v2214, %v2526
        %v2528 = vsub.f32 1.0, %v2527
        %v2529 = vmul.f32 %v2526, %v2528
        %v2530 = vadd.f32 %v2526, %v2529
        %vm2531 = vweird.f32 %v2214
        %vm2532 = vweird.f32 %v2526
        %vm2533 = vmor %vm2531, %vm2532
        %v2534 = vsel %vm2533, %v2526, %v2530
        %v2535 = vand.u32 2147483647, %v2214
        %vm2536 = vcmp.eq.f32.partialorder %v2535, 8.507059e+37
        %v2537 = vand.u32 %v2214, 2147483648
        %v2538 = vor.u32 1.1754944e-38, %v2537
        %v2539 = vsel %vm2536, %v2538, %v2534
        %v2540 = vmul.f32 1.0, %v2539
        %v2541 = vrcp.pop %v2215
        %v2542 = vmul.f32 %v2215, %v2541
        %v2543 = vsub.f32 1.0, %v2542
        %v2544 = vmul.f32 %v2541, %v2543
        %v2545 = vadd.f32 %v2541, %v2544
        %vm2546 = vweird.f32 %v2215
        %vm2547 = vweird.f32 %v2541
        %vm2548 = vmor %vm2546, %vm2547
        %v2549 = vsel %vm2548, %v2541, %v2545
        %v2550 = vand.u32 2147483647, %v2215
        %vm2551 = vcmp.eq.f32.partialorder %v2550, 8.507059e+37
        %v2552 = vand.u32 %v2215, 2147483648
        %v2553 = vor.u32 1.1754944e-38, %v2552
        %v2554 = vsel %vm2551, %v2553, %v2549
        %v2555 = vmul.f32 1.0, %v2554
        %v2556 = vrcp.pop %v2216
        %v2557 = vmul.f32 %v2216, %v2556
        %v2558 = vsub.f32 1.0, %v2557
        %v2559 = vmul.f32 %v2556, %v2558
        %v2560 = vadd.f32 %v2556, %v2559
        %vm2561 = vweird.f32 %v2216
        %vm2562 = vweird.f32 %v2556
        %vm2563 = vmor %vm2561, %vm2562
        %v2564 = vsel %vm2563, %v2556, %v2560
        %v2565 = vand.u32 2147483647, %v2216
        %vm2566 = vcmp.eq.f32.partialorder %v2565, 8.507059e+37
        %v2567 = vand.u32 %v2216, 2147483648
        %v2568 = vor.u32 1.1754944e-38, %v2567
        %v2569 = vsel %vm2566, %v2568, %v2564
        %v2570 = vmul.f32 1.0, %v2569
        %v2571 = vrcp.pop %v2217
        %v2572 = vmul.f32 %v2217, %v2571
        %v2573 = vsub.f32 1.0, %v2572
        %v2574 = vmul.f32 %v2571, %v2573
        %v2575 = vadd.f32 %v2571, %v2574
        %vm2576 = vweird.f32 %v2217
        %vm2577 = vweird.f32 %v2571
        %vm2578 = vmor %vm2576, %vm2577
        %v2579 = vsel %vm2578, %v2571, %v2575
        %v2580 = vand.u32 2147483647, %v2217
        %vm2581 = vcmp.eq.f32.partialorder %v2580, 8.507059e+37
        %v2582 = vand.u32 %v2217, 2147483648
        %v2583 = vor.u32 1.1754944e-38, %v2582
        %v2584 = vsel %vm2581, %v2583, %v2579
        %v2585 = vmul.f32 1.0, %v2584
        %v2586 = vrcp.pop %v2218
        %v2587 = vmul.f32 %v2218, %v2586
        %v2588 = vsub.f32 1.0, %v2587
        %v2589 = vmul.f32 %v2586, %v2588
        %v2590 = vadd.f32 %v2586, %v2589
        %vm2591 = vweird.f32 %v2218
        %vm2592 = vweird.f32 %v2586
        %vm2593 = vmor %vm2591, %vm2592
        %v2594 = vsel %vm2593, %v2586, %v2590
        %v2595 = vand.u32 2147483647, %v2218
        %vm2596 = vcmp.eq.f32.partialorder %v2595, 8.507059e+37
        %v2597 = vand.u32 %v2218, 2147483648
        %v2598 = vor.u32 1.1754944e-38, %v2597
        %v2599 = vsel %vm2596, %v2598, %v2594
        %v2600 = vmul.f32 1.0, %v2599
        %v2601 = vrcp.pop %v2219
        %v2602 = vmul.f32 %v2219, %v2601
        %v2603 = vsub.f32 1.0, %v2602
        %v2604 = vmul.f32 %v2601, %v2603
        %v2605 = vadd.f32 %v2601, %v2604
        %vm2606 = vweird.f32 %v2219
        %vm2607 = vweird.f32 %v2601
        %vm2608 = vmor %vm2606, %vm2607
        %v2609 = vsel %vm2608, %v2601, %v2605
        %v2610 = vand.u32 2147483647, %v2219
        %vm2611 = vcmp.eq.f32.partialorder %v2610, 8.507059e+37
        %v2612 = vand.u32 %v2219, 2147483648
        %v2613 = vor.u32 1.1754944e-38, %v2612
        %v2614 = vsel %vm2611, %v2613, %v2609
        %v2615 = vmul.f32 1.0, %v2614
        %v2616 = vrcp.pop %v2220
        %v2617 = vmul.f32 %v2220, %v2616
        %v2618 = vsub.f32 1.0, %v2617
        %v2619 = vmul.f32 %v2616, %v2618
        %v2620 = vadd.f32 %v2616, %v2619
        %vm2621 = vweird.f32 %v2220
        %vm2622 = vweird.f32 %v2616
        %vm2623 = vmor %vm2621, %vm2622
        %v2624 = vsel %vm2623, %v2616, %v2620
        %v2625 = vand.u32 2147483647, %v2220
        %vm2626 = vcmp.eq.f32.partialorder %v2625, 8.507059e+37
        %v2627 = vand.u32 %v2220, 2147483648
        %v2628 = vor.u32 1.1754944e-38, %v2627
        %v2629 = vsel %vm2626, %v2628, %v2624
        %v2630 = vmul.f32 1.0, %v2629
        %v2631 = vrcp.pop %v2221
        %v2632 = vmul.f32 %v2221, %v2631
        %v2633 = vsub.f32 1.0, %v2632
        %v2634 = vmul.f32 %v2631, %v2633
        %v2635 = vadd.f32 %v2631, %v2634
        %vm2636 = vweird.f32 %v2221
        %vm2637 = vweird.f32 %v2631
        %vm2638 = vmor %vm2636, %vm2637
        %v2639 = vsel %vm2638, %v2631, %v2635
        %v2640 = vand.u32 2147483647, %v2221
        %vm2641 = vcmp.eq.f32.partialorder %v2640, 8.507059e+37
        %v2642 = vand.u32 %v2221, 2147483648
        %v2643 = vor.u32 1.1754944e-38, %v2642
        %v2644 = vsel %vm2641, %v2643, %v2639
        %v2645 = vmul.f32 1.0, %v2644
        %v2646 = vrcp.pop %v2222
        %v2647 = vmul.f32 %v2222, %v2646
        %v2648 = vsub.f32 1.0, %v2647
        %v2649 = vmul.f32 %v2646, %v2648
        %v2650 = vadd.f32 %v2646, %v2649
        %vm2651 = vweird.f32 %v2222
        %vm2652 = vweird.f32 %v2646
        %vm2653 = vmor %vm2651, %vm2652
        %v2654 = vsel %vm2653, %v2646, %v2650
        %v2655 = vand.u32 2147483647, %v2222
        %vm2656 = vcmp.eq.f32.partialorder %v2655, 8.507059e+37
        %v2657 = vand.u32 %v2222, 2147483648
        %v2658 = vor.u32 1.1754944e-38, %v2657
        %v2659 = vsel %vm2656, %v2658, %v2654
        %v2660 = vmul.f32 1.0, %v2659
        %v2661 = vrcp.pop %v2223
        %v2662 = vmul.f32 %v2223, %v2661
        %v2663 = vsub.f32 1.0, %v2662
        %v2664 = vmul.f32 %v2661, %v2663
        %v2665 = vadd.f32 %v2661, %v2664
        %vm2666 = vweird.f32 %v2223
        %vm2667 = vweird.f32 %v2661
        %vm2668 = vmor %vm2666, %vm2667
        %v2669 = vsel %vm2668, %v2661, %v2665
        %v2670 = vand.u32 2147483647, %v2223
        %vm2671 = vcmp.eq.f32.partialorder %v2670, 8.507059e+37
        %v2672 = vand.u32 %v2223, 2147483648
        %v2673 = vor.u32 1.1754944e-38, %v2672
        %v2674 = vsel %vm2671, %v2673, %v2669
        %v2675 = vmul.f32 1.0, %v2674
        %v2676 = vrcp.pop %v2224
        %v2677 = vmul.f32 %v2224, %v2676
        %v2678 = vsub.f32 1.0, %v2677
        %v2679 = vmul.f32 %v2676, %v2678
        %v2680 = vadd.f32 %v2676, %v2679
        %vm2681 = vweird.f32 %v2224
        %vm2682 = vweird.f32 %v2676
        %vm2683 = vmor %vm2681, %vm2682
        %v2684 = vsel %vm2683, %v2676, %v2680
        %v2685 = vand.u32 2147483647, %v2224
        %vm2686 = vcmp.eq.f32.partialorder %v2685, 8.507059e+37
        %v2687 = vand.u32 %v2224, 2147483648
        %v2688 = vor.u32 1.1754944e-38, %v2687
        %v2689 = vsel %vm2686, %v2688, %v2684
        %v2690 = vmul.f32 1.0, %v2689
        %v2691 = vrcp.pop %v2225
        %v2692 = vmul.f32 %v2225, %v2691
        %v2693 = vsub.f32 1.0, %v2692
        %v2694 = vmul.f32 %v2691, %v2693
        %v2695 = vadd.f32 %v2691, %v2694
        %vm2696 = vweird.f32 %v2225
        %vm2697 = vweird.f32 %v2691
        %vm2698 = vmor %vm2696, %vm2697
        %v2699 = vsel %vm2698, %v2691, %v2695
        %v2700 = vand.u32 2147483647, %v2225
        %vm2701 = vcmp.eq.f32.partialorder %v2700, 8.507059e+37
        %v2702 = vand.u32 %v2225, 2147483648
        %v2703 = vor.u32 1.1754944e-38, %v2702
        %v2704 = vsel %vm2701, %v2703, %v2699
        %v2705 = vmul.f32 1.0, %v2704
        %v2706 = vmul.f32 %v2240, 1.0614054
        %v2707 = vmul.f32 %v2255, 1.0614054
        %v2708 = vmul.f32 %v2270, 1.0614054
        %v2709 = vmul.f32 %v2285, 1.0614054
        %v2710 = vmul.f32 %v2300, 1.0614054
        %v2711 = vmul.f32 %v2315, 1.0614054
        %v2712 = vmul.f32 %v2330, 1.0614054
        %v2713 = vmul.f32 %v2345, 1.0614054
        %v2714 = vmul.f32 %v2360, 1.0614054
        %v2715 = vmul.f32 %v2375, 1.0614054
        %v2716 = vmul.f32 %v2390, 1.0614054
        %v2717 = vmul.f32 %v2405, 1.0614054
        %v2718 = vmul.f32 %v2420, 1.0614054
        %v2719 = vmul.f32 %v2435, 1.0614054
        %v2720 = vmul.f32 %v2450, 1.0614054
        %v2721 = vmul.f32 %v2465, 1.0614054
        %v2722 = vmul.f32 %v2480, 1.0614054
        %v2723 = vmul.f32 %v2495, 1.0614054
        %v2724 = vmul.f32 %v2510, 1.0614054
        %v2725 = vmul.f32 %v2525, 1.0614054
        %v2726 = vmul.f32 %v2540, 1.0614054
        %v2727 = vmul.f32 %v2555, 1.0614054
        %v2728 = vmul.f32 %v2570, 1.0614054
        %v2729 = vmul.f32 %v2585, 1.0614054
        %v2730 = vmul.f32 %v2600, 1.0614054
        %v2731 = vmul.f32 %v2615, 1.0614054
        %v2732 = vmul.f32 %v2630, 1.0614054
        %v2733 = vmul.f32 %v2645, 1.0614054
        %v2734 = vmul.f32 %v2660, 1.0614054
        %v2735 = vmul.f32 %v2675, 1.0614054
        %v2736 = vmul.f32 %v2690, 1.0614054
        %v2737 = vmul.f32 %v2705, 1.0614054
        %v2738 = vsub.f32 %v2706, 1.4531521
        %v2739 = vsub.f32 %v2707, 1.4531521
        %v2740 = vsub.f32 %v2708, 1.4531521
        %v2741 = vsub.f32 %v2709, 1.4531521
        %v2742 = vsub.f32 %v2710, 1.4531521
        %v2743 = vsub.f32 %v2711, 1.4531521
        %v2744 = vsub.f32 %v2712, 1.4531521
        %v2745 = vsub.f32 %v2713, 1.4531521
        %v2746 = vsub.f32 %v2714, 1.4531521
        %v2747 = vsub.f32 %v2715, 1.4531521
        %v2748 = vsub.f32 %v2716, 1.4531521
        %v2749 = vsub.f32 %v2717, 1.4531521
        %v2750 = vsub.f32 %v2718, 1.4531521
        %v2751 = vsub.f32 %v2719, 1.4531521
        %v2752 = vsub.f32 %v2720, 1.4531521
        %v2753 = vsub.f32 %v2721, 1.4531521
        %v2754 = vsub.f32 %v2722, 1.4531521
        %v2755 = vsub.f32 %v2723, 1.4531521
        %v2756 = vsub.f32 %v2724, 1.4531521
        %v2757 = vsub.f32 %v2725, 1.4531521
        %v2758 = vsub.f32 %v2726, 1.4531521
        %v2759 = vsub.f32 %v2727, 1.4531521
        %v2760 = vsub.f32 %v2728, 1.4531521
        %v2761 = vsub.f32 %v2729, 1.4531521
        %v2762 = vsub.f32 %v2730, 1.4531521
        %v2763 = vsub.f32 %v2731, 1.4531521
        %v2764 = vsub.f32 %v2732, 1.4531521
        %v2765 = vsub.f32 %v2733, 1.4531521
        %v2766 = vsub.f32 %v2734, 1.4531521
        %v2767 = vsub.f32 %v2735, 1.4531521
        %v2768 = vsub.f32 %v2736, 1.4531521
        %v2769 = vsub.f32 %v2737, 1.4531521
        %v2770 = vmul.f32 %v2738, %v2240
        %v2771 = vmul.f32 %v2739, %v2255
        %v2772 = vmul.f32 %v2740, %v2270
        %v2773 = vmul.f32 %v2741, %v2285
        %v2774 = vmul.f32 %v2742, %v2300
        %v2775 = vmul.f32 %v2743, %v2315
        %v2776 = vmul.f32 %v2744, %v2330
        %v2777 = vmul.f32 %v2745, %v2345
        %v2778 = vmul.f32 %v2746, %v2360
        %v2779 = vmul.f32 %v2747, %v2375
        %v2780 = vmul.f32 %v2748, %v2390
        %v2781 = vmul.f32 %v2749, %v2405
        %v2782 = vmul.f32 %v2750, %v2420
        %v2783 = vmul.f32 %v2751, %v2435
        %v2784 = vmul.f32 %v2752, %v2450
        %v2785 = vmul.f32 %v2753, %v2465
        %v2786 = vmul.f32 %v2754, %v2480
        %v2787 = vmul.f32 %v2755, %v2495
        %v2788 = vmul.f32 %v2756, %v2510
        %v2789 = vmul.f32 %v2757, %v2525
        %v2790 = vmul.f32 %v2758, %v2540
        %v2791 = vmul.f32 %v2759, %v2555
        %v2792 = vmul.f32 %v2760, %v2570
        %v2793 = vmul.f32 %v2761, %v2585
        %v2794 = vmul.f32 %v2762, %v2600
        %v2795 = vmul.f32 %v2763, %v2615
        %v2796 = vmul.f32 %v2764, %v2630
        %v2797 = vmul.f32 %v2765, %v2645
        %v2798 = vmul.f32 %v2766, %v2660
        %v2799 = vmul.f32 %v2767, %v2675
        %v2800 = vmul.f32 %v2768, %v2690
        %v2801 = vmul.f32 %v2769, %v2705
        %v2802 = vadd.f32 %v2770, 1.4214138
        %v2803 = vadd.f32 %v2771, 1.4214138
        %v2804 = vadd.f32 %v2772, 1.4214138
        %v2805 = vadd.f32 %v2773, 1.4214138
        %v2806 = vadd.f32 %v2774, 1.4214138
        %v2807 = vadd.f32 %v2775, 1.4214138
        %v2808 = vadd.f32 %v2776, 1.4214138
        %v2809 = vadd.f32 %v2777, 1.4214138
        %v2810 = vadd.f32 %v2778, 1.4214138
        %v2811 = vadd.f32 %v2779, 1.4214138
        %v2812 = vadd.f32 %v2780, 1.4214138
        %v2813 = vadd.f32 %v2781, 1.4214138
        %v2814 = vadd.f32 %v2782, 1.4214138
        %v2815 = vadd.f32 %v2783, 1.4214138
        %v2816 = vadd.f32 %v2784, 1.4214138
        %v2817 = vadd.f32 %v2785, 1.4214138
        %v2818 = vadd.f32 %v2786, 1.4214138
        %v2819 = vadd.f32 %v2787, 1.4214138
        %v2820 = vadd.f32 %v2788, 1.4214138
        %v2821 = vadd.f32 %v2789, 1.4214138
        %v2822 = vadd.f32 %v2790, 1.4214138
        %v2823 = vadd.f32 %v2791, 1.4214138
        %v2824 = vadd.f32 %v2792, 1.4214138
        %v2825 = vadd.f32 %v2793, 1.4214138
        %v2826 = vadd.f32 %v2794, 1.4214138
        %v2827 = vadd.f32 %v2795, 1.4214138
        %v2828 = vadd.f32 %v2796, 1.4214138
        %v2829 = vadd.f32 %v2797, 1.4214138
        %v2830 = vadd.f32 %v2798, 1.4214138
        %v2831 = vadd.f32 %v2799, 1.4214138
        %v2832 = vadd.f32 %v2800, 1.4214138
        %v2833 = vadd.f32 %v2801, 1.4214138
        %v2834 = vmul.f32 %v2802, %v2240
        %v2835 = vmul.f32 %v2803, %v2255
        %v2836 = vmul.f32 %v2804, %v2270
        %v2837 = vmul.f32 %v2805, %v2285
        %v2838 = vmul.f32 %v2806, %v2300
        %v2839 = vmul.f32 %v2807, %v2315
        %v2840 = vmul.f32 %v2808, %v2330
        %v2841 = vmul.f32 %v2809, %v2345
        %v2842 = vmul.f32 %v2810, %v2360
        %v2843 = vmul.f32 %v2811, %v2375
        %v2844 = vmul.f32 %v2812, %v2390
        %v2845 = vmul.f32 %v2813, %v2405
        %v2846 = vmul.f32 %v2814, %v2420
        %v2847 = vmul.f32 %v2815, %v2435
        %v2848 = vmul.f32 %v2816, %v2450
        %v2849 = vmul.f32 %v2817, %v2465
        %v2850 = vmul.f32 %v2818, %v2480
        %v2851 = vmul.f32 %v2819, %v2495
        %v2852 = vmul.f32 %v2820, %v2510
        %v2853 = vmul.f32 %v2821, %v2525
        %v2854 = vmul.f32 %v2822, %v2540
        %v2855 = vmul.f32 %v2823, %v2555
        %v2856 = vmul.f32 %v2824, %v2570
        %v2857 = vmul.f32 %v2825, %v2585
        %v2858 = vmul.f32 %v2826, %v2600
        %v2859 = vmul.f32 %v2827, %v2615
        %v2860 = vmul.f32 %v2828, %v2630
        %v2861 = vmul.f32 %v2829, %v2645
        %v2862 = vmul.f32 %v2830, %v2660
        %v2863 = vmul.f32 %v2831, %v2675
        %v2864 = vmul.f32 %v2832, %v2690
        %v2865 = vmul.f32 %v2833, %v2705
        %v2866 = vsub.f32 %v2834, 0.28449672
        %v2867 = vsub.f32 %v2835, 0.28449672
        %v2868 = vsub.f32 %v2836, 0.28449672
        %v2869 = vsub.f32 %v2837, 0.28449672
        %v2870 = vsub.f32 %v2838, 0.28449672
        %v2871 = vsub.f32 %v2839, 0.28449672
        %v2872 = vsub.f32 %v2840, 0.28449672
        %v2873 = vsub.f32 %v2841, 0.28449672
        %v2874 = vsub.f32 %v2842, 0.28449672
        %v2875 = vsub.f32 %v2843, 0.28449672
        %v2876 = vsub.f32 %v2844, 0.28449672
        %v2877 = vsub.f32 %v2845, 0.28449672
        %v2878 = vsub.f32 %v2846, 0.28449672
        %v2879 = vsub.f32 %v2847, 0.28449672
        %v2880 = vsub.f32 %v2848, 0.28449672
        %v2881 = vsub.f32 %v2849, 0.28449672
        %v2882 = vsub.f32 %v2850, 0.28449672
        %v2883 = vsub.f32 %v2851, 0.28449672
        %v2884 = vsub.f32 %v2852, 0.28449672
        %v2885 = vsub.f32 %v2853, 0.28449672
        %v2886 = vsub.f32 %v2854, 0.28449672
        %v2887 = vsub.f32 %v2855, 0.28449672
        %v2888 = vsub.f32 %v2856, 0.28449672
        %v2889 = vsub.f32 %v2857, 0.28449672
        %v2890 = vsub.f32 %v2858, 0.28449672
        %v2891 = vsub.f32 %v2859, 0.28449672
        %v2892 = vsub.f32 %v2860, 0.28449672
        %v2893 = vsub.f32 %v2861, 0.28449672
        %v2894 = vsub.f32 %v2862, 0.28449672
        %v2895 = vsub.f32 %v2863, 0.28449672
        %v2896 = vsub.f32 %v2864, 0.28449672
        %v2897 = vsub.f32 %v2865, 0.28449672
        %v2898 = vmul.f32 %v2866, %v2240
        %v2899 = vmul.f32 %v2867, %v2255
        %v2900 = vmul.f32 %v2868, %v2270
        %v2901 = vmul.f32 %v2869, %v2285
        %v2902 = vmul.f32 %v2870, %v2300
        %v2903 = vmul.f32 %v2871, %v2315
        %v2904 = vmul.f32 %v2872, %v2330
        %v2905 = vmul.f32 %v2873, %v2345
        %v2906 = vmul.f32 %v2874, %v2360
        %v2907 = vmul.f32 %v2875, %v2375
        %v2908 = vmul.f32 %v2876, %v2390
        %v2909 = vmul.f32 %v2877, %v2405
        %v2910 = vmul.f32 %v2878, %v2420
        %v2911 = vmul.f32 %v2879, %v2435
        %v2912 = vmul.f32 %v2880, %v2450
        %v2913 = vmul.f32 %v2881, %v2465
        %v2914 = vmul.f32 %v2882, %v2480
        %v2915 = vmul.f32 %v2883, %v2495
        %v2916 = vmul.f32 %v2884, %v2510
        %v2917 = vmul.f32 %v2885, %v2525
        %v2918 = vmul.f32 %v2886, %v2540
        %v2919 = vmul.f32 %v2887, %v2555
        %v2920 = vmul.f32 %v2888, %v2570
        %v2921 = vmul.f32 %v2889, %v2585
        %v2922 = vmul.f32 %v2890, %v2600
        %v2923 = vmul.f32 %v2891, %v2615
        %v2924 = vmul.f32 %v2892, %v2630
        %v2925 = vmul.f32 %v2893, %v2645
        %v2926 = vmul.f32 %v2894, %v2660
        %v2927 = vmul.f32 %v2895, %v2675
        %v2928 = vmul.f32 %v2896, %v2690
        %v2929 = vmul.f32 %v2897, %v2705
        %v2930 = vadd.f32 %v2898, 0.2548296
        %v2931 = vadd.f32 %v2899, 0.2548296
        %v2932 = vadd.f32 %v2900, 0.2548296
        %v2933 = vadd.f32 %v2901, 0.2548296
        %v2934 = vadd.f32 %v2902, 0.2548296
        %v2935 = vadd.f32 %v2903, 0.2548296
        %v2936 = vadd.f32 %v2904, 0.2548296
        %v2937 = vadd.f32 %v2905, 0.2548296
        %v2938 = vadd.f32 %v2906, 0.2548296
        %v2939 = vadd.f32 %v2907, 0.2548296
        %v2940 = vadd.f32 %v2908, 0.2548296
        %v2941 = vadd.f32 %v2909, 0.2548296
        %v2942 = vadd.f32 %v2910, 0.2548296
        %v2943 = vadd.f32 %v2911, 0.2548296
        %v2944 = vadd.f32 %v2912, 0.2548296
        %v2945 = vadd.f32 %v2913, 0.2548296
        %v2946 = vadd.f32 %v2914, 0.2548296
        %v2947 = vadd.f32 %v2915, 0.2548296
        %v2948 = vadd.f32 %v2916, 0.2548296
        %v2949 = vadd.f32 %v2917, 0.2548296
        %v2950 = vadd.f32 %v2918, 0.2548296
        %v2951 = vadd.f32 %v2919, 0.2548296
        %v2952 = vadd.f32 %v2920, 0.2548296
        %v2953 = vadd.f32 %v2921, 0.2548296
        %v2954 = vadd.f32 %v2922, 0.2548296
        %v2955 = vadd.f32 %v2923, 0.2548296
        %v2956 = vadd.f32 %v2924, 0.2548296
        %v2957 = vadd.f32 %v2925, 0.2548296
        %v2958 = vadd.f32 %v2926, 0.2548296
        %v2959 = vadd.f32 %v2927, 0.2548296
        %v2960 = vadd.f32 %v2928, 0.2548296
        %v2961 = vadd.f32 %v2929, 0.2548296
        %v2962 = vmul.f32 %v2930, %v2240
        %v2963 = vmul.f32 %v2931, %v2255
        %v2964 = vmul.f32 %v2932, %v2270
        %v2965 = vmul.f32 %v2933, %v2285
        %v2966 = vmul.f32 %v2934, %v2300
        %v2967 = vmul.f32 %v2935, %v2315
        %v2968 = vmul.f32 %v2936, %v2330
        %v2969 = vmul.f32 %v2937, %v2345
        %v2970 = vmul.f32 %v2938, %v2360
        %v2971 = vmul.f32 %v2939, %v2375
        %v2972 = vmul.f32 %v2940, %v2390
        %v2973 = vmul.f32 %v2941, %v2405
        %v2974 = vmul.f32 %v2942, %v2420
        %v2975 = vmul.f32 %v2943, %v2435
        %v2976 = vmul.f32 %v2944, %v2450
        %v2977 = vmul.f32 %v2945, %v2465
        %v2978 = vmul.f32 %v2946, %v2480
        %v2979 = vmul.f32 %v2947, %v2495
        %v2980 = vmul.f32 %v2948, %v2510
        %v2981 = vmul.f32 %v2949, %v2525
        %v2982 = vmul.f32 %v2950, %v2540
        %v2983 = vmul.f32 %v2951, %v2555
        %v2984 = vmul.f32 %v2952, %v2570
        %v2985 = vmul.f32 %v2953, %v2585
        %v2986 = vmul.f32 %v2954, %v2600
        %v2987 = vmul.f32 %v2955, %v2615
        %v2988 = vmul.f32 %v2956, %v2630
        %v2989 = vmul.f32 %v2957, %v2645
        %v2990 = vmul.f32 %v2958, %v2660
        %v2991 = vmul.f32 %v2959, %v2675
        %v2992 = vmul.f32 %v2960, %v2690
        %v2993 = vmul.f32 %v2961, %v2705
        %v2994 = vsub.f32 0.0, %v2130
        %v2995 = vsub.f32 0.0, %v2131
        %v2996 = vsub.f32 0.0, %v2132
        %v2997 = vsub.f32 0.0, %v2133
        %v2998 = vsub.f32 0.0, %v2134
        %v2999 = vsub.f32 0.0, %v2135
        %v3000 = vsub.f32 0.0, %v2136
        %v3001 = vsub.f32 0.0, %v2137
        %v3002 = vsub.f32 0.0, %v2138
        %v3003 = vsub.f32 0.0, %v2139
        %v3004 = vsub.f32 0.0, %v2140
        %v3005 = vsub.f32 0.0, %v2141
        %v3006 = vsub.f32 0.0, %v2142
        %v3007 = vsub.f32 0.0, %v2143
        %v3008 = vsub.f32 0.0, %v2144
        %v3009 = vsub.f32 0.0, %v2145
        %v3010 = vsub.f32 0.0, %v2146
        %v3011 = vsub.f32 0.0, %v2147
        %v3012 = vsub.f32 0.0, %v2148
        %v3013 = vsub.f32 0.0, %v2149
        %v3014 = vsub.f32 0.0, %v2150
        %v3015 = vsub.f32 0.0, %v2151
        %v3016 = vsub.f32 0.0, %v2152
        %v3017 = vsub.f32 0.0, %v2153
        %v3018 = vsub.f32 0.0, %v2154
        %v3019 = vsub.f32 0.0, %v2155
        %v3020 = vsub.f32 0.0, %v2156
        %v3021 = vsub.f32 0.0, %v2157
        %v3022 = vsub.f32 0.0, %v2158
        %v3023 = vsub.f32 0.0, %v2159
        %v3024 = vsub.f32 0.0, %v2160
        %v3025 = vsub.f32 0.0, %v2161
        %v3026 = vmul.f32 %v2994, %v2130
        %v3027 = vmul.f32 %v2995, %v2131
        %v3028 = vmul.f32 %v2996, %v2132
        %v3029 = vmul.f32 %v2997, %v2133
        %v3030 = vmul.f32 %v2998, %v2134
        %v3031 = vmul.f32 %v2999, %v2135
        %v3032 = vmul.f32 %v3000, %v2136
        %v3033 = vmul.f32 %v3001, %v2137
        %v3034 = vmul.f32 %v3002, %v2138
        %v3035 = vmul.f32 %v3003, %v2139
        %v3036 = vmul.f32 %v3004, %v2140
        %v3037 = vmul.f32 %v3005, %v2141
        %v3038 = vmul.f32 %v3006, %v2142
        %v3039 = vmul.f32 %v3007, %v2143
        %v3040 = vmul.f32 %v3008, %v2144
        %v3041 = vmul.f32 %v3009, %v2145
        %v3042 = vmul.f32 %v3010, %v2146
        %v3043 = vmul.f32 %v3011, %v2147
        %v3044 = vmul.f32 %v3012, %v2148
        %v3045 = vmul.f32 %v3013, %v2149
        %v3046 = vmul.f32 %v3014, %v2150
        %v3047 = vmul.f32 %v3015, %v2151
        %v3048 = vmul.f32 %v3016, %v2152
        %v3049 = vmul.f32 %v3017, %v2153
        %v3050 = vmul.f32 %v3018, %v2154
        %v3051 = vmul.f32 %v3019, %v2155
        %v3052 = vmul.f32 %v3020, %v2156
        %v3053 = vmul.f32 %v3021, %v2157
        %v3054 = vmul.f32 %v3022, %v2158
        %v3055 = vmul.f32 %v3023, %v2159
        %v3056 = vmul.f32 %v3024, %v2160
        %v3057 = vmul.f32 %v3025, %v2161
        %v3058 = vmul.f32 %v3026, 1.442695
        %v3059 = vpow.pop %v3058
        %v3060 = vmul.f32 %v3027, 1.442695
        %v3061 = vpow.pop %v3060
        %v3062 = vmul.f32 %v3028, 1.442695
        %v3063 = vpow.pop %v3062
        %v3064 = vmul.f32 %v3029, 1.442695
        %v3065 = vpow.pop %v3064
        %v3066 = vmul.f32 %v3030, 1.442695
        %v3067 = vpow.pop %v3066
        %v3068 = vmul.f32 %v3031, 1.442695
        %v3069 = vpow.pop %v3068
        %v3070 = vmul.f32 %v3032, 1.442695
        %v3071 = vpow.pop %v3070
        %v3072 = vmul.f32 %v3033, 1.442695
        %v3073 = vpow.pop %v3072
        %v3074 = vmul.f32 %v3034, 1.442695
        %v3075 = vpow.pop %v3074
        %v3076 = vmul.f32 %v3035, 1.442695
        %v3077 = vpow.pop %v3076
        %v3078 = vmul.f32 %v3036, 1.442695
        %v3079 = vpow.pop %v3078
        %v3080 = vmul.f32 %v3037, 1.442695
        %v3081 = vpow.pop %v3080
        %v3082 = vmul.f32 %v3038, 1.442695
        %v3083 = vpow.pop %v3082
        %v3084 = vmul.f32 %v3039, 1.442695
        %v3085 = vpow.pop %v3084
        %v3086 = vmul.f32 %v3040, 1.442695
        %v3087 = vpow.pop %v3086
        %v3088 = vmul.f32 %v3041, 1.442695
        %v3089 = vpow.pop %v3088
        %v3090 = vmul.f32 %v3042, 1.442695
        %v3091 = vpow.pop %v3090
        %v3092 = vmul.f32 %v3043, 1.442695
        %v3093 = vpow.pop %v3092
        %v3094 = vmul.f32 %v3044, 1.442695
        %v3095 = vpow.pop %v3094
        %v3096 = vmul.f32 %v3045, 1.442695
        %v3097 = vpow.pop %v3096
        %v3098 = vmul.f32 %v3046, 1.442695
        %v3099 = vpow.pop %v3098
        %v3100 = vmul.f32 %v3047, 1.442695
        %v3101 = vpow.pop %v3100
        %v3102 = vmul.f32 %v3048, 1.442695
        %v3103 = vpow.pop %v3102
        %v3104 = vmul.f32 %v3049, 1.442695
        %v3105 = vpow.pop %v3104
        %v3106 = vmul.f32 %v3050, 1.442695
        %v3107 = vpow.pop %v3106
        %v3108 = vmul.f32 %v3051, 1.442695
        %v3109 = vpow.pop %v3108
        %v3110 = vmul.f32 %v3052, 1.442695
        %v3111 = vpow.pop %v3110
        %v3112 = vmul.f32 %v3053, 1.442695
        %v3113 = vpow.pop %v3112
        %v3114 = vmul.f32 %v3054, 1.442695
        %v3115 = vpow.pop %v3114
        %v3116 = vmul.f32 %v3055, 1.442695
        %v3117 = vpow.pop %v3116
        %v3118 = vmul.f32 %v3056, 1.442695
        %v3119 = vpow.pop %v3118
        %v3120 = vmul.f32 %v3057, 1.442695
        %v3121 = vpow.pop %v3120
        %v3122 = vmul.f32 %v2962, %v3059
        %v3123 = vmul.f32 %v2963, %v3061
        %v3124 = vmul.f32 %v2964, %v3063
        %v3125 = vmul.f32 %v2965, %v3065
        %v3126 = vmul.f32 %v2966, %v3067
        %v3127 = vmul.f32 %v2967, %v3069
        %v3128 = vmul.f32 %v2968, %v3071
        %v3129 = vmul.f32 %v2969, %v3073
        %v3130 = vmul.f32 %v2970, %v3075
        %v3131 = vmul.f32 %v2971, %v3077
        %v3132 = vmul.f32 %v2972, %v3079
        %v3133 = vmul.f32 %v2973, %v3081
        %v3134 = vmul.f32 %v2974, %v3083
        %v3135 = vmul.f32 %v2975, %v3085
        %v3136 = vmul.f32 %v2976, %v3087
        %v3137 = vmul.f32 %v2977, %v3089
        %v3138 = vmul.f32 %v2978, %v3091
        %v3139 = vmul.f32 %v2979, %v3093
        %v3140 = vmul.f32 %v2980, %v3095
        %v3141 = vmul.f32 %v2981, %v3097
        %v3142 = vmul.f32 %v2982, %v3099
        %v3143 = vmul.f32 %v2983, %v3101
        %v3144 = vmul.f32 %v2984, %v3103
        %v3145 = vmul.f32 %v2985, %v3105
        %v3146 = vmul.f32 %v2986, %v3107
        %v3147 = vmul.f32 %v2987, %v3109
        %v3148 = vmul.f32 %v2988, %v3111
        %v3149 = vmul.f32 %v2989, %v3113
        %v3150 = vmul.f32 %v2990, %v3115
        %v3151 = vmul.f32 %v2991, %v3117
        %v3152 = vmul.f32 %v2992, %v3119
        %v3153 = vmul.f32 %v2993, %v3121
        %v3154 = vsub.f32 1.0, %v3122
        %v3155 = vsub.f32 1.0, %v3123
        %v3156 = vsub.f32 1.0, %v3124
        %v3157 = vsub.f32 1.0, %v3125
        %v3158 = vsub.f32 1.0, %v3126
        %v3159 = vsub.f32 1.0, %v3127
        %v3160 = vsub.f32 1.0, %v3128
        %v3161 = vsub.f32 1.0, %v3129
        %v3162 = vsub.f32 1.0, %v3130
        %v3163 = vsub.f32 1.0, %v3131
        %v3164 = vsub.f32 1.0, %v3132
        %v3165 = vsub.f32 1.0, %v3133
        %v3166 = vsub.f32 1.0, %v3134
        %v3167 = vsub.f32 1.0, %v3135
        %v3168 = vsub.f32 1.0, %v3136
        %v3169 = vsub.f32 1.0, %v3137
        %v3170 = vsub.f32 1.0, %v3138
        %v3171 = vsub.f32 1.0, %v3139
        %v3172 = vsub.f32 1.0, %v3140
        %v3173 = vsub.f32 1.0, %v3141
        %v3174 = vsub.f32 1.0, %v3142
        %v3175 = vsub.f32 1.0, %v3143
        %v3176 = vsub.f32 1.0, %v3144
        %v3177 = vsub.f32 1.0, %v3145
        %v3178 = vsub.f32 1.0, %v3146
        %v3179 = vsub.f32 1.0, %v3147
        %v3180 = vsub.f32 1.0, %v3148
        %v3181 = vsub.f32 1.0, %v3149
        %v3182 = vsub.f32 1.0, %v3150
        %v3183 = vsub.f32 1.0, %v3151
        %v3184 = vsub.f32 1.0, %v3152
        %v3185 = vsub.f32 1.0, %v3153
        %vm3186 = vcmp.lt.f32.partialorder %v2098, 0.0
        %vm3187 = vcmp.lt.f32.partialorder %v2099, 0.0
        %vm3188 = vcmp.lt.f32.partialorder %v2100, 0.0
        %vm3189 = vcmp.lt.f32.partialorder %v2101, 0.0
        %vm3190 = vcmp.lt.f32.partialorder %v2102, 0.0
        %vm3191 = vcmp.lt.f32.partialorder %v2103, 0.0
        %vm3192 = vcmp.lt.f32.partialorder %v2104, 0.0
        %vm3193 = vcmp.lt.f32.partialorder %v2105, 0.0
        %vm3194 = vcmp.lt.f32.partialorder %v2106, 0.0
        %vm3195 = vcmp.lt.f32.partialorder %v2107, 0.0
        %vm3196 = vcmp.lt.f32.partialorder %v2108, 0.0
        %vm3197 = vcmp.lt.f32.partialorder %v2109, 0.0
        %vm3198 = vcmp.lt.f32.partialorder %v2110, 0.0
        %vm3199 = vcmp.lt.f32.partialorder %v2111, 0.0
        %vm3200 = vcmp.lt.f32.partialorder %v2112, 0.0
        %vm3201 = vcmp.lt.f32.partialorder %v2113, 0.0
        %vm3202 = vcmp.lt.f32.partialorder %v2114, 0.0
        %vm3203 = vcmp.lt.f32.partialorder %v2115, 0.0
        %vm3204 = vcmp.lt.f32.partialorder %v2116, 0.0
        %vm3205 = vcmp.lt.f32.partialorder %v2117, 0.0
        %vm3206 = vcmp.lt.f32.partialorder %v2118, 0.0
        %vm3207 = vcmp.lt.f32.partialorder %v2119, 0.0
        %vm3208 = vcmp.lt.f32.partialorder %v2120, 0.0
        %vm3209 = vcmp.lt.f32.partialorder %v2121, 0.0
        %vm3210 = vcmp.lt.f32.partialorder %v2122, 0.0
        %vm3211 = vcmp.lt.f32.partialorder %v2123, 0.0
        %vm3212 = vcmp.lt.f32.partialorder %v2124, 0.0
        %vm3213 = vcmp.lt.f32.partialorder %v2125, 0.0
        %vm3214 = vcmp.lt.f32.partialorder %v2126, 0.0
        %vm3215 = vcmp.lt.f32.partialorder %v2127, 0.0
        %vm3216 = vcmp.lt.f32.partialorder %v2128, 0.0
        %vm3217 = vcmp.lt.f32.partialorder %v2129, 0.0
        %v3218 = vsub.f32 0.0, %v3154
        %v3219 = vsub.f32 0.0, %v3155
        %v3220 = vsub.f32 0.0, %v3156
        %v3221 = vsub.f32 0.0, %v3157
        %v3222 = vsub.f32 0.0, %v3158
        %v3223 = vsub.f32 0.0, %v3159
        %v3224 = vsub.f32 0.0, %v3160
        %v3225 = vsub.f32 0.0, %v3161
        %v3226 = vsub.f32 0.0, %v3162
        %v3227 = vsub.f32 0.0, %v3163
        %v3228 = vsub.f32 0.0, %v3164
        %v3229 = vsub.f32 0.0, %v3165
        %v3230 = vsub.f32 0.0, %v3166
        %v3231 = vsub.f32 0.0, %v3167
        %v3232 = vsub.f32 0.0, %v3168
        %v3233 = vsub.f32 0.0, %v3169
        %v3234 = vsub.f32 0.0, %v3170
        %v3235 = vsub.f32 0.0, %v3171
        %v3236 = vsub.f32 0.0, %v3172
        %v3237 = vsub.f32 0.0, %v3173
        %v3238 = vsub.f32 0.0, %v3174
        %v3239 = vsub.f32 0.0, %v3175
        %v3240 = vsub.f32 0.0, %v3176
        %v3241 = vsub.f32 0.0, %v3177
        %v3242 = vsub.f32 0.0, %v3178
        %v3243 = vsub.f32 0.0, %v3179
        %v3244 = vsub.f32 0.0, %v3180
        %v3245 = vsub.f32 0.0, %v3181
        %v3246 = vsub.f32 0.0, %v3182
        %v3247 = vsub.f32 0.0, %v3183
        %v3248 = vsub.f32 0.0, %v3184
        %v3249 = vsub.f32 0.0, %v3185
        %v3250 = vsel %vm3186, %v3218, %v3154
        %v3251 = vsel %vm3187, %v3219, %v3155
        %v3252 = vsel %vm3188, %v3220, %v3156
        %v3253 = vsel %vm3189, %v3221, %v3157
        %v3254 = vsel %vm3190, %v3222, %v3158
        %v3255 = vsel %vm3191, %v3223, %v3159
        %v3256 = vsel %vm3192, %v3224, %v3160
        %v3257 = vsel %vm3193, %v3225, %v3161
        %v3258 = vsel %vm3194, %v3226, %v3162
        %v3259 = vsel %vm3195, %v3227, %v3163
        %v3260 = vsel %vm3196, %v3228, %v3164
        %v3261 = vsel %vm3197, %v3229, %v3165
        %v3262 = vsel %vm3198, %v3230, %v3166
        %v3263 = vsel %vm3199, %v3231, %v3167
        %v3264 = vsel %vm3200, %v3232, %v3168
        %v3265 = vsel %vm3201, %v3233, %v3169
        %v3266 = vsel %vm3202, %v3234, %v3170
        %v3267 = vsel %vm3203, %v3235, %v3171
        %v3268 = vsel %vm3204, %v3236, %v3172
        %v3269 = vsel %vm3205, %v3237, %v3173
        %v3270 = vsel %vm3206, %v3238, %v3174
        %v3271 = vsel %vm3207, %v3239, %v3175
        %v3272 = vsel %vm3208, %v3240, %v3176
        %v3273 = vsel %vm3209, %v3241, %v3177
        %v3274 = vsel %vm3210, %v3242, %v3178
        %v3275 = vsel %vm3211, %v3243, %v3179
        %v3276 = vsel %vm3212, %v3244, %v3180
        %v3277 = vsel %vm3213, %v3245, %v3181
        %v3278 = vsel %vm3214, %v3246, %v3182
        %v3279 = vsel %vm3215, %v3247, %v3183
        %v3280 = vsel %vm3216, %v3248, %v3184
        %v3281 = vsel %vm3217, %v3249, %v3185
        %v3282 = vadd.f32 %v3250, 1.0
        %v3283 = vadd.f32 %v3251, 1.0
        %v3284 = vadd.f32 %v3252, 1.0
        %v3285 = vadd.f32 %v3253, 1.0
        %v3286 = vadd.f32 %v3254, 1.0
        %v3287 = vadd.f32 %v3255, 1.0
        %v3288 = vadd.f32 %v3256, 1.0
        %v3289 = vadd.f32 %v3257, 1.0
        %v3290 = vadd.f32 %v3258, 1.0
        %v3291 = vadd.f32 %v3259, 1.0
        %v3292 = vadd.f32 %v3260, 1.0
        %v3293 = vadd.f32 %v3261, 1.0
        %v3294 = vadd.f32 %v3262, 1.0
        %v3295 = vadd.f32 %v3263, 1.0
        %v3296 = vadd.f32 %v3264, 1.0
        %v3297 = vadd.f32 %v3265, 1.0
        %v3298 = vadd.f32 %v3266, 1.0
        %v3299 = vadd.f32 %v3267, 1.0
        %v3300 = vadd.f32 %v3268, 1.0
        %v3301 = vadd.f32 %v3269, 1.0
        %v3302 = vadd.f32 %v3270, 1.0
        %v3303 = vadd.f32 %v3271, 1.0
        %v3304 = vadd.f32 %v3272, 1.0
        %v3305 = vadd.f32 %v3273, 1.0
        %v3306 = vadd.f32 %v3274, 1.0
        %v3307 = vadd.f32 %v3275, 1.0
        %v3308 = vadd.f32 %v3276, 1.0
        %v3309 = vadd.f32 %v3277, 1.0
        %v3310 = vadd.f32 %v3278, 1.0
        %v3311 = vadd.f32 %v3279, 1.0
        %v3312 = vadd.f32 %v3280, 1.0
        %v3313 = vadd.f32 %v3281, 1.0
        %v3314 = vmul.f32 %v2059, %v3282
        %v3315 = vmul.f32 %v2060, %v3283
        %v3316 = vmul.f32 %v2061, %v3284
        %v3317 = vmul.f32 %v2062, %v3285
        %v3318 = vmul.f32 %v2063, %v3286
        %v3319 = vmul.f32 %v2064, %v3287
        %v3320 = vmul.f32 %v2065, %v3288
        %v3321 = vmul.f32 %v2066, %v3289
        %v3322 = vmul.f32 %v2067, %v3290
        %v3323 = vmul.f32 %v2068, %v3291
        %v3324 = vmul.f32 %v2069, %v3292
        %v3325 = vmul.f32 %v2070, %v3293
        %v3326 = vmul.f32 %v2071, %v3294
        %v3327 = vmul.f32 %v2072, %v3295
        %v3328 = vmul.f32 %v2073, %v3296
        %v3329 = vmul.f32 %v2074, %v3297
        %v3330 = vmul.f32 %v2075, %v3298
        %v3331 = vmul.f32 %v2076, %v3299
        %v3332 = vmul.f32 %v2077, %v3300
        %v3333 = vmul.f32 %v2078, %v3301
        %v3334 = vmul.f32 %v2079, %v3302
        %v3335 = vmul.f32 %v2080, %v3303
        %v3336 = vmul.f32 %v2081, %v3304
        %v3337 = vmul.f32 %v2082, %v3305
        %v3338 = vmul.f32 %v2083, %v3306
        %v3339 = vmul.f32 %v2084, %v3307
        %v3340 = vmul.f32 %v2085, %v3308
        %v3341 = vmul.f32 %v2086, %v3309
        %v3342 = vmul.f32 %v2087, %v3310
        %v3343 = vmul.f32 %v2088, %v3311
        %v3344 = vmul.f32 %v2089, %v3312
        %v3345 = vmul.f32 %v2090, %v3313
        %v3346 = vmul.f32 %v3314, %v758
        %v3347 = vmul.f32 %v3315, %v761
        %v3348 = vmul.f32 %v3316, %v764
        %v3349 = vmul.f32 %v3317, %v767
        %v3350 = vmul.f32 %v3318, %v770
        %v3351 = vmul.f32 %v3319, %v773
        %v3352 = vmul.f32 %v3320, %v776
        %v3353 = vmul.f32 %v3321, %v779
        %v3354 = vmul.f32 %v3322, %v782
        %v3355 = vmul.f32 %v3323, %v785
        %v3356 = vmul.f32 %v3324, %v788
        %v3357 = vmul.f32 %v3325, %v791
        %v3358 = vmul.f32 %v3326, %v794
        %v3359 = vmul.f32 %v3327, %v797
        %v3360 = vmul.f32 %v3328, %v800
        %v3361 = vmul.f32 %v3329, %v803
        %v3362 = vmul.f32 %v3330, %v806
        %v3363 = vmul.f32 %v3331, %v809
        %v3364 = vmul.f32 %v3332, %v812
        %v3365 = vmul.f32 %v3333, %v815
        %v3366 = vmul.f32 %v3334, %v818
        %v3367 = vmul.f32 %v3335, %v821
        %v3368 = vmul.f32 %v3336, %v824
        %v3369 = vmul.f32 %v3337, %v827
        %v3370 = vmul.f32 %v3338, %v830
        %v3371 = vmul.f32 %v3339, %v833
        %v3372 = vmul.f32 %v3340, %v836
        %v3373 = vmul.f32 %v3341, %v839
        %v3374 = vmul.f32 %v3342, %v842
        %v3375 = vmul.f32 %v3343, %v845
        %v3376 = vmul.f32 %v3344, %v848
        %v3377 = vmul.f32 %v3345, %v851
        %v3378 = vadd.f32 %v3346, 0.0
        %v3379 = vadd.f32 %v3347, 0.0
        %v3380 = vadd.f32 %v3348, 0.0
        %v3381 = vadd.f32 %v3349, 0.0
        %v3382 = vadd.f32 %v3350, 0.0
        %v3383 = vadd.f32 %v3351, 0.0
        %v3384 = vadd.f32 %v3352, 0.0
        %v3385 = vadd.f32 %v3353, 0.0
        %v3386 = vadd.f32 %v3354, 0.0
        %v3387 = vadd.f32 %v3355, 0.0
        %v3388 = vadd.f32 %v3356, 0.0
        %v3389 = vadd.f32 %v3357, 0.0
        %v3390 = vadd.f32 %v3358, 0.0
        %v3391 = vadd.f32 %v3359, 0.0
        %v3392 = vadd.f32 %v3360, 0.0
        %v3393 = vadd.f32 %v3361, 0.0
        %v3394 = vadd.f32 %v3362, 0.0
        %v3395 = vadd.f32 %v3363, 0.0
        %v3396 = vadd.f32 %v3364, 0.0
        %v3397 = vadd.f32 %v3365, 0.0
        %v3398 = vadd.f32 %v3366, 0.0
        %v3399 = vadd.f32 %v3367, 0.0
        %v3400 = vadd.f32 %v3368, 0.0
        %v3401 = vadd.f32 %v3369, 0.0
        %v3402 = vadd.f32 %v3370, 0.0
        %v3403 = vadd.f32 %v3371, 0.0
        %v3404 = vadd.f32 %v3372, 0.0
        %v3405 = vadd.f32 %v3373, 0.0
        %v3406 = vadd.f32 %v3374, 0.0
        %v3407 = vadd.f32 %v3375, 0.0
        %v3408 = vadd.f32 %v3376, 0.0
        %v3409 = vadd.f32 %v3377, 0.0
        %3410 = vst.msk [vmem:[%s1140 + $0x2] sm:$0xff] %vm417, %v3314
        %3411 = vst.msk [vmem:[%s1140 + $0xa] sm:$0xff] %vm417, %v3315
        %3412 = vst.msk [vmem:[%s1140 + $0x1a] sm:$0xff] %vm417, %v3316
        %3413 = vst.msk [vmem:[%s1140 + $0x22] sm:$0xff] %vm417, %v3317
        %3414 = vst.msk [vmem:[%s1140 + $0x32] sm:$0xff] %vm417, %v3318
        %3415 = vst.msk [vmem:[%s1140 + $0x3a] sm:$0xff] %vm417, %v3319
        %3416 = vst.msk [vmem:[%s1140 + $0x4a] sm:$0xff] %vm417, %v3320
        %3417 = vst.msk [vmem:[%s1140 + $0x52] sm:$0xff] %vm417, %v3321
        %3418 = vst.msk [vmem:[%s1140 + $0x62] sm:$0xff] %vm417, %v3322
        %3419 = vst.msk [vmem:[%s1140 + $0x6a] sm:$0xff] %vm417, %v3323
        %3420 = vst.msk [vmem:[%s1140 + $0x7a] sm:$0xff] %vm417, %v3324
        %3421 = vst.msk [vmem:[%s1140 + $0x82] sm:$0xff] %vm417, %v3325
        %3422 = vst.msk [vmem:[%s1140 + $0x92] sm:$0xff] %vm417, %v3326
        %3423 = vst.msk [vmem:[%s1140 + $0x9a] sm:$0xff] %vm417, %v3327
        %3424 = vst.msk [vmem:[%s1140 + $0xaa] sm:$0xff] %vm417, %v3328
        %3425 = vst.msk [vmem:[%s1140 + $0xb2] sm:$0xff] %vm417, %v3329
        %3426 = vst.msk [vmem:[%s1140 + $0xc2] sm:$0xff] %vm417, %v3330
        %3427 = vst.msk [vmem:[%s1140 + $0xca] sm:$0xff] %vm417, %v3331
        %3428 = vst.msk [vmem:[%s1140 + $0xda] sm:$0xff] %vm417, %v3332
        %3429 = vst.msk [vmem:[%s1140 + $0xe2] sm:$0xff] %vm417, %v3333
        %3430 = vst.msk [vmem:[%s1140 + $0xf2] sm:$0xff] %vm417, %v3334
        %3431 = vst.msk [vmem:[%s1140 + $0xfa] sm:$0xff] %vm417, %v3335
        %3432 = vst.msk [vmem:[%s1140 + $0x10a] sm:$0xff] %vm417, %v3336
        %3433 = vst.msk [vmem:[%s1140 + $0x112] sm:$0xff] %vm417, %v3337
        %3434 = vst.msk [vmem:[%s1140 + $0x122] sm:$0xff] %vm417, %v3338
        %3435 = vst.msk [vmem:[%s1140 + $0x12a] sm:$0xff] %vm417, %v3339
        %3436 = vst.msk [vmem:[%s1140 + $0x13a] sm:$0xff] %vm417, %v3340
        %3437 = vst.msk [vmem:[%s1140 + $0x142] sm:$0xff] %vm417, %v3341
        %3438 = vst.msk [vmem:[%s1140 + $0x152] sm:$0xff] %vm417, %v3342
        %3439 = vst.msk [vmem:[%s1140 + $0x15a] sm:$0xff] %vm417, %v3343
        %3440 = vst.msk [vmem:[%s1140 + $0x16a] sm:$0xff] %vm417, %v3344
        %3441 = vst.msk [vmem:[%s1140 + $0x172] sm:$0xff] %vm417, %v3345
        %v3442 = vld [vmem:[%s4] sm:$0x1]
        %v3443 = vld [vmem:[#allocation2] sm:$0xff]
        %v3444 = vld [vmem:[#allocation2 + $0x8] sm:$0xff]
        %v3445 = vld [vmem:[#allocation2 + $0x18] sm:$0xff]
        %v3446 = vld [vmem:[#allocation2 + $0x20] sm:$0xff]
        %v3447 = vld [vmem:[#allocation2 + $0x30] sm:$0xff]
        %v3448 = vld [vmem:[#allocation2 + $0x38] sm:$0xff]
        %v3449 = vld [vmem:[#allocation2 + $0x48] sm:$0xff]
        %v3450 = vld [vmem:[#allocation2 + $0x50] sm:$0xff]
        %v3451 = vld [vmem:[#allocation2 + $0x60] sm:$0xff]
        %v3452 = vld [vmem:[#allocation2 + $0x68] sm:$0xff]
        %v3453 = vld [vmem:[#allocation2 + $0x78] sm:$0xff]
        %v3454 = vld [vmem:[#allocation2 + $0x80] sm:$0xff]
        %v3455 = vld [vmem:[#allocation2 + $0x90] sm:$0xff]
        %v3456 = vld [vmem:[#allocation2 + $0x98] sm:$0xff]
        %v3457 = vld [vmem:[#allocation2 + $0xa8] sm:$0xff]
        %v3458 = vld [vmem:[#allocation2 + $0xb0] sm:$0xff]
        %v3459 = vld [vmem:[#allocation2 + $0xc0] sm:$0xff]
        %v3460 = vld [vmem:[#allocation2 + $0xc8] sm:$0xff]
        %v3461 = vld [vmem:[#allocation2 + $0xd8] sm:$0xff]
        %v3462 = vld [vmem:[#allocation2 + $0xe0] sm:$0xff]
        %v3463 = vld [vmem:[#allocation2 + $0xf0] sm:$0xff]
        %v3464 = vld [vmem:[#allocation2 + $0xf8] sm:$0xff]
        %v3465 = vld [vmem:[#allocation2 + $0x108] sm:$0xff]
        %v3466 = vld [vmem:[#allocation2 + $0x110] sm:$0xff]
        %v3467 = vld [vmem:[#allocation2 + $0x120] sm:$0xff]
        %v3468 = vld [vmem:[#allocation2 + $0x128] sm:$0xff]
        %v3469 = vld [vmem:[#allocation2 + $0x138] sm:$0xff]
        %v3470 = vld [vmem:[#allocation2 + $0x140] sm:$0xff]
        %v3471 = vld [vmem:[#allocation2 + $0x150] sm:$0xff]
        %v3472 = vld [vmem:[#allocation2 + $0x158] sm:$0xff]
        %v3473 = vld [vmem:[#allocation2 + $0x168] sm:$0xff]
        %v3474 = vld [vmem:[#allocation2 + $0x170] sm:$0xff]
        %v3475 = vperm.slane %v3442, 0
        %v3476 = vmul.f32 %v3443, %v3475
        %v3477 = vmul.f32 %v3444, %v3475
        %v3478 = vmul.f32 %v3445, %v3475
        %v3479 = vmul.f32 %v3446, %v3475
        %v3480 = vmul.f32 %v3447, %v3475
        %v3481 = vmul.f32 %v3448, %v3475
        %v3482 = vmul.f32 %v3449, %v3475
        %v3483 = vmul.f32 %v3450, %v3475
        %v3484 = vmul.f32 %v3451, %v3475
        %v3485 = vmul.f32 %v3452, %v3475
        %v3486 = vmul.f32 %v3453, %v3475
        %v3487 = vmul.f32 %v3454, %v3475
        %v3488 = vmul.f32 %v3455, %v3475
        %v3489 = vmul.f32 %v3456, %v3475
        %v3490 = vmul.f32 %v3457, %v3475
        %v3491 = vmul.f32 %v3458, %v3475
        %v3492 = vmul.f32 %v3459, %v3475
        %v3493 = vmul.f32 %v3460, %v3475
        %v3494 = vmul.f32 %v3461, %v3475
        %v3495 = vmul.f32 %v3462, %v3475
        %v3496 = vmul.f32 %v3463, %v3475
        %v3497 = vmul.f32 %v3464, %v3475
        %v3498 = vmul.f32 %v3465, %v3475
        %v3499 = vmul.f32 %v3466, %v3475
        %v3500 = vmul.f32 %v3467, %v3475
        %v3501 = vmul.f32 %v3468, %v3475
        %v3502 = vmul.f32 %v3469, %v3475
        %v3503 = vmul.f32 %v3470, %v3475
        %v3504 = vmul.f32 %v3471, %v3475
        %v3505 = vmul.f32 %v3472, %v3475
        %v3506 = vmul.f32 %v3473, %v3475
        %v3507 = vmul.f32 %v3474, %v3475
        %v3508 = vadd.f32 %v3476, 0.0
        %v3509 = vadd.f32 %v3477, 0.0
        %v3510 = vadd.f32 %v3478, 0.0
        %v3511 = vadd.f32 %v3479, 0.0
        %v3512 = vadd.f32 %v3480, 0.0
        %v3513 = vadd.f32 %v3481, 0.0
        %v3514 = vadd.f32 %v3482, 0.0
        %v3515 = vadd.f32 %v3483, 0.0
        %v3516 = vadd.f32 %v3484, 0.0
        %v3517 = vadd.f32 %v3485, 0.0
        %v3518 = vadd.f32 %v3486, 0.0
        %v3519 = vadd.f32 %v3487, 0.0
        %v3520 = vadd.f32 %v3488, 0.0
        %v3521 = vadd.f32 %v3489, 0.0
        %v3522 = vadd.f32 %v3490, 0.0
        %v3523 = vadd.f32 %v3491, 0.0
        %v3524 = vadd.f32 %v3492, 0.0
        %v3525 = vadd.f32 %v3493, 0.0
        %v3526 = vadd.f32 %v3494, 0.0
        %v3527 = vadd.f32 %v3495, 0.0
        %v3528 = vadd.f32 %v3496, 0.0
        %v3529 = vadd.f32 %v3497, 0.0
        %v3530 = vadd.f32 %v3498, 0.0
        %v3531 = vadd.f32 %v3499, 0.0
        %v3532 = vadd.f32 %v3500, 0.0
        %v3533 = vadd.f32 %v3501, 0.0
        %v3534 = vadd.f32 %v3502, 0.0
        %v3535 = vadd.f32 %v3503, 0.0
        %v3536 = vadd.f32 %v3504, 0.0
        %v3537 = vadd.f32 %v3505, 0.0
        %v3538 = vadd.f32 %v3506, 0.0
        %v3539 = vadd.f32 %v3507, 0.0
        %v3540 = vld [vmem:[%s4 + $0x1] sm:$0x1]
        %v3541 = vld [vmem:[#allocation2 + $0x1] sm:$0xff]
        %v3542 = vld [vmem:[#allocation2 + $0x9] sm:$0xff]
        %v3543 = vld [vmem:[#allocation2 + $0x19] sm:$0xff]
        %v3544 = vld [vmem:[#allocation2 + $0x21] sm:$0xff]
        %v3545 = vld [vmem:[#allocation2 + $0x31] sm:$0xff]
        %v3546 = vld [vmem:[#allocation2 + $0x39] sm:$0xff]
        %v3547 = vld [vmem:[#allocation2 + $0x49] sm:$0xff]
        %v3548 = vld [vmem:[#allocation2 + $0x51] sm:$0xff]
        %v3549 = vld [vmem:[#allocation2 + $0x61] sm:$0xff]
        %v3550 = vld [vmem:[#allocation2 + $0x69] sm:$0xff]
        %v3551 = vld [vmem:[#allocation2 + $0x79] sm:$0xff]
        %v3552 = vld [vmem:[#allocation2 + $0x81] sm:$0xff]
        %v3553 = vld [vmem:[#allocation2 + $0x91] sm:$0xff]
        %v3554 = vld [vmem:[#allocation2 + $0x99] sm:$0xff]
        %v3555 = vld [vmem:[#allocation2 + $0xa9] sm:$0xff]
        %v3556 = vld [vmem:[#allocation2 + $0xb1] sm:$0xff]
        %v3557 = vld [vmem:[#allocation2 + $0xc1] sm:$0xff]
        %v3558 = vld [vmem:[#allocation2 + $0xc9] sm:$0xff]
        %v3559 = vld [vmem:[#allocation2 + $0xd9] sm:$0xff]
        %v3560 = vld [vmem:[#allocation2 + $0xe1] sm:$0xff]
        %v3561 = vld [vmem:[#allocation2 + $0xf1] sm:$0xff]
        %v3562 = vld [vmem:[#allocation2 + $0xf9] sm:$0xff]
        %v3563 = vld [vmem:[#allocation2 + $0x109] sm:$0xff]
        %v3564 = vld [vmem:[#allocation2 + $0x111] sm:$0xff]
        %v3565 = vld [vmem:[#allocation2 + $0x121] sm:$0xff]
        %v3566 = vld [vmem:[#allocation2 + $0x129] sm:$0xff]
        %v3567 = vld [vmem:[#allocation2 + $0x139] sm:$0xff]
        %v3568 = vld [vmem:[#allocation2 + $0x141] sm:$0xff]
        %v3569 = vld [vmem:[#allocation2 + $0x151] sm:$0xff]
        %v3570 = vld [vmem:[#allocation2 + $0x159] sm:$0xff]
        %v3571 = vld [vmem:[#allocation2 + $0x169] sm:$0xff]
        %v3572 = vld [vmem:[#allocation2 + $0x171] sm:$0xff]
        %v3573 = vperm.slane %v3540, 0
        %v3574 = vmul.f32 %v3541, %v3573
        %v3575 = vmul.f32 %v3542, %v3573
        %v3576 = vmul.f32 %v3543, %v3573
        %v3577 = vmul.f32 %v3544, %v3573
        %v3578 = vmul.f32 %v3545, %v3573
        %v3579 = vmul.f32 %v3546, %v3573
        %v3580 = vmul.f32 %v3547, %v3573
        %v3581 = vmul.f32 %v3548, %v3573
        %v3582 = vmul.f32 %v3549, %v3573
        %v3583 = vmul.f32 %v3550, %v3573
        %v3584 = vmul.f32 %v3551, %v3573
        %v3585 = vmul.f32 %v3552, %v3573
        %v3586 = vmul.f32 %v3553, %v3573
        %v3587 = vmul.f32 %v3554, %v3573
        %v3588 = vmul.f32 %v3555, %v3573
        %v3589 = vmul.f32 %v3556, %v3573
        %v3590 = vmul.f32 %v3557, %v3573
        %v3591 = vmul.f32 %v3558, %v3573
        %v3592 = vmul.f32 %v3559, %v3573
        %v3593 = vmul.f32 %v3560, %v3573
        %v3594 = vmul.f32 %v3561, %v3573
        %v3595 = vmul.f32 %v3562, %v3573
        %v3596 = vmul.f32 %v3563, %v3573
        %v3597 = vmul.f32 %v3564, %v3573
        %v3598 = vmul.f32 %v3565, %v3573
        %v3599 = vmul.f32 %v3566, %v3573
        %v3600 = vmul.f32 %v3567, %v3573
        %v3601 = vmul.f32 %v3568, %v3573
        %v3602 = vmul.f32 %v3569, %v3573
        %v3603 = vmul.f32 %v3570, %v3573
        %v3604 = vmul.f32 %v3571, %v3573
        %v3605 = vmul.f32 %v3572, %v3573
        %v3606 = vadd.f32 %v3508, %v3574
        %v3607 = vadd.f32 %v3509, %v3575
        %v3608 = vadd.f32 %v3510, %v3576
        %v3609 = vadd.f32 %v3511, %v3577
        %v3610 = vadd.f32 %v3512, %v3578
        %v3611 = vadd.f32 %v3513, %v3579
        %v3612 = vadd.f32 %v3514, %v3580
        %v3613 = vadd.f32 %v3515, %v3581
        %v3614 = vadd.f32 %v3516, %v3582
        %v3615 = vadd.f32 %v3517, %v3583
        %v3616 = vadd.f32 %v3518, %v3584
        %v3617 = vadd.f32 %v3519, %v3585
        %v3618 = vadd.f32 %v3520, %v3586
        %v3619 = vadd.f32 %v3521, %v3587
        %v3620 = vadd.f32 %v3522, %v3588
        %v3621 = vadd.f32 %v3523, %v3589
        %v3622 = vadd.f32 %v3524, %v3590
        %v3623 = vadd.f32 %v3525, %v3591
        %v3624 = vadd.f32 %v3526, %v3592
        %v3625 = vadd.f32 %v3527, %v3593
        %v3626 = vadd.f32 %v3528, %v3594
        %v3627 = vadd.f32 %v3529, %v3595
        %v3628 = vadd.f32 %v3530, %v3596
        %v3629 = vadd.f32 %v3531, %v3597
        %v3630 = vadd.f32 %v3532, %v3598
        %v3631 = vadd.f32 %v3533, %v3599
        %v3632 = vadd.f32 %v3534, %v3600
        %v3633 = vadd.f32 %v3535, %v3601
        %v3634 = vadd.f32 %v3536, %v3602
        %v3635 = vadd.f32 %v3537, %v3603
        %v3636 = vadd.f32 %v3538, %v3604
        %v3637 = vadd.f32 %v3539, %v3605
        %v3638 = vld [vmem:[%s4 + $0x2] sm:$0x1]
        %v3639 = vld [vmem:[#allocation2 + $0x2] sm:$0xff]
        %v3640 = vld [vmem:[#allocation2 + $0xa] sm:$0xff]
        %v3641 = vld [vmem:[#allocation2 + $0x1a] sm:$0xff]
        %v3642 = vld [vmem:[#allocation2 + $0x22] sm:$0xff]
        %v3643 = vld [vmem:[#allocation2 + $0x32] sm:$0xff]
        %v3644 = vld [vmem:[#allocation2 + $0x3a] sm:$0xff]
        %v3645 = vld [vmem:[#allocation2 + $0x4a] sm:$0xff]
        %v3646 = vld [vmem:[#allocation2 + $0x52] sm:$0xff]
        %v3647 = vld [vmem:[#allocation2 + $0x62] sm:$0xff]
        %v3648 = vld [vmem:[#allocation2 + $0x6a] sm:$0xff]
        %v3649 = vld [vmem:[#allocation2 + $0x7a] sm:$0xff]
        %v3650 = vld [vmem:[#allocation2 + $0x82] sm:$0xff]
        %v3651 = vld [vmem:[#allocation2 + $0x92] sm:$0xff]
        %v3652 = vld [vmem:[#allocation2 + $0x9a] sm:$0xff]
        %v3653 = vld [vmem:[#allocation2 + $0xaa] sm:$0xff]
        %v3654 = vld [vmem:[#allocation2 + $0xb2] sm:$0xff]
        %v3655 = vld [vmem:[#allocation2 + $0xc2] sm:$0xff]
        %v3656 = vld [vmem:[#allocation2 + $0xca] sm:$0xff]
        %v3657 = vld [vmem:[#allocation2 + $0xda] sm:$0xff]
        %v3658 = vld [vmem:[#allocation2 + $0xe2] sm:$0xff]
        %v3659 = vld [vmem:[#allocation2 + $0xf2] sm:$0xff]
        %v3660 = vld [vmem:[#allocation2 + $0xfa] sm:$0xff]
        %v3661 = vld [vmem:[#allocation2 + $0x10a] sm:$0xff]
        %v3662 = vld [vmem:[#allocation2 + $0x112] sm:$0xff]
        %v3663 = vld [vmem:[#allocation2 + $0x122] sm:$0xff]
        %v3664 = vld [vmem:[#allocation2 + $0x12a] sm:$0xff]
        %v3665 = vld [vmem:[#allocation2 + $0x13a] sm:$0xff]
        %v3666 = vld [vmem:[#allocation2 + $0x142] sm:$0xff]
        %v3667 = vld [vmem:[#allocation2 + $0x152] sm:$0xff]
        %v3668 = vld [vmem:[#allocation2 + $0x15a] sm:$0xff]
        %v3669 = vld [vmem:[#allocation2 + $0x16a] sm:$0xff]
        %v3670 = vld [vmem:[#allocation2 + $0x172] sm:$0xff]
        %v3671 = vperm.slane %v3638, 0
        %v3672 = vmul.f32 %v3639, %v3671
        %v3673 = vmul.f32 %v3640, %v3671
        %v3674 = vmul.f32 %v3641, %v3671
        %v3675 = vmul.f32 %v3642, %v3671
        %v3676 = vmul.f32 %v3643, %v3671
        %v3677 = vmul.f32 %v3644, %v3671
        %v3678 = vmul.f32 %v3645, %v3671
        %v3679 = vmul.f32 %v3646, %v3671
        %v3680 = vmul.f32 %v3647, %v3671
        %v3681 = vmul.f32 %v3648, %v3671
        %v3682 = vmul.f32 %v3649, %v3671
        %v3683 = vmul.f32 %v3650, %v3671
        %v3684 = vmul.f32 %v3651, %v3671
        %v3685 = vmul.f32 %v3652, %v3671
        %v3686 = vmul.f32 %v3653, %v3671
        %v3687 = vmul.f32 %v3654, %v3671
        %v3688 = vmul.f32 %v3655, %v3671
        %v3689 = vmul.f32 %v3656, %v3671
        %v3690 = vmul.f32 %v3657, %v3671
        %v3691 = vmul.f32 %v3658, %v3671
        %v3692 = vmul.f32 %v3659, %v3671
        %v3693 = vmul.f32 %v3660, %v3671
        %v3694 = vmul.f32 %v3661, %v3671
        %v3695 = vmul.f32 %v3662, %v3671
        %v3696 = vmul.f32 %v3663, %v3671
        %v3697 = vmul.f32 %v3664, %v3671
        %v3698 = vmul.f32 %v3665, %v3671
        %v3699 = vmul.f32 %v3666, %v3671
        %v3700 = vmul.f32 %v3667, %v3671
        %v3701 = vmul.f32 %v3668, %v3671
        %v3702 = vmul.f32 %v3669, %v3671
        %v3703 = vmul.f32 %v3670, %v3671
        %v3704 = vadd.f32 %v3606, %v3672
        %v3705 = vadd.f32 %v3607, %v3673
        %v3706 = vadd.f32 %v3608, %v3674
        %v3707 = vadd.f32 %v3609, %v3675
        %v3708 = vadd.f32 %v3610, %v3676
        %v3709 = vadd.f32 %v3611, %v3677
        %v3710 = vadd.f32 %v3612, %v3678
        %v3711 = vadd.f32 %v3613, %v3679
        %v3712 = vadd.f32 %v3614, %v3680
        %v3713 = vadd.f32 %v3615, %v3681
        %v3714 = vadd.f32 %v3616, %v3682
        %v3715 = vadd.f32 %v3617, %v3683
        %v3716 = vadd.f32 %v3618, %v3684
        %v3717 = vadd.f32 %v3619, %v3685
        %v3718 = vadd.f32 %v3620, %v3686
        %v3719 = vadd.f32 %v3621, %v3687
        %v3720 = vadd.f32 %v3622, %v3688
        %v3721 = vadd.f32 %v3623, %v3689
        %v3722 = vadd.f32 %v3624, %v3690
        %v3723 = vadd.f32 %v3625, %v3691
        %v3724 = vadd.f32 %v3626, %v3692
        %v3725 = vadd.f32 %v3627, %v3693
        %v3726 = vadd.f32 %v3628, %v3694
        %v3727 = vadd.f32 %v3629, %v3695
        %v3728 = vadd.f32 %v3630, %v3696
        %v3729 = vadd.f32 %v3631, %v3697
        %v3730 = vadd.f32 %v3632, %v3698
        %v3731 = vadd.f32 %v3633, %v3699
        %v3732 = vadd.f32 %v3634, %v3700
        %v3733 = vadd.f32 %v3635, %v3701
        %v3734 = vadd.f32 %v3636, %v3702
        %v3735 = vadd.f32 %v3637, %v3703
        %v3736 = vld [vmem:[%s4 + $0x3] sm:$0x1]
        %v3737 = vld [vmem:[#allocation2 + $0x3] sm:$0xff]
        %v3738 = vld [vmem:[#allocation2 + $0xb] sm:$0xff]
        %v3739 = vld [vmem:[#allocation2 + $0x1b] sm:$0xff]
        %v3740 = vld [vmem:[#allocation2 + $0x23] sm:$0xff]
        %v3741 = vld [vmem:[#allocation2 + $0x33] sm:$0xff]
        %v3742 = vld [vmem:[#allocation2 + $0x3b] sm:$0xff]
        %v3743 = vld [vmem:[#allocation2 + $0x4b] sm:$0xff]
        %v3744 = vld [vmem:[#allocation2 + $0x53] sm:$0xff]
        %v3745 = vld [vmem:[#allocation2 + $0x63] sm:$0xff]
        %v3746 = vld [vmem:[#allocation2 + $0x6b] sm:$0xff]
        %v3747 = vld [vmem:[#allocation2 + $0x7b] sm:$0xff]
        %v3748 = vld [vmem:[#allocation2 + $0x83] sm:$0xff]
        %v3749 = vld [vmem:[#allocation2 + $0x93] sm:$0xff]
        %v3750 = vld [vmem:[#allocation2 + $0x9b] sm:$0xff]
        %v3751 = vld [vmem:[#allocation2 + $0xab] sm:$0xff]
        %v3752 = vld [vmem:[#allocation2 + $0xb3] sm:$0xff]
        %v3753 = vld [vmem:[#allocation2 + $0xc3] sm:$0xff]
        %v3754 = vld [vmem:[#allocation2 + $0xcb] sm:$0xff]
        %v3755 = vld [vmem:[#allocation2 + $0xdb] sm:$0xff]
        %v3756 = vld [vmem:[#allocation2 + $0xe3] sm:$0xff]
        %v3757 = vld [vmem:[#allocation2 + $0xf3] sm:$0xff]
        %v3758 = vld [vmem:[#allocation2 + $0xfb] sm:$0xff]
        %v3759 = vld [vmem:[#allocation2 + $0x10b] sm:$0xff]
        %v3760 = vld [vmem:[#allocation2 + $0x113] sm:$0xff]
        %v3761 = vld [vmem:[#allocation2 + $0x123] sm:$0xff]
        %v3762 = vld [vmem:[#allocation2 + $0x12b] sm:$0xff]
        %v3763 = vld [vmem:[#allocation2 + $0x13b] sm:$0xff]
        %v3764 = vld [vmem:[#allocation2 + $0x143] sm:$0xff]
        %v3765 = vld [vmem:[#allocation2 + $0x153] sm:$0xff]
        %v3766 = vld [vmem:[#allocation2 + $0x15b] sm:$0xff]
        %v3767 = vld [vmem:[#allocation2 + $0x16b] sm:$0xff]
        %v3768 = vld [vmem:[#allocation2 + $0x173] sm:$0xff]
        %v3769 = vperm.slane %v3736, 0
        %v3770 = vmul.f32 %v3737, %v3769
        %v3771 = vmul.f32 %v3738, %v3769
        %v3772 = vmul.f32 %v3739, %v3769
        %v3773 = vmul.f32 %v3740, %v3769
        %v3774 = vmul.f32 %v3741, %v3769
        %v3775 = vmul.f32 %v3742, %v3769
        %v3776 = vmul.f32 %v3743, %v3769
        %v3777 = vmul.f32 %v3744, %v3769
        %v3778 = vmul.f32 %v3745, %v3769
        %v3779 = vmul.f32 %v3746, %v3769
        %v3780 = vmul.f32 %v3747, %v3769
        %v3781 = vmul.f32 %v3748, %v3769
        %v3782 = vmul.f32 %v3749, %v3769
        %v3783 = vmul.f32 %v3750, %v3769
        %v3784 = vmul.f32 %v3751, %v3769
        %v3785 = vmul.f32 %v3752, %v3769
        %v3786 = vmul.f32 %v3753, %v3769
        %v3787 = vmul.f32 %v3754, %v3769
        %v3788 = vmul.f32 %v3755, %v3769
        %v3789 = vmul.f32 %v3756, %v3769
        %v3790 = vmul.f32 %v3757, %v3769
        %v3791 = vmul.f32 %v3758, %v3769
        %v3792 = vmul.f32 %v3759, %v3769
        %v3793 = vmul.f32 %v3760, %v3769
        %v3794 = vmul.f32 %v3761, %v3769
        %v3795 = vmul.f32 %v3762, %v3769
        %v3796 = vmul.f32 %v3763, %v3769
        %v3797 = vmul.f32 %v3764, %v3769
        %v3798 = vmul.f32 %v3765, %v3769
        %v3799 = vmul.f32 %v3766, %v3769
        %v3800 = vmul.f32 %v3767, %v3769
        %v3801 = vmul.f32 %v3768, %v3769
        %v3802 = vadd.f32 %v3704, %v3770
        %v3803 = vadd.f32 %v3705, %v3771
        %v3804 = vadd.f32 %v3706, %v3772
        %v3805 = vadd.f32 %v3707, %v3773
        %v3806 = vadd.f32 %v3708, %v3774
        %v3807 = vadd.f32 %v3709, %v3775
        %v3808 = vadd.f32 %v3710, %v3776
        %v3809 = vadd.f32 %v3711, %v3777
        %v3810 = vadd.f32 %v3712, %v3778
        %v3811 = vadd.f32 %v3713, %v3779
        %v3812 = vadd.f32 %v3714, %v3780
        %v3813 = vadd.f32 %v3715, %v3781
        %v3814 = vadd.f32 %v3716, %v3782
        %v3815 = vadd.f32 %v3717, %v3783
        %v3816 = vadd.f32 %v3718, %v3784
        %v3817 = vadd.f32 %v3719, %v3785
        %v3818 = vadd.f32 %v3720, %v3786
        %v3819 = vadd.f32 %v3721, %v3787
        %v3820 = vadd.f32 %v3722, %v3788
        %v3821 = vadd.f32 %v3723, %v3789
        %v3822 = vadd.f32 %v3724, %v3790
        %v3823 = vadd.f32 %v3725, %v3791
        %v3824 = vadd.f32 %v3726, %v3792
        %v3825 = vadd.f32 %v3727, %v3793
        %v3826 = vadd.f32 %v3728, %v3794
        %v3827 = vadd.f32 %v3729, %v3795
        %v3828 = vadd.f32 %v3730, %v3796
        %v3829 = vadd.f32 %v3731, %v3797
        %v3830 = vadd.f32 %v3732, %v3798
        %v3831 = vadd.f32 %v3733, %v3799
        %v3832 = vadd.f32 %v3734, %v3800
        %v3833 = vadd.f32 %v3735, %v3801
        %v3834 = vld [vmem:[%s4 + $0x4] sm:$0x1]
        %v3835 = vld [vmem:[#allocation2 + $0x4] sm:$0xff]
        %v3836 = vld [vmem:[#allocation2 + $0xc] sm:$0xff]
        %v3837 = vld [vmem:[#allocation2 + $0x1c] sm:$0xff]
        %v3838 = vld [vmem:[#allocation2 + $0x24] sm:$0xff]
        %v3839 = vld [vmem:[#allocation2 + $0x34] sm:$0xff]
        %v3840 = vld [vmem:[#allocation2 + $0x3c] sm:$0xff]
        %v3841 = vld [vmem:[#allocation2 + $0x4c] sm:$0xff]
        %v3842 = vld [vmem:[#allocation2 + $0x54] sm:$0xff]
        %v3843 = vld [vmem:[#allocation2 + $0x64] sm:$0xff]
        %v3844 = vld [vmem:[#allocation2 + $0x6c] sm:$0xff]
        %v3845 = vld [vmem:[#allocation2 + $0x7c] sm:$0xff]
        %v3846 = vld [vmem:[#allocation2 + $0x84] sm:$0xff]
        %v3847 = vld [vmem:[#allocation2 + $0x94] sm:$0xff]
        %v3848 = vld [vmem:[#allocation2 + $0x9c] sm:$0xff]
        %v3849 = vld [vmem:[#allocation2 + $0xac] sm:$0xff]
        %v3850 = vld [vmem:[#allocation2 + $0xb4] sm:$0xff]
        %v3851 = vld [vmem:[#allocation2 + $0xc4] sm:$0xff]
        %v3852 = vld [vmem:[#allocation2 + $0xcc] sm:$0xff]
        %v3853 = vld [vmem:[#allocation2 + $0xdc] sm:$0xff]
        %v3854 = vld [vmem:[#allocation2 + $0xe4] sm:$0xff]
        %v3855 = vld [vmem:[#allocation2 + $0xf4] sm:$0xff]
        %v3856 = vld [vmem:[#allocation2 + $0xfc] sm:$0xff]
        %v3857 = vld [vmem:[#allocation2 + $0x10c] sm:$0xff]
        %v3858 = vld [vmem:[#allocation2 + $0x114] sm:$0xff]
        %v3859 = vld [vmem:[#allocation2 + $0x124] sm:$0xff]
        %v3860 = vld [vmem:[#allocation2 + $0x12c] sm:$0xff]
        %v3861 = vld [vmem:[#allocation2 + $0x13c] sm:$0xff]
        %v3862 = vld [vmem:[#allocation2 + $0x144] sm:$0xff]
        %v3863 = vld [vmem:[#allocation2 + $0x154] sm:$0xff]
        %v3864 = vld [vmem:[#allocation2 + $0x15c] sm:$0xff]
        %v3865 = vld [vmem:[#allocation2 + $0x16c] sm:$0xff]
        %v3866 = vld [vmem:[#allocation2 + $0x174] sm:$0xff]
        %v3867 = vperm.slane %v3834, 0
        %v3868 = vmul.f32 %v3835, %v3867
        %v3869 = vmul.f32 %v3836, %v3867
        %v3870 = vmul.f32 %v3837, %v3867
        %v3871 = vmul.f32 %v3838, %v3867
        %v3872 = vmul.f32 %v3839, %v3867
        %v3873 = vmul.f32 %v3840, %v3867
        %v3874 = vmul.f32 %v3841, %v3867
        %v3875 = vmul.f32 %v3842, %v3867
        %v3876 = vmul.f32 %v3843, %v3867
        %v3877 = vmul.f32 %v3844, %v3867
        %v3878 = vmul.f32 %v3845, %v3867
        %v3879 = vmul.f32 %v3846, %v3867
        %v3880 = vmul.f32 %v3847, %v3867
        %v3881 = vmul.f32 %v3848, %v3867
        %v3882 = vmul.f32 %v3849, %v3867
        %v3883 = vmul.f32 %v3850, %v3867
        %v3884 = vmul.f32 %v3851, %v3867
        %v3885 = vmul.f32 %v3852, %v3867
        %v3886 = vmul.f32 %v3853, %v3867
        %v3887 = vmul.f32 %v3854, %v3867
        %v3888 = vmul.f32 %v3855, %v3867
        %v3889 = vmul.f32 %v3856, %v3867
        %v3890 = vmul.f32 %v3857, %v3867
        %v3891 = vmul.f32 %v3858, %v3867
        %v3892 = vmul.f32 %v3859, %v3867
        %v3893 = vmul.f32 %v3860, %v3867
        %v3894 = vmul.f32 %v3861, %v3867
        %v3895 = vmul.f32 %v3862, %v3867
        %v3896 = vmul.f32 %v3863, %v3867
        %v3897 = vmul.f32 %v3864, %v3867
        %v3898 = vmul.f32 %v3865, %v3867
        %v3899 = vmul.f32 %v3866, %v3867
        %v3900 = vadd.f32 %v3802, %v3868
        %v3901 = vadd.f32 %v3803, %v3869
        %v3902 = vadd.f32 %v3804, %v3870
        %v3903 = vadd.f32 %v3805, %v3871
        %v3904 = vadd.f32 %v3806, %v3872
        %v3905 = vadd.f32 %v3807, %v3873
        %v3906 = vadd.f32 %v3808, %v3874
        %v3907 = vadd.f32 %v3809, %v3875
        %v3908 = vadd.f32 %v3810, %v3876
        %v3909 = vadd.f32 %v3811, %v3877
        %v3910 = vadd.f32 %v3812, %v3878
        %v3911 = vadd.f32 %v3813, %v3879
        %v3912 = vadd.f32 %v3814, %v3880
        %v3913 = vadd.f32 %v3815, %v3881
        %v3914 = vadd.f32 %v3816, %v3882
        %v3915 = vadd.f32 %v3817, %v3883
        %v3916 = vadd.f32 %v3818, %v3884
        %v3917 = vadd.f32 %v3819, %v3885
        %v3918 = vadd.f32 %v3820, %v3886
        %v3919 = vadd.f32 %v3821, %v3887
        %v3920 = vadd.f32 %v3822, %v3888
        %v3921 = vadd.f32 %v3823, %v3889
        %v3922 = vadd.f32 %v3824, %v3890
        %v3923 = vadd.f32 %v3825, %v3891
        %v3924 = vadd.f32 %v3826, %v3892
        %v3925 = vadd.f32 %v3827, %v3893
        %v3926 = vadd.f32 %v3828, %v3894
        %v3927 = vadd.f32 %v3829, %v3895
        %v3928 = vadd.f32 %v3830, %v3896
        %v3929 = vadd.f32 %v3831, %v3897
        %v3930 = vadd.f32 %v3832, %v3898
        %v3931 = vadd.f32 %v3833, %v3899
        %s3932 = scalar_lea.vmem %s4, 8
        %v3933 = vld [vmem:[%s3932] sm:$0x1]
        %v3934 = vld [vmem:[%s1174] sm:$0xff]
        %v3935 = vld [vmem:[%s1174 + $0x8] sm:$0xff]
        %v3936 = vld [vmem:[%s1174 + $0x18] sm:$0xff]
        %v3937 = vld [vmem:[%s1174 + $0x20] sm:$0xff]
        %v3938 = vld [vmem:[%s1174 + $0x30] sm:$0xff]
        %v3939 = vld [vmem:[%s1174 + $0x38] sm:$0xff]
        %v3940 = vld [vmem:[%s1174 + $0x48] sm:$0xff]
        %v3941 = vld [vmem:[%s1174 + $0x50] sm:$0xff]
        %v3942 = vld [vmem:[%s1174 + $0x60] sm:$0xff]
        %v3943 = vld [vmem:[%s1174 + $0x68] sm:$0xff]
        %v3944 = vld [vmem:[%s1174 + $0x78] sm:$0xff]
        %v3945 = vld [vmem:[%s1174 + $0x80] sm:$0xff]
        %v3946 = vld [vmem:[%s1174 + $0x90] sm:$0xff]
        %v3947 = vld [vmem:[%s1174 + $0x98] sm:$0xff]
        %v3948 = vld [vmem:[%s1174 + $0xa8] sm:$0xff]
        %v3949 = vld [vmem:[%s1174 + $0xb0] sm:$0xff]
        %v3950 = vld [vmem:[%s1174 + $0xc0] sm:$0xff]
        %v3951 = vld [vmem:[%s1174 + $0xc8] sm:$0xff]
        %v3952 = vld [vmem:[%s1174 + $0xd8] sm:$0xff]
        %v3953 = vld [vmem:[%s1174 + $0xe0] sm:$0xff]
        %v3954 = vld [vmem:[%s1174 + $0xf0] sm:$0xff]
        %v3955 = vld [vmem:[%s1174 + $0xf8] sm:$0xff]
        %v3956 = vld [vmem:[%s1174 + $0x108] sm:$0xff]
        %v3957 = vld [vmem:[%s1174 + $0x110] sm:$0xff]
        %v3958 = vld [vmem:[%s1174 + $0x120] sm:$0xff]
        %v3959 = vld [vmem:[%s1174 + $0x128] sm:$0xff]
        %v3960 = vld [vmem:[%s1174 + $0x138] sm:$0xff]
        %v3961 = vld [vmem:[%s1174 + $0x140] sm:$0xff]
        %v3962 = vld [vmem:[%s1174 + $0x150] sm:$0xff]
        %v3963 = vld [vmem:[%s1174 + $0x158] sm:$0xff]
        %v3964 = vld [vmem:[%s1174 + $0x168] sm:$0xff]
        %v3965 = vld [vmem:[%s1174 + $0x170] sm:$0xff]
        %v3966 = vperm.slane %v3933, 0
        %v3967 = vmul.f32 %v3934, %v3966
        %v3968 = vmul.f32 %v3935, %v3966
        %v3969 = vmul.f32 %v3936, %v3966
        %v3970 = vmul.f32 %v3937, %v3966
        %v3971 = vmul.f32 %v3938, %v3966
        %v3972 = vmul.f32 %v3939, %v3966
        %v3973 = vmul.f32 %v3940, %v3966
        %v3974 = vmul.f32 %v3941, %v3966
        %v3975 = vmul.f32 %v3942, %v3966
        %v3976 = vmul.f32 %v3943, %v3966
        %v3977 = vmul.f32 %v3944, %v3966
        %v3978 = vmul.f32 %v3945, %v3966
        %v3979 = vmul.f32 %v3946, %v3966
        %v3980 = vmul.f32 %v3947, %v3966
        %v3981 = vmul.f32 %v3948, %v3966
        %v3982 = vmul.f32 %v3949, %v3966
        %v3983 = vmul.f32 %v3950, %v3966
        %v3984 = vmul.f32 %v3951, %v3966
        %v3985 = vmul.f32 %v3952, %v3966
        %v3986 = vmul.f32 %v3953, %v3966
        %v3987 = vmul.f32 %v3954, %v3966
        %v3988 = vmul.f32 %v3955, %v3966
        %v3989 = vmul.f32 %v3956, %v3966
        %v3990 = vmul.f32 %v3957, %v3966
        %v3991 = vmul.f32 %v3958, %v3966
        %v3992 = vmul.f32 %v3959, %v3966
        %v3993 = vmul.f32 %v3960, %v3966
        %v3994 = vmul.f32 %v3961, %v3966
        %v3995 = vmul.f32 %v3962, %v3966
        %v3996 = vmul.f32 %v3963, %v3966
        %v3997 = vmul.f32 %v3964, %v3966
        %v3998 = vmul.f32 %v3965, %v3966
        %v3999 = vadd.f32 %v3900, %v3967
        %v4000 = vadd.f32 %v3901, %v3968
        %v4001 = vadd.f32 %v3902, %v3969
        %v4002 = vadd.f32 %v3903, %v3970
        %v4003 = vadd.f32 %v3904, %v3971
        %v4004 = vadd.f32 %v3905, %v3972
        %v4005 = vadd.f32 %v3906, %v3973
        %v4006 = vadd.f32 %v3907, %v3974
        %v4007 = vadd.f32 %v3908, %v3975
        %v4008 = vadd.f32 %v3909, %v3976
        %v4009 = vadd.f32 %v3910, %v3977
        %v4010 = vadd.f32 %v3911, %v3978
        %v4011 = vadd.f32 %v3912, %v3979
        %v4012 = vadd.f32 %v3913, %v3980
        %v4013 = vadd.f32 %v3914, %v3981
        %v4014 = vadd.f32 %v3915, %v3982
        %v4015 = vadd.f32 %v3916, %v3983
        %v4016 = vadd.f32 %v3917, %v3984
        %v4017 = vadd.f32 %v3918, %v3985
        %v4018 = vadd.f32 %v3919, %v3986
        %v4019 = vadd.f32 %v3920, %v3987
        %v4020 = vadd.f32 %v3921, %v3988
        %v4021 = vadd.f32 %v3922, %v3989
        %v4022 = vadd.f32 %v3923, %v3990
        %v4023 = vadd.f32 %v3924, %v3991
        %v4024 = vadd.f32 %v3925, %v3992
        %v4025 = vadd.f32 %v3926, %v3993
        %v4026 = vadd.f32 %v3927, %v3994
        %v4027 = vadd.f32 %v3928, %v3995
        %v4028 = vadd.f32 %v3929, %v3996
        %v4029 = vadd.f32 %v3930, %v3997
        %v4030 = vadd.f32 %v3931, %v3998
        %v4031 = vld [vmem:[%s3932 + $0x1] sm:$0x1]
        %v4032 = vld [vmem:[%s1174 + $0x1] sm:$0xff]
        %v4033 = vld [vmem:[%s1174 + $0x9] sm:$0xff]
        %v4034 = vld [vmem:[%s1174 + $0x19] sm:$0xff]
        %v4035 = vld [vmem:[%s1174 + $0x21] sm:$0xff]
        %v4036 = vld [vmem:[%s1174 + $0x31] sm:$0xff]
        %v4037 = vld [vmem:[%s1174 + $0x39] sm:$0xff]
        %v4038 = vld [vmem:[%s1174 + $0x49] sm:$0xff]
        %v4039 = vld [vmem:[%s1174 + $0x51] sm:$0xff]
        %v4040 = vld [vmem:[%s1174 + $0x61] sm:$0xff]
        %v4041 = vld [vmem:[%s1174 + $0x69] sm:$0xff]
        %v4042 = vld [vmem:[%s1174 + $0x79] sm:$0xff]
        %v4043 = vld [vmem:[%s1174 + $0x81] sm:$0xff]
        %v4044 = vld [vmem:[%s1174 + $0x91] sm:$0xff]
        %v4045 = vld [vmem:[%s1174 + $0x99] sm:$0xff]
        %v4046 = vld [vmem:[%s1174 + $0xa9] sm:$0xff]
        %v4047 = vld [vmem:[%s1174 + $0xb1] sm:$0xff]
        %v4048 = vld [vmem:[%s1174 + $0xc1] sm:$0xff]
        %v4049 = vld [vmem:[%s1174 + $0xc9] sm:$0xff]
        %v4050 = vld [vmem:[%s1174 + $0xd9] sm:$0xff]
        %v4051 = vld [vmem:[%s1174 + $0xe1] sm:$0xff]
        %v4052 = vld [vmem:[%s1174 + $0xf1] sm:$0xff]
        %v4053 = vld [vmem:[%s1174 + $0xf9] sm:$0xff]
        %v4054 = vld [vmem:[%s1174 + $0x109] sm:$0xff]
        %v4055 = vld [vmem:[%s1174 + $0x111] sm:$0xff]
        %v4056 = vld [vmem:[%s1174 + $0x121] sm:$0xff]
        %v4057 = vld [vmem:[%s1174 + $0x129] sm:$0xff]
        %v4058 = vld [vmem:[%s1174 + $0x139] sm:$0xff]
        %v4059 = vld [vmem:[%s1174 + $0x141] sm:$0xff]
        %v4060 = vld [vmem:[%s1174 + $0x151] sm:$0xff]
        %v4061 = vld [vmem:[%s1174 + $0x159] sm:$0xff]
        %v4062 = vld [vmem:[%s1174 + $0x169] sm:$0xff]
        %v4063 = vld [vmem:[%s1174 + $0x171] sm:$0xff]
        %v4064 = vperm.slane %v4031, 0
        %v4065 = vmul.f32 %v4032, %v4064
        %v4066 = vmul.f32 %v4033, %v4064
        %v4067 = vmul.f32 %v4034, %v4064
        %v4068 = vmul.f32 %v4035, %v4064
        %v4069 = vmul.f32 %v4036, %v4064
        %v4070 = vmul.f32 %v4037, %v4064
        %v4071 = vmul.f32 %v4038, %v4064
        %v4072 = vmul.f32 %v4039, %v4064
        %v4073 = vmul.f32 %v4040, %v4064
        %v4074 = vmul.f32 %v4041, %v4064
        %v4075 = vmul.f32 %v4042, %v4064
        %v4076 = vmul.f32 %v4043, %v4064
        %v4077 = vmul.f32 %v4044, %v4064
        %v4078 = vmul.f32 %v4045, %v4064
        %v4079 = vmul.f32 %v4046, %v4064
        %v4080 = vmul.f32 %v4047, %v4064
        %v4081 = vmul.f32 %v4048, %v4064
        %v4082 = vmul.f32 %v4049, %v4064
        %v4083 = vmul.f32 %v4050, %v4064
        %v4084 = vmul.f32 %v4051, %v4064
        %v4085 = vmul.f32 %v4052, %v4064
        %v4086 = vmul.f32 %v4053, %v4064
        %v4087 = vmul.f32 %v4054, %v4064
        %v4088 = vmul.f32 %v4055, %v4064
        %v4089 = vmul.f32 %v4056, %v4064
        %v4090 = vmul.f32 %v4057, %v4064
        %v4091 = vmul.f32 %v4058, %v4064
        %v4092 = vmul.f32 %v4059, %v4064
        %v4093 = vmul.f32 %v4060, %v4064
        %v4094 = vmul.f32 %v4061, %v4064
        %v4095 = vmul.f32 %v4062, %v4064
        %v4096 = vmul.f32 %v4063, %v4064
        %v4097 = vadd.f32 %v3999, %v4065
        %v4098 = vadd.f32 %v4000, %v4066
        %v4099 = vadd.f32 %v4001, %v4067
        %v4100 = vadd.f32 %v4002, %v4068
        %v4101 = vadd.f32 %v4003, %v4069
        %v4102 = vadd.f32 %v4004, %v4070
        %v4103 = vadd.f32 %v4005, %v4071
        %v4104 = vadd.f32 %v4006, %v4072
        %v4105 = vadd.f32 %v4007, %v4073
        %v4106 = vadd.f32 %v4008, %v4074
        %v4107 = vadd.f32 %v4009, %v4075
        %v4108 = vadd.f32 %v4010, %v4076
        %v4109 = vadd.f32 %v4011, %v4077
        %v4110 = vadd.f32 %v4012, %v4078
        %v4111 = vadd.f32 %v4013, %v4079
        %v4112 = vadd.f32 %v4014, %v4080
        %v4113 = vadd.f32 %v4015, %v4081
        %v4114 = vadd.f32 %v4016, %v4082
        %v4115 = vadd.f32 %v4017, %v4083
        %v4116 = vadd.f32 %v4018, %v4084
        %v4117 = vadd.f32 %v4019, %v4085
        %v4118 = vadd.f32 %v4020, %v4086
        %v4119 = vadd.f32 %v4021, %v4087
        %v4120 = vadd.f32 %v4022, %v4088
        %v4121 = vadd.f32 %v4023, %v4089
        %v4122 = vadd.f32 %v4024, %v4090
        %v4123 = vadd.f32 %v4025, %v4091
        %v4124 = vadd.f32 %v4026, %v4092
        %v4125 = vadd.f32 %v4027, %v4093
        %v4126 = vadd.f32 %v4028, %v4094
        %v4127 = vadd.f32 %v4029, %v4095
        %v4128 = vadd.f32 %v4030, %v4096
        %v4129 = vld [vmem:[%s3932 + $0x2] sm:$0x1]
        %v4130 = vld [vmem:[%s1174 + $0x2] sm:$0xff]
        %v4131 = vld [vmem:[%s1174 + $0xa] sm:$0xff]
        %v4132 = vld [vmem:[%s1174 + $0x1a] sm:$0xff]
        %v4133 = vld [vmem:[%s1174 + $0x22] sm:$0xff]
        %v4134 = vld [vmem:[%s1174 + $0x32] sm:$0xff]
        %v4135 = vld [vmem:[%s1174 + $0x3a] sm:$0xff]
        %v4136 = vld [vmem:[%s1174 + $0x4a] sm:$0xff]
        %v4137 = vld [vmem:[%s1174 + $0x52] sm:$0xff]
        %v4138 = vld [vmem:[%s1174 + $0x62] sm:$0xff]
        %v4139 = vld [vmem:[%s1174 + $0x6a] sm:$0xff]
        %v4140 = vld [vmem:[%s1174 + $0x7a] sm:$0xff]
        %v4141 = vld [vmem:[%s1174 + $0x82] sm:$0xff]
        %v4142 = vld [vmem:[%s1174 + $0x92] sm:$0xff]
        %v4143 = vld [vmem:[%s1174 + $0x9a] sm:$0xff]
        %v4144 = vld [vmem:[%s1174 + $0xaa] sm:$0xff]
        %v4145 = vld [vmem:[%s1174 + $0xb2] sm:$0xff]
        %v4146 = vld [vmem:[%s1174 + $0xc2] sm:$0xff]
        %v4147 = vld [vmem:[%s1174 + $0xca] sm:$0xff]
        %v4148 = vld [vmem:[%s1174 + $0xda] sm:$0xff]
        %v4149 = vld [vmem:[%s1174 + $0xe2] sm:$0xff]
        %v4150 = vld [vmem:[%s1174 + $0xf2] sm:$0xff]
        %v4151 = vld [vmem:[%s1174 + $0xfa] sm:$0xff]
        %v4152 = vld [vmem:[%s1174 + $0x10a] sm:$0xff]
        %v4153 = vld [vmem:[%s1174 + $0x112] sm:$0xff]
        %v4154 = vld [vmem:[%s1174 + $0x122] sm:$0xff]
        %v4155 = vld [vmem:[%s1174 + $0x12a] sm:$0xff]
        %v4156 = vld [vmem:[%s1174 + $0x13a] sm:$0xff]
        %v4157 = vld [vmem:[%s1174 + $0x142] sm:$0xff]
        %v4158 = vld [vmem:[%s1174 + $0x152] sm:$0xff]
        %v4159 = vld [vmem:[%s1174 + $0x15a] sm:$0xff]
        %v4160 = vld [vmem:[%s1174 + $0x16a] sm:$0xff]
        %v4161 = vld [vmem:[%s1174 + $0x172] sm:$0xff]
        %v4162 = vperm.slane %v4129, 0
        %v4163 = vmul.f32 %v4130, %v4162
        %v4164 = vmul.f32 %v4131, %v4162
        %v4165 = vmul.f32 %v4132, %v4162
        %v4166 = vmul.f32 %v4133, %v4162
        %v4167 = vmul.f32 %v4134, %v4162
        %v4168 = vmul.f32 %v4135, %v4162
        %v4169 = vmul.f32 %v4136, %v4162
        %v4170 = vmul.f32 %v4137, %v4162
        %v4171 = vmul.f32 %v4138, %v4162
        %v4172 = vmul.f32 %v4139, %v4162
        %v4173 = vmul.f32 %v4140, %v4162
        %v4174 = vmul.f32 %v4141, %v4162
        %v4175 = vmul.f32 %v4142, %v4162
        %v4176 = vmul.f32 %v4143, %v4162
        %v4177 = vmul.f32 %v4144, %v4162
        %v4178 = vmul.f32 %v4145, %v4162
        %v4179 = vmul.f32 %v4146, %v4162
        %v4180 = vmul.f32 %v4147, %v4162
        %v4181 = vmul.f32 %v4148, %v4162
        %v4182 = vmul.f32 %v4149, %v4162
        %v4183 = vmul.f32 %v4150, %v4162
        %v4184 = vmul.f32 %v4151, %v4162
        %v4185 = vmul.f32 %v4152, %v4162
        %v4186 = vmul.f32 %v4153, %v4162
        %v4187 = vmul.f32 %v4154, %v4162
        %v4188 = vmul.f32 %v4155, %v4162
        %v4189 = vmul.f32 %v4156, %v4162
        %v4190 = vmul.f32 %v4157, %v4162
        %v4191 = vmul.f32 %v4158, %v4162
        %v4192 = vmul.f32 %v4159, %v4162
        %v4193 = vmul.f32 %v4160, %v4162
        %v4194 = vmul.f32 %v4161, %v4162
        %v4195 = vadd.f32 %v4097, %v4163
        %v4196 = vadd.f32 %v4098, %v4164
        %v4197 = vadd.f32 %v4099, %v4165
        %v4198 = vadd.f32 %v4100, %v4166
        %v4199 = vadd.f32 %v4101, %v4167
        %v4200 = vadd.f32 %v4102, %v4168
        %v4201 = vadd.f32 %v4103, %v4169
        %v4202 = vadd.f32 %v4104, %v4170
        %v4203 = vadd.f32 %v4105, %v4171
        %v4204 = vadd.f32 %v4106, %v4172
        %v4205 = vadd.f32 %v4107, %v4173
        %v4206 = vadd.f32 %v4108, %v4174
        %v4207 = vadd.f32 %v4109, %v4175
        %v4208 = vadd.f32 %v4110, %v4176
        %v4209 = vadd.f32 %v4111, %v4177
        %v4210 = vadd.f32 %v4112, %v4178
        %v4211 = vadd.f32 %v4113, %v4179
        %v4212 = vadd.f32 %v4114, %v4180
        %v4213 = vadd.f32 %v4115, %v4181
        %v4214 = vadd.f32 %v4116, %v4182
        %v4215 = vadd.f32 %v4117, %v4183
        %v4216 = vadd.f32 %v4118, %v4184
        %v4217 = vadd.f32 %v4119, %v4185
        %v4218 = vadd.f32 %v4120, %v4186
        %v4219 = vadd.f32 %v4121, %v4187
        %v4220 = vadd.f32 %v4122, %v4188
        %v4221 = vadd.f32 %v4123, %v4189
        %v4222 = vadd.f32 %v4124, %v4190
        %v4223 = vadd.f32 %v4125, %v4191
        %v4224 = vadd.f32 %v4126, %v4192
        %v4225 = vadd.f32 %v4127, %v4193
        %v4226 = vadd.f32 %v4128, %v4194
        %v4227 = vld [vmem:[%s3932 + $0x3] sm:$0x1]
        %v4228 = vld [vmem:[%s1174 + $0x3] sm:$0xff]
        %v4229 = vld [vmem:[%s1174 + $0xb] sm:$0xff]
        %v4230 = vld [vmem:[%s1174 + $0x1b] sm:$0xff]
        %v4231 = vld [vmem:[%s1174 + $0x23] sm:$0xff]
        %v4232 = vld [vmem:[%s1174 + $0x33] sm:$0xff]
        %v4233 = vld [vmem:[%s1174 + $0x3b] sm:$0xff]
        %v4234 = vld [vmem:[%s1174 + $0x4b] sm:$0xff]
        %v4235 = vld [vmem:[%s1174 + $0x53] sm:$0xff]
        %v4236 = vld [vmem:[%s1174 + $0x63] sm:$0xff]
        %v4237 = vld [vmem:[%s1174 + $0x6b] sm:$0xff]
        %v4238 = vld [vmem:[%s1174 + $0x7b] sm:$0xff]
        %v4239 = vld [vmem:[%s1174 + $0x83] sm:$0xff]
        %v4240 = vld [vmem:[%s1174 + $0x93] sm:$0xff]
        %v4241 = vld [vmem:[%s1174 + $0x9b] sm:$0xff]
        %v4242 = vld [vmem:[%s1174 + $0xab] sm:$0xff]
        %v4243 = vld [vmem:[%s1174 + $0xb3] sm:$0xff]
        %v4244 = vld [vmem:[%s1174 + $0xc3] sm:$0xff]
        %v4245 = vld [vmem:[%s1174 + $0xcb] sm:$0xff]
        %v4246 = vld [vmem:[%s1174 + $0xdb] sm:$0xff]
        %v4247 = vld [vmem:[%s1174 + $0xe3] sm:$0xff]
        %v4248 = vld [vmem:[%s1174 + $0xf3] sm:$0xff]
        %v4249 = vld [vmem:[%s1174 + $0xfb] sm:$0xff]
        %v4250 = vld [vmem:[%s1174 + $0x10b] sm:$0xff]
        %v4251 = vld [vmem:[%s1174 + $0x113] sm:$0xff]
        %v4252 = vld [vmem:[%s1174 + $0x123] sm:$0xff]
        %v4253 = vld [vmem:[%s1174 + $0x12b] sm:$0xff]
        %v4254 = vld [vmem:[%s1174 + $0x13b] sm:$0xff]
        %v4255 = vld [vmem:[%s1174 + $0x143] sm:$0xff]
        %v4256 = vld [vmem:[%s1174 + $0x153] sm:$0xff]
        %v4257 = vld [vmem:[%s1174 + $0x15b] sm:$0xff]
        %v4258 = vld [vmem:[%s1174 + $0x16b] sm:$0xff]
        %v4259 = vld [vmem:[%s1174 + $0x173] sm:$0xff]
        %v4260 = vperm.slane %v4227, 0
        %v4261 = vmul.f32 %v4228, %v4260
        %v4262 = vmul.f32 %v4229, %v4260
        %v4263 = vmul.f32 %v4230, %v4260
        %v4264 = vmul.f32 %v4231, %v4260
        %v4265 = vmul.f32 %v4232, %v4260
        %v4266 = vmul.f32 %v4233, %v4260
        %v4267 = vmul.f32 %v4234, %v4260
        %v4268 = vmul.f32 %v4235, %v4260
        %v4269 = vmul.f32 %v4236, %v4260
        %v4270 = vmul.f32 %v4237, %v4260
        %v4271 = vmul.f32 %v4238, %v4260
        %v4272 = vmul.f32 %v4239, %v4260
        %v4273 = vmul.f32 %v4240, %v4260
        %v4274 = vmul.f32 %v4241, %v4260
        %v4275 = vmul.f32 %v4242, %v4260
        %v4276 = vmul.f32 %v4243, %v4260
        %v4277 = vmul.f32 %v4244, %v4260
        %v4278 = vmul.f32 %v4245, %v4260
        %v4279 = vmul.f32 %v4246, %v4260
        %v4280 = vmul.f32 %v4247, %v4260
        %v4281 = vmul.f32 %v4248, %v4260
        %v4282 = vmul.f32 %v4249, %v4260
        %v4283 = vmul.f32 %v4250, %v4260
        %v4284 = vmul.f32 %v4251, %v4260
        %v4285 = vmul.f32 %v4252, %v4260
        %v4286 = vmul.f32 %v4253, %v4260
        %v4287 = vmul.f32 %v4254, %v4260
        %v4288 = vmul.f32 %v4255, %v4260
        %v4289 = vmul.f32 %v4256, %v4260
        %v4290 = vmul.f32 %v4257, %v4260
        %v4291 = vmul.f32 %v4258, %v4260
        %v4292 = vmul.f32 %v4259, %v4260
        %v4293 = vadd.f32 %v4195, %v4261
        %v4294 = vadd.f32 %v4196, %v4262
        %v4295 = vadd.f32 %v4197, %v4263
        %v4296 = vadd.f32 %v4198, %v4264
        %v4297 = vadd.f32 %v4199, %v4265
        %v4298 = vadd.f32 %v4200, %v4266
        %v4299 = vadd.f32 %v4201, %v4267
        %v4300 = vadd.f32 %v4202, %v4268
        %v4301 = vadd.f32 %v4203, %v4269
        %v4302 = vadd.f32 %v4204, %v4270
        %v4303 = vadd.f32 %v4205, %v4271
        %v4304 = vadd.f32 %v4206, %v4272
        %v4305 = vadd.f32 %v4207, %v4273
        %v4306 = vadd.f32 %v4208, %v4274
        %v4307 = vadd.f32 %v4209, %v4275
        %v4308 = vadd.f32 %v4210, %v4276
        %v4309 = vadd.f32 %v4211, %v4277
        %v4310 = vadd.f32 %v4212, %v4278
        %v4311 = vadd.f32 %v4213, %v4279
        %v4312 = vadd.f32 %v4214, %v4280
        %v4313 = vadd.f32 %v4215, %v4281
        %v4314 = vadd.f32 %v4216, %v4282
        %v4315 = vadd.f32 %v4217, %v4283
        %v4316 = vadd.f32 %v4218, %v4284
        %v4317 = vadd.f32 %v4219, %v4285
        %v4318 = vadd.f32 %v4220, %v4286
        %v4319 = vadd.f32 %v4221, %v4287
        %v4320 = vadd.f32 %v4222, %v4288
        %v4321 = vadd.f32 %v4223, %v4289
        %v4322 = vadd.f32 %v4224, %v4290
        %v4323 = vadd.f32 %v4225, %v4291
        %v4324 = vadd.f32 %v4226, %v4292
        %v4325 = vld [vmem:[%s3932 + $0x4] sm:$0x1]
        %v4326 = vld [vmem:[%s1174 + $0x4] sm:$0xff]
        %v4327 = vld [vmem:[%s1174 + $0xc] sm:$0xff]
        %v4328 = vld [vmem:[%s1174 + $0x1c] sm:$0xff]
        %v4329 = vld [vmem:[%s1174 + $0x24] sm:$0xff]
        %v4330 = vld [vmem:[%s1174 + $0x34] sm:$0xff]
        %v4331 = vld [vmem:[%s1174 + $0x3c] sm:$0xff]
        %v4332 = vld [vmem:[%s1174 + $0x4c] sm:$0xff]
        %v4333 = vld [vmem:[%s1174 + $0x54] sm:$0xff]
        %v4334 = vld [vmem:[%s1174 + $0x64] sm:$0xff]
        %v4335 = vld [vmem:[%s1174 + $0x6c] sm:$0xff]
        %v4336 = vld [vmem:[%s1174 + $0x7c] sm:$0xff]
        %v4337 = vld [vmem:[%s1174 + $0x84] sm:$0xff]
        %v4338 = vld [vmem:[%s1174 + $0x94] sm:$0xff]
        %v4339 = vld [vmem:[%s1174 + $0x9c] sm:$0xff]
        %v4340 = vld [vmem:[%s1174 + $0xac] sm:$0xff]
        %v4341 = vld [vmem:[%s1174 + $0xb4] sm:$0xff]
        %v4342 = vld [vmem:[%s1174 + $0xc4] sm:$0xff]
        %v4343 = vld [vmem:[%s1174 + $0xcc] sm:$0xff]
        %v4344 = vld [vmem:[%s1174 + $0xdc] sm:$0xff]
        %v4345 = vld [vmem:[%s1174 + $0xe4] sm:$0xff]
        %v4346 = vld [vmem:[%s1174 + $0xf4] sm:$0xff]
        %v4347 = vld [vmem:[%s1174 + $0xfc] sm:$0xff]
        %v4348 = vld [vmem:[%s1174 + $0x10c] sm:$0xff]
        %v4349 = vld [vmem:[%s1174 + $0x114] sm:$0xff]
        %v4350 = vld [vmem:[%s1174 + $0x124] sm:$0xff]
        %v4351 = vld [vmem:[%s1174 + $0x12c] sm:$0xff]
        %v4352 = vld [vmem:[%s1174 + $0x13c] sm:$0xff]
        %v4353 = vld [vmem:[%s1174 + $0x144] sm:$0xff]
        %v4354 = vld [vmem:[%s1174 + $0x154] sm:$0xff]
        %v4355 = vld [vmem:[%s1174 + $0x15c] sm:$0xff]
        %v4356 = vld [vmem:[%s1174 + $0x16c] sm:$0xff]
        %v4357 = vld [vmem:[%s1174 + $0x174] sm:$0xff]
        %v4358 = vperm.slane %v4325, 0
        %v4359 = vmul.f32 %v4326, %v4358
        %v4360 = vmul.f32 %v4327, %v4358
        %v4361 = vmul.f32 %v4328, %v4358
        %v4362 = vmul.f32 %v4329, %v4358
        %v4363 = vmul.f32 %v4330, %v4358
        %v4364 = vmul.f32 %v4331, %v4358
        %v4365 = vmul.f32 %v4332, %v4358
        %v4366 = vmul.f32 %v4333, %v4358
        %v4367 = vmul.f32 %v4334, %v4358
        %v4368 = vmul.f32 %v4335, %v4358
        %v4369 = vmul.f32 %v4336, %v4358
        %v4370 = vmul.f32 %v4337, %v4358
        %v4371 = vmul.f32 %v4338, %v4358
        %v4372 = vmul.f32 %v4339, %v4358
        %v4373 = vmul.f32 %v4340, %v4358
        %v4374 = vmul.f32 %v4341, %v4358
        %v4375 = vmul.f32 %v4342, %v4358
        %v4376 = vmul.f32 %v4343, %v4358
        %v4377 = vmul.f32 %v4344, %v4358
        %v4378 = vmul.f32 %v4345, %v4358
        %v4379 = vmul.f32 %v4346, %v4358
        %v4380 = vmul.f32 %v4347, %v4358
        %v4381 = vmul.f32 %v4348, %v4358
        %v4382 = vmul.f32 %v4349, %v4358
        %v4383 = vmul.f32 %v4350, %v4358
        %v4384 = vmul.f32 %v4351, %v4358
        %v4385 = vmul.f32 %v4352, %v4358
        %v4386 = vmul.f32 %v4353, %v4358
        %v4387 = vmul.f32 %v4354, %v4358
        %v4388 = vmul.f32 %v4355, %v4358
        %v4389 = vmul.f32 %v4356, %v4358
        %v4390 = vmul.f32 %v4357, %v4358
        %v4391 = vadd.f32 %v4293, %v4359
        %v4392 = vadd.f32 %v4294, %v4360
        %v4393 = vadd.f32 %v4295, %v4361
        %v4394 = vadd.f32 %v4296, %v4362
        %v4395 = vadd.f32 %v4297, %v4363
        %v4396 = vadd.f32 %v4298, %v4364
        %v4397 = vadd.f32 %v4299, %v4365
        %v4398 = vadd.f32 %v4300, %v4366
        %v4399 = vadd.f32 %v4301, %v4367
        %v4400 = vadd.f32 %v4302, %v4368
        %v4401 = vadd.f32 %v4303, %v4369
        %v4402 = vadd.f32 %v4304, %v4370
        %v4403 = vadd.f32 %v4305, %v4371
        %v4404 = vadd.f32 %v4306, %v4372
        %v4405 = vadd.f32 %v4307, %v4373
        %v4406 = vadd.f32 %v4308, %v4374
        %v4407 = vadd.f32 %v4309, %v4375
        %v4408 = vadd.f32 %v4310, %v4376
        %v4409 = vadd.f32 %v4311, %v4377
        %v4410 = vadd.f32 %v4312, %v4378
        %v4411 = vadd.f32 %v4313, %v4379
        %v4412 = vadd.f32 %v4314, %v4380
        %v4413 = vadd.f32 %v4315, %v4381
        %v4414 = vadd.f32 %v4316, %v4382
        %v4415 = vadd.f32 %v4317, %v4383
        %v4416 = vadd.f32 %v4318, %v4384
        %v4417 = vadd.f32 %v4319, %v4385
        %v4418 = vadd.f32 %v4320, %v4386
        %v4419 = vadd.f32 %v4321, %v4387
        %v4420 = vadd.f32 %v4322, %v4388
        %v4421 = vadd.f32 %v4323, %v4389
        %v4422 = vadd.f32 %v4324, %v4390
        %s4423 = scalar_lea.vmem %s4, 16
        %v4424 = vld [vmem:[%s4423] sm:$0x1]
        %v4425 = vld [vmem:[%s1140] sm:$0xff]
        %v4426 = vld [vmem:[%s1140 + $0x8] sm:$0xff]
        %v4427 = vld [vmem:[%s1140 + $0x18] sm:$0xff]
        %v4428 = vld [vmem:[%s1140 + $0x20] sm:$0xff]
        %v4429 = vld [vmem:[%s1140 + $0x30] sm:$0xff]
        %v4430 = vld [vmem:[%s1140 + $0x38] sm:$0xff]
        %v4431 = vld [vmem:[%s1140 + $0x48] sm:$0xff]
        %v4432 = vld [vmem:[%s1140 + $0x50] sm:$0xff]
        %v4433 = vld [vmem:[%s1140 + $0x60] sm:$0xff]
        %v4434 = vld [vmem:[%s1140 + $0x68] sm:$0xff]
        %v4435 = vld [vmem:[%s1140 + $0x78] sm:$0xff]
        %v4436 = vld [vmem:[%s1140 + $0x80] sm:$0xff]
        %v4437 = vld [vmem:[%s1140 + $0x90] sm:$0xff]
        %v4438 = vld [vmem:[%s1140 + $0x98] sm:$0xff]
        %v4439 = vld [vmem:[%s1140 + $0xa8] sm:$0xff]
        %v4440 = vld [vmem:[%s1140 + $0xb0] sm:$0xff]
        %v4441 = vld [vmem:[%s1140 + $0xc0] sm:$0xff]
        %v4442 = vld [vmem:[%s1140 + $0xc8] sm:$0xff]
        %v4443 = vld [vmem:[%s1140 + $0xd8] sm:$0xff]
        %v4444 = vld [vmem:[%s1140 + $0xe0] sm:$0xff]
        %v4445 = vld [vmem:[%s1140 + $0xf0] sm:$0xff]
        %v4446 = vld [vmem:[%s1140 + $0xf8] sm:$0xff]
        %v4447 = vld [vmem:[%s1140 + $0x108] sm:$0xff]
        %v4448 = vld [vmem:[%s1140 + $0x110] sm:$0xff]
        %v4449 = vld [vmem:[%s1140 + $0x120] sm:$0xff]
        %v4450 = vld [vmem:[%s1140 + $0x128] sm:$0xff]
        %v4451 = vld [vmem:[%s1140 + $0x138] sm:$0xff]
        %v4452 = vld [vmem:[%s1140 + $0x140] sm:$0xff]
        %v4453 = vld [vmem:[%s1140 + $0x150] sm:$0xff]
        %v4454 = vld [vmem:[%s1140 + $0x158] sm:$0xff]
        %v4455 = vld [vmem:[%s1140 + $0x168] sm:$0xff]
        %v4456 = vld [vmem:[%s1140 + $0x170] sm:$0xff]
        %v4457 = vperm.slane %v4424, 0
        %v4458 = vmul.f32 %v4425, %v4457
        %v4459 = vmul.f32 %v4426, %v4457
        %v4460 = vmul.f32 %v4427, %v4457
        %v4461 = vmul.f32 %v4428, %v4457
        %v4462 = vmul.f32 %v4429, %v4457
        %v4463 = vmul.f32 %v4430, %v4457
        %v4464 = vmul.f32 %v4431, %v4457
        %v4465 = vmul.f32 %v4432, %v4457
        %v4466 = vmul.f32 %v4433, %v4457
        %v4467 = vmul.f32 %v4434, %v4457
        %v4468 = vmul.f32 %v4435, %v4457
        %v4469 = vmul.f32 %v4436, %v4457
        %v4470 = vmul.f32 %v4437, %v4457
        %v4471 = vmul.f32 %v4438, %v4457
        %v4472 = vmul.f32 %v4439, %v4457
        %v4473 = vmul.f32 %v4440, %v4457
        %v4474 = vmul.f32 %v4441, %v4457
        %v4475 = vmul.f32 %v4442, %v4457
        %v4476 = vmul.f32 %v4443, %v4457
        %v4477 = vmul.f32 %v4444, %v4457
        %v4478 = vmul.f32 %v4445, %v4457
        %v4479 = vmul.f32 %v4446, %v4457
        %v4480 = vmul.f32 %v4447, %v4457
        %v4481 = vmul.f32 %v4448, %v4457
        %v4482 = vmul.f32 %v4449, %v4457
        %v4483 = vmul.f32 %v4450, %v4457
        %v4484 = vmul.f32 %v4451, %v4457
        %v4485 = vmul.f32 %v4452, %v4457
        %v4486 = vmul.f32 %v4453, %v4457
        %v4487 = vmul.f32 %v4454, %v4457
        %v4488 = vmul.f32 %v4455, %v4457
        %v4489 = vmul.f32 %v4456, %v4457
        %v4490 = vadd.f32 %v4391, %v4458
        %v4491 = vadd.f32 %v4392, %v4459
        %v4492 = vadd.f32 %v4393, %v4460
        %v4493 = vadd.f32 %v4394, %v4461
        %v4494 = vadd.f32 %v4395, %v4462
        %v4495 = vadd.f32 %v4396, %v4463
        %v4496 = vadd.f32 %v4397, %v4464
        %v4497 = vadd.f32 %v4398, %v4465
        %v4498 = vadd.f32 %v4399, %v4466
        %v4499 = vadd.f32 %v4400, %v4467
        %v4500 = vadd.f32 %v4401, %v4468
        %v4501 = vadd.f32 %v4402, %v4469
        %v4502 = vadd.f32 %v4403, %v4470
        %v4503 = vadd.f32 %v4404, %v4471
        %v4504 = vadd.f32 %v4405, %v4472
        %v4505 = vadd.f32 %v4406, %v4473
        %v4506 = vadd.f32 %v4407, %v4474
        %v4507 = vadd.f32 %v4408, %v4475
        %v4508 = vadd.f32 %v4409, %v4476
        %v4509 = vadd.f32 %v4410, %v4477
        %v4510 = vadd.f32 %v4411, %v4478
        %v4511 = vadd.f32 %v4412, %v4479
        %v4512 = vadd.f32 %v4413, %v4480
        %v4513 = vadd.f32 %v4414, %v4481
        %v4514 = vadd.f32 %v4415, %v4482
        %v4515 = vadd.f32 %v4416, %v4483
        %v4516 = vadd.f32 %v4417, %v4484
        %v4517 = vadd.f32 %v4418, %v4485
        %v4518 = vadd.f32 %v4419, %v4486
        %v4519 = vadd.f32 %v4420, %v4487
        %v4520 = vadd.f32 %v4421, %v4488
        %v4521 = vadd.f32 %v4422, %v4489
        %v4522 = vld [vmem:[%s4423 + $0x1] sm:$0x1]
        %v4523 = vld [vmem:[%s1140 + $0x1] sm:$0xff]
        %v4524 = vld [vmem:[%s1140 + $0x9] sm:$0xff]
        %v4525 = vld [vmem:[%s1140 + $0x19] sm:$0xff]
        %v4526 = vld [vmem:[%s1140 + $0x21] sm:$0xff]
        %v4527 = vld [vmem:[%s1140 + $0x31] sm:$0xff]
        %v4528 = vld [vmem:[%s1140 + $0x39] sm:$0xff]
        %v4529 = vld [vmem:[%s1140 + $0x49] sm:$0xff]
        %v4530 = vld [vmem:[%s1140 + $0x51] sm:$0xff]
        %v4531 = vld [vmem:[%s1140 + $0x61] sm:$0xff]
        %v4532 = vld [vmem:[%s1140 + $0x69] sm:$0xff]
        %v4533 = vld [vmem:[%s1140 + $0x79] sm:$0xff]
        %v4534 = vld [vmem:[%s1140 + $0x81] sm:$0xff]
        %v4535 = vld [vmem:[%s1140 + $0x91] sm:$0xff]
        %v4536 = vld [vmem:[%s1140 + $0x99] sm:$0xff]
        %v4537 = vld [vmem:[%s1140 + $0xa9] sm:$0xff]
        %v4538 = vld [vmem:[%s1140 + $0xb1] sm:$0xff]
        %v4539 = vld [vmem:[%s1140 + $0xc1] sm:$0xff]
        %v4540 = vld [vmem:[%s1140 + $0xc9] sm:$0xff]
        %v4541 = vld [vmem:[%s1140 + $0xd9] sm:$0xff]
        %v4542 = vld [vmem:[%s1140 + $0xe1] sm:$0xff]
        %v4543 = vld [vmem:[%s1140 + $0xf1] sm:$0xff]
        %v4544 = vld [vmem:[%s1140 + $0xf9] sm:$0xff]
        %v4545 = vld [vmem:[%s1140 + $0x109] sm:$0xff]
        %v4546 = vld [vmem:[%s1140 + $0x111] sm:$0xff]
        %v4547 = vld [vmem:[%s1140 + $0x121] sm:$0xff]
        %v4548 = vld [vmem:[%s1140 + $0x129] sm:$0xff]
        %v4549 = vld [vmem:[%s1140 + $0x139] sm:$0xff]
        %v4550 = vld [vmem:[%s1140 + $0x141] sm:$0xff]
        %v4551 = vld [vmem:[%s1140 + $0x151] sm:$0xff]
        %v4552 = vld [vmem:[%s1140 + $0x159] sm:$0xff]
        %v4553 = vld [vmem:[%s1140 + $0x169] sm:$0xff]
        %v4554 = vld [vmem:[%s1140 + $0x171] sm:$0xff]
        %v4555 = vperm.slane %v4522, 0
        %v4556 = vmul.f32 %v4523, %v4555
        %v4557 = vmul.f32 %v4524, %v4555
        %v4558 = vmul.f32 %v4525, %v4555
        %v4559 = vmul.f32 %v4526, %v4555
        %v4560 = vmul.f32 %v4527, %v4555
        %v4561 = vmul.f32 %v4528, %v4555
        %v4562 = vmul.f32 %v4529, %v4555
        %v4563 = vmul.f32 %v4530, %v4555
        %v4564 = vmul.f32 %v4531, %v4555
        %v4565 = vmul.f32 %v4532, %v4555
        %v4566 = vmul.f32 %v4533, %v4555
        %v4567 = vmul.f32 %v4534, %v4555
        %v4568 = vmul.f32 %v4535, %v4555
        %v4569 = vmul.f32 %v4536, %v4555
        %v4570 = vmul.f32 %v4537, %v4555
        %v4571 = vmul.f32 %v4538, %v4555
        %v4572 = vmul.f32 %v4539, %v4555
        %v4573 = vmul.f32 %v4540, %v4555
        %v4574 = vmul.f32 %v4541, %v4555
        %v4575 = vmul.f32 %v4542, %v4555
        %v4576 = vmul.f32 %v4543, %v4555
        %v4577 = vmul.f32 %v4544, %v4555
        %v4578 = vmul.f32 %v4545, %v4555
        %v4579 = vmul.f32 %v4546, %v4555
        %v4580 = vmul.f32 %v4547, %v4555
        %v4581 = vmul.f32 %v4548, %v4555
        %v4582 = vmul.f32 %v4549, %v4555
        %v4583 = vmul.f32 %v4550, %v4555
        %v4584 = vmul.f32 %v4551, %v4555
        %v4585 = vmul.f32 %v4552, %v4555
        %v4586 = vmul.f32 %v4553, %v4555
        %v4587 = vmul.f32 %v4554, %v4555
        %v4588 = vadd.f32 %v4490, %v4556
        %v4589 = vadd.f32 %v4491, %v4557
        %v4590 = vadd.f32 %v4492, %v4558
        %v4591 = vadd.f32 %v4493, %v4559
        %v4592 = vadd.f32 %v4494, %v4560
        %v4593 = vadd.f32 %v4495, %v4561
        %v4594 = vadd.f32 %v4496, %v4562
        %v4595 = vadd.f32 %v4497, %v4563
        %v4596 = vadd.f32 %v4498, %v4564
        %v4597 = vadd.f32 %v4499, %v4565
        %v4598 = vadd.f32 %v4500, %v4566
        %v4599 = vadd.f32 %v4501, %v4567
        %v4600 = vadd.f32 %v4502, %v4568
        %v4601 = vadd.f32 %v4503, %v4569
        %v4602 = vadd.f32 %v4504, %v4570
        %v4603 = vadd.f32 %v4505, %v4571
        %v4604 = vadd.f32 %v4506, %v4572
        %v4605 = vadd.f32 %v4507, %v4573
        %v4606 = vadd.f32 %v4508, %v4574
        %v4607 = vadd.f32 %v4509, %v4575
        %v4608 = vadd.f32 %v4510, %v4576
        %v4609 = vadd.f32 %v4511, %v4577
        %v4610 = vadd.f32 %v4512, %v4578
        %v4611 = vadd.f32 %v4513, %v4579
        %v4612 = vadd.f32 %v4514, %v4580
        %v4613 = vadd.f32 %v4515, %v4581
        %v4614 = vadd.f32 %v4516, %v4582
        %v4615 = vadd.f32 %v4517, %v4583
        %v4616 = vadd.f32 %v4518, %v4584
        %v4617 = vadd.f32 %v4519, %v4585
        %v4618 = vadd.f32 %v4520, %v4586
        %v4619 = vadd.f32 %v4521, %v4587
        %v4620 = vld [vmem:[%s4423 + $0x2] sm:$0x1]
        %v4621 = vld [vmem:[%s1140 + $0x2] sm:$0xff]
        %v4622 = vld [vmem:[%s1140 + $0xa] sm:$0xff]
        %v4623 = vld [vmem:[%s1140 + $0x1a] sm:$0xff]
        %v4624 = vld [vmem:[%s1140 + $0x22] sm:$0xff]
        %v4625 = vld [vmem:[%s1140 + $0x32] sm:$0xff]
        %v4626 = vld [vmem:[%s1140 + $0x3a] sm:$0xff]
        %v4627 = vld [vmem:[%s1140 + $0x4a] sm:$0xff]
        %v4628 = vld [vmem:[%s1140 + $0x52] sm:$0xff]
        %v4629 = vld [vmem:[%s1140 + $0x62] sm:$0xff]
        %v4630 = vld [vmem:[%s1140 + $0x6a] sm:$0xff]
        %v4631 = vld [vmem:[%s1140 + $0x7a] sm:$0xff]
        %v4632 = vld [vmem:[%s1140 + $0x82] sm:$0xff]
        %v4633 = vld [vmem:[%s1140 + $0x92] sm:$0xff]
        %v4634 = vld [vmem:[%s1140 + $0x9a] sm:$0xff]
        %v4635 = vld [vmem:[%s1140 + $0xaa] sm:$0xff]
        %v4636 = vld [vmem:[%s1140 + $0xb2] sm:$0xff]
        %v4637 = vld [vmem:[%s1140 + $0xc2] sm:$0xff]
        %v4638 = vld [vmem:[%s1140 + $0xca] sm:$0xff]
        %v4639 = vld [vmem:[%s1140 + $0xda] sm:$0xff]
        %v4640 = vld [vmem:[%s1140 + $0xe2] sm:$0xff]
        %v4641 = vld [vmem:[%s1140 + $0xf2] sm:$0xff]
        %v4642 = vld [vmem:[%s1140 + $0xfa] sm:$0xff]
        %v4643 = vld [vmem:[%s1140 + $0x10a] sm:$0xff]
        %v4644 = vld [vmem:[%s1140 + $0x112] sm:$0xff]
        %v4645 = vld [vmem:[%s1140 + $0x122] sm:$0xff]
        %v4646 = vld [vmem:[%s1140 + $0x12a] sm:$0xff]
        %v4647 = vld [vmem:[%s1140 + $0x13a] sm:$0xff]
        %v4648 = vld [vmem:[%s1140 + $0x142] sm:$0xff]
        %v4649 = vld [vmem:[%s1140 + $0x152] sm:$0xff]
        %v4650 = vld [vmem:[%s1140 + $0x15a] sm:$0xff]
        %v4651 = vld [vmem:[%s1140 + $0x16a] sm:$0xff]
        %v4652 = vld [vmem:[%s1140 + $0x172] sm:$0xff]
        %v4653 = vperm.slane %v4620, 0
        %v4654 = vmul.f32 %v4621, %v4653
        %v4655 = vmul.f32 %v4622, %v4653
        %v4656 = vmul.f32 %v4623, %v4653
        %v4657 = vmul.f32 %v4624, %v4653
        %v4658 = vmul.f32 %v4625, %v4653
        %v4659 = vmul.f32 %v4626, %v4653
        %v4660 = vmul.f32 %v4627, %v4653
        %v4661 = vmul.f32 %v4628, %v4653
        %v4662 = vmul.f32 %v4629, %v4653
        %v4663 = vmul.f32 %v4630, %v4653
        %v4664 = vmul.f32 %v4631, %v4653
        %v4665 = vmul.f32 %v4632, %v4653
        %v4666 = vmul.f32 %v4633, %v4653
        %v4667 = vmul.f32 %v4634, %v4653
        %v4668 = vmul.f32 %v4635, %v4653
        %v4669 = vmul.f32 %v4636, %v4653
        %v4670 = vmul.f32 %v4637, %v4653
        %v4671 = vmul.f32 %v4638, %v4653
        %v4672 = vmul.f32 %v4639, %v4653
        %v4673 = vmul.f32 %v4640, %v4653
        %v4674 = vmul.f32 %v4641, %v4653
        %v4675 = vmul.f32 %v4642, %v4653
        %v4676 = vmul.f32 %v4643, %v4653
        %v4677 = vmul.f32 %v4644, %v4653
        %v4678 = vmul.f32 %v4645, %v4653
        %v4679 = vmul.f32 %v4646, %v4653
        %v4680 = vmul.f32 %v4647, %v4653
        %v4681 = vmul.f32 %v4648, %v4653
        %v4682 = vmul.f32 %v4649, %v4653
        %v4683 = vmul.f32 %v4650, %v4653
        %v4684 = vmul.f32 %v4651, %v4653
        %v4685 = vmul.f32 %v4652, %v4653
        %v4686 = vadd.f32 %v4588, %v4654
        %v4687 = vadd.f32 %v4589, %v4655
        %v4688 = vadd.f32 %v4590, %v4656
        %v4689 = vadd.f32 %v4591, %v4657
        %v4690 = vadd.f32 %v4592, %v4658
        %v4691 = vadd.f32 %v4593, %v4659
        %v4692 = vadd.f32 %v4594, %v4660
        %v4693 = vadd.f32 %v4595, %v4661
        %v4694 = vadd.f32 %v4596, %v4662
        %v4695 = vadd.f32 %v4597, %v4663
        %v4696 = vadd.f32 %v4598, %v4664
        %v4697 = vadd.f32 %v4599, %v4665
        %v4698 = vadd.f32 %v4600, %v4666
        %v4699 = vadd.f32 %v4601, %v4667
        %v4700 = vadd.f32 %v4602, %v4668
        %v4701 = vadd.f32 %v4603, %v4669
        %v4702 = vadd.f32 %v4604, %v4670
        %v4703 = vadd.f32 %v4605, %v4671
        %v4704 = vadd.f32 %v4606, %v4672
        %v4705 = vadd.f32 %v4607, %v4673
        %v4706 = vadd.f32 %v4608, %v4674
        %v4707 = vadd.f32 %v4609, %v4675
        %v4708 = vadd.f32 %v4610, %v4676
        %v4709 = vadd.f32 %v4611, %v4677
        %v4710 = vadd.f32 %v4612, %v4678
        %v4711 = vadd.f32 %v4613, %v4679
        %v4712 = vadd.f32 %v4614, %v4680
        %v4713 = vadd.f32 %v4615, %v4681
        %v4714 = vadd.f32 %v4616, %v4682
        %v4715 = vadd.f32 %v4617, %v4683
        %v4716 = vadd.f32 %v4618, %v4684
        %v4717 = vadd.f32 %v4619, %v4685
        %v4718 = vld [vmem:[%s4423 + $0x3] sm:$0x1]
        %v4719 = vld [vmem:[%s1140 + $0x3] sm:$0xff]
        %v4720 = vld [vmem:[%s1140 + $0xb] sm:$0xff]
        %v4721 = vld [vmem:[%s1140 + $0x1b] sm:$0xff]
        %v4722 = vld [vmem:[%s1140 + $0x23] sm:$0xff]
        %v4723 = vld [vmem:[%s1140 + $0x33] sm:$0xff]
        %v4724 = vld [vmem:[%s1140 + $0x3b] sm:$0xff]
        %v4725 = vld [vmem:[%s1140 + $0x4b] sm:$0xff]
        %v4726 = vld [vmem:[%s1140 + $0x53] sm:$0xff]
        %v4727 = vld [vmem:[%s1140 + $0x63] sm:$0xff]
        %v4728 = vld [vmem:[%s1140 + $0x6b] sm:$0xff]
        %v4729 = vld [vmem:[%s1140 + $0x7b] sm:$0xff]
        %v4730 = vld [vmem:[%s1140 + $0x83] sm:$0xff]
        %v4731 = vld [vmem:[%s1140 + $0x93] sm:$0xff]
        %v4732 = vld [vmem:[%s1140 + $0x9b] sm:$0xff]
        %v4733 = vld [vmem:[%s1140 + $0xab] sm:$0xff]
        %v4734 = vld [vmem:[%s1140 + $0xb3] sm:$0xff]
        %v4735 = vld [vmem:[%s1140 + $0xc3] sm:$0xff]
        %v4736 = vld [vmem:[%s1140 + $0xcb] sm:$0xff]
        %v4737 = vld [vmem:[%s1140 + $0xdb] sm:$0xff]
        %v4738 = vld [vmem:[%s1140 + $0xe3] sm:$0xff]
        %v4739 = vld [vmem:[%s1140 + $0xf3] sm:$0xff]
        %v4740 = vld [vmem:[%s1140 + $0xfb] sm:$0xff]
        %v4741 = vld [vmem:[%s1140 + $0x10b] sm:$0xff]
        %v4742 = vld [vmem:[%s1140 + $0x113] sm:$0xff]
        %v4743 = vld [vmem:[%s1140 + $0x123] sm:$0xff]
        %v4744 = vld [vmem:[%s1140 + $0x12b] sm:$0xff]
        %v4745 = vld [vmem:[%s1140 + $0x13b] sm:$0xff]
        %v4746 = vld [vmem:[%s1140 + $0x143] sm:$0xff]
        %v4747 = vld [vmem:[%s1140 + $0x153] sm:$0xff]
        %v4748 = vld [vmem:[%s1140 + $0x15b] sm:$0xff]
        %v4749 = vld [vmem:[%s1140 + $0x16b] sm:$0xff]
        %v4750 = vld [vmem:[%s1140 + $0x173] sm:$0xff]
        %v4751 = vperm.slane %v4718, 0
        %v4752 = vmul.f32 %v4719, %v4751
        %v4753 = vmul.f32 %v4720, %v4751
        %v4754 = vmul.f32 %v4721, %v4751
        %v4755 = vmul.f32 %v4722, %v4751
        %v4756 = vmul.f32 %v4723, %v4751
        %v4757 = vmul.f32 %v4724, %v4751
        %v4758 = vmul.f32 %v4725, %v4751
        %v4759 = vmul.f32 %v4726, %v4751
        %v4760 = vmul.f32 %v4727, %v4751
        %v4761 = vmul.f32 %v4728, %v4751
        %v4762 = vmul.f32 %v4729, %v4751
        %v4763 = vmul.f32 %v4730, %v4751
        %v4764 = vmul.f32 %v4731, %v4751
        %v4765 = vmul.f32 %v4732, %v4751
        %v4766 = vmul.f32 %v4733, %v4751
        %v4767 = vmul.f32 %v4734, %v4751
        %v4768 = vmul.f32 %v4735, %v4751
        %v4769 = vmul.f32 %v4736, %v4751
        %v4770 = vmul.f32 %v4737, %v4751
        %v4771 = vmul.f32 %v4738, %v4751
        %v4772 = vmul.f32 %v4739, %v4751
        %v4773 = vmul.f32 %v4740, %v4751
        %v4774 = vmul.f32 %v4741, %v4751
        %v4775 = vmul.f32 %v4742, %v4751
        %v4776 = vmul.f32 %v4743, %v4751
        %v4777 = vmul.f32 %v4744, %v4751
        %v4778 = vmul.f32 %v4745, %v4751
        %v4779 = vmul.f32 %v4746, %v4751
        %v4780 = vmul.f32 %v4747, %v4751
        %v4781 = vmul.f32 %v4748, %v4751
        %v4782 = vmul.f32 %v4749, %v4751
        %v4783 = vmul.f32 %v4750, %v4751
        %v4784 = vadd.f32 %v4686, %v4752
        %v4785 = vadd.f32 %v4687, %v4753
        %v4786 = vadd.f32 %v4688, %v4754
        %v4787 = vadd.f32 %v4689, %v4755
        %v4788 = vadd.f32 %v4690, %v4756
        %v4789 = vadd.f32 %v4691, %v4757
        %v4790 = vadd.f32 %v4692, %v4758
        %v4791 = vadd.f32 %v4693, %v4759
        %v4792 = vadd.f32 %v4694, %v4760
        %v4793 = vadd.f32 %v4695, %v4761
        %v4794 = vadd.f32 %v4696, %v4762
        %v4795 = vadd.f32 %v4697, %v4763
        %v4796 = vadd.f32 %v4698, %v4764
        %v4797 = vadd.f32 %v4699, %v4765
        %v4798 = vadd.f32 %v4700, %v4766
        %v4799 = vadd.f32 %v4701, %v4767
        %v4800 = vadd.f32 %v4702, %v4768
        %v4801 = vadd.f32 %v4703, %v4769
        %v4802 = vadd.f32 %v4704, %v4770
        %v4803 = vadd.f32 %v4705, %v4771
        %v4804 = vadd.f32 %v4706, %v4772
        %v4805 = vadd.f32 %v4707, %v4773
        %v4806 = vadd.f32 %v4708, %v4774
        %v4807 = vadd.f32 %v4709, %v4775
        %v4808 = vadd.f32 %v4710, %v4776
        %v4809 = vadd.f32 %v4711, %v4777
        %v4810 = vadd.f32 %v4712, %v4778
        %v4811 = vadd.f32 %v4713, %v4779
        %v4812 = vadd.f32 %v4714, %v4780
        %v4813 = vadd.f32 %v4715, %v4781
        %v4814 = vadd.f32 %v4716, %v4782
        %v4815 = vadd.f32 %v4717, %v4783
        %v4816 = vld [vmem:[%s4423 + $0x4] sm:$0x1]
        %v4817 = vld [vmem:[%s1140 + $0x4] sm:$0xff]
        %v4818 = vld [vmem:[%s1140 + $0xc] sm:$0xff]
        %v4819 = vld [vmem:[%s1140 + $0x1c] sm:$0xff]
        %v4820 = vld [vmem:[%s1140 + $0x24] sm:$0xff]
        %v4821 = vld [vmem:[%s1140 + $0x34] sm:$0xff]
        %v4822 = vld [vmem:[%s1140 + $0x3c] sm:$0xff]
        %v4823 = vld [vmem:[%s1140 + $0x4c] sm:$0xff]
        %v4824 = vld [vmem:[%s1140 + $0x54] sm:$0xff]
        %v4825 = vld [vmem:[%s1140 + $0x64] sm:$0xff]
        %v4826 = vld [vmem:[%s1140 + $0x6c] sm:$0xff]
        %v4827 = vld [vmem:[%s1140 + $0x7c] sm:$0xff]
        %v4828 = vld [vmem:[%s1140 + $0x84] sm:$0xff]
        %v4829 = vld [vmem:[%s1140 + $0x94] sm:$0xff]
        %v4830 = vld [vmem:[%s1140 + $0x9c] sm:$0xff]
        %v4831 = vld [vmem:[%s1140 + $0xac] sm:$0xff]
        %v4832 = vld [vmem:[%s1140 + $0xb4] sm:$0xff]
        %v4833 = vld [vmem:[%s1140 + $0xc4] sm:$0xff]
        %v4834 = vld [vmem:[%s1140 + $0xcc] sm:$0xff]
        %v4835 = vld [vmem:[%s1140 + $0xdc] sm:$0xff]
        %v4836 = vld [vmem:[%s1140 + $0xe4] sm:$0xff]
        %v4837 = vld [vmem:[%s1140 + $0xf4] sm:$0xff]
        %v4838 = vld [vmem:[%s1140 + $0xfc] sm:$0xff]
        %v4839 = vld [vmem:[%s1140 + $0x10c] sm:$0xff]
        %v4840 = vld [vmem:[%s1140 + $0x114] sm:$0xff]
        %v4841 = vld [vmem:[%s1140 + $0x124] sm:$0xff]
        %v4842 = vld [vmem:[%s1140 + $0x12c] sm:$0xff]
        %v4843 = vld [vmem:[%s1140 + $0x13c] sm:$0xff]
        %v4844 = vld [vmem:[%s1140 + $0x144] sm:$0xff]
        %v4845 = vld [vmem:[%s1140 + $0x154] sm:$0xff]
        %v4846 = vld [vmem:[%s1140 + $0x15c] sm:$0xff]
        %v4847 = vld [vmem:[%s1140 + $0x16c] sm:$0xff]
        %v4848 = vld [vmem:[%s1140 + $0x174] sm:$0xff]
        %v4849 = vperm.slane %v4816, 0
        %v4850 = vmul.f32 %v4817, %v4849
        %v4851 = vmul.f32 %v4818, %v4849
        %v4852 = vmul.f32 %v4819, %v4849
        %v4853 = vmul.f32 %v4820, %v4849
        %v4854 = vmul.f32 %v4821, %v4849
        %v4855 = vmul.f32 %v4822, %v4849
        %v4856 = vmul.f32 %v4823, %v4849
        %v4857 = vmul.f32 %v4824, %v4849
        %v4858 = vmul.f32 %v4825, %v4849
        %v4859 = vmul.f32 %v4826, %v4849
        %v4860 = vmul.f32 %v4827, %v4849
        %v4861 = vmul.f32 %v4828, %v4849
        %v4862 = vmul.f32 %v4829, %v4849
        %v4863 = vmul.f32 %v4830, %v4849
        %v4864 = vmul.f32 %v4831, %v4849
        %v4865 = vmul.f32 %v4832, %v4849
        %v4866 = vmul.f32 %v4833, %v4849
        %v4867 = vmul.f32 %v4834, %v4849
        %v4868 = vmul.f32 %v4835, %v4849
        %v4869 = vmul.f32 %v4836, %v4849
        %v4870 = vmul.f32 %v4837, %v4849
        %v4871 = vmul.f32 %v4838, %v4849
        %v4872 = vmul.f32 %v4839, %v4849
        %v4873 = vmul.f32 %v4840, %v4849
        %v4874 = vmul.f32 %v4841, %v4849
        %v4875 = vmul.f32 %v4842, %v4849
        %v4876 = vmul.f32 %v4843, %v4849
        %v4877 = vmul.f32 %v4844, %v4849
        %v4878 = vmul.f32 %v4845, %v4849
        %v4879 = vmul.f32 %v4846, %v4849
        %v4880 = vmul.f32 %v4847, %v4849
        %v4881 = vmul.f32 %v4848, %v4849
        %v4882 = vadd.f32 %v4784, %v4850
        %v4883 = vadd.f32 %v4785, %v4851
        %v4884 = vadd.f32 %v4786, %v4852
        %v4885 = vadd.f32 %v4787, %v4853
        %v4886 = vadd.f32 %v4788, %v4854
        %v4887 = vadd.f32 %v4789, %v4855
        %v4888 = vadd.f32 %v4790, %v4856
        %v4889 = vadd.f32 %v4791, %v4857
        %v4890 = vadd.f32 %v4792, %v4858
        %v4891 = vadd.f32 %v4793, %v4859
        %v4892 = vadd.f32 %v4794, %v4860
        %v4893 = vadd.f32 %v4795, %v4861
        %v4894 = vadd.f32 %v4796, %v4862
        %v4895 = vadd.f32 %v4797, %v4863
        %v4896 = vadd.f32 %v4798, %v4864
        %v4897 = vadd.f32 %v4799, %v4865
        %v4898 = vadd.f32 %v4800, %v4866
        %v4899 = vadd.f32 %v4801, %v4867
        %v4900 = vadd.f32 %v4802, %v4868
        %v4901 = vadd.f32 %v4803, %v4869
        %v4902 = vadd.f32 %v4804, %v4870
        %v4903 = vadd.f32 %v4805, %v4871
        %v4904 = vadd.f32 %v4806, %v4872
        %v4905 = vadd.f32 %v4807, %v4873
        %v4906 = vadd.f32 %v4808, %v4874
        %v4907 = vadd.f32 %v4809, %v4875
        %v4908 = vadd.f32 %v4810, %v4876
        %v4909 = vadd.f32 %v4811, %v4877
        %v4910 = vadd.f32 %v4812, %v4878
        %v4911 = vadd.f32 %v4813, %v4879
        %v4912 = vadd.f32 %v4814, %v4880
        %v4913 = vadd.f32 %v4815, %v4881
        %s4914 = scalar_lea.vmem %s4, 24
        %v4915 = vld [vmem:[%s4914] sm:$0x1]
        %v4916 = vld [vmem:[%s1765] sm:$0xff]
        %v4917 = vld [vmem:[%s1765 + $0x8] sm:$0xff]
        %v4918 = vld [vmem:[%s1765 + $0x18] sm:$0xff]
        %v4919 = vld [vmem:[%s1765 + $0x20] sm:$0xff]
        %v4920 = vld [vmem:[%s1765 + $0x30] sm:$0xff]
        %v4921 = vld [vmem:[%s1765 + $0x38] sm:$0xff]
        %v4922 = vld [vmem:[%s1765 + $0x48] sm:$0xff]
        %v4923 = vld [vmem:[%s1765 + $0x50] sm:$0xff]
        %v4924 = vld [vmem:[%s1765 + $0x60] sm:$0xff]
        %v4925 = vld [vmem:[%s1765 + $0x68] sm:$0xff]
        %v4926 = vld [vmem:[%s1765 + $0x78] sm:$0xff]
        %v4927 = vld [vmem:[%s1765 + $0x80] sm:$0xff]
        %v4928 = vld [vmem:[%s1765 + $0x90] sm:$0xff]
        %v4929 = vld [vmem:[%s1765 + $0x98] sm:$0xff]
        %v4930 = vld [vmem:[%s1765 + $0xa8] sm:$0xff]
        %v4931 = vld [vmem:[%s1765 + $0xb0] sm:$0xff]
        %v4932 = vld [vmem:[%s1765 + $0xc0] sm:$0xff]
        %v4933 = vld [vmem:[%s1765 + $0xc8] sm:$0xff]
        %v4934 = vld [vmem:[%s1765 + $0xd8] sm:$0xff]
        %v4935 = vld [vmem:[%s1765 + $0xe0] sm:$0xff]
        %v4936 = vld [vmem:[%s1765 + $0xf0] sm:$0xff]
        %v4937 = vld [vmem:[%s1765 + $0xf8] sm:$0xff]
        %v4938 = vld [vmem:[%s1765 + $0x108] sm:$0xff]
        %v4939 = vld [vmem:[%s1765 + $0x110] sm:$0xff]
        %v4940 = vld [vmem:[%s1765 + $0x120] sm:$0xff]
        %v4941 = vld [vmem:[%s1765 + $0x128] sm:$0xff]
        %v4942 = vld [vmem:[%s1765 + $0x138] sm:$0xff]
        %v4943 = vld [vmem:[%s1765 + $0x140] sm:$0xff]
        %v4944 = vld [vmem:[%s1765 + $0x150] sm:$0xff]
        %v4945 = vld [vmem:[%s1765 + $0x158] sm:$0xff]
        %v4946 = vld [vmem:[%s1765 + $0x168] sm:$0xff]
        %v4947 = vld [vmem:[%s1765 + $0x170] sm:$0xff]
        %v4948 = vperm.slane %v4915, 0
        %v4949 = vmul.f32 %v4916, %v4948
        %v4950 = vmul.f32 %v4917, %v4948
        %v4951 = vmul.f32 %v4918, %v4948
        %v4952 = vmul.f32 %v4919, %v4948
        %v4953 = vmul.f32 %v4920, %v4948
        %v4954 = vmul.f32 %v4921, %v4948
        %v4955 = vmul.f32 %v4922, %v4948
        %v4956 = vmul.f32 %v4923, %v4948
        %v4957 = vmul.f32 %v4924, %v4948
        %v4958 = vmul.f32 %v4925, %v4948
        %v4959 = vmul.f32 %v4926, %v4948
        %v4960 = vmul.f32 %v4927, %v4948
        %v4961 = vmul.f32 %v4928, %v4948
        %v4962 = vmul.f32 %v4929, %v4948
        %v4963 = vmul.f32 %v4930, %v4948
        %v4964 = vmul.f32 %v4931, %v4948
        %v4965 = vmul.f32 %v4932, %v4948
        %v4966 = vmul.f32 %v4933, %v4948
        %v4967 = vmul.f32 %v4934, %v4948
        %v4968 = vmul.f32 %v4935, %v4948
        %v4969 = vmul.f32 %v4936, %v4948
        %v4970 = vmul.f32 %v4937, %v4948
        %v4971 = vmul.f32 %v4938, %v4948
        %v4972 = vmul.f32 %v4939, %v4948
        %v4973 = vmul.f32 %v4940, %v4948
        %v4974 = vmul.f32 %v4941, %v4948
        %v4975 = vmul.f32 %v4942, %v4948
        %v4976 = vmul.f32 %v4943, %v4948
        %v4977 = vmul.f32 %v4944, %v4948
        %v4978 = vmul.f32 %v4945, %v4948
        %v4979 = vmul.f32 %v4946, %v4948
        %v4980 = vmul.f32 %v4947, %v4948
        %v4981 = vadd.f32 %v4882, %v4949
        %v4982 = vadd.f32 %v4883, %v4950
        %v4983 = vadd.f32 %v4884, %v4951
        %v4984 = vadd.f32 %v4885, %v4952
        %v4985 = vadd.f32 %v4886, %v4953
        %v4986 = vadd.f32 %v4887, %v4954
        %v4987 = vadd.f32 %v4888, %v4955
        %v4988 = vadd.f32 %v4889, %v4956
        %v4989 = vadd.f32 %v4890, %v4957
        %v4990 = vadd.f32 %v4891, %v4958
        %v4991 = vadd.f32 %v4892, %v4959
        %v4992 = vadd.f32 %v4893, %v4960
        %v4993 = vadd.f32 %v4894, %v4961
        %v4994 = vadd.f32 %v4895, %v4962
        %v4995 = vadd.f32 %v4896, %v4963
        %v4996 = vadd.f32 %v4897, %v4964
        %v4997 = vadd.f32 %v4898, %v4965
        %v4998 = vadd.f32 %v4899, %v4966
        %v4999 = vadd.f32 %v4900, %v4967
        %v5000 = vadd.f32 %v4901, %v4968
        %v5001 = vadd.f32 %v4902, %v4969
        %v5002 = vadd.f32 %v4903, %v4970
        %v5003 = vadd.f32 %v4904, %v4971
        %v5004 = vadd.f32 %v4905, %v4972
        %v5005 = vadd.f32 %v4906, %v4973
        %v5006 = vadd.f32 %v4907, %v4974
        %v5007 = vadd.f32 %v4908, %v4975
        %v5008 = vadd.f32 %v4909, %v4976
        %v5009 = vadd.f32 %v4910, %v4977
        %v5010 = vadd.f32 %v4911, %v4978
        %v5011 = vadd.f32 %v4912, %v4979
        %v5012 = vadd.f32 %v4913, %v4980
        %v5013 = vld [vmem:[%s4914 + $0x1] sm:$0x1]
        %v5014 = vld [vmem:[%s1765 + $0x1] sm:$0xff]
        %v5015 = vld [vmem:[%s1765 + $0x9] sm:$0xff]
        %v5016 = vld [vmem:[%s1765 + $0x19] sm:$0xff]
        %v5017 = vld [vmem:[%s1765 + $0x21] sm:$0xff]
        %v5018 = vld [vmem:[%s1765 + $0x31] sm:$0xff]
        %v5019 = vld [vmem:[%s1765 + $0x39] sm:$0xff]
        %v5020 = vld [vmem:[%s1765 + $0x49] sm:$0xff]
        %v5021 = vld [vmem:[%s1765 + $0x51] sm:$0xff]
        %v5022 = vld [vmem:[%s1765 + $0x61] sm:$0xff]
        %v5023 = vld [vmem:[%s1765 + $0x69] sm:$0xff]
        %v5024 = vld [vmem:[%s1765 + $0x79] sm:$0xff]
        %v5025 = vld [vmem:[%s1765 + $0x81] sm:$0xff]
        %v5026 = vld [vmem:[%s1765 + $0x91] sm:$0xff]
        %v5027 = vld [vmem:[%s1765 + $0x99] sm:$0xff]
        %v5028 = vld [vmem:[%s1765 + $0xa9] sm:$0xff]
        %v5029 = vld [vmem:[%s1765 + $0xb1] sm:$0xff]
        %v5030 = vld [vmem:[%s1765 + $0xc1] sm:$0xff]
        %v5031 = vld [vmem:[%s1765 + $0xc9] sm:$0xff]
        %v5032 = vld [vmem:[%s1765 + $0xd9] sm:$0xff]
        %v5033 = vld [vmem:[%s1765 + $0xe1] sm:$0xff]
        %v5034 = vld [vmem:[%s1765 + $0xf1] sm:$0xff]
        %v5035 = vld [vmem:[%s1765 + $0xf9] sm:$0xff]
        %v5036 = vld [vmem:[%s1765 + $0x109] sm:$0xff]
        %v5037 = vld [vmem:[%s1765 + $0x111] sm:$0xff]
        %v5038 = vld [vmem:[%s1765 + $0x121] sm:$0xff]
        %v5039 = vld [vmem:[%s1765 + $0x129] sm:$0xff]
        %v5040 = vld [vmem:[%s1765 + $0x139] sm:$0xff]
        %v5041 = vld [vmem:[%s1765 + $0x141] sm:$0xff]
        %v5042 = vld [vmem:[%s1765 + $0x151] sm:$0xff]
        %v5043 = vld [vmem:[%s1765 + $0x159] sm:$0xff]
        %v5044 = vld [vmem:[%s1765 + $0x169] sm:$0xff]
        %v5045 = vld [vmem:[%s1765 + $0x171] sm:$0xff]
        %v5046 = vperm.slane %v5013, 0
        %v5047 = vmul.f32 %v5014, %v5046
        %v5048 = vmul.f32 %v5015, %v5046
        %v5049 = vmul.f32 %v5016, %v5046
        %v5050 = vmul.f32 %v5017, %v5046
        %v5051 = vmul.f32 %v5018, %v5046
        %v5052 = vmul.f32 %v5019, %v5046
        %v5053 = vmul.f32 %v5020, %v5046
        %v5054 = vmul.f32 %v5021, %v5046
        %v5055 = vmul.f32 %v5022, %v5046
        %v5056 = vmul.f32 %v5023, %v5046
        %v5057 = vmul.f32 %v5024, %v5046
        %v5058 = vmul.f32 %v5025, %v5046
        %v5059 = vmul.f32 %v5026, %v5046
        %v5060 = vmul.f32 %v5027, %v5046
        %v5061 = vmul.f32 %v5028, %v5046
        %v5062 = vmul.f32 %v5029, %v5046
        %v5063 = vmul.f32 %v5030, %v5046
        %v5064 = vmul.f32 %v5031, %v5046
        %v5065 = vmul.f32 %v5032, %v5046
        %v5066 = vmul.f32 %v5033, %v5046
        %v5067 = vmul.f32 %v5034, %v5046
        %v5068 = vmul.f32 %v5035, %v5046
        %v5069 = vmul.f32 %v5036, %v5046
        %v5070 = vmul.f32 %v5037, %v5046
        %v5071 = vmul.f32 %v5038, %v5046
        %v5072 = vmul.f32 %v5039, %v5046
        %v5073 = vmul.f32 %v5040, %v5046
        %v5074 = vmul.f32 %v5041, %v5046
        %v5075 = vmul.f32 %v5042, %v5046
        %v5076 = vmul.f32 %v5043, %v5046
        %v5077 = vmul.f32 %v5044, %v5046
        %v5078 = vmul.f32 %v5045, %v5046
        %v5079 = vadd.f32 %v4981, %v5047
        %v5080 = vadd.f32 %v4982, %v5048
        %v5081 = vadd.f32 %v4983, %v5049
        %v5082 = vadd.f32 %v4984, %v5050
        %v5083 = vadd.f32 %v4985, %v5051
        %v5084 = vadd.f32 %v4986, %v5052
        %v5085 = vadd.f32 %v4987, %v5053
        %v5086 = vadd.f32 %v4988, %v5054
        %v5087 = vadd.f32 %v4989, %v5055
        %v5088 = vadd.f32 %v4990, %v5056
        %v5089 = vadd.f32 %v4991, %v5057
        %v5090 = vadd.f32 %v4992, %v5058
        %v5091 = vadd.f32 %v4993, %v5059
        %v5092 = vadd.f32 %v4994, %v5060
        %v5093 = vadd.f32 %v4995, %v5061
        %v5094 = vadd.f32 %v4996, %v5062
        %v5095 = vadd.f32 %v4997, %v5063
        %v5096 = vadd.f32 %v4998, %v5064
        %v5097 = vadd.f32 %v4999, %v5065
        %v5098 = vadd.f32 %v5000, %v5066
        %v5099 = vadd.f32 %v5001, %v5067
        %v5100 = vadd.f32 %v5002, %v5068
        %v5101 = vadd.f32 %v5003, %v5069
        %v5102 = vadd.f32 %v5004, %v5070
        %v5103 = vadd.f32 %v5005, %v5071
        %v5104 = vadd.f32 %v5006, %v5072
        %v5105 = vadd.f32 %v5007, %v5073
        %v5106 = vadd.f32 %v5008, %v5074
        %v5107 = vadd.f32 %v5009, %v5075
        %v5108 = vadd.f32 %v5010, %v5076
        %v5109 = vadd.f32 %v5011, %v5077
        %v5110 = vadd.f32 %v5012, %v5078
        %v5111 = vld [vmem:[%s4914 + $0x2] sm:$0x1]
        %v5112 = vld [vmem:[%s1765 + $0x2] sm:$0xff]
        %v5113 = vld [vmem:[%s1765 + $0xa] sm:$0xff]
        %v5114 = vld [vmem:[%s1765 + $0x1a] sm:$0xff]
        %v5115 = vld [vmem:[%s1765 + $0x22] sm:$0xff]
        %v5116 = vld [vmem:[%s1765 + $0x32] sm:$0xff]
        %v5117 = vld [vmem:[%s1765 + $0x3a] sm:$0xff]
        %v5118 = vld [vmem:[%s1765 + $0x4a] sm:$0xff]
        %v5119 = vld [vmem:[%s1765 + $0x52] sm:$0xff]
        %v5120 = vld [vmem:[%s1765 + $0x62] sm:$0xff]
        %v5121 = vld [vmem:[%s1765 + $0x6a] sm:$0xff]
        %v5122 = vld [vmem:[%s1765 + $0x7a] sm:$0xff]
        %v5123 = vld [vmem:[%s1765 + $0x82] sm:$0xff]
        %v5124 = vld [vmem:[%s1765 + $0x92] sm:$0xff]
        %v5125 = vld [vmem:[%s1765 + $0x9a] sm:$0xff]
        %v5126 = vld [vmem:[%s1765 + $0xaa] sm:$0xff]
        %v5127 = vld [vmem:[%s1765 + $0xb2] sm:$0xff]
        %v5128 = vld [vmem:[%s1765 + $0xc2] sm:$0xff]
        %v5129 = vld [vmem:[%s1765 + $0xca] sm:$0xff]
        %v5130 = vld [vmem:[%s1765 + $0xda] sm:$0xff]
        %v5131 = vld [vmem:[%s1765 + $0xe2] sm:$0xff]
        %v5132 = vld [vmem:[%s1765 + $0xf2] sm:$0xff]
        %v5133 = vld [vmem:[%s1765 + $0xfa] sm:$0xff]
        %v5134 = vld [vmem:[%s1765 + $0x10a] sm:$0xff]
        %v5135 = vld [vmem:[%s1765 + $0x112] sm:$0xff]
        %v5136 = vld [vmem:[%s1765 + $0x122] sm:$0xff]
        %v5137 = vld [vmem:[%s1765 + $0x12a] sm:$0xff]
        %v5138 = vld [vmem:[%s1765 + $0x13a] sm:$0xff]
        %v5139 = vld [vmem:[%s1765 + $0x142] sm:$0xff]
        %v5140 = vld [vmem:[%s1765 + $0x152] sm:$0xff]
        %v5141 = vld [vmem:[%s1765 + $0x15a] sm:$0xff]
        %v5142 = vld [vmem:[%s1765 + $0x16a] sm:$0xff]
        %v5143 = vld [vmem:[%s1765 + $0x172] sm:$0xff]
        %v5144 = vperm.slane %v5111, 0
        %v5145 = vmul.f32 %v5112, %v5144
        %v5146 = vmul.f32 %v5113, %v5144
        %v5147 = vmul.f32 %v5114, %v5144
        %v5148 = vmul.f32 %v5115, %v5144
        %v5149 = vmul.f32 %v5116, %v5144
        %v5150 = vmul.f32 %v5117, %v5144
        %v5151 = vmul.f32 %v5118, %v5144
        %v5152 = vmul.f32 %v5119, %v5144
        %v5153 = vmul.f32 %v5120, %v5144
        %v5154 = vmul.f32 %v5121, %v5144
        %v5155 = vmul.f32 %v5122, %v5144
        %v5156 = vmul.f32 %v5123, %v5144
        %v5157 = vmul.f32 %v5124, %v5144
        %v5158 = vmul.f32 %v5125, %v5144
        %v5159 = vmul.f32 %v5126, %v5144
        %v5160 = vmul.f32 %v5127, %v5144
        %v5161 = vmul.f32 %v5128, %v5144
        %v5162 = vmul.f32 %v5129, %v5144
        %v5163 = vmul.f32 %v5130, %v5144
        %v5164 = vmul.f32 %v5131, %v5144
        %v5165 = vmul.f32 %v5132, %v5144
        %v5166 = vmul.f32 %v5133, %v5144
        %v5167 = vmul.f32 %v5134, %v5144
        %v5168 = vmul.f32 %v5135, %v5144
        %v5169 = vmul.f32 %v5136, %v5144
        %v5170 = vmul.f32 %v5137, %v5144
        %v5171 = vmul.f32 %v5138, %v5144
        %v5172 = vmul.f32 %v5139, %v5144
        %v5173 = vmul.f32 %v5140, %v5144
        %v5174 = vmul.f32 %v5141, %v5144
        %v5175 = vmul.f32 %v5142, %v5144
        %v5176 = vmul.f32 %v5143, %v5144
        %v5177 = vadd.f32 %v5079, %v5145
        %v5178 = vadd.f32 %v5080, %v5146
        %v5179 = vadd.f32 %v5081, %v5147
        %v5180 = vadd.f32 %v5082, %v5148
        %v5181 = vadd.f32 %v5083, %v5149
        %v5182 = vadd.f32 %v5084, %v5150
        %v5183 = vadd.f32 %v5085, %v5151
        %v5184 = vadd.f32 %v5086, %v5152
        %v5185 = vadd.f32 %v5087, %v5153
        %v5186 = vadd.f32 %v5088, %v5154
        %v5187 = vadd.f32 %v5089, %v5155
        %v5188 = vadd.f32 %v5090, %v5156
        %v5189 = vadd.f32 %v5091, %v5157
        %v5190 = vadd.f32 %v5092, %v5158
        %v5191 = vadd.f32 %v5093, %v5159
        %v5192 = vadd.f32 %v5094, %v5160
        %v5193 = vadd.f32 %v5095, %v5161
        %v5194 = vadd.f32 %v5096, %v5162
        %v5195 = vadd.f32 %v5097, %v5163
        %v5196 = vadd.f32 %v5098, %v5164
        %v5197 = vadd.f32 %v5099, %v5165
        %v5198 = vadd.f32 %v5100, %v5166
        %v5199 = vadd.f32 %v5101, %v5167
        %v5200 = vadd.f32 %v5102, %v5168
        %v5201 = vadd.f32 %v5103, %v5169
        %v5202 = vadd.f32 %v5104, %v5170
        %v5203 = vadd.f32 %v5105, %v5171
        %v5204 = vadd.f32 %v5106, %v5172
        %v5205 = vadd.f32 %v5107, %v5173
        %v5206 = vadd.f32 %v5108, %v5174
        %v5207 = vadd.f32 %v5109, %v5175
        %v5208 = vadd.f32 %v5110, %v5176
        %v5209 = vld [vmem:[%s4914 + $0x3] sm:$0x1]
        %v5210 = vld [vmem:[%s1765 + $0x3] sm:$0xff]
        %v5211 = vld [vmem:[%s1765 + $0xb] sm:$0xff]
        %v5212 = vld [vmem:[%s1765 + $0x1b] sm:$0xff]
        %v5213 = vld [vmem:[%s1765 + $0x23] sm:$0xff]
        %v5214 = vld [vmem:[%s1765 + $0x33] sm:$0xff]
        %v5215 = vld [vmem:[%s1765 + $0x3b] sm:$0xff]
        %v5216 = vld [vmem:[%s1765 + $0x4b] sm:$0xff]
        %v5217 = vld [vmem:[%s1765 + $0x53] sm:$0xff]
        %v5218 = vld [vmem:[%s1765 + $0x63] sm:$0xff]
        %v5219 = vld [vmem:[%s1765 + $0x6b] sm:$0xff]
        %v5220 = vld [vmem:[%s1765 + $0x7b] sm:$0xff]
        %v5221 = vld [vmem:[%s1765 + $0x83] sm:$0xff]
        %v5222 = vld [vmem:[%s1765 + $0x93] sm:$0xff]
        %v5223 = vld [vmem:[%s1765 + $0x9b] sm:$0xff]
        %v5224 = vld [vmem:[%s1765 + $0xab] sm:$0xff]
        %v5225 = vld [vmem:[%s1765 + $0xb3] sm:$0xff]
        %v5226 = vld [vmem:[%s1765 + $0xc3] sm:$0xff]
        %v5227 = vld [vmem:[%s1765 + $0xcb] sm:$0xff]
        %v5228 = vld [vmem:[%s1765 + $0xdb] sm:$0xff]
        %v5229 = vld [vmem:[%s1765 + $0xe3] sm:$0xff]
        %v5230 = vld [vmem:[%s1765 + $0xf3] sm:$0xff]
        %v5231 = vld [vmem:[%s1765 + $0xfb] sm:$0xff]
        %v5232 = vld [vmem:[%s1765 + $0x10b] sm:$0xff]
        %v5233 = vld [vmem:[%s1765 + $0x113] sm:$0xff]
        %v5234 = vld [vmem:[%s1765 + $0x123] sm:$0xff]
        %v5235 = vld [vmem:[%s1765 + $0x12b] sm:$0xff]
        %v5236 = vld [vmem:[%s1765 + $0x13b] sm:$0xff]
        %v5237 = vld [vmem:[%s1765 + $0x143] sm:$0xff]
        %v5238 = vld [vmem:[%s1765 + $0x153] sm:$0xff]
        %v5239 = vld [vmem:[%s1765 + $0x15b] sm:$0xff]
        %v5240 = vld [vmem:[%s1765 + $0x16b] sm:$0xff]
        %v5241 = vld [vmem:[%s1765 + $0x173] sm:$0xff]
        %v5242 = vperm.slane %v5209, 0
        %v5243 = vmul.f32 %v5210, %v5242
        %v5244 = vmul.f32 %v5211, %v5242
        %v5245 = vmul.f32 %v5212, %v5242
        %v5246 = vmul.f32 %v5213, %v5242
        %v5247 = vmul.f32 %v5214, %v5242
        %v5248 = vmul.f32 %v5215, %v5242
        %v5249 = vmul.f32 %v5216, %v5242
        %v5250 = vmul.f32 %v5217, %v5242
        %v5251 = vmul.f32 %v5218, %v5242
        %v5252 = vmul.f32 %v5219, %v5242
        %v5253 = vmul.f32 %v5220, %v5242
        %v5254 = vmul.f32 %v5221, %v5242
        %v5255 = vmul.f32 %v5222, %v5242
        %v5256 = vmul.f32 %v5223, %v5242
        %v5257 = vmul.f32 %v5224, %v5242
        %v5258 = vmul.f32 %v5225, %v5242
        %v5259 = vmul.f32 %v5226, %v5242
        %v5260 = vmul.f32 %v5227, %v5242
        %v5261 = vmul.f32 %v5228, %v5242
        %v5262 = vmul.f32 %v5229, %v5242
        %v5263 = vmul.f32 %v5230, %v5242
        %v5264 = vmul.f32 %v5231, %v5242
        %v5265 = vmul.f32 %v5232, %v5242
        %v5266 = vmul.f32 %v5233, %v5242
        %v5267 = vmul.f32 %v5234, %v5242
        %v5268 = vmul.f32 %v5235, %v5242
        %v5269 = vmul.f32 %v5236, %v5242
        %v5270 = vmul.f32 %v5237, %v5242
        %v5271 = vmul.f32 %v5238, %v5242
        %v5272 = vmul.f32 %v5239, %v5242
        %v5273 = vmul.f32 %v5240, %v5242
        %v5274 = vmul.f32 %v5241, %v5242
        %v5275 = vadd.f32 %v5177, %v5243
        %v5276 = vadd.f32 %v5178, %v5244
        %v5277 = vadd.f32 %v5179, %v5245
        %v5278 = vadd.f32 %v5180, %v5246
        %v5279 = vadd.f32 %v5181, %v5247
        %v5280 = vadd.f32 %v5182, %v5248
        %v5281 = vadd.f32 %v5183, %v5249
        %v5282 = vadd.f32 %v5184, %v5250
        %v5283 = vadd.f32 %v5185, %v5251
        %v5284 = vadd.f32 %v5186, %v5252
        %v5285 = vadd.f32 %v5187, %v5253
        %v5286 = vadd.f32 %v5188, %v5254
        %v5287 = vadd.f32 %v5189, %v5255
        %v5288 = vadd.f32 %v5190, %v5256
        %v5289 = vadd.f32 %v5191, %v5257
        %v5290 = vadd.f32 %v5192, %v5258
        %v5291 = vadd.f32 %v5193, %v5259
        %v5292 = vadd.f32 %v5194, %v5260
        %v5293 = vadd.f32 %v5195, %v5261
        %v5294 = vadd.f32 %v5196, %v5262
        %v5295 = vadd.f32 %v5197, %v5263
        %v5296 = vadd.f32 %v5198, %v5264
        %v5297 = vadd.f32 %v5199, %v5265
        %v5298 = vadd.f32 %v5200, %v5266
        %v5299 = vadd.f32 %v5201, %v5267
        %v5300 = vadd.f32 %v5202, %v5268
        %v5301 = vadd.f32 %v5203, %v5269
        %v5302 = vadd.f32 %v5204, %v5270
        %v5303 = vadd.f32 %v5205, %v5271
        %v5304 = vadd.f32 %v5206, %v5272
        %v5305 = vadd.f32 %v5207, %v5273
        %v5306 = vadd.f32 %v5208, %v5274
        %v5307 = vld [vmem:[%s4914 + $0x4] sm:$0x1]
        %v5308 = vld [vmem:[%s1765 + $0x4] sm:$0xff]
        %v5309 = vld [vmem:[%s1765 + $0xc] sm:$0xff]
        %v5310 = vld [vmem:[%s1765 + $0x1c] sm:$0xff]
        %v5311 = vld [vmem:[%s1765 + $0x24] sm:$0xff]
        %v5312 = vld [vmem:[%s1765 + $0x34] sm:$0xff]
        %v5313 = vld [vmem:[%s1765 + $0x3c] sm:$0xff]
        %v5314 = vld [vmem:[%s1765 + $0x4c] sm:$0xff]
        %v5315 = vld [vmem:[%s1765 + $0x54] sm:$0xff]
        %v5316 = vld [vmem:[%s1765 + $0x64] sm:$0xff]
        %v5317 = vld [vmem:[%s1765 + $0x6c] sm:$0xff]
        %v5318 = vld [vmem:[%s1765 + $0x7c] sm:$0xff]
        %v5319 = vld [vmem:[%s1765 + $0x84] sm:$0xff]
        %v5320 = vld [vmem:[%s1765 + $0x94] sm:$0xff]
        %v5321 = vld [vmem:[%s1765 + $0x9c] sm:$0xff]
        %v5322 = vld [vmem:[%s1765 + $0xac] sm:$0xff]
        %v5323 = vld [vmem:[%s1765 + $0xb4] sm:$0xff]
        %v5324 = vld [vmem:[%s1765 + $0xc4] sm:$0xff]
        %v5325 = vld [vmem:[%s1765 + $0xcc] sm:$0xff]
        %v5326 = vld [vmem:[%s1765 + $0xdc] sm:$0xff]
        %v5327 = vld [vmem:[%s1765 + $0xe4] sm:$0xff]
        %v5328 = vld [vmem:[%s1765 + $0xf4] sm:$0xff]
        %v5329 = vld [vmem:[%s1765 + $0xfc] sm:$0xff]
        %v5330 = vld [vmem:[%s1765 + $0x10c] sm:$0xff]
        %v5331 = vld [vmem:[%s1765 + $0x114] sm:$0xff]
        %v5332 = vld [vmem:[%s1765 + $0x124] sm:$0xff]
        %v5333 = vld [vmem:[%s1765 + $0x12c] sm:$0xff]
        %v5334 = vld [vmem:[%s1765 + $0x13c] sm:$0xff]
        %v5335 = vld [vmem:[%s1765 + $0x144] sm:$0xff]
        %v5336 = vld [vmem:[%s1765 + $0x154] sm:$0xff]
        %v5337 = vld [vmem:[%s1765 + $0x15c] sm:$0xff]
        %v5338 = vld [vmem:[%s1765 + $0x16c] sm:$0xff]
        %v5339 = vld [vmem:[%s1765 + $0x174] sm:$0xff]
        %v5340 = vperm.slane %v5307, 0
        %v5341 = vmul.f32 %v5308, %v5340
        %v5342 = vmul.f32 %v5309, %v5340
        %v5343 = vmul.f32 %v5310, %v5340
        %v5344 = vmul.f32 %v5311, %v5340
        %v5345 = vmul.f32 %v5312, %v5340
        %v5346 = vmul.f32 %v5313, %v5340
        %v5347 = vmul.f32 %v5314, %v5340
        %v5348 = vmul.f32 %v5315, %v5340
        %v5349 = vmul.f32 %v5316, %v5340
        %v5350 = vmul.f32 %v5317, %v5340
        %v5351 = vmul.f32 %v5318, %v5340
        %v5352 = vmul.f32 %v5319, %v5340
        %v5353 = vmul.f32 %v5320, %v5340
        %v5354 = vmul.f32 %v5321, %v5340
        %v5355 = vmul.f32 %v5322, %v5340
        %v5356 = vmul.f32 %v5323, %v5340
        %v5357 = vmul.f32 %v5324, %v5340
        %v5358 = vmul.f32 %v5325, %v5340
        %v5359 = vmul.f32 %v5326, %v5340
        %v5360 = vmul.f32 %v5327, %v5340
        %v5361 = vmul.f32 %v5328, %v5340
        %v5362 = vmul.f32 %v5329, %v5340
        %v5363 = vmul.f32 %v5330, %v5340
        %v5364 = vmul.f32 %v5331, %v5340
        %v5365 = vmul.f32 %v5332, %v5340
        %v5366 = vmul.f32 %v5333, %v5340
        %v5367 = vmul.f32 %v5334, %v5340
        %v5368 = vmul.f32 %v5335, %v5340
        %v5369 = vmul.f32 %v5336, %v5340
        %v5370 = vmul.f32 %v5337, %v5340
        %v5371 = vmul.f32 %v5338, %v5340
        %v5372 = vmul.f32 %v5339, %v5340
        %v5373 = vadd.f32 %v5275, %v5341
        %v5374 = vadd.f32 %v5276, %v5342
        %v5375 = vadd.f32 %v5277, %v5343
        %v5376 = vadd.f32 %v5278, %v5344
        %v5377 = vadd.f32 %v5279, %v5345
        %v5378 = vadd.f32 %v5280, %v5346
        %v5379 = vadd.f32 %v5281, %v5347
        %v5380 = vadd.f32 %v5282, %v5348
        %v5381 = vadd.f32 %v5283, %v5349
        %v5382 = vadd.f32 %v5284, %v5350
        %v5383 = vadd.f32 %v5285, %v5351
        %v5384 = vadd.f32 %v5286, %v5352
        %v5385 = vadd.f32 %v5287, %v5353
        %v5386 = vadd.f32 %v5288, %v5354
        %v5387 = vadd.f32 %v5289, %v5355
        %v5388 = vadd.f32 %v5290, %v5356
        %v5389 = vadd.f32 %v5291, %v5357
        %v5390 = vadd.f32 %v5292, %v5358
        %v5391 = vadd.f32 %v5293, %v5359
        %v5392 = vadd.f32 %v5294, %v5360
        %v5393 = vadd.f32 %v5295, %v5361
        %v5394 = vadd.f32 %v5296, %v5362
        %v5395 = vadd.f32 %v5297, %v5363
        %v5396 = vadd.f32 %v5298, %v5364
        %v5397 = vadd.f32 %v5299, %v5365
        %v5398 = vadd.f32 %v5300, %v5366
        %v5399 = vadd.f32 %v5301, %v5367
        %v5400 = vadd.f32 %v5302, %v5368
        %v5401 = vadd.f32 %v5303, %v5369
        %v5402 = vadd.f32 %v5304, %v5370
        %v5403 = vadd.f32 %v5305, %v5371
        %v5404 = vadd.f32 %v5306, %v5372
        %s5405 = scalar_lea.vmem %s4, 32
        %v5406 = vld [vmem:[%s5405] sm:$0x1]
        %s5407 = scalar_lea.vmem [#allocation2], 96
        %v5408 = vld [vmem:[%s5407] sm:$0xff]
        %v5409 = vld [vmem:[%s5407 + $0x8] sm:$0xff]
        %v5410 = vld [vmem:[%s5407 + $0x18] sm:$0xff]
        %v5411 = vld [vmem:[%s5407 + $0x20] sm:$0xff]
        %v5412 = vld [vmem:[%s5407 + $0x30] sm:$0xff]
        %v5413 = vld [vmem:[%s5407 + $0x38] sm:$0xff]
        %v5414 = vld [vmem:[%s5407 + $0x48] sm:$0xff]
        %v5415 = vld [vmem:[%s5407 + $0x50] sm:$0xff]
        %v5416 = vld [vmem:[%s5407 + $0x60] sm:$0xff]
        %v5417 = vld [vmem:[%s5407 + $0x68] sm:$0xff]
        %v5418 = vld [vmem:[%s5407 + $0x78] sm:$0xff]
        %v5419 = vld [vmem:[%s5407 + $0x80] sm:$0xff]
        %v5420 = vld [vmem:[%s5407 + $0x90] sm:$0xff]
        %v5421 = vld [vmem:[%s5407 + $0x98] sm:$0xff]
        %v5422 = vld [vmem:[%s5407 + $0xa8] sm:$0xff]
        %v5423 = vld [vmem:[%s5407 + $0xb0] sm:$0xff]
        %v5424 = vld [vmem:[%s5407 + $0xc0] sm:$0xff]
        %v5425 = vld [vmem:[%s5407 + $0xc8] sm:$0xff]
        %v5426 = vld [vmem:[%s5407 + $0xd8] sm:$0xff]
        %v5427 = vld [vmem:[%s5407 + $0xe0] sm:$0xff]
        %v5428 = vld [vmem:[%s5407 + $0xf0] sm:$0xff]
        %v5429 = vld [vmem:[%s5407 + $0xf8] sm:$0xff]
        %v5430 = vld [vmem:[%s5407 + $0x108] sm:$0xff]
        %v5431 = vld [vmem:[%s5407 + $0x110] sm:$0xff]
        %v5432 = vld [vmem:[%s5407 + $0x120] sm:$0xff]
        %v5433 = vld [vmem:[%s5407 + $0x128] sm:$0xff]
        %v5434 = vld [vmem:[%s5407 + $0x138] sm:$0xff]
        %v5435 = vld [vmem:[%s5407 + $0x140] sm:$0xff]
        %v5436 = vld [vmem:[%s5407 + $0x150] sm:$0xff]
        %v5437 = vld [vmem:[%s5407 + $0x158] sm:$0xff]
        %v5438 = vld [vmem:[%s5407 + $0x168] sm:$0xff]
        %v5439 = vld [vmem:[%s5407 + $0x170] sm:$0xff]
        %v5440 = vperm.slane %v5406, 0
        %v5441 = vmul.f32 %v5408, %v5440
        %v5442 = vmul.f32 %v5409, %v5440
        %v5443 = vmul.f32 %v5410, %v5440
        %v5444 = vmul.f32 %v5411, %v5440
        %v5445 = vmul.f32 %v5412, %v5440
        %v5446 = vmul.f32 %v5413, %v5440
        %v5447 = vmul.f32 %v5414, %v5440
        %v5448 = vmul.f32 %v5415, %v5440
        %v5449 = vmul.f32 %v5416, %v5440
        %v5450 = vmul.f32 %v5417, %v5440
        %v5451 = vmul.f32 %v5418, %v5440
        %v5452 = vmul.f32 %v5419, %v5440
        %v5453 = vmul.f32 %v5420, %v5440
        %v5454 = vmul.f32 %v5421, %v5440
        %v5455 = vmul.f32 %v5422, %v5440
        %v5456 = vmul.f32 %v5423, %v5440
        %v5457 = vmul.f32 %v5424, %v5440
        %v5458 = vmul.f32 %v5425, %v5440
        %v5459 = vmul.f32 %v5426, %v5440
        %v5460 = vmul.f32 %v5427, %v5440
        %v5461 = vmul.f32 %v5428, %v5440
        %v5462 = vmul.f32 %v5429, %v5440
        %v5463 = vmul.f32 %v5430, %v5440
        %v5464 = vmul.f32 %v5431, %v5440
        %v5465 = vmul.f32 %v5432, %v5440
        %v5466 = vmul.f32 %v5433, %v5440
        %v5467 = vmul.f32 %v5434, %v5440
        %v5468 = vmul.f32 %v5435, %v5440
        %v5469 = vmul.f32 %v5436, %v5440
        %v5470 = vmul.f32 %v5437, %v5440
        %v5471 = vmul.f32 %v5438, %v5440
        %v5472 = vmul.f32 %v5439, %v5440
        %v5473 = vadd.f32 %v5373, %v5441
        %v5474 = vadd.f32 %v5374, %v5442
        %v5475 = vadd.f32 %v5375, %v5443
        %v5476 = vadd.f32 %v5376, %v5444
        %v5477 = vadd.f32 %v5377, %v5445
        %v5478 = vadd.f32 %v5378, %v5446
        %v5479 = vadd.f32 %v5379, %v5447
        %v5480 = vadd.f32 %v5380, %v5448
        %v5481 = vadd.f32 %v5381, %v5449
        %v5482 = vadd.f32 %v5382, %v5450
        %v5483 = vadd.f32 %v5383, %v5451
        %v5484 = vadd.f32 %v5384, %v5452
        %v5485 = vadd.f32 %v5385, %v5453
        %v5486 = vadd.f32 %v5386, %v5454
        %v5487 = vadd.f32 %v5387, %v5455
        %v5488 = vadd.f32 %v5388, %v5456
        %v5489 = vadd.f32 %v5389, %v5457
        %v5490 = vadd.f32 %v5390, %v5458
        %v5491 = vadd.f32 %v5391, %v5459
        %v5492 = vadd.f32 %v5392, %v5460
        %v5493 = vadd.f32 %v5393, %v5461
        %v5494 = vadd.f32 %v5394, %v5462
        %v5495 = vadd.f32 %v5395, %v5463
        %v5496 = vadd.f32 %v5396, %v5464
        %v5497 = vadd.f32 %v5397, %v5465
        %v5498 = vadd.f32 %v5398, %v5466
        %v5499 = vadd.f32 %v5399, %v5467
        %v5500 = vadd.f32 %v5400, %v5468
        %v5501 = vadd.f32 %v5401, %v5469
        %v5502 = vadd.f32 %v5402, %v5470
        %v5503 = vadd.f32 %v5403, %v5471
        %v5504 = vadd.f32 %v5404, %v5472
        %v5505 = vld [vmem:[%s5405 + $0x1] sm:$0x1]
        %v5506 = vld [vmem:[%s5407 + $0x1] sm:$0xff]
        %v5507 = vld [vmem:[%s5407 + $0x9] sm:$0xff]
        %v5508 = vld [vmem:[%s5407 + $0x19] sm:$0xff]
        %v5509 = vld [vmem:[%s5407 + $0x21] sm:$0xff]
        %v5510 = vld [vmem:[%s5407 + $0x31] sm:$0xff]
        %v5511 = vld [vmem:[%s5407 + $0x39] sm:$0xff]
        %v5512 = vld [vmem:[%s5407 + $0x49] sm:$0xff]
        %v5513 = vld [vmem:[%s5407 + $0x51] sm:$0xff]
        %v5514 = vld [vmem:[%s5407 + $0x61] sm:$0xff]
        %v5515 = vld [vmem:[%s5407 + $0x69] sm:$0xff]
        %v5516 = vld [vmem:[%s5407 + $0x79] sm:$0xff]
        %v5517 = vld [vmem:[%s5407 + $0x81] sm:$0xff]
        %v5518 = vld [vmem:[%s5407 + $0x91] sm:$0xff]
        %v5519 = vld [vmem:[%s5407 + $0x99] sm:$0xff]
        %v5520 = vld [vmem:[%s5407 + $0xa9] sm:$0xff]
        %v5521 = vld [vmem:[%s5407 + $0xb1] sm:$0xff]
        %v5522 = vld [vmem:[%s5407 + $0xc1] sm:$0xff]
        %v5523 = vld [vmem:[%s5407 + $0xc9] sm:$0xff]
        %v5524 = vld [vmem:[%s5407 + $0xd9] sm:$0xff]
        %v5525 = vld [vmem:[%s5407 + $0xe1] sm:$0xff]
        %v5526 = vld [vmem:[%s5407 + $0xf1] sm:$0xff]
        %v5527 = vld [vmem:[%s5407 + $0xf9] sm:$0xff]
        %v5528 = vld [vmem:[%s5407 + $0x109] sm:$0xff]
        %v5529 = vld [vmem:[%s5407 + $0x111] sm:$0xff]
        %v5530 = vld [vmem:[%s5407 + $0x121] sm:$0xff]
        %v5531 = vld [vmem:[%s5407 + $0x129] sm:$0xff]
        %v5532 = vld [vmem:[%s5407 + $0x139] sm:$0xff]
        %v5533 = vld [vmem:[%s5407 + $0x141] sm:$0xff]
        %v5534 = vld [vmem:[%s5407 + $0x151] sm:$0xff]
        %v5535 = vld [vmem:[%s5407 + $0x159] sm:$0xff]
        %v5536 = vld [vmem:[%s5407 + $0x169] sm:$0xff]
        %v5537 = vld [vmem:[%s5407 + $0x171] sm:$0xff]
        %v5538 = vperm.slane %v5505, 0
        %v5539 = vmul.f32 %v5506, %v5538
        %v5540 = vmul.f32 %v5507, %v5538
        %v5541 = vmul.f32 %v5508, %v5538
        %v5542 = vmul.f32 %v5509, %v5538
        %v5543 = vmul.f32 %v5510, %v5538
        %v5544 = vmul.f32 %v5511, %v5538
        %v5545 = vmul.f32 %v5512, %v5538
        %v5546 = vmul.f32 %v5513, %v5538
        %v5547 = vmul.f32 %v5514, %v5538
        %v5548 = vmul.f32 %v5515, %v5538
        %v5549 = vmul.f32 %v5516, %v5538
        %v5550 = vmul.f32 %v5517, %v5538
        %v5551 = vmul.f32 %v5518, %v5538
        %v5552 = vmul.f32 %v5519, %v5538
        %v5553 = vmul.f32 %v5520, %v5538
        %v5554 = vmul.f32 %v5521, %v5538
        %v5555 = vmul.f32 %v5522, %v5538
        %v5556 = vmul.f32 %v5523, %v5538
        %v5557 = vmul.f32 %v5524, %v5538
        %v5558 = vmul.f32 %v5525, %v5538
        %v5559 = vmul.f32 %v5526, %v5538
        %v5560 = vmul.f32 %v5527, %v5538
        %v5561 = vmul.f32 %v5528, %v5538
        %v5562 = vmul.f32 %v5529, %v5538
        %v5563 = vmul.f32 %v5530, %v5538
        %v5564 = vmul.f32 %v5531, %v5538
        %v5565 = vmul.f32 %v5532, %v5538
        %v5566 = vmul.f32 %v5533, %v5538
        %v5567 = vmul.f32 %v5534, %v5538
        %v5568 = vmul.f32 %v5535, %v5538
        %v5569 = vmul.f32 %v5536, %v5538
        %v5570 = vmul.f32 %v5537, %v5538
        %v5571 = vadd.f32 %v5473, %v5539
        %v5572 = vadd.f32 %v5474, %v5540
        %v5573 = vadd.f32 %v5475, %v5541
        %v5574 = vadd.f32 %v5476, %v5542
        %v5575 = vadd.f32 %v5477, %v5543
        %v5576 = vadd.f32 %v5478, %v5544
        %v5577 = vadd.f32 %v5479, %v5545
        %v5578 = vadd.f32 %v5480, %v5546
        %v5579 = vadd.f32 %v5481, %v5547
        %v5580 = vadd.f32 %v5482, %v5548
        %v5581 = vadd.f32 %v5483, %v5549
        %v5582 = vadd.f32 %v5484, %v5550
        %v5583 = vadd.f32 %v5485, %v5551
        %v5584 = vadd.f32 %v5486, %v5552
        %v5585 = vadd.f32 %v5487, %v5553
        %v5586 = vadd.f32 %v5488, %v5554
        %v5587 = vadd.f32 %v5489, %v5555
        %v5588 = vadd.f32 %v5490, %v5556
        %v5589 = vadd.f32 %v5491, %v5557
        %v5590 = vadd.f32 %v5492, %v5558
        %v5591 = vadd.f32 %v5493, %v5559
        %v5592 = vadd.f32 %v5494, %v5560
        %v5593 = vadd.f32 %v5495, %v5561
        %v5594 = vadd.f32 %v5496, %v5562
        %v5595 = vadd.f32 %v5497, %v5563
        %v5596 = vadd.f32 %v5498, %v5564
        %v5597 = vadd.f32 %v5499, %v5565
        %v5598 = vadd.f32 %v5500, %v5566
        %v5599 = vadd.f32 %v5501, %v5567
        %v5600 = vadd.f32 %v5502, %v5568
        %v5601 = vadd.f32 %v5503, %v5569
        %v5602 = vadd.f32 %v5504, %v5570
        %v5603 = vld [vmem:[%s5405 + $0x2] sm:$0x1]
        %v5604 = vld [vmem:[%s5407 + $0x2] sm:$0xff]
        %v5605 = vld [vmem:[%s5407 + $0xa] sm:$0xff]
        %v5606 = vld [vmem:[%s5407 + $0x1a] sm:$0xff]
        %v5607 = vld [vmem:[%s5407 + $0x22] sm:$0xff]
        %v5608 = vld [vmem:[%s5407 + $0x32] sm:$0xff]
        %v5609 = vld [vmem:[%s5407 + $0x3a] sm:$0xff]
        %v5610 = vld [vmem:[%s5407 + $0x4a] sm:$0xff]
        %v5611 = vld [vmem:[%s5407 + $0x52] sm:$0xff]
        %v5612 = vld [vmem:[%s5407 + $0x62] sm:$0xff]
        %v5613 = vld [vmem:[%s5407 + $0x6a] sm:$0xff]
        %v5614 = vld [vmem:[%s5407 + $0x7a] sm:$0xff]
        %v5615 = vld [vmem:[%s5407 + $0x82] sm:$0xff]
        %v5616 = vld [vmem:[%s5407 + $0x92] sm:$0xff]
        %v5617 = vld [vmem:[%s5407 + $0x9a] sm:$0xff]
        %v5618 = vld [vmem:[%s5407 + $0xaa] sm:$0xff]
        %v5619 = vld [vmem:[%s5407 + $0xb2] sm:$0xff]
        %v5620 = vld [vmem:[%s5407 + $0xc2] sm:$0xff]
        %v5621 = vld [vmem:[%s5407 + $0xca] sm:$0xff]
        %v5622 = vld [vmem:[%s5407 + $0xda] sm:$0xff]
        %v5623 = vld [vmem:[%s5407 + $0xe2] sm:$0xff]
        %v5624 = vld [vmem:[%s5407 + $0xf2] sm:$0xff]
        %v5625 = vld [vmem:[%s5407 + $0xfa] sm:$0xff]
        %v5626 = vld [vmem:[%s5407 + $0x10a] sm:$0xff]
        %v5627 = vld [vmem:[%s5407 + $0x112] sm:$0xff]
        %v5628 = vld [vmem:[%s5407 + $0x122] sm:$0xff]
        %v5629 = vld [vmem:[%s5407 + $0x12a] sm:$0xff]
        %v5630 = vld [vmem:[%s5407 + $0x13a] sm:$0xff]
        %v5631 = vld [vmem:[%s5407 + $0x142] sm:$0xff]
        %v5632 = vld [vmem:[%s5407 + $0x152] sm:$0xff]
        %v5633 = vld [vmem:[%s5407 + $0x15a] sm:$0xff]
        %v5634 = vld [vmem:[%s5407 + $0x16a] sm:$0xff]
        %v5635 = vld [vmem:[%s5407 + $0x172] sm:$0xff]
        %v5636 = vperm.slane %v5603, 0
        %v5637 = vmul.f32 %v5604, %v5636
        %v5638 = vmul.f32 %v5605, %v5636
        %v5639 = vmul.f32 %v5606, %v5636
        %v5640 = vmul.f32 %v5607, %v5636
        %v5641 = vmul.f32 %v5608, %v5636
        %v5642 = vmul.f32 %v5609, %v5636
        %v5643 = vmul.f32 %v5610, %v5636
        %v5644 = vmul.f32 %v5611, %v5636
        %v5645 = vmul.f32 %v5612, %v5636
        %v5646 = vmul.f32 %v5613, %v5636
        %v5647 = vmul.f32 %v5614, %v5636
        %v5648 = vmul.f32 %v5615, %v5636
        %v5649 = vmul.f32 %v5616, %v5636
        %v5650 = vmul.f32 %v5617, %v5636
        %v5651 = vmul.f32 %v5618, %v5636
        %v5652 = vmul.f32 %v5619, %v5636
        %v5653 = vmul.f32 %v5620, %v5636
        %v5654 = vmul.f32 %v5621, %v5636
        %v5655 = vmul.f32 %v5622, %v5636
        %v5656 = vmul.f32 %v5623, %v5636
        %v5657 = vmul.f32 %v5624, %v5636
        %v5658 = vmul.f32 %v5625, %v5636
        %v5659 = vmul.f32 %v5626, %v5636
        %v5660 = vmul.f32 %v5627, %v5636
        %v5661 = vmul.f32 %v5628, %v5636
        %v5662 = vmul.f32 %v5629, %v5636
        %v5663 = vmul.f32 %v5630, %v5636
        %v5664 = vmul.f32 %v5631, %v5636
        %v5665 = vmul.f32 %v5632, %v5636
        %v5666 = vmul.f32 %v5633, %v5636
        %v5667 = vmul.f32 %v5634, %v5636
        %v5668 = vmul.f32 %v5635, %v5636
        %v5669 = vadd.f32 %v5571, %v5637
        %v5670 = vadd.f32 %v5572, %v5638
        %v5671 = vadd.f32 %v5573, %v5639
        %v5672 = vadd.f32 %v5574, %v5640
        %v5673 = vadd.f32 %v5575, %v5641
        %v5674 = vadd.f32 %v5576, %v5642
        %v5675 = vadd.f32 %v5577, %v5643
        %v5676 = vadd.f32 %v5578, %v5644
        %v5677 = vadd.f32 %v5579, %v5645
        %v5678 = vadd.f32 %v5580, %v5646
        %v5679 = vadd.f32 %v5581, %v5647
        %v5680 = vadd.f32 %v5582, %v5648
        %v5681 = vadd.f32 %v5583, %v5649
        %v5682 = vadd.f32 %v5584, %v5650
        %v5683 = vadd.f32 %v5585, %v5651
        %v5684 = vadd.f32 %v5586, %v5652
        %v5685 = vadd.f32 %v5587, %v5653
        %v5686 = vadd.f32 %v5588, %v5654
        %v5687 = vadd.f32 %v5589, %v5655
        %v5688 = vadd.f32 %v5590, %v5656
        %v5689 = vadd.f32 %v5591, %v5657
        %v5690 = vadd.f32 %v5592, %v5658
        %v5691 = vadd.f32 %v5593, %v5659
        %v5692 = vadd.f32 %v5594, %v5660
        %v5693 = vadd.f32 %v5595, %v5661
        %v5694 = vadd.f32 %v5596, %v5662
        %v5695 = vadd.f32 %v5597, %v5663
        %v5696 = vadd.f32 %v5598, %v5664
        %v5697 = vadd.f32 %v5599, %v5665
        %v5698 = vadd.f32 %v5600, %v5666
        %v5699 = vadd.f32 %v5601, %v5667
        %v5700 = vadd.f32 %v5602, %v5668
        %v5701 = vld [vmem:[%s5405 + $0x3] sm:$0x1]
        %v5702 = vld [vmem:[%s5407 + $0x3] sm:$0xff]
        %v5703 = vld [vmem:[%s5407 + $0xb] sm:$0xff]
        %v5704 = vld [vmem:[%s5407 + $0x1b] sm:$0xff]
        %v5705 = vld [vmem:[%s5407 + $0x23] sm:$0xff]
        %v5706 = vld [vmem:[%s5407 + $0x33] sm:$0xff]
        %v5707 = vld [vmem:[%s5407 + $0x3b] sm:$0xff]
        %v5708 = vld [vmem:[%s5407 + $0x4b] sm:$0xff]
        %v5709 = vld [vmem:[%s5407 + $0x53] sm:$0xff]
        %v5710 = vld [vmem:[%s5407 + $0x63] sm:$0xff]
        %v5711 = vld [vmem:[%s5407 + $0x6b] sm:$0xff]
        %v5712 = vld [vmem:[%s5407 + $0x7b] sm:$0xff]
        %v5713 = vld [vmem:[%s5407 + $0x83] sm:$0xff]
        %v5714 = vld [vmem:[%s5407 + $0x93] sm:$0xff]
        %v5715 = vld [vmem:[%s5407 + $0x9b] sm:$0xff]
        %v5716 = vld [vmem:[%s5407 + $0xab] sm:$0xff]
        %v5717 = vld [vmem:[%s5407 + $0xb3] sm:$0xff]
        %v5718 = vld [vmem:[%s5407 + $0xc3] sm:$0xff]
        %v5719 = vld [vmem:[%s5407 + $0xcb] sm:$0xff]
        %v5720 = vld [vmem:[%s5407 + $0xdb] sm:$0xff]
        %v5721 = vld [vmem:[%s5407 + $0xe3] sm:$0xff]
        %v5722 = vld [vmem:[%s5407 + $0xf3] sm:$0xff]
        %v5723 = vld [vmem:[%s5407 + $0xfb] sm:$0xff]
        %v5724 = vld [vmem:[%s5407 + $0x10b] sm:$0xff]
        %v5725 = vld [vmem:[%s5407 + $0x113] sm:$0xff]
        %v5726 = vld [vmem:[%s5407 + $0x123] sm:$0xff]
        %v5727 = vld [vmem:[%s5407 + $0x12b] sm:$0xff]
        %v5728 = vld [vmem:[%s5407 + $0x13b] sm:$0xff]
        %v5729 = vld [vmem:[%s5407 + $0x143] sm:$0xff]
        %v5730 = vld [vmem:[%s5407 + $0x153] sm:$0xff]
        %v5731 = vld [vmem:[%s5407 + $0x15b] sm:$0xff]
        %v5732 = vld [vmem:[%s5407 + $0x16b] sm:$0xff]
        %v5733 = vld [vmem:[%s5407 + $0x173] sm:$0xff]
        %v5734 = vperm.slane %v5701, 0
        %v5735 = vmul.f32 %v5702, %v5734
        %v5736 = vmul.f32 %v5703, %v5734
        %v5737 = vmul.f32 %v5704, %v5734
        %v5738 = vmul.f32 %v5705, %v5734
        %v5739 = vmul.f32 %v5706, %v5734
        %v5740 = vmul.f32 %v5707, %v5734
        %v5741 = vmul.f32 %v5708, %v5734
        %v5742 = vmul.f32 %v5709, %v5734
        %v5743 = vmul.f32 %v5710, %v5734
        %v5744 = vmul.f32 %v5711, %v5734
        %v5745 = vmul.f32 %v5712, %v5734
        %v5746 = vmul.f32 %v5713, %v5734
        %v5747 = vmul.f32 %v5714, %v5734
        %v5748 = vmul.f32 %v5715, %v5734
        %v5749 = vmul.f32 %v5716, %v5734
        %v5750 = vmul.f32 %v5717, %v5734
        %v5751 = vmul.f32 %v5718, %v5734
        %v5752 = vmul.f32 %v5719, %v5734
        %v5753 = vmul.f32 %v5720, %v5734
        %v5754 = vmul.f32 %v5721, %v5734
        %v5755 = vmul.f32 %v5722, %v5734
        %v5756 = vmul.f32 %v5723, %v5734
        %v5757 = vmul.f32 %v5724, %v5734
        %v5758 = vmul.f32 %v5725, %v5734
        %v5759 = vmul.f32 %v5726, %v5734
        %v5760 = vmul.f32 %v5727, %v5734
        %v5761 = vmul.f32 %v5728, %v5734
        %v5762 = vmul.f32 %v5729, %v5734
        %v5763 = vmul.f32 %v5730, %v5734
        %v5764 = vmul.f32 %v5731, %v5734
        %v5765 = vmul.f32 %v5732, %v5734
        %v5766 = vmul.f32 %v5733, %v5734
        %v5767 = vadd.f32 %v5669, %v5735
        %v5768 = vadd.f32 %v5670, %v5736
        %v5769 = vadd.f32 %v5671, %v5737
        %v5770 = vadd.f32 %v5672, %v5738
        %v5771 = vadd.f32 %v5673, %v5739
        %v5772 = vadd.f32 %v5674, %v5740
        %v5773 = vadd.f32 %v5675, %v5741
        %v5774 = vadd.f32 %v5676, %v5742
        %v5775 = vadd.f32 %v5677, %v5743
        %v5776 = vadd.f32 %v5678, %v5744
        %v5777 = vadd.f32 %v5679, %v5745
        %v5778 = vadd.f32 %v5680, %v5746
        %v5779 = vadd.f32 %v5681, %v5747
        %v5780 = vadd.f32 %v5682, %v5748
        %v5781 = vadd.f32 %v5683, %v5749
        %v5782 = vadd.f32 %v5684, %v5750
        %v5783 = vadd.f32 %v5685, %v5751
        %v5784 = vadd.f32 %v5686, %v5752
        %v5785 = vadd.f32 %v5687, %v5753
        %v5786 = vadd.f32 %v5688, %v5754
        %v5787 = vadd.f32 %v5689, %v5755
        %v5788 = vadd.f32 %v5690, %v5756
        %v5789 = vadd.f32 %v5691, %v5757
        %v5790 = vadd.f32 %v5692, %v5758
        %v5791 = vadd.f32 %v5693, %v5759
        %v5792 = vadd.f32 %v5694, %v5760
        %v5793 = vadd.f32 %v5695, %v5761
        %v5794 = vadd.f32 %v5696, %v5762
        %v5795 = vadd.f32 %v5697, %v5763
        %v5796 = vadd.f32 %v5698, %v5764
        %v5797 = vadd.f32 %v5699, %v5765
        %v5798 = vadd.f32 %v5700, %v5766
        %v5799 = vld [vmem:[%s5405 + $0x4] sm:$0x1]
        %v5800 = vld [vmem:[%s5407 + $0x4] sm:$0xff]
        %v5801 = vld [vmem:[%s5407 + $0xc] sm:$0xff]
        %v5802 = vld [vmem:[%s5407 + $0x1c] sm:$0xff]
        %v5803 = vld [vmem:[%s5407 + $0x24] sm:$0xff]
        %v5804 = vld [vmem:[%s5407 + $0x34] sm:$0xff]
        %v5805 = vld [vmem:[%s5407 + $0x3c] sm:$0xff]
        %v5806 = vld [vmem:[%s5407 + $0x4c] sm:$0xff]
        %v5807 = vld [vmem:[%s5407 + $0x54] sm:$0xff]
        %v5808 = vld [vmem:[%s5407 + $0x64] sm:$0xff]
        %v5809 = vld [vmem:[%s5407 + $0x6c] sm:$0xff]
        %v5810 = vld [vmem:[%s5407 + $0x7c] sm:$0xff]
        %v5811 = vld [vmem:[%s5407 + $0x84] sm:$0xff]
        %v5812 = vld [vmem:[%s5407 + $0x94] sm:$0xff]
        %v5813 = vld [vmem:[%s5407 + $0x9c] sm:$0xff]
        %v5814 = vld [vmem:[%s5407 + $0xac] sm:$0xff]
        %v5815 = vld [vmem:[%s5407 + $0xb4] sm:$0xff]
        %v5816 = vld [vmem:[%s5407 + $0xc4] sm:$0xff]
        %v5817 = vld [vmem:[%s5407 + $0xcc] sm:$0xff]
        %v5818 = vld [vmem:[%s5407 + $0xdc] sm:$0xff]
        %v5819 = vld [vmem:[%s5407 + $0xe4] sm:$0xff]
        %v5820 = vld [vmem:[%s5407 + $0xf4] sm:$0xff]
        %v5821 = vld [vmem:[%s5407 + $0xfc] sm:$0xff]
        %v5822 = vld [vmem:[%s5407 + $0x10c] sm:$0xff]
        %v5823 = vld [vmem:[%s5407 + $0x114] sm:$0xff]
        %v5824 = vld [vmem:[%s5407 + $0x124] sm:$0xff]
        %v5825 = vld [vmem:[%s5407 + $0x12c] sm:$0xff]
        %v5826 = vld [vmem:[%s5407 + $0x13c] sm:$0xff]
        %v5827 = vld [vmem:[%s5407 + $0x144] sm:$0xff]
        %v5828 = vld [vmem:[%s5407 + $0x154] sm:$0xff]
        %v5829 = vld [vmem:[%s5407 + $0x15c] sm:$0xff]
        %v5830 = vld [vmem:[%s5407 + $0x16c] sm:$0xff]
        %v5831 = vld [vmem:[%s5407 + $0x174] sm:$0xff]
        %v5832 = vperm.slane %v5799, 0
        %v5833 = vmul.f32 %v5800, %v5832
        %v5834 = vmul.f32 %v5801, %v5832
        %v5835 = vmul.f32 %v5802, %v5832
        %v5836 = vmul.f32 %v5803, %v5832
        %v5837 = vmul.f32 %v5804, %v5832
        %v5838 = vmul.f32 %v5805, %v5832
        %v5839 = vmul.f32 %v5806, %v5832
        %v5840 = vmul.f32 %v5807, %v5832
        %v5841 = vmul.f32 %v5808, %v5832
        %v5842 = vmul.f32 %v5809, %v5832
        %v5843 = vmul.f32 %v5810, %v5832
        %v5844 = vmul.f32 %v5811, %v5832
        %v5845 = vmul.f32 %v5812, %v5832
        %v5846 = vmul.f32 %v5813, %v5832
        %v5847 = vmul.f32 %v5814, %v5832
        %v5848 = vmul.f32 %v5815, %v5832
        %v5849 = vmul.f32 %v5816, %v5832
        %v5850 = vmul.f32 %v5817, %v5832
        %v5851 = vmul.f32 %v5818, %v5832
        %v5852 = vmul.f32 %v5819, %v5832
        %v5853 = vmul.f32 %v5820, %v5832
        %v5854 = vmul.f32 %v5821, %v5832
        %v5855 = vmul.f32 %v5822, %v5832
        %v5856 = vmul.f32 %v5823, %v5832
        %v5857 = vmul.f32 %v5824, %v5832
        %v5858 = vmul.f32 %v5825, %v5832
        %v5859 = vmul.f32 %v5826, %v5832
        %v5860 = vmul.f32 %v5827, %v5832
        %v5861 = vmul.f32 %v5828, %v5832
        %v5862 = vmul.f32 %v5829, %v5832
        %v5863 = vmul.f32 %v5830, %v5832
        %v5864 = vmul.f32 %v5831, %v5832
        %v5865 = vadd.f32 %v5767, %v5833
        %v5866 = vadd.f32 %v5768, %v5834
        %v5867 = vadd.f32 %v5769, %v5835
        %v5868 = vadd.f32 %v5770, %v5836
        %v5869 = vadd.f32 %v5771, %v5837
        %v5870 = vadd.f32 %v5772, %v5838
        %v5871 = vadd.f32 %v5773, %v5839
        %v5872 = vadd.f32 %v5774, %v5840
        %v5873 = vadd.f32 %v5775, %v5841
        %v5874 = vadd.f32 %v5776, %v5842
        %v5875 = vadd.f32 %v5777, %v5843
        %v5876 = vadd.f32 %v5778, %v5844
        %v5877 = vadd.f32 %v5779, %v5845
        %v5878 = vadd.f32 %v5780, %v5846
        %v5879 = vadd.f32 %v5781, %v5847
        %v5880 = vadd.f32 %v5782, %v5848
        %v5881 = vadd.f32 %v5783, %v5849
        %v5882 = vadd.f32 %v5784, %v5850
        %v5883 = vadd.f32 %v5785, %v5851
        %v5884 = vadd.f32 %v5786, %v5852
        %v5885 = vadd.f32 %v5787, %v5853
        %v5886 = vadd.f32 %v5788, %v5854
        %v5887 = vadd.f32 %v5789, %v5855
        %v5888 = vadd.f32 %v5790, %v5856
        %v5889 = vadd.f32 %v5791, %v5857
        %v5890 = vadd.f32 %v5792, %v5858
        %v5891 = vadd.f32 %v5793, %v5859
        %v5892 = vadd.f32 %v5794, %v5860
        %v5893 = vadd.f32 %v5795, %v5861
        %v5894 = vadd.f32 %v5796, %v5862
        %v5895 = vadd.f32 %v5797, %v5863
        %v5896 = vadd.f32 %v5798, %v5864
        %v5897 = vmul.f32 %v5865, 0.5
        %v5898 = vmul.f32 %v5866, 0.5
        %v5899 = vmul.f32 %v5867, 0.5
        %v5900 = vmul.f32 %v5868, 0.5
        %v5901 = vmul.f32 %v5869, 0.5
        %v5902 = vmul.f32 %v5870, 0.5
        %v5903 = vmul.f32 %v5871, 0.5
        %v5904 = vmul.f32 %v5872, 0.5
        %v5905 = vmul.f32 %v5873, 0.5
        %v5906 = vmul.f32 %v5874, 0.5
        %v5907 = vmul.f32 %v5875, 0.5
        %v5908 = vmul.f32 %v5876, 0.5
        %v5909 = vmul.f32 %v5877, 0.5
        %v5910 = vmul.f32 %v5878, 0.5
        %v5911 = vmul.f32 %v5879, 0.5
        %v5912 = vmul.f32 %v5880, 0.5
        %v5913 = vmul.f32 %v5881, 0.5
        %v5914 = vmul.f32 %v5882, 0.5
        %v5915 = vmul.f32 %v5883, 0.5
        %v5916 = vmul.f32 %v5884, 0.5
        %v5917 = vmul.f32 %v5885, 0.5
        %v5918 = vmul.f32 %v5886, 0.5
        %v5919 = vmul.f32 %v5887, 0.5
        %v5920 = vmul.f32 %v5888, 0.5
        %v5921 = vmul.f32 %v5889, 0.5
        %v5922 = vmul.f32 %v5890, 0.5
        %v5923 = vmul.f32 %v5891, 0.5
        %v5924 = vmul.f32 %v5892, 0.5
        %v5925 = vmul.f32 %v5893, 0.5
        %v5926 = vmul.f32 %v5894, 0.5
        %v5927 = vmul.f32 %v5895, 0.5
        %v5928 = vmul.f32 %v5896, 0.5
        %v5929 = vmul.f32 %v5865, %v2097
        %v5930 = vmul.f32 %v5866, %v2097
        %v5931 = vmul.f32 %v5867, %v2097
        %v5932 = vmul.f32 %v5868, %v2097
        %v5933 = vmul.f32 %v5869, %v2097
        %v5934 = vmul.f32 %v5870, %v2097
        %v5935 = vmul.f32 %v5871, %v2097
        %v5936 = vmul.f32 %v5872, %v2097
        %v5937 = vmul.f32 %v5873, %v2097
        %v5938 = vmul.f32 %v5874, %v2097
        %v5939 = vmul.f32 %v5875, %v2097
        %v5940 = vmul.f32 %v5876, %v2097
        %v5941 = vmul.f32 %v5877, %v2097
        %v5942 = vmul.f32 %v5878, %v2097
        %v5943 = vmul.f32 %v5879, %v2097
        %v5944 = vmul.f32 %v5880, %v2097
        %v5945 = vmul.f32 %v5881, %v2097
        %v5946 = vmul.f32 %v5882, %v2097
        %v5947 = vmul.f32 %v5883, %v2097
        %v5948 = vmul.f32 %v5884, %v2097
        %v5949 = vmul.f32 %v5885, %v2097
        %v5950 = vmul.f32 %v5886, %v2097
        %v5951 = vmul.f32 %v5887, %v2097
        %v5952 = vmul.f32 %v5888, %v2097
        %v5953 = vmul.f32 %v5889, %v2097
        %v5954 = vmul.f32 %v5890, %v2097
        %v5955 = vmul.f32 %v5891, %v2097
        %v5956 = vmul.f32 %v5892, %v2097
        %v5957 = vmul.f32 %v5893, %v2097
        %v5958 = vmul.f32 %v5894, %v2097
        %v5959 = vmul.f32 %v5895, %v2097
        %v5960 = vmul.f32 %v5896, %v2097
        %v5961 = vand.u32 2147483647, %v5929
        %v5962 = vand.u32 2147483647, %v5930
        %v5963 = vand.u32 2147483647, %v5931
        %v5964 = vand.u32 2147483647, %v5932
        %v5965 = vand.u32 2147483647, %v5933
        %v5966 = vand.u32 2147483647, %v5934
        %v5967 = vand.u32 2147483647, %v5935
        %v5968 = vand.u32 2147483647, %v5936
        %v5969 = vand.u32 2147483647, %v5937
        %v5970 = vand.u32 2147483647, %v5938
        %v5971 = vand.u32 2147483647, %v5939
        %v5972 = vand.u32 2147483647, %v5940
        %v5973 = vand.u32 2147483647, %v5941
        %v5974 = vand.u32 2147483647, %v5942
        %v5975 = vand.u32 2147483647, %v5943
        %v5976 = vand.u32 2147483647, %v5944
        %v5977 = vand.u32 2147483647, %v5945
        %v5978 = vand.u32 2147483647, %v5946
        %v5979 = vand.u32 2147483647, %v5947
        %v5980 = vand.u32 2147483647, %v5948
        %v5981 = vand.u32 2147483647, %v5949
        %v5982 = vand.u32 2147483647, %v5950
        %v5983 = vand.u32 2147483647, %v5951
        %v5984 = vand.u32 2147483647, %v5952
        %v5985 = vand.u32 2147483647, %v5953
        %v5986 = vand.u32 2147483647, %v5954
        %v5987 = vand.u32 2147483647, %v5955
        %v5988 = vand.u32 2147483647, %v5956
        %v5989 = vand.u32 2147483647, %v5957
        %v5990 = vand.u32 2147483647, %v5958
        %v5991 = vand.u32 2147483647, %v5959
        %v5992 = vand.u32 2147483647, %v5960
        %v5993 = vmul.f32 %v5961, 0.3275911
        %v5994 = vmul.f32 %v5962, 0.3275911
        %v5995 = vmul.f32 %v5963, 0.3275911
        %v5996 = vmul.f32 %v5964, 0.3275911
        %v5997 = vmul.f32 %v5965, 0.3275911
        %v5998 = vmul.f32 %v5966, 0.3275911
        %v5999 = vmul.f32 %v5967, 0.3275911
        %v6000 = vmul.f32 %v5968, 0.3275911
        %v6001 = vmul.f32 %v5969, 0.3275911
        %v6002 = vmul.f32 %v5970, 0.3275911
        %v6003 = vmul.f32 %v5971, 0.3275911
        %v6004 = vmul.f32 %v5972, 0.3275911
        %v6005 = vmul.f32 %v5973, 0.3275911
        %v6006 = vmul.f32 %v5974, 0.3275911
        %v6007 = vmul.f32 %v5975, 0.3275911
        %v6008 = vmul.f32 %v5976, 0.3275911
        %v6009 = vmul.f32 %v5977, 0.3275911
        %v6010 = vmul.f32 %v5978, 0.3275911
        %v6011 = vmul.f32 %v5979, 0.3275911
        %v6012 = vmul.f32 %v5980, 0.3275911
        %v6013 = vmul.f32 %v5981, 0.3275911
        %v6014 = vmul.f32 %v5982, 0.3275911
        %v6015 = vmul.f32 %v5983, 0.3275911
        %v6016 = vmul.f32 %v5984, 0.3275911
        %v6017 = vmul.f32 %v5985, 0.3275911
        %v6018 = vmul.f32 %v5986, 0.3275911
        %v6019 = vmul.f32 %v5987, 0.3275911
        %v6020 = vmul.f32 %v5988, 0.3275911
        %v6021 = vmul.f32 %v5989, 0.3275911
        %v6022 = vmul.f32 %v5990, 0.3275911
        %v6023 = vmul.f32 %v5991, 0.3275911
        %v6024 = vmul.f32 %v5992, 0.3275911
        %v6025 = vadd.f32 %v5993, 1.0
        %v6026 = vadd.f32 %v5994, 1.0
        %v6027 = vadd.f32 %v5995, 1.0
        %v6028 = vadd.f32 %v5996, 1.0
        %v6029 = vadd.f32 %v5997, 1.0
        %v6030 = vadd.f32 %v5998, 1.0
        %v6031 = vadd.f32 %v5999, 1.0
        %v6032 = vadd.f32 %v6000, 1.0
        %v6033 = vadd.f32 %v6001, 1.0
        %v6034 = vadd.f32 %v6002, 1.0
        %v6035 = vadd.f32 %v6003, 1.0
        %v6036 = vadd.f32 %v6004, 1.0
        %v6037 = vadd.f32 %v6005, 1.0
        %v6038 = vadd.f32 %v6006, 1.0
        %v6039 = vadd.f32 %v6007, 1.0
        %v6040 = vadd.f32 %v6008, 1.0
        %v6041 = vadd.f32 %v6009, 1.0
        %v6042 = vadd.f32 %v6010, 1.0
        %v6043 = vadd.f32 %v6011, 1.0
        %v6044 = vadd.f32 %v6012, 1.0
        %v6045 = vadd.f32 %v6013, 1.0
        %v6046 = vadd.f32 %v6014, 1.0
        %v6047 = vadd.f32 %v6015, 1.0
        %v6048 = vadd.f32 %v6016, 1.0
        %v6049 = vadd.f32 %v6017, 1.0
        %v6050 = vadd.f32 %v6018, 1.0
        %v6051 = vadd.f32 %v6019, 1.0
        %v6052 = vadd.f32 %v6020, 1.0
        %v6053 = vadd.f32 %v6021, 1.0
        %v6054 = vadd.f32 %v6022, 1.0
        %v6055 = vadd.f32 %v6023, 1.0
        %v6056 = vadd.f32 %v6024, 1.0
        %v6057 = vrcp.pop %v6025
        %v6058 = vmul.f32 %v6025, %v6057
        %v6059 = vsub.f32 1.0, %v6058
        %v6060 = vmul.f32 %v6057, %v6059
        %v6061 = vadd.f32 %v6057, %v6060
        %vm6062 = vweird.f32 %v6025
        %vm6063 = vweird.f32 %v6057
        %vm6064 = vmor %vm6062, %vm6063
        %v6065 = vsel %vm6064, %v6057, %v6061
        %v6066 = vand.u32 2147483647, %v6025
        %vm6067 = vcmp.eq.f32.partialorder %v6066, 8.507059e+37
        %v6068 = vand.u32 %v6025, 2147483648
        %v6069 = vor.u32 1.1754944e-38, %v6068
        %v6070 = vsel %vm6067, %v6069, %v6065
        %v6071 = vmul.f32 1.0, %v6070
        %v6072 = vrcp.pop %v6026
        %v6073 = vmul.f32 %v6026, %v6072
        %v6074 = vsub.f32 1.0, %v6073
        %v6075 = vmul.f32 %v6072, %v6074
        %v6076 = vadd.f32 %v6072, %v6075
        %vm6077 = vweird.f32 %v6026
        %vm6078 = vweird.f32 %v6072
        %vm6079 = vmor %vm6077, %vm6078
        %v6080 = vsel %vm6079, %v6072, %v6076
        %v6081 = vand.u32 2147483647, %v6026
        %vm6082 = vcmp.eq.f32.partialorder %v6081, 8.507059e+37
        %v6083 = vand.u32 %v6026, 2147483648
        %v6084 = vor.u32 1.1754944e-38, %v6083
        %v6085 = vsel %vm6082, %v6084, %v6080
        %v6086 = vmul.f32 1.0, %v6085
        %v6087 = vrcp.pop %v6027
        %v6088 = vmul.f32 %v6027, %v6087
        %v6089 = vsub.f32 1.0, %v6088
        %v6090 = vmul.f32 %v6087, %v6089
        %v6091 = vadd.f32 %v6087, %v6090
        %vm6092 = vweird.f32 %v6027
        %vm6093 = vweird.f32 %v6087
        %vm6094 = vmor %vm6092, %vm6093
        %v6095 = vsel %vm6094, %v6087, %v6091
        %v6096 = vand.u32 2147483647, %v6027
        %vm6097 = vcmp.eq.f32.partialorder %v6096, 8.507059e+37
        %v6098 = vand.u32 %v6027, 2147483648
        %v6099 = vor.u32 1.1754944e-38, %v6098
        %v6100 = vsel %vm6097, %v6099, %v6095
        %v6101 = vmul.f32 1.0, %v6100
        %v6102 = vrcp.pop %v6028
        %v6103 = vmul.f32 %v6028, %v6102
        %v6104 = vsub.f32 1.0, %v6103
        %v6105 = vmul.f32 %v6102, %v6104
        %v6106 = vadd.f32 %v6102, %v6105
        %vm6107 = vweird.f32 %v6028
        %vm6108 = vweird.f32 %v6102
        %vm6109 = vmor %vm6107, %vm6108
        %v6110 = vsel %vm6109, %v6102, %v6106
        %v6111 = vand.u32 2147483647, %v6028
        %vm6112 = vcmp.eq.f32.partialorder %v6111, 8.507059e+37
        %v6113 = vand.u32 %v6028, 2147483648
        %v6114 = vor.u32 1.1754944e-38, %v6113
        %v6115 = vsel %vm6112, %v6114, %v6110
        %v6116 = vmul.f32 1.0, %v6115
        %v6117 = vrcp.pop %v6029
        %v6118 = vmul.f32 %v6029, %v6117
        %v6119 = vsub.f32 1.0, %v6118
        %v6120 = vmul.f32 %v6117, %v6119
        %v6121 = vadd.f32 %v6117, %v6120
        %vm6122 = vweird.f32 %v6029
        %vm6123 = vweird.f32 %v6117
        %vm6124 = vmor %vm6122, %vm6123
        %v6125 = vsel %vm6124, %v6117, %v6121
        %v6126 = vand.u32 2147483647, %v6029
        %vm6127 = vcmp.eq.f32.partialorder %v6126, 8.507059e+37
        %v6128 = vand.u32 %v6029, 2147483648
        %v6129 = vor.u32 1.1754944e-38, %v6128
        %v6130 = vsel %vm6127, %v6129, %v6125
        %v6131 = vmul.f32 1.0, %v6130
        %v6132 = vrcp.pop %v6030
        %v6133 = vmul.f32 %v6030, %v6132
        %v6134 = vsub.f32 1.0, %v6133
        %v6135 = vmul.f32 %v6132, %v6134
        %v6136 = vadd.f32 %v6132, %v6135
        %vm6137 = vweird.f32 %v6030
        %vm6138 = vweird.f32 %v6132
        %vm6139 = vmor %vm6137, %vm6138
        %v6140 = vsel %vm6139, %v6132, %v6136
        %v6141 = vand.u32 2147483647, %v6030
        %vm6142 = vcmp.eq.f32.partialorder %v6141, 8.507059e+37
        %v6143 = vand.u32 %v6030, 2147483648
        %v6144 = vor.u32 1.1754944e-38, %v6143
        %v6145 = vsel %vm6142, %v6144, %v6140
        %v6146 = vmul.f32 1.0, %v6145
        %v6147 = vrcp.pop %v6031
        %v6148 = vmul.f32 %v6031, %v6147
        %v6149 = vsub.f32 1.0, %v6148
        %v6150 = vmul.f32 %v6147, %v6149
        %v6151 = vadd.f32 %v6147, %v6150
        %vm6152 = vweird.f32 %v6031
        %vm6153 = vweird.f32 %v6147
        %vm6154 = vmor %vm6152, %vm6153
        %v6155 = vsel %vm6154, %v6147, %v6151
        %v6156 = vand.u32 2147483647, %v6031
        %vm6157 = vcmp.eq.f32.partialorder %v6156, 8.507059e+37
        %v6158 = vand.u32 %v6031, 2147483648
        %v6159 = vor.u32 1.1754944e-38, %v6158
        %v6160 = vsel %vm6157, %v6159, %v6155
        %v6161 = vmul.f32 1.0, %v6160
        %v6162 = vrcp.pop %v6032
        %v6163 = vmul.f32 %v6032, %v6162
        %v6164 = vsub.f32 1.0, %v6163
        %v6165 = vmul.f32 %v6162, %v6164
        %v6166 = vadd.f32 %v6162, %v6165
        %vm6167 = vweird.f32 %v6032
        %vm6168 = vweird.f32 %v6162
        %vm6169 = vmor %vm6167, %vm6168
        %v6170 = vsel %vm6169, %v6162, %v6166
        %v6171 = vand.u32 2147483647, %v6032
        %vm6172 = vcmp.eq.f32.partialorder %v6171, 8.507059e+37
        %v6173 = vand.u32 %v6032, 2147483648
        %v6174 = vor.u32 1.1754944e-38, %v6173
        %v6175 = vsel %vm6172, %v6174, %v6170
        %v6176 = vmul.f32 1.0, %v6175
        %v6177 = vrcp.pop %v6033
        %v6178 = vmul.f32 %v6033, %v6177
        %v6179 = vsub.f32 1.0, %v6178
        %v6180 = vmul.f32 %v6177, %v6179
        %v6181 = vadd.f32 %v6177, %v6180
        %vm6182 = vweird.f32 %v6033
        %vm6183 = vweird.f32 %v6177
        %vm6184 = vmor %vm6182, %vm6183
        %v6185 = vsel %vm6184, %v6177, %v6181
        %v6186 = vand.u32 2147483647, %v6033
        %vm6187 = vcmp.eq.f32.partialorder %v6186, 8.507059e+37
        %v6188 = vand.u32 %v6033, 2147483648
        %v6189 = vor.u32 1.1754944e-38, %v6188
        %v6190 = vsel %vm6187, %v6189, %v6185
        %v6191 = vmul.f32 1.0, %v6190
        %v6192 = vrcp.pop %v6034
        %v6193 = vmul.f32 %v6034, %v6192
        %v6194 = vsub.f32 1.0, %v6193
        %v6195 = vmul.f32 %v6192, %v6194
        %v6196 = vadd.f32 %v6192, %v6195
        %vm6197 = vweird.f32 %v6034
        %vm6198 = vweird.f32 %v6192
        %vm6199 = vmor %vm6197, %vm6198
        %v6200 = vsel %vm6199, %v6192, %v6196
        %v6201 = vand.u32 2147483647, %v6034
        %vm6202 = vcmp.eq.f32.partialorder %v6201, 8.507059e+37
        %v6203 = vand.u32 %v6034, 2147483648
        %v6204 = vor.u32 1.1754944e-38, %v6203
        %v6205 = vsel %vm6202, %v6204, %v6200
        %v6206 = vmul.f32 1.0, %v6205
        %v6207 = vrcp.pop %v6035
        %v6208 = vmul.f32 %v6035, %v6207
        %v6209 = vsub.f32 1.0, %v6208
        %v6210 = vmul.f32 %v6207, %v6209
        %v6211 = vadd.f32 %v6207, %v6210
        %vm6212 = vweird.f32 %v6035
        %vm6213 = vweird.f32 %v6207
        %vm6214 = vmor %vm6212, %vm6213
        %v6215 = vsel %vm6214, %v6207, %v6211
        %v6216 = vand.u32 2147483647, %v6035
        %vm6217 = vcmp.eq.f32.partialorder %v6216, 8.507059e+37
        %v6218 = vand.u32 %v6035, 2147483648
        %v6219 = vor.u32 1.1754944e-38, %v6218
        %v6220 = vsel %vm6217, %v6219, %v6215
        %v6221 = vmul.f32 1.0, %v6220
        %v6222 = vrcp.pop %v6036
        %v6223 = vmul.f32 %v6036, %v6222
        %v6224 = vsub.f32 1.0, %v6223
        %v6225 = vmul.f32 %v6222, %v6224
        %v6226 = vadd.f32 %v6222, %v6225
        %vm6227 = vweird.f32 %v6036
        %vm6228 = vweird.f32 %v6222
        %vm6229 = vmor %vm6227, %vm6228
        %v6230 = vsel %vm6229, %v6222, %v6226
        %v6231 = vand.u32 2147483647, %v6036
        %vm6232 = vcmp.eq.f32.partialorder %v6231, 8.507059e+37
        %v6233 = vand.u32 %v6036, 2147483648
        %v6234 = vor.u32 1.1754944e-38, %v6233
        %v6235 = vsel %vm6232, %v6234, %v6230
        %v6236 = vmul.f32 1.0, %v6235
        %v6237 = vrcp.pop %v6037
        %v6238 = vmul.f32 %v6037, %v6237
        %v6239 = vsub.f32 1.0, %v6238
        %v6240 = vmul.f32 %v6237, %v6239
        %v6241 = vadd.f32 %v6237, %v6240
        %vm6242 = vweird.f32 %v6037
        %vm6243 = vweird.f32 %v6237
        %vm6244 = vmor %vm6242, %vm6243
        %v6245 = vsel %vm6244, %v6237, %v6241
        %v6246 = vand.u32 2147483647, %v6037
        %vm6247 = vcmp.eq.f32.partialorder %v6246, 8.507059e+37
        %v6248 = vand.u32 %v6037, 2147483648
        %v6249 = vor.u32 1.1754944e-38, %v6248
        %v6250 = vsel %vm6247, %v6249, %v6245
        %v6251 = vmul.f32 1.0, %v6250
        %v6252 = vrcp.pop %v6038
        %v6253 = vmul.f32 %v6038, %v6252
        %v6254 = vsub.f32 1.0, %v6253
        %v6255 = vmul.f32 %v6252, %v6254
        %v6256 = vadd.f32 %v6252, %v6255
        %vm6257 = vweird.f32 %v6038
        %vm6258 = vweird.f32 %v6252
        %vm6259 = vmor %vm6257, %vm6258
        %v6260 = vsel %vm6259, %v6252, %v6256
        %v6261 = vand.u32 2147483647, %v6038
        %vm6262 = vcmp.eq.f32.partialorder %v6261, 8.507059e+37
        %v6263 = vand.u32 %v6038, 2147483648
        %v6264 = vor.u32 1.1754944e-38, %v6263
        %v6265 = vsel %vm6262, %v6264, %v6260
        %v6266 = vmul.f32 1.0, %v6265
        %v6267 = vrcp.pop %v6039
        %v6268 = vmul.f32 %v6039, %v6267
        %v6269 = vsub.f32 1.0, %v6268
        %v6270 = vmul.f32 %v6267, %v6269
        %v6271 = vadd.f32 %v6267, %v6270
        %vm6272 = vweird.f32 %v6039
        %vm6273 = vweird.f32 %v6267
        %vm6274 = vmor %vm6272, %vm6273
        %v6275 = vsel %vm6274, %v6267, %v6271
        %v6276 = vand.u32 2147483647, %v6039
        %vm6277 = vcmp.eq.f32.partialorder %v6276, 8.507059e+37
        %v6278 = vand.u32 %v6039, 2147483648
        %v6279 = vor.u32 1.1754944e-38, %v6278
        %v6280 = vsel %vm6277, %v6279, %v6275
        %v6281 = vmul.f32 1.0, %v6280
        %v6282 = vrcp.pop %v6040
        %v6283 = vmul.f32 %v6040, %v6282
        %v6284 = vsub.f32 1.0, %v6283
        %v6285 = vmul.f32 %v6282, %v6284
        %v6286 = vadd.f32 %v6282, %v6285
        %vm6287 = vweird.f32 %v6040
        %vm6288 = vweird.f32 %v6282
        %vm6289 = vmor %vm6287, %vm6288
        %v6290 = vsel %vm6289, %v6282, %v6286
        %v6291 = vand.u32 2147483647, %v6040
        %vm6292 = vcmp.eq.f32.partialorder %v6291, 8.507059e+37
        %v6293 = vand.u32 %v6040, 2147483648
        %v6294 = vor.u32 1.1754944e-38, %v6293
        %v6295 = vsel %vm6292, %v6294, %v6290
        %v6296 = vmul.f32 1.0, %v6295
        %v6297 = vrcp.pop %v6041
        %v6298 = vmul.f32 %v6041, %v6297
        %v6299 = vsub.f32 1.0, %v6298
        %v6300 = vmul.f32 %v6297, %v6299
        %v6301 = vadd.f32 %v6297, %v6300
        %vm6302 = vweird.f32 %v6041
        %vm6303 = vweird.f32 %v6297
        %vm6304 = vmor %vm6302, %vm6303
        %v6305 = vsel %vm6304, %v6297, %v6301
        %v6306 = vand.u32 2147483647, %v6041
        %vm6307 = vcmp.eq.f32.partialorder %v6306, 8.507059e+37
        %v6308 = vand.u32 %v6041, 2147483648
        %v6309 = vor.u32 1.1754944e-38, %v6308
        %v6310 = vsel %vm6307, %v6309, %v6305
        %v6311 = vmul.f32 1.0, %v6310
        %v6312 = vrcp.pop %v6042
        %v6313 = vmul.f32 %v6042, %v6312
        %v6314 = vsub.f32 1.0, %v6313
        %v6315 = vmul.f32 %v6312, %v6314
        %v6316 = vadd.f32 %v6312, %v6315
        %vm6317 = vweird.f32 %v6042
        %vm6318 = vweird.f32 %v6312
        %vm6319 = vmor %vm6317, %vm6318
        %v6320 = vsel %vm6319, %v6312, %v6316
        %v6321 = vand.u32 2147483647, %v6042
        %vm6322 = vcmp.eq.f32.partialorder %v6321, 8.507059e+37
        %v6323 = vand.u32 %v6042, 2147483648
        %v6324 = vor.u32 1.1754944e-38, %v6323
        %v6325 = vsel %vm6322, %v6324, %v6320
        %v6326 = vmul.f32 1.0, %v6325
        %v6327 = vrcp.pop %v6043
        %v6328 = vmul.f32 %v6043, %v6327
        %v6329 = vsub.f32 1.0, %v6328
        %v6330 = vmul.f32 %v6327, %v6329
        %v6331 = vadd.f32 %v6327, %v6330
        %vm6332 = vweird.f32 %v6043
        %vm6333 = vweird.f32 %v6327
        %vm6334 = vmor %vm6332, %vm6333
        %v6335 = vsel %vm6334, %v6327, %v6331
        %v6336 = vand.u32 2147483647, %v6043
        %vm6337 = vcmp.eq.f32.partialorder %v6336, 8.507059e+37
        %v6338 = vand.u32 %v6043, 2147483648
        %v6339 = vor.u32 1.1754944e-38, %v6338
        %v6340 = vsel %vm6337, %v6339, %v6335
        %v6341 = vmul.f32 1.0, %v6340
        %v6342 = vrcp.pop %v6044
        %v6343 = vmul.f32 %v6044, %v6342
        %v6344 = vsub.f32 1.0, %v6343
        %v6345 = vmul.f32 %v6342, %v6344
        %v6346 = vadd.f32 %v6342, %v6345
        %vm6347 = vweird.f32 %v6044
        %vm6348 = vweird.f32 %v6342
        %vm6349 = vmor %vm6347, %vm6348
        %v6350 = vsel %vm6349, %v6342, %v6346
        %v6351 = vand.u32 2147483647, %v6044
        %vm6352 = vcmp.eq.f32.partialorder %v6351, 8.507059e+37
        %v6353 = vand.u32 %v6044, 2147483648
        %v6354 = vor.u32 1.1754944e-38, %v6353
        %v6355 = vsel %vm6352, %v6354, %v6350
        %v6356 = vmul.f32 1.0, %v6355
        %v6357 = vrcp.pop %v6045
        %v6358 = vmul.f32 %v6045, %v6357
        %v6359 = vsub.f32 1.0, %v6358
        %v6360 = vmul.f32 %v6357, %v6359
        %v6361 = vadd.f32 %v6357, %v6360
        %vm6362 = vweird.f32 %v6045
        %vm6363 = vweird.f32 %v6357
        %vm6364 = vmor %vm6362, %vm6363
        %v6365 = vsel %vm6364, %v6357, %v6361
        %v6366 = vand.u32 2147483647, %v6045
        %vm6367 = vcmp.eq.f32.partialorder %v6366, 8.507059e+37
        %v6368 = vand.u32 %v6045, 2147483648
        %v6369 = vor.u32 1.1754944e-38, %v6368
        %v6370 = vsel %vm6367, %v6369, %v6365
        %v6371 = vmul.f32 1.0, %v6370
        %v6372 = vrcp.pop %v6046
        %v6373 = vmul.f32 %v6046, %v6372
        %v6374 = vsub.f32 1.0, %v6373
        %v6375 = vmul.f32 %v6372, %v6374
        %v6376 = vadd.f32 %v6372, %v6375
        %vm6377 = vweird.f32 %v6046
        %vm6378 = vweird.f32 %v6372
        %vm6379 = vmor %vm6377, %vm6378
        %v6380 = vsel %vm6379, %v6372, %v6376
        %v6381 = vand.u32 2147483647, %v6046
        %vm6382 = vcmp.eq.f32.partialorder %v6381, 8.507059e+37
        %v6383 = vand.u32 %v6046, 2147483648
        %v6384 = vor.u32 1.1754944e-38, %v6383
        %v6385 = vsel %vm6382, %v6384, %v6380
        %v6386 = vmul.f32 1.0, %v6385
        %v6387 = vrcp.pop %v6047
        %v6388 = vmul.f32 %v6047, %v6387
        %v6389 = vsub.f32 1.0, %v6388
        %v6390 = vmul.f32 %v6387, %v6389
        %v6391 = vadd.f32 %v6387, %v6390
        %vm6392 = vweird.f32 %v6047
        %vm6393 = vweird.f32 %v6387
        %vm6394 = vmor %vm6392, %vm6393
        %v6395 = vsel %vm6394, %v6387, %v6391
        %v6396 = vand.u32 2147483647, %v6047
        %vm6397 = vcmp.eq.f32.partialorder %v6396, 8.507059e+37
        %v6398 = vand.u32 %v6047, 2147483648
        %v6399 = vor.u32 1.1754944e-38, %v6398
        %v6400 = vsel %vm6397, %v6399, %v6395
        %v6401 = vmul.f32 1.0, %v6400
        %v6402 = vrcp.pop %v6048
        %v6403 = vmul.f32 %v6048, %v6402
        %v6404 = vsub.f32 1.0, %v6403
        %v6405 = vmul.f32 %v6402, %v6404
        %v6406 = vadd.f32 %v6402, %v6405
        %vm6407 = vweird.f32 %v6048
        %vm6408 = vweird.f32 %v6402
        %vm6409 = vmor %vm6407, %vm6408
        %v6410 = vsel %vm6409, %v6402, %v6406
        %v6411 = vand.u32 2147483647, %v6048
        %vm6412 = vcmp.eq.f32.partialorder %v6411, 8.507059e+37
        %v6413 = vand.u32 %v6048, 2147483648
        %v6414 = vor.u32 1.1754944e-38, %v6413
        %v6415 = vsel %vm6412, %v6414, %v6410
        %v6416 = vmul.f32 1.0, %v6415
        %v6417 = vrcp.pop %v6049
        %v6418 = vmul.f32 %v6049, %v6417
        %v6419 = vsub.f32 1.0, %v6418
        %v6420 = vmul.f32 %v6417, %v6419
        %v6421 = vadd.f32 %v6417, %v6420
        %vm6422 = vweird.f32 %v6049
        %vm6423 = vweird.f32 %v6417
        %vm6424 = vmor %vm6422, %vm6423
        %v6425 = vsel %vm6424, %v6417, %v6421
        %v6426 = vand.u32 2147483647, %v6049
        %vm6427 = vcmp.eq.f32.partialorder %v6426, 8.507059e+37
        %v6428 = vand.u32 %v6049, 2147483648
        %v6429 = vor.u32 1.1754944e-38, %v6428
        %v6430 = vsel %vm6427, %v6429, %v6425
        %v6431 = vmul.f32 1.0, %v6430
        %v6432 = vrcp.pop %v6050
        %v6433 = vmul.f32 %v6050, %v6432
        %v6434 = vsub.f32 1.0, %v6433
        %v6435 = vmul.f32 %v6432, %v6434
        %v6436 = vadd.f32 %v6432, %v6435
        %vm6437 = vweird.f32 %v6050
        %vm6438 = vweird.f32 %v6432
        %vm6439 = vmor %vm6437, %vm6438
        %v6440 = vsel %vm6439, %v6432, %v6436
        %v6441 = vand.u32 2147483647, %v6050
        %vm6442 = vcmp.eq.f32.partialorder %v6441, 8.507059e+37
        %v6443 = vand.u32 %v6050, 2147483648
        %v6444 = vor.u32 1.1754944e-38, %v6443
        %v6445 = vsel %vm6442, %v6444, %v6440
        %v6446 = vmul.f32 1.0, %v6445
        %v6447 = vrcp.pop %v6051
        %v6448 = vmul.f32 %v6051, %v6447
        %v6449 = vsub.f32 1.0, %v6448
        %v6450 = vmul.f32 %v6447, %v6449
        %v6451 = vadd.f32 %v6447, %v6450
        %vm6452 = vweird.f32 %v6051
        %vm6453 = vweird.f32 %v6447
        %vm6454 = vmor %vm6452, %vm6453
        %v6455 = vsel %vm6454, %v6447, %v6451
        %v6456 = vand.u32 2147483647, %v6051
        %vm6457 = vcmp.eq.f32.partialorder %v6456, 8.507059e+37
        %v6458 = vand.u32 %v6051, 2147483648
        %v6459 = vor.u32 1.1754944e-38, %v6458
        %v6460 = vsel %vm6457, %v6459, %v6455
        %v6461 = vmul.f32 1.0, %v6460
        %v6462 = vrcp.pop %v6052
        %v6463 = vmul.f32 %v6052, %v6462
        %v6464 = vsub.f32 1.0, %v6463
        %v6465 = vmul.f32 %v6462, %v6464
        %v6466 = vadd.f32 %v6462, %v6465
        %vm6467 = vweird.f32 %v6052
        %vm6468 = vweird.f32 %v6462
        %vm6469 = vmor %vm6467, %vm6468
        %v6470 = vsel %vm6469, %v6462, %v6466
        %v6471 = vand.u32 2147483647, %v6052
        %vm6472 = vcmp.eq.f32.partialorder %v6471, 8.507059e+37
        %v6473 = vand.u32 %v6052, 2147483648
        %v6474 = vor.u32 1.1754944e-38, %v6473
        %v6475 = vsel %vm6472, %v6474, %v6470
        %v6476 = vmul.f32 1.0, %v6475
        %v6477 = vrcp.pop %v6053
        %v6478 = vmul.f32 %v6053, %v6477
        %v6479 = vsub.f32 1.0, %v6478
        %v6480 = vmul.f32 %v6477, %v6479
        %v6481 = vadd.f32 %v6477, %v6480
        %vm6482 = vweird.f32 %v6053
        %vm6483 = vweird.f32 %v6477
        %vm6484 = vmor %vm6482, %vm6483
        %v6485 = vsel %vm6484, %v6477, %v6481
        %v6486 = vand.u32 2147483647, %v6053
        %vm6487 = vcmp.eq.f32.partialorder %v6486, 8.507059e+37
        %v6488 = vand.u32 %v6053, 2147483648
        %v6489 = vor.u32 1.1754944e-38, %v6488
        %v6490 = vsel %vm6487, %v6489, %v6485
        %v6491 = vmul.f32 1.0, %v6490
        %v6492 = vrcp.pop %v6054
        %v6493 = vmul.f32 %v6054, %v6492
        %v6494 = vsub.f32 1.0, %v6493
        %v6495 = vmul.f32 %v6492, %v6494
        %v6496 = vadd.f32 %v6492, %v6495
        %vm6497 = vweird.f32 %v6054
        %vm6498 = vweird.f32 %v6492
        %vm6499 = vmor %vm6497, %vm6498
        %v6500 = vsel %vm6499, %v6492, %v6496
        %v6501 = vand.u32 2147483647, %v6054
        %vm6502 = vcmp.eq.f32.partialorder %v6501, 8.507059e+37
        %v6503 = vand.u32 %v6054, 2147483648
        %v6504 = vor.u32 1.1754944e-38, %v6503
        %v6505 = vsel %vm6502, %v6504, %v6500
        %v6506 = vmul.f32 1.0, %v6505
        %v6507 = vrcp.pop %v6055
        %v6508 = vmul.f32 %v6055, %v6507
        %v6509 = vsub.f32 1.0, %v6508
        %v6510 = vmul.f32 %v6507, %v6509
        %v6511 = vadd.f32 %v6507, %v6510
        %vm6512 = vweird.f32 %v6055
        %vm6513 = vweird.f32 %v6507
        %vm6514 = vmor %vm6512, %vm6513
        %v6515 = vsel %vm6514, %v6507, %v6511
        %v6516 = vand.u32 2147483647, %v6055
        %vm6517 = vcmp.eq.f32.partialorder %v6516, 8.507059e+37
        %v6518 = vand.u32 %v6055, 2147483648
        %v6519 = vor.u32 1.1754944e-38, %v6518
        %v6520 = vsel %vm6517, %v6519, %v6515
        %v6521 = vmul.f32 1.0, %v6520
        %v6522 = vrcp.pop %v6056
        %v6523 = vmul.f32 %v6056, %v6522
        %v6524 = vsub.f32 1.0, %v6523
        %v6525 = vmul.f32 %v6522, %v6524
        %v6526 = vadd.f32 %v6522, %v6525
        %vm6527 = vweird.f32 %v6056
        %vm6528 = vweird.f32 %v6522
        %vm6529 = vmor %vm6527, %vm6528
        %v6530 = vsel %vm6529, %v6522, %v6526
        %v6531 = vand.u32 2147483647, %v6056
        %vm6532 = vcmp.eq.f32.partialorder %v6531, 8.507059e+37
        %v6533 = vand.u32 %v6056, 2147483648
        %v6534 = vor.u32 1.1754944e-38, %v6533
        %v6535 = vsel %vm6532, %v6534, %v6530
        %v6536 = vmul.f32 1.0, %v6535
        %v6537 = vmul.f32 %v6071, 1.0614054
        %v6538 = vmul.f32 %v6086, 1.0614054
        %v6539 = vmul.f32 %v6101, 1.0614054
        %v6540 = vmul.f32 %v6116, 1.0614054
        %v6541 = vmul.f32 %v6131, 1.0614054
        %v6542 = vmul.f32 %v6146, 1.0614054
        %v6543 = vmul.f32 %v6161, 1.0614054
        %v6544 = vmul.f32 %v6176, 1.0614054
        %v6545 = vmul.f32 %v6191, 1.0614054
        %v6546 = vmul.f32 %v6206, 1.0614054
        %v6547 = vmul.f32 %v6221, 1.0614054
        %v6548 = vmul.f32 %v6236, 1.0614054
        %v6549 = vmul.f32 %v6251, 1.0614054
        %v6550 = vmul.f32 %v6266, 1.0614054
        %v6551 = vmul.f32 %v6281, 1.0614054
        %v6552 = vmul.f32 %v6296, 1.0614054
        %v6553 = vmul.f32 %v6311, 1.0614054
        %v6554 = vmul.f32 %v6326, 1.0614054
        %v6555 = vmul.f32 %v6341, 1.0614054
        %v6556 = vmul.f32 %v6356, 1.0614054
        %v6557 = vmul.f32 %v6371, 1.0614054
        %v6558 = vmul.f32 %v6386, 1.0614054
        %v6559 = vmul.f32 %v6401, 1.0614054
        %v6560 = vmul.f32 %v6416, 1.0614054
        %v6561 = vmul.f32 %v6431, 1.0614054
        %v6562 = vmul.f32 %v6446, 1.0614054
        %v6563 = vmul.f32 %v6461, 1.0614054
        %v6564 = vmul.f32 %v6476, 1.0614054
        %v6565 = vmul.f32 %v6491, 1.0614054
        %v6566 = vmul.f32 %v6506, 1.0614054
        %v6567 = vmul.f32 %v6521, 1.0614054
        %v6568 = vmul.f32 %v6536, 1.0614054
        %v6569 = vsub.f32 %v6537, 1.4531521
        %v6570 = vsub.f32 %v6538, 1.4531521
        %v6571 = vsub.f32 %v6539, 1.4531521
        %v6572 = vsub.f32 %v6540, 1.4531521
        %v6573 = vsub.f32 %v6541, 1.4531521
        %v6574 = vsub.f32 %v6542, 1.4531521
        %v6575 = vsub.f32 %v6543, 1.4531521
        %v6576 = vsub.f32 %v6544, 1.4531521
        %v6577 = vsub.f32 %v6545, 1.4531521
        %v6578 = vsub.f32 %v6546, 1.4531521
        %v6579 = vsub.f32 %v6547, 1.4531521
        %v6580 = vsub.f32 %v6548, 1.4531521
        %v6581 = vsub.f32 %v6549, 1.4531521
        %v6582 = vsub.f32 %v6550, 1.4531521
        %v6583 = vsub.f32 %v6551, 1.4531521
        %v6584 = vsub.f32 %v6552, 1.4531521
        %v6585 = vsub.f32 %v6553, 1.4531521
        %v6586 = vsub.f32 %v6554, 1.4531521
        %v6587 = vsub.f32 %v6555, 1.4531521
        %v6588 = vsub.f32 %v6556, 1.4531521
        %v6589 = vsub.f32 %v6557, 1.4531521
        %v6590 = vsub.f32 %v6558, 1.4531521
        %v6591 = vsub.f32 %v6559, 1.4531521
        %v6592 = vsub.f32 %v6560, 1.4531521
        %v6593 = vsub.f32 %v6561, 1.4531521
        %v6594 = vsub.f32 %v6562, 1.4531521
        %v6595 = vsub.f32 %v6563, 1.4531521
        %v6596 = vsub.f32 %v6564, 1.4531521
        %v6597 = vsub.f32 %v6565, 1.4531521
        %v6598 = vsub.f32 %v6566, 1.4531521
        %v6599 = vsub.f32 %v6567, 1.4531521
        %v6600 = vsub.f32 %v6568, 1.4531521
        %v6601 = vmul.f32 %v6569, %v6071
        %v6602 = vmul.f32 %v6570, %v6086
        %v6603 = vmul.f32 %v6571, %v6101
        %v6604 = vmul.f32 %v6572, %v6116
        %v6605 = vmul.f32 %v6573, %v6131
        %v6606 = vmul.f32 %v6574, %v6146
        %v6607 = vmul.f32 %v6575, %v6161
        %v6608 = vmul.f32 %v6576, %v6176
        %v6609 = vmul.f32 %v6577, %v6191
        %v6610 = vmul.f32 %v6578, %v6206
        %v6611 = vmul.f32 %v6579, %v6221
        %v6612 = vmul.f32 %v6580, %v6236
        %v6613 = vmul.f32 %v6581, %v6251
        %v6614 = vmul.f32 %v6582, %v6266
        %v6615 = vmul.f32 %v6583, %v6281
        %v6616 = vmul.f32 %v6584, %v6296
        %v6617 = vmul.f32 %v6585, %v6311
        %v6618 = vmul.f32 %v6586, %v6326
        %v6619 = vmul.f32 %v6587, %v6341
        %v6620 = vmul.f32 %v6588, %v6356
        %v6621 = vmul.f32 %v6589, %v6371
        %v6622 = vmul.f32 %v6590, %v6386
        %v6623 = vmul.f32 %v6591, %v6401
        %v6624 = vmul.f32 %v6592, %v6416
        %v6625 = vmul.f32 %v6593, %v6431
        %v6626 = vmul.f32 %v6594, %v6446
        %v6627 = vmul.f32 %v6595, %v6461
        %v6628 = vmul.f32 %v6596, %v6476
        %v6629 = vmul.f32 %v6597, %v6491
        %v6630 = vmul.f32 %v6598, %v6506
        %v6631 = vmul.f32 %v6599, %v6521
        %v6632 = vmul.f32 %v6600, %v6536
        %v6633 = vadd.f32 %v6601, 1.4214138
        %v6634 = vadd.f32 %v6602, 1.4214138
        %v6635 = vadd.f32 %v6603, 1.4214138
        %v6636 = vadd.f32 %v6604, 1.4214138
        %v6637 = vadd.f32 %v6605, 1.4214138
        %v6638 = vadd.f32 %v6606, 1.4214138
        %v6639 = vadd.f32 %v6607, 1.4214138
        %v6640 = vadd.f32 %v6608, 1.4214138
        %v6641 = vadd.f32 %v6609, 1.4214138
        %v6642 = vadd.f32 %v6610, 1.4214138
        %v6643 = vadd.f32 %v6611, 1.4214138
        %v6644 = vadd.f32 %v6612, 1.4214138
        %v6645 = vadd.f32 %v6613, 1.4214138
        %v6646 = vadd.f32 %v6614, 1.4214138
        %v6647 = vadd.f32 %v6615, 1.4214138
        %v6648 = vadd.f32 %v6616, 1.4214138
        %v6649 = vadd.f32 %v6617, 1.4214138
        %v6650 = vadd.f32 %v6618, 1.4214138
        %v6651 = vadd.f32 %v6619, 1.4214138
        %v6652 = vadd.f32 %v6620, 1.4214138
        %v6653 = vadd.f32 %v6621, 1.4214138
        %v6654 = vadd.f32 %v6622, 1.4214138
        %v6655 = vadd.f32 %v6623, 1.4214138
        %v6656 = vadd.f32 %v6624, 1.4214138
        %v6657 = vadd.f32 %v6625, 1.4214138
        %v6658 = vadd.f32 %v6626, 1.4214138
        %v6659 = vadd.f32 %v6627, 1.4214138
        %v6660 = vadd.f32 %v6628, 1.4214138
        %v6661 = vadd.f32 %v6629, 1.4214138
        %v6662 = vadd.f32 %v6630, 1.4214138
        %v6663 = vadd.f32 %v6631, 1.4214138
        %v6664 = vadd.f32 %v6632, 1.4214138
        %v6665 = vmul.f32 %v6633, %v6071
        %v6666 = vmul.f32 %v6634, %v6086
        %v6667 = vmul.f32 %v6635, %v6101
        %v6668 = vmul.f32 %v6636, %v6116
        %v6669 = vmul.f32 %v6637, %v6131
        %v6670 = vmul.f32 %v6638, %v6146
        %v6671 = vmul.f32 %v6639, %v6161
        %v6672 = vmul.f32 %v6640, %v6176
        %v6673 = vmul.f32 %v6641, %v6191
        %v6674 = vmul.f32 %v6642, %v6206
        %v6675 = vmul.f32 %v6643, %v6221
        %v6676 = vmul.f32 %v6644, %v6236
        %v6677 = vmul.f32 %v6645, %v6251
        %v6678 = vmul.f32 %v6646, %v6266
        %v6679 = vmul.f32 %v6647, %v6281
        %v6680 = vmul.f32 %v6648, %v6296
        %v6681 = vmul.f32 %v6649, %v6311
        %v6682 = vmul.f32 %v6650, %v6326
        %v6683 = vmul.f32 %v6651, %v6341
        %v6684 = vmul.f32 %v6652, %v6356
        %v6685 = vmul.f32 %v6653, %v6371
        %v6686 = vmul.f32 %v6654, %v6386
        %v6687 = vmul.f32 %v6655, %v6401
        %v6688 = vmul.f32 %v6656, %v6416
        %v6689 = vmul.f32 %v6657, %v6431
        %v6690 = vmul.f32 %v6658, %v6446
        %v6691 = vmul.f32 %v6659, %v6461
        %v6692 = vmul.f32 %v6660, %v6476
        %v6693 = vmul.f32 %v6661, %v6491
        %v6694 = vmul.f32 %v6662, %v6506
        %v6695 = vmul.f32 %v6663, %v6521
        %v6696 = vmul.f32 %v6664, %v6536
        %v6697 = vsub.f32 %v6665, 0.28449672
        %v6698 = vsub.f32 %v6666, 0.28449672
        %v6699 = vsub.f32 %v6667, 0.28449672
        %v6700 = vsub.f32 %v6668, 0.28449672
        %v6701 = vsub.f32 %v6669, 0.28449672
        %v6702 = vsub.f32 %v6670, 0.28449672
        %v6703 = vsub.f32 %v6671, 0.28449672
        %v6704 = vsub.f32 %v6672, 0.28449672
        %v6705 = vsub.f32 %v6673, 0.28449672
        %v6706 = vsub.f32 %v6674, 0.28449672
        %v6707 = vsub.f32 %v6675, 0.28449672
        %v6708 = vsub.f32 %v6676, 0.28449672
        %v6709 = vsub.f32 %v6677, 0.28449672
        %v6710 = vsub.f32 %v6678, 0.28449672
        %v6711 = vsub.f32 %v6679, 0.28449672
        %v6712 = vsub.f32 %v6680, 0.28449672
        %v6713 = vsub.f32 %v6681, 0.28449672
        %v6714 = vsub.f32 %v6682, 0.28449672
        %v6715 = vsub.f32 %v6683, 0.28449672
        %v6716 = vsub.f32 %v6684, 0.28449672
        %v6717 = vsub.f32 %v6685, 0.28449672
        %v6718 = vsub.f32 %v6686, 0.28449672
        %v6719 = vsub.f32 %v6687, 0.28449672
        %v6720 = vsub.f32 %v6688, 0.28449672
        %v6721 = vsub.f32 %v6689, 0.28449672
        %v6722 = vsub.f32 %v6690, 0.28449672
        %v6723 = vsub.f32 %v6691, 0.28449672
        %v6724 = vsub.f32 %v6692, 0.28449672
        %v6725 = vsub.f32 %v6693, 0.28449672
        %v6726 = vsub.f32 %v6694, 0.28449672
        %v6727 = vsub.f32 %v6695, 0.28449672
        %v6728 = vsub.f32 %v6696, 0.28449672
        %v6729 = vmul.f32 %v6697, %v6071
        %v6730 = vmul.f32 %v6698, %v6086
        %v6731 = vmul.f32 %v6699, %v6101
        %v6732 = vmul.f32 %v6700, %v6116
        %v6733 = vmul.f32 %v6701, %v6131
        %v6734 = vmul.f32 %v6702, %v6146
        %v6735 = vmul.f32 %v6703, %v6161
        %v6736 = vmul.f32 %v6704, %v6176
        %v6737 = vmul.f32 %v6705, %v6191
        %v6738 = vmul.f32 %v6706, %v6206
        %v6739 = vmul.f32 %v6707, %v6221
        %v6740 = vmul.f32 %v6708, %v6236
        %v6741 = vmul.f32 %v6709, %v6251
        %v6742 = vmul.f32 %v6710, %v6266
        %v6743 = vmul.f32 %v6711, %v6281
        %v6744 = vmul.f32 %v6712, %v6296
        %v6745 = vmul.f32 %v6713, %v6311
        %v6746 = vmul.f32 %v6714, %v6326
        %v6747 = vmul.f32 %v6715, %v6341
        %v6748 = vmul.f32 %v6716, %v6356
        %v6749 = vmul.f32 %v6717, %v6371
        %v6750 = vmul.f32 %v6718, %v6386
        %v6751 = vmul.f32 %v6719, %v6401
        %v6752 = vmul.f32 %v6720, %v6416
        %v6753 = vmul.f32 %v6721, %v6431
        %v6754 = vmul.f32 %v6722, %v6446
        %v6755 = vmul.f32 %v6723, %v6461
        %v6756 = vmul.f32 %v6724, %v6476
        %v6757 = vmul.f32 %v6725, %v6491
        %v6758 = vmul.f32 %v6726, %v6506
        %v6759 = vmul.f32 %v6727, %v6521
        %v6760 = vmul.f32 %v6728, %v6536
        %v6761 = vadd.f32 %v6729, 0.2548296
        %v6762 = vadd.f32 %v6730, 0.2548296
        %v6763 = vadd.f32 %v6731, 0.2548296
        %v6764 = vadd.f32 %v6732, 0.2548296
        %v6765 = vadd.f32 %v6733, 0.2548296
        %v6766 = vadd.f32 %v6734, 0.2548296
        %v6767 = vadd.f32 %v6735, 0.2548296
        %v6768 = vadd.f32 %v6736, 0.2548296
        %v6769 = vadd.f32 %v6737, 0.2548296
        %v6770 = vadd.f32 %v6738, 0.2548296
        %v6771 = vadd.f32 %v6739, 0.2548296
        %v6772 = vadd.f32 %v6740, 0.2548296
        %v6773 = vadd.f32 %v6741, 0.2548296
        %v6774 = vadd.f32 %v6742, 0.2548296
        %v6775 = vadd.f32 %v6743, 0.2548296
        %v6776 = vadd.f32 %v6744, 0.2548296
        %v6777 = vadd.f32 %v6745, 0.2548296
        %v6778 = vadd.f32 %v6746, 0.2548296
        %v6779 = vadd.f32 %v6747, 0.2548296
        %v6780 = vadd.f32 %v6748, 0.2548296
        %v6781 = vadd.f32 %v6749, 0.2548296
        %v6782 = vadd.f32 %v6750, 0.2548296
        %v6783 = vadd.f32 %v6751, 0.2548296
        %v6784 = vadd.f32 %v6752, 0.2548296
        %v6785 = vadd.f32 %v6753, 0.2548296
        %v6786 = vadd.f32 %v6754, 0.2548296
        %v6787 = vadd.f32 %v6755, 0.2548296
        %v6788 = vadd.f32 %v6756, 0.2548296
        %v6789 = vadd.f32 %v6757, 0.2548296
        %v6790 = vadd.f32 %v6758, 0.2548296
        %v6791 = vadd.f32 %v6759, 0.2548296
        %v6792 = vadd.f32 %v6760, 0.2548296
        %v6793 = vmul.f32 %v6761, %v6071
        %v6794 = vmul.f32 %v6762, %v6086
        %v6795 = vmul.f32 %v6763, %v6101
        %v6796 = vmul.f32 %v6764, %v6116
        %v6797 = vmul.f32 %v6765, %v6131
        %v6798 = vmul.f32 %v6766, %v6146
        %v6799 = vmul.f32 %v6767, %v6161
        %v6800 = vmul.f32 %v6768, %v6176
        %v6801 = vmul.f32 %v6769, %v6191
        %v6802 = vmul.f32 %v6770, %v6206
        %v6803 = vmul.f32 %v6771, %v6221
        %v6804 = vmul.f32 %v6772, %v6236
        %v6805 = vmul.f32 %v6773, %v6251
        %v6806 = vmul.f32 %v6774, %v6266
        %v6807 = vmul.f32 %v6775, %v6281
        %v6808 = vmul.f32 %v6776, %v6296
        %v6809 = vmul.f32 %v6777, %v6311
        %v6810 = vmul.f32 %v6778, %v6326
        %v6811 = vmul.f32 %v6779, %v6341
        %v6812 = vmul.f32 %v6780, %v6356
        %v6813 = vmul.f32 %v6781, %v6371
        %v6814 = vmul.f32 %v6782, %v6386
        %v6815 = vmul.f32 %v6783, %v6401
        %v6816 = vmul.f32 %v6784, %v6416
        %v6817 = vmul.f32 %v6785, %v6431
        %v6818 = vmul.f32 %v6786, %v6446
        %v6819 = vmul.f32 %v6787, %v6461
        %v6820 = vmul.f32 %v6788, %v6476
        %v6821 = vmul.f32 %v6789, %v6491
        %v6822 = vmul.f32 %v6790, %v6506
        %v6823 = vmul.f32 %v6791, %v6521
        %v6824 = vmul.f32 %v6792, %v6536
        %v6825 = vsub.f32 0.0, %v5961
        %v6826 = vsub.f32 0.0, %v5962
        %v6827 = vsub.f32 0.0, %v5963
        %v6828 = vsub.f32 0.0, %v5964
        %v6829 = vsub.f32 0.0, %v5965
        %v6830 = vsub.f32 0.0, %v5966
        %v6831 = vsub.f32 0.0, %v5967
        %v6832 = vsub.f32 0.0, %v5968
        %v6833 = vsub.f32 0.0, %v5969
        %v6834 = vsub.f32 0.0, %v5970
        %v6835 = vsub.f32 0.0, %v5971
        %v6836 = vsub.f32 0.0, %v5972
        %v6837 = vsub.f32 0.0, %v5973
        %v6838 = vsub.f32 0.0, %v5974
        %v6839 = vsub.f32 0.0, %v5975
        %v6840 = vsub.f32 0.0, %v5976
        %v6841 = vsub.f32 0.0, %v5977
        %v6842 = vsub.f32 0.0, %v5978
        %v6843 = vsub.f32 0.0, %v5979
        %v6844 = vsub.f32 0.0, %v5980
        %v6845 = vsub.f32 0.0, %v5981
        %v6846 = vsub.f32 0.0, %v5982
        %v6847 = vsub.f32 0.0, %v5983
        %v6848 = vsub.f32 0.0, %v5984
        %v6849 = vsub.f32 0.0, %v5985
        %v6850 = vsub.f32 0.0, %v5986
        %v6851 = vsub.f32 0.0, %v5987
        %v6852 = vsub.f32 0.0, %v5988
        %v6853 = vsub.f32 0.0, %v5989
        %v6854 = vsub.f32 0.0, %v5990
        %v6855 = vsub.f32 0.0, %v5991
        %v6856 = vsub.f32 0.0, %v5992
        %v6857 = vmul.f32 %v6825, %v5961
        %v6858 = vmul.f32 %v6826, %v5962
        %v6859 = vmul.f32 %v6827, %v5963
        %v6860 = vmul.f32 %v6828, %v5964
        %v6861 = vmul.f32 %v6829, %v5965
        %v6862 = vmul.f32 %v6830, %v5966
        %v6863 = vmul.f32 %v6831, %v5967
        %v6864 = vmul.f32 %v6832, %v5968
        %v6865 = vmul.f32 %v6833, %v5969
        %v6866 = vmul.f32 %v6834, %v5970
        %v6867 = vmul.f32 %v6835, %v5971
        %v6868 = vmul.f32 %v6836, %v5972
        %v6869 = vmul.f32 %v6837, %v5973
        %v6870 = vmul.f32 %v6838, %v5974
        %v6871 = vmul.f32 %v6839, %v5975
        %v6872 = vmul.f32 %v6840, %v5976
        %v6873 = vmul.f32 %v6841, %v5977
        %v6874 = vmul.f32 %v6842, %v5978
        %v6875 = vmul.f32 %v6843, %v5979
        %v6876 = vmul.f32 %v6844, %v5980
        %v6877 = vmul.f32 %v6845, %v5981
        %v6878 = vmul.f32 %v6846, %v5982
        %v6879 = vmul.f32 %v6847, %v5983
        %v6880 = vmul.f32 %v6848, %v5984
        %v6881 = vmul.f32 %v6849, %v5985
        %v6882 = vmul.f32 %v6850, %v5986
        %v6883 = vmul.f32 %v6851, %v5987
        %v6884 = vmul.f32 %v6852, %v5988
        %v6885 = vmul.f32 %v6853, %v5989
        %v6886 = vmul.f32 %v6854, %v5990
        %v6887 = vmul.f32 %v6855, %v5991
        %v6888 = vmul.f32 %v6856, %v5992
        %v6889 = vmul.f32 %v6857, 1.442695
        %v6890 = vpow.pop %v6889
        %v6891 = vmul.f32 %v6858, 1.442695
        %v6892 = vpow.pop %v6891
        %v6893 = vmul.f32 %v6859, 1.442695
        %v6894 = vpow.pop %v6893
        %v6895 = vmul.f32 %v6860, 1.442695
        %v6896 = vpow.pop %v6895
        %v6897 = vmul.f32 %v6861, 1.442695
        %v6898 = vpow.pop %v6897
        %v6899 = vmul.f32 %v6862, 1.442695
        %v6900 = vpow.pop %v6899
        %v6901 = vmul.f32 %v6863, 1.442695
        %v6902 = vpow.pop %v6901
        %v6903 = vmul.f32 %v6864, 1.442695
        %v6904 = vpow.pop %v6903
        %v6905 = vmul.f32 %v6865, 1.442695
        %v6906 = vpow.pop %v6905
        %v6907 = vmul.f32 %v6866, 1.442695
        %v6908 = vpow.pop %v6907
        %v6909 = vmul.f32 %v6867, 1.442695
        %v6910 = vpow.pop %v6909
        %v6911 = vmul.f32 %v6868, 1.442695
        %v6912 = vpow.pop %v6911
        %v6913 = vmul.f32 %v6869, 1.442695
        %v6914 = vpow.pop %v6913
        %v6915 = vmul.f32 %v6870, 1.442695
        %v6916 = vpow.pop %v6915
        %v6917 = vmul.f32 %v6871, 1.442695
        %v6918 = vpow.pop %v6917
        %v6919 = vmul.f32 %v6872, 1.442695
        %v6920 = vpow.pop %v6919
        %v6921 = vmul.f32 %v6873, 1.442695
        %v6922 = vpow.pop %v6921
        %v6923 = vmul.f32 %v6874, 1.442695
        %v6924 = vpow.pop %v6923
        %v6925 = vmul.f32 %v6875, 1.442695
        %v6926 = vpow.pop %v6925
        %v6927 = vmul.f32 %v6876, 1.442695
        %v6928 = vpow.pop %v6927
        %v6929 = vmul.f32 %v6877, 1.442695
        %v6930 = vpow.pop %v6929
        %v6931 = vmul.f32 %v6878, 1.442695
        %v6932 = vpow.pop %v6931
        %v6933 = vmul.f32 %v6879, 1.442695
        %v6934 = vpow.pop %v6933
        %v6935 = vmul.f32 %v6880, 1.442695
        %v6936 = vpow.pop %v6935
        %v6937 = vmul.f32 %v6881, 1.442695
        %v6938 = vpow.pop %v6937
        %v6939 = vmul.f32 %v6882, 1.442695
        %v6940 = vpow.pop %v6939
        %v6941 = vmul.f32 %v6883, 1.442695
        %v6942 = vpow.pop %v6941
        %v6943 = vmul.f32 %v6884, 1.442695
        %v6944 = vpow.pop %v6943
        %v6945 = vmul.f32 %v6885, 1.442695
        %v6946 = vpow.pop %v6945
        %v6947 = vmul.f32 %v6886, 1.442695
        %v6948 = vpow.pop %v6947
        %v6949 = vmul.f32 %v6887, 1.442695
        %v6950 = vpow.pop %v6949
        %v6951 = vmul.f32 %v6888, 1.442695
        %v6952 = vpow.pop %v6951
        %v6953 = vmul.f32 %v6793, %v6890
        %v6954 = vmul.f32 %v6794, %v6892
        %v6955 = vmul.f32 %v6795, %v6894
        %v6956 = vmul.f32 %v6796, %v6896
        %v6957 = vmul.f32 %v6797, %v6898
        %v6958 = vmul.f32 %v6798, %v6900
        %v6959 = vmul.f32 %v6799, %v6902
        %v6960 = vmul.f32 %v6800, %v6904
        %v6961 = vmul.f32 %v6801, %v6906
        %v6962 = vmul.f32 %v6802, %v6908
        %v6963 = vmul.f32 %v6803, %v6910
        %v6964 = vmul.f32 %v6804, %v6912
        %v6965 = vmul.f32 %v6805, %v6914
        %v6966 = vmul.f32 %v6806, %v6916
        %v6967 = vmul.f32 %v6807, %v6918
        %v6968 = vmul.f32 %v6808, %v6920
        %v6969 = vmul.f32 %v6809, %v6922
        %v6970 = vmul.f32 %v6810, %v6924
        %v6971 = vmul.f32 %v6811, %v6926
        %v6972 = vmul.f32 %v6812, %v6928
        %v6973 = vmul.f32 %v6813, %v6930
        %v6974 = vmul.f32 %v6814, %v6932
        %v6975 = vmul.f32 %v6815, %v6934
        %v6976 = vmul.f32 %v6816, %v6936
        %v6977 = vmul.f32 %v6817, %v6938
        %v6978 = vmul.f32 %v6818, %v6940
        %v6979 = vmul.f32 %v6819, %v6942
        %v6980 = vmul.f32 %v6820, %v6944
        %v6981 = vmul.f32 %v6821, %v6946
        %v6982 = vmul.f32 %v6822, %v6948
        %v6983 = vmul.f32 %v6823, %v6950
        %v6984 = vmul.f32 %v6824, %v6952
        %v6985 = vsub.f32 1.0, %v6953
        %v6986 = vsub.f32 1.0, %v6954
        %v6987 = vsub.f32 1.0, %v6955
        %v6988 = vsub.f32 1.0, %v6956
        %v6989 = vsub.f32 1.0, %v6957
        %v6990 = vsub.f32 1.0, %v6958
        %v6991 = vsub.f32 1.0, %v6959
        %v6992 = vsub.f32 1.0, %v6960
        %v6993 = vsub.f32 1.0, %v6961
        %v6994 = vsub.f32 1.0, %v6962
        %v6995 = vsub.f32 1.0, %v6963
        %v6996 = vsub.f32 1.0, %v6964
        %v6997 = vsub.f32 1.0, %v6965
        %v6998 = vsub.f32 1.0, %v6966
        %v6999 = vsub.f32 1.0, %v6967
        %v7000 = vsub.f32 1.0, %v6968
        %v7001 = vsub.f32 1.0, %v6969
        %v7002 = vsub.f32 1.0, %v6970
        %v7003 = vsub.f32 1.0, %v6971
        %v7004 = vsub.f32 1.0, %v6972
        %v7005 = vsub.f32 1.0, %v6973
        %v7006 = vsub.f32 1.0, %v6974
        %v7007 = vsub.f32 1.0, %v6975
        %v7008 = vsub.f32 1.0, %v6976
        %v7009 = vsub.f32 1.0, %v6977
        %v7010 = vsub.f32 1.0, %v6978
        %v7011 = vsub.f32 1.0, %v6979
        %v7012 = vsub.f32 1.0, %v6980
        %v7013 = vsub.f32 1.0, %v6981
        %v7014 = vsub.f32 1.0, %v6982
        %v7015 = vsub.f32 1.0, %v6983
        %v7016 = vsub.f32 1.0, %v6984
        %vm7017 = vcmp.lt.f32.partialorder %v5929, 0.0
        %vm7018 = vcmp.lt.f32.partialorder %v5930, 0.0
        %vm7019 = vcmp.lt.f32.partialorder %v5931, 0.0
        %vm7020 = vcmp.lt.f32.partialorder %v5932, 0.0
        %vm7021 = vcmp.lt.f32.partialorder %v5933, 0.0
        %vm7022 = vcmp.lt.f32.partialorder %v5934, 0.0
        %vm7023 = vcmp.lt.f32.partialorder %v5935, 0.0
        %vm7024 = vcmp.lt.f32.partialorder %v5936, 0.0
        %vm7025 = vcmp.lt.f32.partialorder %v5937, 0.0
        %vm7026 = vcmp.lt.f32.partialorder %v5938, 0.0
        %vm7027 = vcmp.lt.f32.partialorder %v5939, 0.0
        %vm7028 = vcmp.lt.f32.partialorder %v5940, 0.0
        %vm7029 = vcmp.lt.f32.partialorder %v5941, 0.0
        %vm7030 = vcmp.lt.f32.partialorder %v5942, 0.0
        %vm7031 = vcmp.lt.f32.partialorder %v5943, 0.0
        %vm7032 = vcmp.lt.f32.partialorder %v5944, 0.0
        %vm7033 = vcmp.lt.f32.partialorder %v5945, 0.0
        %vm7034 = vcmp.lt.f32.partialorder %v5946, 0.0
        %vm7035 = vcmp.lt.f32.partialorder %v5947, 0.0
        %vm7036 = vcmp.lt.f32.partialorder %v5948, 0.0
        %vm7037 = vcmp.lt.f32.partialorder %v5949, 0.0
        %vm7038 = vcmp.lt.f32.partialorder %v5950, 0.0
        %vm7039 = vcmp.lt.f32.partialorder %v5951, 0.0
        %vm7040 = vcmp.lt.f32.partialorder %v5952, 0.0
        %vm7041 = vcmp.lt.f32.partialorder %v5953, 0.0
        %vm7042 = vcmp.lt.f32.partialorder %v5954, 0.0
        %vm7043 = vcmp.lt.f32.partialorder %v5955, 0.0
        %vm7044 = vcmp.lt.f32.partialorder %v5956, 0.0
        %vm7045 = vcmp.lt.f32.partialorder %v5957, 0.0
        %vm7046 = vcmp.lt.f32.partialorder %v5958, 0.0
        %vm7047 = vcmp.lt.f32.partialorder %v5959, 0.0
        %vm7048 = vcmp.lt.f32.partialorder %v5960, 0.0
        %v7049 = vsub.f32 0.0, %v6985
        %v7050 = vsub.f32 0.0, %v6986
        %v7051 = vsub.f32 0.0, %v6987
        %v7052 = vsub.f32 0.0, %v6988
        %v7053 = vsub.f32 0.0, %v6989
        %v7054 = vsub.f32 0.0, %v6990
        %v7055 = vsub.f32 0.0, %v6991
        %v7056 = vsub.f32 0.0, %v6992
        %v7057 = vsub.f32 0.0, %v6993
        %v7058 = vsub.f32 0.0, %v6994
        %v7059 = vsub.f32 0.0, %v6995
        %v7060 = vsub.f32 0.0, %v6996
        %v7061 = vsub.f32 0.0, %v6997
        %v7062 = vsub.f32 0.0, %v6998
        %v7063 = vsub.f32 0.0, %v6999
        %v7064 = vsub.f32 0.0, %v7000
        %v7065 = vsub.f32 0.0, %v7001
        %v7066 = vsub.f32 0.0, %v7002
        %v7067 = vsub.f32 0.0, %v7003
        %v7068 = vsub.f32 0.0, %v7004
        %v7069 = vsub.f32 0.0, %v7005
        %v7070 = vsub.f32 0.0, %v7006
        %v7071 = vsub.f32 0.0, %v7007
        %v7072 = vsub.f32 0.0, %v7008
        %v7073 = vsub.f32 0.0, %v7009
        %v7074 = vsub.f32 0.0, %v7010
        %v7075 = vsub.f32 0.0, %v7011
        %v7076 = vsub.f32 0.0, %v7012
        %v7077 = vsub.f32 0.0, %v7013
        %v7078 = vsub.f32 0.0, %v7014
        %v7079 = vsub.f32 0.0, %v7015
        %v7080 = vsub.f32 0.0, %v7016
        %v7081 = vsel %vm7017, %v7049, %v6985
        %v7082 = vsel %vm7018, %v7050, %v6986
        %v7083 = vsel %vm7019, %v7051, %v6987
        %v7084 = vsel %vm7020, %v7052, %v6988
        %v7085 = vsel %vm7021, %v7053, %v6989
        %v7086 = vsel %vm7022, %v7054, %v6990
        %v7087 = vsel %vm7023, %v7055, %v6991
        %v7088 = vsel %vm7024, %v7056, %v6992
        %v7089 = vsel %vm7025, %v7057, %v6993
        %v7090 = vsel %vm7026, %v7058, %v6994
        %v7091 = vsel %vm7027, %v7059, %v6995
        %v7092 = vsel %vm7028, %v7060, %v6996
        %v7093 = vsel %vm7029, %v7061, %v6997
        %v7094 = vsel %vm7030, %v7062, %v6998
        %v7095 = vsel %vm7031, %v7063, %v6999
        %v7096 = vsel %vm7032, %v7064, %v7000
        %v7097 = vsel %vm7033, %v7065, %v7001
        %v7098 = vsel %vm7034, %v7066, %v7002
        %v7099 = vsel %vm7035, %v7067, %v7003
        %v7100 = vsel %vm7036, %v7068, %v7004
        %v7101 = vsel %vm7037, %v7069, %v7005
        %v7102 = vsel %vm7038, %v7070, %v7006
        %v7103 = vsel %vm7039, %v7071, %v7007
        %v7104 = vsel %vm7040, %v7072, %v7008
        %v7105 = vsel %vm7041, %v7073, %v7009
        %v7106 = vsel %vm7042, %v7074, %v7010
        %v7107 = vsel %vm7043, %v7075, %v7011
        %v7108 = vsel %vm7044, %v7076, %v7012
        %v7109 = vsel %vm7045, %v7077, %v7013
        %v7110 = vsel %vm7046, %v7078, %v7014
        %v7111 = vsel %vm7047, %v7079, %v7015
        %v7112 = vsel %vm7048, %v7080, %v7016
        %v7113 = vadd.f32 %v7081, 1.0
        %v7114 = vadd.f32 %v7082, 1.0
        %v7115 = vadd.f32 %v7083, 1.0
        %v7116 = vadd.f32 %v7084, 1.0
        %v7117 = vadd.f32 %v7085, 1.0
        %v7118 = vadd.f32 %v7086, 1.0
        %v7119 = vadd.f32 %v7087, 1.0
        %v7120 = vadd.f32 %v7088, 1.0
        %v7121 = vadd.f32 %v7089, 1.0
        %v7122 = vadd.f32 %v7090, 1.0
        %v7123 = vadd.f32 %v7091, 1.0
        %v7124 = vadd.f32 %v7092, 1.0
        %v7125 = vadd.f32 %v7093, 1.0
        %v7126 = vadd.f32 %v7094, 1.0
        %v7127 = vadd.f32 %v7095, 1.0
        %v7128 = vadd.f32 %v7096, 1.0
        %v7129 = vadd.f32 %v7097, 1.0
        %v7130 = vadd.f32 %v7098, 1.0
        %v7131 = vadd.f32 %v7099, 1.0
        %v7132 = vadd.f32 %v7100, 1.0
        %v7133 = vadd.f32 %v7101, 1.0
        %v7134 = vadd.f32 %v7102, 1.0
        %v7135 = vadd.f32 %v7103, 1.0
        %v7136 = vadd.f32 %v7104, 1.0
        %v7137 = vadd.f32 %v7105, 1.0
        %v7138 = vadd.f32 %v7106, 1.0
        %v7139 = vadd.f32 %v7107, 1.0
        %v7140 = vadd.f32 %v7108, 1.0
        %v7141 = vadd.f32 %v7109, 1.0
        %v7142 = vadd.f32 %v7110, 1.0
        %v7143 = vadd.f32 %v7111, 1.0
        %v7144 = vadd.f32 %v7112, 1.0
        %v7145 = vmul.f32 %v5897, %v7113
        %v7146 = vmul.f32 %v5898, %v7114
        %v7147 = vmul.f32 %v5899, %v7115
        %v7148 = vmul.f32 %v5900, %v7116
        %v7149 = vmul.f32 %v5901, %v7117
        %v7150 = vmul.f32 %v5902, %v7118
        %v7151 = vmul.f32 %v5903, %v7119
        %v7152 = vmul.f32 %v5904, %v7120
        %v7153 = vmul.f32 %v5905, %v7121
        %v7154 = vmul.f32 %v5906, %v7122
        %v7155 = vmul.f32 %v5907, %v7123
        %v7156 = vmul.f32 %v5908, %v7124
        %v7157 = vmul.f32 %v5909, %v7125
        %v7158 = vmul.f32 %v5910, %v7126
        %v7159 = vmul.f32 %v5911, %v7127
        %v7160 = vmul.f32 %v5912, %v7128
        %v7161 = vmul.f32 %v5913, %v7129
        %v7162 = vmul.f32 %v5914, %v7130
        %v7163 = vmul.f32 %v5915, %v7131
        %v7164 = vmul.f32 %v5916, %v7132
        %v7165 = vmul.f32 %v5917, %v7133
        %v7166 = vmul.f32 %v5918, %v7134
        %v7167 = vmul.f32 %v5919, %v7135
        %v7168 = vmul.f32 %v5920, %v7136
        %v7169 = vmul.f32 %v5921, %v7137
        %v7170 = vmul.f32 %v5922, %v7138
        %v7171 = vmul.f32 %v5923, %v7139
        %v7172 = vmul.f32 %v5924, %v7140
        %v7173 = vmul.f32 %v5925, %v7141
        %v7174 = vmul.f32 %v5926, %v7142
        %v7175 = vmul.f32 %v5927, %v7143
        %v7176 = vmul.f32 %v5928, %v7144
        %v7177 = vmul.f32 %v7145, %v871
        %v7178 = vmul.f32 %v7146, %v874
        %v7179 = vmul.f32 %v7147, %v877
        %v7180 = vmul.f32 %v7148, %v880
        %v7181 = vmul.f32 %v7149, %v883
        %v7182 = vmul.f32 %v7150, %v886
        %v7183 = vmul.f32 %v7151, %v889
        %v7184 = vmul.f32 %v7152, %v892
        %v7185 = vmul.f32 %v7153, %v895
        %v7186 = vmul.f32 %v7154, %v898
        %v7187 = vmul.f32 %v7155, %v901
        %v7188 = vmul.f32 %v7156, %v904
        %v7189 = vmul.f32 %v7157, %v907
        %v7190 = vmul.f32 %v7158, %v910
        %v7191 = vmul.f32 %v7159, %v913
        %v7192 = vmul.f32 %v7160, %v916
        %v7193 = vmul.f32 %v7161, %v919
        %v7194 = vmul.f32 %v7162, %v922
        %v7195 = vmul.f32 %v7163, %v925
        %v7196 = vmul.f32 %v7164, %v928
        %v7197 = vmul.f32 %v7165, %v931
        %v7198 = vmul.f32 %v7166, %v934
        %v7199 = vmul.f32 %v7167, %v937
        %v7200 = vmul.f32 %v7168, %v940
        %v7201 = vmul.f32 %v7169, %v943
        %v7202 = vmul.f32 %v7170, %v946
        %v7203 = vmul.f32 %v7171, %v949
        %v7204 = vmul.f32 %v7172, %v952
        %v7205 = vmul.f32 %v7173, %v955
        %v7206 = vmul.f32 %v7174, %v958
        %v7207 = vmul.f32 %v7175, %v961
        %v7208 = vmul.f32 %v7176, %v964
        %v7209 = vadd.f32 %v3378, %v7177
        %v7210 = vadd.f32 %v3379, %v7178
        %v7211 = vadd.f32 %v3380, %v7179
        %v7212 = vadd.f32 %v3381, %v7180
        %v7213 = vadd.f32 %v3382, %v7181
        %v7214 = vadd.f32 %v3383, %v7182
        %v7215 = vadd.f32 %v3384, %v7183
        %v7216 = vadd.f32 %v3385, %v7184
        %v7217 = vadd.f32 %v3386, %v7185
        %v7218 = vadd.f32 %v3387, %v7186
        %v7219 = vadd.f32 %v3388, %v7187
        %v7220 = vadd.f32 %v3389, %v7188
        %v7221 = vadd.f32 %v3390, %v7189
        %v7222 = vadd.f32 %v3391, %v7190
        %v7223 = vadd.f32 %v3392, %v7191
        %v7224 = vadd.f32 %v3393, %v7192
        %v7225 = vadd.f32 %v3394, %v7193
        %v7226 = vadd.f32 %v3395, %v7194
        %v7227 = vadd.f32 %v3396, %v7195
        %v7228 = vadd.f32 %v3397, %v7196
        %v7229 = vadd.f32 %v3398, %v7197
        %v7230 = vadd.f32 %v3399, %v7198
        %v7231 = vadd.f32 %v3400, %v7199
        %v7232 = vadd.f32 %v3401, %v7200
        %v7233 = vadd.f32 %v3402, %v7201
        %v7234 = vadd.f32 %v3403, %v7202
        %v7235 = vadd.f32 %v3404, %v7203
        %v7236 = vadd.f32 %v3405, %v7204
        %v7237 = vadd.f32 %v3406, %v7205
        %v7238 = vadd.f32 %v3407, %v7206
        %v7239 = vadd.f32 %v3408, %v7207
        %v7240 = vadd.f32 %v3409, %v7208
        %v7241 = vsel %vm417, %v7145, 0.0
        %v7242 = vsel %vm417, %v7146, 0.0
        %v7243 = vadd.f32 %v7241, %v7242
        %v7244 = vsel %vm417, %v7147, 0.0
        %v7245 = vadd.f32 %v7243, %v7244
        %v7246 = vsel %vm417, %v7148, 0.0
        %v7247 = vadd.f32 %v7245, %v7246
        %v7248 = vsel %vm417, %v7149, 0.0
        %v7249 = vadd.f32 %v7247, %v7248
        %v7250 = vsel %vm417, %v7150, 0.0
        %v7251 = vadd.f32 %v7249, %v7250
        %v7252 = vsel %vm417, %v7151, 0.0
        %v7253 = vadd.f32 %v7251, %v7252
        %v7254 = vsel %vm417, %v7152, 0.0
        %v7255 = vadd.f32 %v7253, %v7254
        %v7256 = vsel %vm417, %v7153, 0.0
        %v7257 = vadd.f32 %v7255, %v7256
        %v7258 = vsel %vm417, %v7154, 0.0
        %v7259 = vadd.f32 %v7257, %v7258
        %v7260 = vsel %vm417, %v7155, 0.0
        %v7261 = vadd.f32 %v7259, %v7260
        %v7262 = vsel %vm417, %v7156, 0.0
        %v7263 = vadd.f32 %v7261, %v7262
        %v7264 = vsel %vm417, %v7157, 0.0
        %v7265 = vadd.f32 %v7263, %v7264
        %v7266 = vsel %vm417, %v7158, 0.0
        %v7267 = vadd.f32 %v7265, %v7266
        %v7268 = vsel %vm417, %v7159, 0.0
        %v7269 = vadd.f32 %v7267, %v7268
        %v7270 = vsel %vm417, %v7160, 0.0
        %v7271 = vadd.f32 %v7269, %v7270
        %v7272 = vsel %vm417, %v7161, 0.0
        %v7273 = vadd.f32 %v7271, %v7272
        %v7274 = vsel %vm417, %v7162, 0.0
        %v7275 = vadd.f32 %v7273, %v7274
        %v7276 = vsel %vm417, %v7163, 0.0
        %v7277 = vadd.f32 %v7275, %v7276
        %v7278 = vsel %vm417, %v7164, 0.0
        %v7279 = vadd.f32 %v7277, %v7278
        %v7280 = vsel %vm417, %v7165, 0.0
        %v7281 = vadd.f32 %v7279, %v7280
        %v7282 = vsel %vm417, %v7166, 0.0
        %v7283 = vadd.f32 %v7281, %v7282
        %v7284 = vsel %vm417, %v7167, 0.0
        %v7285 = vadd.f32 %v7283, %v7284
        %v7286 = vsel %vm417, %v7168, 0.0
        %v7287 = vadd.f32 %v7285, %v7286
        %v7288 = vsel %vm417, %v7169, 0.0
        %v7289 = vadd.f32 %v7287, %v7288
        %v7290 = vsel %vm417, %v7170, 0.0
        %v7291 = vadd.f32 %v7289, %v7290
        %v7292 = vsel %vm417, %v7171, 0.0
        %v7293 = vadd.f32 %v7291, %v7292
        %v7294 = vsel %vm417, %v7172, 0.0
        %v7295 = vadd.f32 %v7293, %v7294
        %v7296 = vsel %vm417, %v7173, 0.0
        %v7297 = vadd.f32 %v7295, %v7296
        %v7298 = vsel %vm417, %v7174, 0.0
        %v7299 = vadd.f32 %v7297, %v7298
        %v7300 = vsel %vm417, %v7175, 0.0
        %v7301 = vadd.f32 %v7299, %v7300
        %v7302 = vsel %vm417, %v7176, 0.0
        %v7303 = vadd.f32 %v7301, %v7302
        %v7304 = vrot.slane %v7303, 4
        %v7305 = vadd.f32 %v7303, %v7304
        %v7306 = vrot.slane %v7305, 2
        %v7307 = vadd.f32 %v7305, %v7306
        %v7308 = vrot.slane %v7307, 1
        %v7309 = vadd.f32 %v7307, %v7308
        %v7310 = vrcp.pop 256.0
        %v7311 = vmul.f32 256.0, %v7310
        %v7312 = vsub.f32 1.0, %v7311
        %v7313 = vmul.f32 %v7310, %v7312
        %v7314 = vadd.f32 %v7310, %v7313
        %vm7315 = vweird.f32 %v7310
        %v7316 = vsel %vm7315, %v7310, %v7314
        %v7317 = vmul.f32 %v7309, %v7316
        %v7318 = vmul.f32 %v7317, 0.5
        %v7319 = vmul.f32 %v7317, %v2097
        %v7320 = vand.u32 2147483647, %v7319
        %v7321 = vmul.f32 %v7320, 0.3275911
        %v7322 = vadd.f32 %v7321, 1.0
        %v7323 = vrcp.pop %v7322
        %v7324 = vmul.f32 %v7322, %v7323
        %v7325 = vsub.f32 1.0, %v7324
        %v7326 = vmul.f32 %v7323, %v7325
        %v7327 = vadd.f32 %v7323, %v7326
        %vm7328 = vweird.f32 %v7322
        %vm7329 = vweird.f32 %v7323
        %vm7330 = vmor %vm7328, %vm7329
        %v7331 = vsel %vm7330, %v7323, %v7327
        %v7332 = vand.u32 2147483647, %v7322
        %vm7333 = vcmp.eq.f32.partialorder %v7332, 8.507059e+37
        %v7334 = vand.u32 %v7322, 2147483648
        %v7335 = vor.u32 1.1754944e-38, %v7334
        %v7336 = vsel %vm7333, %v7335, %v7331
        %v7337 = vmul.f32 1.0, %v7336
        %v7338 = vmul.f32 %v7337, 1.0614054
        %v7339 = vsub.f32 %v7338, 1.4531521
        %v7340 = vmul.f32 %v7339, %v7337
        %v7341 = vadd.f32 %v7340, 1.4214138
        %v7342 = vmul.f32 %v7341, %v7337
        %v7343 = vsub.f32 %v7342, 0.28449672
        %v7344 = vmul.f32 %v7343, %v7337
        %v7345 = vadd.f32 %v7344, 0.2548296
        %v7346 = vmul.f32 %v7345, %v7337
        %v7347 = vsub.f32 0.0, %v7320
        %v7348 = vmul.f32 %v7347, %v7320
        %v7349 = vmul.f32 %v7348, 1.442695
        %v7350 = vpow.pop %v7349
        %v7351 = vmul.f32 %v7346, %v7350
        %v7352 = vsub.f32 1.0, %v7351
        %vm7353 = vcmp.lt.f32.partialorder %v7319, 0.0
        %v7354 = vsub.f32 0.0, %v7352
        %v7355 = vsel %vm7353, %v7354, %v7352
        %v7356 = vadd.f32 %v7355, 1.0
        %v7357 = vmul.f32 %v7318, %v7356
        %v7358 = vmul.f32 %v7357, %v984
        %v7359 = vmul.f32 %v7357, %v987
        %v7360 = vmul.f32 %v7357, %v990
        %v7361 = vmul.f32 %v7357, %v993
        %v7362 = vmul.f32 %v7357, %v996
        %v7363 = vmul.f32 %v7357, %v999
        %v7364 = vmul.f32 %v7357, %v1002
        %v7365 = vmul.f32 %v7357, %v1005
        %v7366 = vmul.f32 %v7357, %v1008
        %v7367 = vmul.f32 %v7357, %v1011
        %v7368 = vmul.f32 %v7357, %v1014
        %v7369 = vmul.f32 %v7357, %v1017
        %v7370 = vmul.f32 %v7357, %v1020
        %v7371 = vmul.f32 %v7357, %v1023
        %v7372 = vmul.f32 %v7357, %v1026
        %v7373 = vmul.f32 %v7357, %v1029
        %v7374 = vmul.f32 %v7357, %v1032
        %v7375 = vmul.f32 %v7357, %v1035
        %v7376 = vmul.f32 %v7357, %v1038
        %v7377 = vmul.f32 %v7357, %v1041
        %v7378 = vmul.f32 %v7357, %v1044
        %v7379 = vmul.f32 %v7357, %v1047
        %v7380 = vmul.f32 %v7357, %v1050
        %v7381 = vmul.f32 %v7357, %v1053
        %v7382 = vmul.f32 %v7357, %v1056
        %v7383 = vmul.f32 %v7357, %v1059
        %v7384 = vmul.f32 %v7357, %v1062
        %v7385 = vmul.f32 %v7357, %v1065
        %v7386 = vmul.f32 %v7357, %v1068
        %v7387 = vmul.f32 %v7357, %v1071
        %v7388 = vmul.f32 %v7357, %v1074
        %v7389 = vmul.f32 %v7357, %v1077
        %v7390 = vadd.f32 %v7209, %v7358
        %v7391 = vadd.f32 %v7210, %v7359
        %v7392 = vadd.f32 %v7211, %v7360
        %v7393 = vadd.f32 %v7212, %v7361
        %v7394 = vadd.f32 %v7213, %v7362
        %v7395 = vadd.f32 %v7214, %v7363
        %v7396 = vadd.f32 %v7215, %v7364
        %v7397 = vadd.f32 %v7216, %v7365
        %v7398 = vadd.f32 %v7217, %v7366
        %v7399 = vadd.f32 %v7218, %v7367
        %v7400 = vadd.f32 %v7219, %v7368
        %v7401 = vadd.f32 %v7220, %v7369
        %v7402 = vadd.f32 %v7221, %v7370
        %v7403 = vadd.f32 %v7222, %v7371
        %v7404 = vadd.f32 %v7223, %v7372
        %v7405 = vadd.f32 %v7224, %v7373
        %v7406 = vadd.f32 %v7225, %v7374
        %v7407 = vadd.f32 %v7226, %v7375
        %v7408 = vadd.f32 %v7227, %v7376
        %v7409 = vadd.f32 %v7228, %v7377
        %v7410 = vadd.f32 %v7229, %v7378
        %v7411 = vadd.f32 %v7230, %v7379
        %v7412 = vadd.f32 %v7231, %v7380
        %v7413 = vadd.f32 %v7232, %v7381
        %v7414 = vadd.f32 %v7233, %v7382
        %v7415 = vadd.f32 %v7234, %v7383
        %v7416 = vadd.f32 %v7235, %v7384
        %v7417 = vadd.f32 %v7236, %v7385
        %v7418 = vadd.f32 %v7237, %v7386
        %v7419 = vadd.f32 %v7238, %v7387
        %v7420 = vadd.f32 %v7239, %v7388
        %v7421 = vadd.f32 %v7240, %v7389
        %v7422 = vld [vmem:[%s5] sm:$0xff]
        %v7423 = vld [vmem:[%s5 + $0x8] sm:$0xff]
        %v7424 = vld [vmem:[%s5 + $0x10] sm:$0xff]
        %v7425 = vld [vmem:[%s5 + $0x18] sm:$0xff]
        %v7426 = vld [vmem:[%s6] sm:$0x1]
        %v7428 = vperm.slane %v7426, 0
        %v7431 = vsel %vm417, %v7390, 0
        %v7434 = vsel %vm417, %v7391, 0
        %v7437 = vsel %vm417, %v7392, 0
        %v7440 = vsel %vm417, %v7393, 0
        %v7443 = vsel %vm417, %v7394, 0
        %v7446 = vsel %vm417, %v7395, 0
        %v7449 = vsel %vm417, %v7396, 0
        %v7452 = vsel %vm417, %v7397, 0
        %v7455 = vsel %vm417, %v7398, 0
        %v7458 = vsel %vm417, %v7399, 0
        %v7461 = vsel %vm417, %v7400, 0
        %v7464 = vsel %vm417, %v7401, 0
        %v7467 = vsel %vm417, %v7402, 0
        %v7470 = vsel %vm417, %v7403, 0
        %v7473 = vsel %vm417, %v7404, 0
        %v7476 = vsel %vm417, %v7405, 0
        %v7479 = vsel %vm417, %v7406, 0
        %v7482 = vsel %vm417, %v7407, 0
        %v7485 = vsel %vm417, %v7408, 0
        %v7488 = vsel %vm417, %v7409, 0
        %v7491 = vsel %vm417, %v7410, 0
        %v7494 = vsel %vm417, %v7411, 0
        %v7497 = vsel %vm417, %v7412, 0
        %v7500 = vsel %vm417, %v7413, 0
        %v7503 = vsel %vm417, %v7414, 0
        %v7506 = vsel %vm417, %v7415, 0
        %v7509 = vsel %vm417, %v7416, 0
        %v7512 = vsel %vm417, %v7417, 0
        %v7515 = vsel %vm417, %v7418, 0
        %v7518 = vsel %vm417, %v7419, 0
        %v7521 = vsel %vm417, %v7420, 0
        %v7524 = vsel %vm417, %v7421, 0
        %7526 = vmatpush.msra.mxu0 0.0
        %7527 = vmatpush.msra.mxu0 0.0
        %7528 = vmatpush.msra.mxu0 0.0
        %7529 = vmatpush.msra.mxu0 0.0
        %7530 = vmatpush.msra.mxu0 0.0
        %7531 = vmatpush.msra.mxu0 0.0
        %7532 = vmatpush.msra.mxu0 0.0
        %7533 = vmatpush.msra.mxu0 0.0
        %7534 = vmatpush.msra.mxu0 0.0
        %7535 = vmatpush.msra.mxu0 0.0
        %7536 = vmatpush.msra.mxu0 0.0
        %7537 = vmatpush.msra.mxu0 0.0
        %7538 = vmatpush.msra.mxu0 %v7425
        %7539 = vmatpush.msra.mxu0 %v7424
        %7540 = vmatpush.msra.mxu0 %v7423
        %7541 = vmatpush.msra.mxu0 %v7422
        %7542 = vmatmul.f32.gmra.mxu0 %v7431
        %v7543 = vpop.f32.mrf.mxu0
        %v7544 = vadd.f32 %v7428, %v7543
        %7545 = vmatmul.f32.gmra.mxu0 %v7434
        %v7546 = vpop.f32.mrf.mxu0
        %v7547 = vadd.f32 %v7428, %v7546
        %7548 = vmatmul.f32.gmra.mxu0 %v7437
        %v7549 = vpop.f32.mrf.mxu0
        %v7550 = vadd.f32 %v7428, %v7549
        %7551 = vmatmul.f32.gmra.mxu0 %v7440
        %v7552 = vpop.f32.mrf.mxu0
        %v7553 = vadd.f32 %v7428, %v7552
        %7554 = vmatmul.f32.gmra.mxu0 %v7443
        %v7555 = vpop.f32.mrf.mxu0
        %v7556 = vadd.f32 %v7428, %v7555
        %7557 = vmatmul.f32.gmra.mxu0 %v7446
        %v7558 = vpop.f32.mrf.mxu0
        %v7559 = vadd.f32 %v7428, %v7558
        %7560 = vmatmul.f32.gmra.mxu0 %v7449
        %v7561 = vpop.f32.mrf.mxu0
        %v7562 = vadd.f32 %v7428, %v7561
        %7563 = vmatmul.f32.gmra.mxu0 %v7452
        %v7564 = vpop.f32.mrf.mxu0
        %v7565 = vadd.f32 %v7428, %v7564
        %7566 = vmatmul.f32.gmra.mxu0 %v7455
        %v7567 = vpop.f32.mrf.mxu0
        %v7568 = vadd.f32 %v7428, %v7567
        %7569 = vmatmul.f32.gmra.mxu0 %v7458
        %v7570 = vpop.f32.mrf.mxu0
        %v7571 = vadd.f32 %v7428, %v7570
        %7572 = vmatmul.f32.gmra.mxu0 %v7461
        %v7573 = vpop.f32.mrf.mxu0
        %v7574 = vadd.f32 %v7428, %v7573
        %7575 = vmatmul.f32.gmra.mxu0 %v7464
        %v7576 = vpop.f32.mrf.mxu0
        %v7577 = vadd.f32 %v7428, %v7576
        %7578 = vmatmul.f32.gmra.mxu0 %v7467
        %v7579 = vpop.f32.mrf.mxu0
        %v7580 = vadd.f32 %v7428, %v7579
        %7581 = vmatmul.f32.gmra.mxu0 %v7470
        %v7582 = vpop.f32.mrf.mxu0
        %v7583 = vadd.f32 %v7428, %v7582
        %7584 = vmatmul.f32.gmra.mxu0 %v7473
        %v7585 = vpop.f32.mrf.mxu0
        %v7586 = vadd.f32 %v7428, %v7585
        %7587 = vmatmul.f32.gmra.mxu0 %v7476
        %v7588 = vpop.f32.mrf.mxu0
        %v7589 = vadd.f32 %v7428, %v7588
        %7590 = vmatmul.f32.gmra.mxu0 %v7479
        %v7591 = vpop.f32.mrf.mxu0
        %v7592 = vadd.f32 %v7428, %v7591
        %7593 = vmatmul.f32.gmra.mxu0 %v7482
        %v7594 = vpop.f32.mrf.mxu0
        %v7595 = vadd.f32 %v7428, %v7594
        %7596 = vmatmul.f32.gmra.mxu0 %v7485
        %v7597 = vpop.f32.mrf.mxu0
        %v7598 = vadd.f32 %v7428, %v7597
        %7599 = vmatmul.f32.gmra.mxu0 %v7488
        %v7600 = vpop.f32.mrf.mxu0
        %v7601 = vadd.f32 %v7428, %v7600
        %7602 = vmatmul.f32.gmra.mxu0 %v7491
        %v7603 = vpop.f32.mrf.mxu0
        %v7604 = vadd.f32 %v7428, %v7603
        %7605 = vmatmul.f32.gmra.mxu0 %v7494
        %v7606 = vpop.f32.mrf.mxu0
        %v7607 = vadd.f32 %v7428, %v7606
        %7608 = vmatmul.f32.gmra.mxu0 %v7497
        %v7609 = vpop.f32.mrf.mxu0
        %v7610 = vadd.f32 %v7428, %v7609
        %7611 = vmatmul.f32.gmra.mxu0 %v7500
        %v7612 = vpop.f32.mrf.mxu0
        %v7613 = vadd.f32 %v7428, %v7612
        %7614 = vmatmul.f32.gmra.mxu0 %v7503
        %v7615 = vpop.f32.mrf.mxu0
        %v7616 = vadd.f32 %v7428, %v7615
        %7617 = vmatmul.f32.gmra.mxu0 %v7506
        %v7618 = vpop.f32.mrf.mxu0
        %v7619 = vadd.f32 %v7428, %v7618
        %7620 = vmatmul.f32.gmra.mxu0 %v7509
        %v7621 = vpop.f32.mrf.mxu0
        %v7622 = vadd.f32 %v7428, %v7621
        %7623 = vmatmul.f32.gmra.mxu0 %v7512
        %v7624 = vpop.f32.mrf.mxu0
        %v7625 = vadd.f32 %v7428, %v7624
        %7626 = vmatmul.f32.gmra.mxu0 %v7515
        %v7627 = vpop.f32.mrf.mxu0
        %v7628 = vadd.f32 %v7428, %v7627
        %7629 = vmatmul.f32.gmra.mxu0 %v7518
        %v7630 = vpop.f32.mrf.mxu0
        %v7631 = vadd.f32 %v7428, %v7630
        %7632 = vmatmul.f32.gmra.mxu0 %v7521
        %v7633 = vpop.f32.mrf.mxu0
        %v7634 = vadd.f32 %v7428, %v7633
        %7635 = vmatmul.f32.gmra.mxu0 %v7524
        %v7636 = vpop.f32.mrf.mxu0
        %v7637 = vadd.f32 %v7428, %v7636
        %7638 = vdwg.mxu0
        %v7639 = vmul.f32 %v532, %v7544
        %v7640 = vmul.f32 %v535, %v7547
        %v7641 = vmul.f32 %v538, %v7550
        %v7642 = vmul.f32 %v541, %v7553
        %v7643 = vmul.f32 %v544, %v7556
        %v7644 = vmul.f32 %v547, %v7559
        %v7645 = vmul.f32 %v550, %v7562
        %v7646 = vmul.f32 %v553, %v7565
        %v7647 = vmul.f32 %v556, %v7568
        %v7648 = vmul.f32 %v559, %v7571
        %v7649 = vmul.f32 %v562, %v7574
        %v7650 = vmul.f32 %v565, %v7577
        %v7651 = vmul.f32 %v568, %v7580
        %v7652 = vmul.f32 %v571, %v7583
        %v7653 = vmul.f32 %v574, %v7586
        %v7654 = vmul.f32 %v577, %v7589
        %v7655 = vmul.f32 %v580, %v7592
        %v7656 = vmul.f32 %v583, %v7595
        %v7657 = vmul.f32 %v586, %v7598
        %v7658 = vmul.f32 %v589, %v7601
        %v7659 = vmul.f32 %v592, %v7604
        %v7660 = vmul.f32 %v595, %v7607
        %v7661 = vmul.f32 %v598, %v7610
        %v7662 = vmul.f32 %v601, %v7613
        %v7663 = vmul.f32 %v604, %v7616
        %v7664 = vmul.f32 %v607, %v7619
        %v7665 = vmul.f32 %v610, %v7622
        %v7666 = vmul.f32 %v613, %v7625
        %v7667 = vmul.f32 %v616, %v7628
        %v7668 = vmul.f32 %v619, %v7631
        %v7669 = vmul.f32 %v622, %v7634
        %v7670 = vmul.f32 %v625, %v7637
        %v7671 = vld [vmem:[%s7] sm:$0xff]
        %v7672 = vld [vmem:[%s7 + $0x8] sm:$0xff]
        %v7673 = vld [vmem:[%s7 + $0x10] sm:$0xff]
        %v7674 = vld [vmem:[%s7 + $0x18] sm:$0xff]
        %v7675 = vld [vmem:[%s8] sm:$0x1]
        %v7677 = vperm.slane %v7675, 0
        %v7680 = vsel %vm417, %v7639, 0
        %v7683 = vsel %vm417, %v7640, 0
        %v7686 = vsel %vm417, %v7641, 0
        %v7689 = vsel %vm417, %v7642, 0
        %v7692 = vsel %vm417, %v7643, 0
        %v7695 = vsel %vm417, %v7644, 0
        %v7698 = vsel %vm417, %v7645, 0
        %v7701 = vsel %vm417, %v7646, 0
        %v7704 = vsel %vm417, %v7647, 0
        %v7707 = vsel %vm417, %v7648, 0
        %v7710 = vsel %vm417, %v7649, 0
        %v7713 = vsel %vm417, %v7650, 0
        %v7716 = vsel %vm417, %v7651, 0
        %v7719 = vsel %vm417, %v7652, 0
        %v7722 = vsel %vm417, %v7653, 0
        %v7725 = vsel %vm417, %v7654, 0
        %v7728 = vsel %vm417, %v7655, 0
        %v7731 = vsel %vm417, %v7656, 0
        %v7734 = vsel %vm417, %v7657, 0
        %v7737 = vsel %vm417, %v7658, 0
        %v7740 = vsel %vm417, %v7659, 0
        %v7743 = vsel %vm417, %v7660, 0
        %v7746 = vsel %vm417, %v7661, 0
        %v7749 = vsel %vm417, %v7662, 0
        %v7752 = vsel %vm417, %v7663, 0
        %v7755 = vsel %vm417, %v7664, 0
        %v7758 = vsel %vm417, %v7665, 0
        %v7761 = vsel %vm417, %v7666, 0
        %v7764 = vsel %vm417, %v7667, 0
        %v7767 = vsel %vm417, %v7668, 0
        %v7770 = vsel %vm417, %v7669, 0
        %v7773 = vsel %vm417, %v7670, 0
        %7775 = vmatpush.msra.mxu0 0.0
        %7776 = vmatpush.msra.mxu0 0.0
        %7777 = vmatpush.msra.mxu0 0.0
        %7778 = vmatpush.msra.mxu0 0.0
        %7779 = vmatpush.msra.mxu0 0.0
        %7780 = vmatpush.msra.mxu0 0.0
        %7781 = vmatpush.msra.mxu0 0.0
        %7782 = vmatpush.msra.mxu0 0.0
        %7783 = vmatpush.msra.mxu0 0.0
        %7784 = vmatpush.msra.mxu0 0.0
        %7785 = vmatpush.msra.mxu0 0.0
        %7786 = vmatpush.msra.mxu0 0.0
        %7787 = vmatpush.msra.mxu0 %v7674
        %7788 = vmatpush.msra.mxu0 %v7673
        %7789 = vmatpush.msra.mxu0 %v7672
        %7790 = vmatpush.msra.mxu0 %v7671
        %7791 = vmatmul.f32.gmra.mxu0 %v7680
        %v7792 = vpop.f32.mrf.mxu0
        %v7793 = vadd.f32 %v7677, %v7792
        %7794 = vmatmul.f32.gmra.mxu0 %v7683
        %v7795 = vpop.f32.mrf.mxu0
        %v7796 = vadd.f32 %v7677, %v7795
        %7797 = vmatmul.f32.gmra.mxu0 %v7686
        %v7798 = vpop.f32.mrf.mxu0
        %v7799 = vadd.f32 %v7677, %v7798
        %7800 = vmatmul.f32.gmra.mxu0 %v7689
        %v7801 = vpop.f32.mrf.mxu0
        %v7802 = vadd.f32 %v7677, %v7801
        %7803 = vmatmul.f32.gmra.mxu0 %v7692
        %v7804 = vpop.f32.mrf.mxu0
        %v7805 = vadd.f32 %v7677, %v7804
        %7806 = vmatmul.f32.gmra.mxu0 %v7695
        %v7807 = vpop.f32.mrf.mxu0
        %v7808 = vadd.f32 %v7677, %v7807
        %7809 = vmatmul.f32.gmra.mxu0 %v7698
        %v7810 = vpop.f32.mrf.mxu0
        %v7811 = vadd.f32 %v7677, %v7810
        %7812 = vmatmul.f32.gmra.mxu0 %v7701
        %v7813 = vpop.f32.mrf.mxu0
        %v7814 = vadd.f32 %v7677, %v7813
        %7815 = vmatmul.f32.gmra.mxu0 %v7704
        %v7816 = vpop.f32.mrf.mxu0
        %v7817 = vadd.f32 %v7677, %v7816
        %7818 = vmatmul.f32.gmra.mxu0 %v7707
        %v7819 = vpop.f32.mrf.mxu0
        %v7820 = vadd.f32 %v7677, %v7819
        %7821 = vmatmul.f32.gmra.mxu0 %v7710
        %v7822 = vpop.f32.mrf.mxu0
        %v7823 = vadd.f32 %v7677, %v7822
        %7824 = vmatmul.f32.gmra.mxu0 %v7713
        %v7825 = vpop.f32.mrf.mxu0
        %v7826 = vadd.f32 %v7677, %v7825
        %7827 = vmatmul.f32.gmra.mxu0 %v7716
        %v7828 = vpop.f32.mrf.mxu0
        %v7829 = vadd.f32 %v7677, %v7828
        %7830 = vmatmul.f32.gmra.mxu0 %v7719
        %v7831 = vpop.f32.mrf.mxu0
        %v7832 = vadd.f32 %v7677, %v7831
        %7833 = vmatmul.f32.gmra.mxu0 %v7722
        %v7834 = vpop.f32.mrf.mxu0
        %v7835 = vadd.f32 %v7677, %v7834
        %7836 = vmatmul.f32.gmra.mxu0 %v7725
        %v7837 = vpop.f32.mrf.mxu0
        %v7838 = vadd.f32 %v7677, %v7837
        %7839 = vmatmul.f32.gmra.mxu0 %v7728
        %v7840 = vpop.f32.mrf.mxu0
        %v7841 = vadd.f32 %v7677, %v7840
        %7842 = vmatmul.f32.gmra.mxu0 %v7731
        %v7843 = vpop.f32.mrf.mxu0
        %v7844 = vadd.f32 %v7677, %v7843
        %7845 = vmatmul.f32.gmra.mxu0 %v7734
        %v7846 = vpop.f32.mrf.mxu0
        %v7847 = vadd.f32 %v7677, %v7846
        %7848 = vmatmul.f32.gmra.mxu0 %v7737
        %v7849 = vpop.f32.mrf.mxu0
        %v7850 = vadd.f32 %v7677, %v7849
        %7851 = vmatmul.f32.gmra.mxu0 %v7740
        %v7852 = vpop.f32.mrf.mxu0
        %v7853 = vadd.f32 %v7677, %v7852
        %7854 = vmatmul.f32.gmra.mxu0 %v7743
        %v7855 = vpop.f32.mrf.mxu0
        %v7856 = vadd.f32 %v7677, %v7855
        %7857 = vmatmul.f32.gmra.mxu0 %v7746
        %v7858 = vpop.f32.mrf.mxu0
        %v7859 = vadd.f32 %v7677, %v7858
        %7860 = vmatmul.f32.gmra.mxu0 %v7749
        %v7861 = vpop.f32.mrf.mxu0
        %v7862 = vadd.f32 %v7677, %v7861
        %7863 = vmatmul.f32.gmra.mxu0 %v7752
        %v7864 = vpop.f32.mrf.mxu0
        %v7865 = vadd.f32 %v7677, %v7864
        %7866 = vmatmul.f32.gmra.mxu0 %v7755
        %v7867 = vpop.f32.mrf.mxu0
        %v7868 = vadd.f32 %v7677, %v7867
        %7869 = vmatmul.f32.gmra.mxu0 %v7758
        %v7870 = vpop.f32.mrf.mxu0
        %v7871 = vadd.f32 %v7677, %v7870
        %7872 = vmatmul.f32.gmra.mxu0 %v7761
        %v7873 = vpop.f32.mrf.mxu0
        %v7874 = vadd.f32 %v7677, %v7873
        %7875 = vmatmul.f32.gmra.mxu0 %v7764
        %v7876 = vpop.f32.mrf.mxu0
        %v7877 = vadd.f32 %v7677, %v7876
        %7878 = vmatmul.f32.gmra.mxu0 %v7767
        %v7879 = vpop.f32.mrf.mxu0
        %v7880 = vadd.f32 %v7677, %v7879
        %7881 = vmatmul.f32.gmra.mxu0 %v7770
        %v7882 = vpop.f32.mrf.mxu0
        %v7883 = vadd.f32 %v7677, %v7882
        %7884 = vmatmul.f32.gmra.mxu0 %v7773
        %v7885 = vpop.f32.mrf.mxu0
        %v7886 = vadd.f32 %v7677, %v7885
        %7887 = vdwg.mxu0
        %7888 = vst.msk [vmem:[%s352] sm:$0xff] %vm417, %v7793
        %7889 = vst.msk [vmem:[%s352 + $0x8] sm:$0xff] %vm417, %v7796
        %7890 = vst.msk [vmem:[%s352 + $0x10] sm:$0xff] %vm417, %v7799
        %7891 = vst.msk [vmem:[%s352 + $0x18] sm:$0xff] %vm417, %v7802
        %7892 = vst.msk [vmem:[%s352 + $0x20] sm:$0xff] %vm417, %v7805
        %7893 = vst.msk [vmem:[%s352 + $0x28] sm:$0xff] %vm417, %v7808
        %7894 = vst.msk [vmem:[%s352 + $0x30] sm:$0xff] %vm417, %v7811
        %7895 = vst.msk [vmem:[%s352 + $0x38] sm:$0xff] %vm417, %v7814
        %7896 = vst.msk [vmem:[%s352 + $0x40] sm:$0xff] %vm417, %v7817
        %7897 = vst.msk [vmem:[%s352 + $0x48] sm:$0xff] %vm417, %v7820
        %7898 = vst.msk [vmem:[%s352 + $0x50] sm:$0xff] %vm417, %v7823
        %7899 = vst.msk [vmem:[%s352 + $0x58] sm:$0xff] %vm417, %v7826
        %7900 = vst.msk [vmem:[%s352 + $0x60] sm:$0xff] %vm417, %v7829
        %7901 = vst.msk [vmem:[%s352 + $0x68] sm:$0xff] %vm417, %v7832
        %7902 = vst.msk [vmem:[%s352 + $0x70] sm:$0xff] %vm417, %v7835
        %7903 = vst.msk [vmem:[%s352 + $0x78] sm:$0xff] %vm417, %v7838
        %7904 = vst.msk [vmem:[%s352 + $0x80] sm:$0xff] %vm417, %v7841
        %7905 = vst.msk [vmem:[%s352 + $0x88] sm:$0xff] %vm417, %v7844
        %7906 = vst.msk [vmem:[%s352 + $0x90] sm:$0xff] %vm417, %v7847
        %7907 = vst.msk [vmem:[%s352 + $0x98] sm:$0xff] %vm417, %v7850
        %7908 = vst.msk [vmem:[%s352 + $0xa0] sm:$0xff] %vm417, %v7853
        %7909 = vst.msk [vmem:[%s352 + $0xa8] sm:$0xff] %vm417, %v7856
        %7910 = vst.msk [vmem:[%s352 + $0xb0] sm:$0xff] %vm417, %v7859
        %7911 = vst.msk [vmem:[%s352 + $0xb8] sm:$0xff] %vm417, %v7862
        %7912 = vst.msk [vmem:[%s352 + $0xc0] sm:$0xff] %vm417, %v7865
        %7913 = vst.msk [vmem:[%s352 + $0xc8] sm:$0xff] %vm417, %v7868
        %7914 = vst.msk [vmem:[%s352 + $0xd0] sm:$0xff] %vm417, %v7871
        %7915 = vst.msk [vmem:[%s352 + $0xd8] sm:$0xff] %vm417, %v7874
        %7916 = vst.msk [vmem:[%s352 + $0xe0] sm:$0xff] %vm417, %v7877
        %7917 = vst.msk [vmem:[%s352 + $0xe8] sm:$0xff] %vm417, %v7880
        %7918 = vst.msk [vmem:[%s352 + $0xf0] sm:$0xff] %vm417, %v7883
        %7919 = vst.msk [vmem:[%s352 + $0xf8] sm:$0xff] %vm417, %v7886
        %s7920 = sand.u32 %s228, 1
        %s7921 = scalar_lea.sflag [#allocation5], %s7920
        %s7922 = sand.u32 %s228, 1
        %s7923 = smul.addr %s7922, 256
        %s7924 = scalar_lea.vmem [#allocation6], %s7923
        // Predicated region
        $region61: #{focal_modulation_forward.1} parent=55 // pred_check
          %p7925 = pneg %p238
        $region62: #{focal_modulation_forward.1} parent=55 // pred_check_branch
          %7927 = sbr.rel (%p7925) target = $region64
        $region63: #{focal_modulation_forward.1} parent=55 // pred_region
          %7929 = vsyncadd %s7921, 0
          %s7930 = smul.addr %s26, 32
          %s7931 = smul.addr %s7930, 8
          %s7932 = scalar_lea.hbm %s9, %s7931
          %s7933 = sshll.u32 %s7924, 4
          %s7934 = int_to_ptr.vmem [resolvable:$true] %s7933
          %s7935 = sshll.u32 %s7932, 4
          %s7936 = int_to_ptr.hbm [resolvable:$true] %s7935
          %7941 = dma.vmem_to_hbm [thread:$0]  %s7934, 4096, %s7936, %s7921, 128, 128, 8
        $region64: #{focal_modulation_forward.1} parent=55 // pred_fallthru
          _
      $region56: #{focal_modulation_forward.1} parent=5 // pred_fallthru
        _
      %p7942 = scmp.le.s32.totalorder 2, %s21
      // Predicated region
      $region65: #{focal_modulation_forward.1} parent=5 // pred_check
        %p7943 = pneg %p7942
      $region66: #{focal_modulation_forward.1} parent=5 // pred_check_branch
        %7945 = sbr.rel (%p7943) target = $region68
      $region67: #{focal_modulation_forward.1} parent=5 // pred_region
        %s7946 = ssub.s32 %s21, 2
        // Predicated region
        $region69: #{focal_modulation_forward.1} parent=67 // pred_check
          %p7947 = pneg %p244
        $region70: #{focal_modulation_forward.1} parent=67 // pred_check_branch
          %7949 = sbr.rel (%p7947) target = $region72
        $region71: #{focal_modulation_forward.1} parent=67 // pred_region
          %s7950 = sand.u32 %s229, 1
          %s7951 = scalar_lea.sflag [#allocation5], %s7950
          %s7952 = sand.u32 %s229, 1
          %s7953 = smul.addr %s7952, 256
          %s7954 = scalar_lea.vmem [#allocation6], %s7953
          %7956 = dma.done %s7951, 4096
        $region72: #{focal_modulation_forward.1} parent=67 // pred_fallthru
          _
      $region68: #{focal_modulation_forward.1} parent=5 // pred_fallthru
        _
    $region6: #{focal_modulation_forward.1} parent=1 // loop_footer
      %s25 = sadd.s32 1, %s21
    $region7: #{focal_modulation_forward.1} parent=1 // loop_footer_branch
      %20 = sbr.rel target = $region3
    $region8: #{focal_modulation_forward.1} parent=1 // loop_exit
      _
    %7957 = vsyncpa [#allocation4], 1
    %s7958 = scalar_lea.sflag [#allocation4], 1
    %7959 = vsyncpa %s7958, 1
    %7960 = vsyncpa [#allocation5], 1
    %s7961 = scalar_lea.sflag [#allocation5], 1
    %7962 = vsyncpa %s7961, 1

</llo_original>
